<compile_context>
chip_gen: v7x
topology: tpu7x:2x2x1
jax: 0.10.0
libtpu: 0.0.40
codegen_flags: <defaults>
</compile_context>

<pallas_src>
import functools

import jax
import jax.numpy as jnp
from jax.experimental import pallas as pl
from jax.experimental.pallas import tpu as pltpu

_EPS = 1e-5


# ---------------------------------------------------------------------------
# Fused Pallas kernel: one batch element per grid step.
# ---------------------------------------------------------------------------
def _depth_corr_kernel(zcol_ref, xcol_ref,
                       wk_ref, bk_ref,
                       ws_ref, bs_ref,
                       w1_ref, b1_ref,
                       w2t_ref,
                       out_ref,
                       kf_scr, sf3_scr, feat_scr,
                       *, kh, kw, sh, sw, oh, ow, cout, chunk):
    hidden = kf_scr.shape[-1]

    # conv_kernel on template: (mk, 9*Cin) @ (9*Cin, hidden), BN scale folded.
    kf = jnp.dot(zcol_ref[0], wk_ref[...], preferred_element_type=jnp.float32)
    kf_scr[...] = jnp.maximum(kf + bk_ref[...], 0.0)

    # conv_search on search image: one small matmul per spatial row, written
    # straight into the (sh, sw, hidden) spatial scratch (no flat intermediate
    # + relayout pass).
    for i in range(sh):
        sfi = jnp.dot(xcol_ref[0, i * sw:(i + 1) * sw, :], ws_ref[...],
                      preferred_element_type=jnp.float32)
        sf3_scr[i] = jnp.maximum(sfi + bs_ref[...], 0.0)

    # Depthwise cross-correlation: shift-and-MAC over the template extent.
    acc = jnp.zeros((oh, ow, hidden), jnp.float32)
    for p in range(kh):
        for q in range(kw):
            win = sf3_scr[p:p + oh, q:q + ow, :]            # (oh, ow, hidden)
            kv = kf_scr[p * kw + q:p * kw + q + 1, :]        # (1, hidden)
            acc = acc + win * kv

    # Flatten (oh, ow, hidden) -> (oh*ow, hidden) with row stores (stays in VMEM).
    # TODO(synk): a direct (oh,ow,hidden)->(oh*ow,hidden) value reshape would drop
    # this scratch, but a sublane-merging reshape is not reliably lowerable.
    for i in range(oh):
        feat_scr[i * ow:(i + 1) * ow, :] = acc[i]

    # head-1: 1x1 conv + folded BN + ReLU.  The weight has an extra zero column
    # and the bias an extra 1.0 entry, so h gets an all-ones last column that
    # carries the head-2 bias through the final matmul.
    h = jnp.dot(feat_scr[...].astype(jnp.bfloat16), w1_ref[...],
                preferred_element_type=jnp.float32)
    h_bf = jnp.maximum(h + b1_ref[...], 0.0).astype(jnp.bfloat16)   # (mo, hidden+1)

    # head-2, emitted channel-major (cout, mo) in row chunks:
    #   out[c, m] = sum_k w2t[c, k] * h[m, k]   (bias folded into last k).
    c0 = 0
    while c0 < cout:
        csz = min(chunk, cout - c0)
        oc = jax.lax.dot_general(
            w2t_ref[c0:c0 + csz, :], h_bf,
            (((1,), (1,)), ((), ())),                # contract hidden+1 on both
            preferred_element_type=jnp.float32)      # (csz, mo)
        out_ref[0, c0:c0 + csz, :] = oc.astype(out_ref.dtype)
        c0 += csz


# ---------------------------------------------------------------------------
# Glue: BN folding, im2col, weight prep, pallas_call wrapper.
# ---------------------------------------------------------------------------
def _fold_bn(gamma, beta, mean, var):
    scale = gamma / jnp.sqrt(var + _EPS)
    bias = beta - mean * scale
    return scale, bias


def _im2col3x3(x_nhwc):
    """(B, H, W, C) -> (B, (H-2)*(W-2), 9*C), column order (p, q, c)."""
    B, H, W, C = x_nhwc.shape
    Ho, Wo = H - 2, W - 2
    cols = [x_nhwc[:, p:p + Ho, q:q + Wo, :] for p in range(3) for q in range(3)]
    return jnp.concatenate(cols, axis=-1).reshape(B, Ho * Wo, 9 * C)


def depth_corr_forward(z_nchw, x_nchw, params):
    """DepthCorr.forward(kernel=z, search=x) -> (B, out_channels, Ho, Wo)."""
    z = jnp.transpose(z_nchw, (0, 2, 3, 1)).astype(jnp.float32)   # NCHW -> NHWC
    x = jnp.transpose(x_nchw, (0, 2, 3, 1)).astype(jnp.float32)
    B, Hz, Wz, cin = z.shape
    _, Hx, Wx, _ = x.shape
    hidden = params["wk"].shape[0]
    cout = params["wh2"].shape[0]

    kh, kw = Hz - 2, Wz - 2            # template feature spatial size
    sh, sw = Hx - 2, Wx - 2            # search feature spatial size
    oh, ow = sh - kh + 1, sw - kw + 1  # xcorr / output spatial size
    mk, ms, mo = kh * kw, sh * sw, oh * ow
    kc = 9 * cin

    # im2col (tiny at these sizes), bf16 operands for the MXU.
    zcol = _im2col3x3(z).astype(jnp.bfloat16)          # (B, mk, kc)
    xcol = _im2col3x3(x).astype(jnp.bfloat16)          # (B, ms, kc)

    sk, bk = _fold_bn(*params["bnk"])
    ss, bs = _fold_bn(*params["bns"])
    s1, b1 = _fold_bn(*params["bnh1"])

    # Fold BN scales into the weights; cast weights to bf16 (f32 accumulation
    # happens inside the kernel via preferred_element_type).
    wk_m = (jnp.transpose(params["wk"], (2, 3, 1, 0)).reshape(kc, hidden)
            * sk[None, :]).astype(jnp.bfloat16)
    ws_m = (jnp.transpose(params["ws"], (2, 3, 1, 0)).reshape(kc, hidden)
            * ss[None, :]).astype(jnp.bfloat16)

    w1_m = jnp.transpose(params["wh1"], (2, 3, 1, 0)).reshape(hidden, hidden) * s1[None, :]
    w1_aug = jnp.concatenate(
        [w1_m, jnp.zeros((hidden, 1), jnp.float32)], axis=1).astype(jnp.bfloat16)
    b1_aug = jnp.concatenate([b1, jnp.ones((1,), jnp.float32)]).reshape(1, hidden + 1)

    # head-2 weight, transposed (cout, hidden) with the bias as an extra column.
    w2_m = jnp.transpose(params["wh2"], (2, 3, 1, 0)).reshape(hidden, cout)
    w2t_aug = jnp.concatenate(
        [w2_m.T, params["bh2"].reshape(cout, 1)], axis=1).astype(jnp.bfloat16)

    const = lambda shape: pl.BlockSpec(shape, lambda b: (0,) * len(shape))

    kernel = functools.partial(_depth_corr_kernel,
                               kh=kh, kw=kw, sh=sh, sw=sw, oh=oh, ow=ow,
                               cout=cout, chunk=256)

    out = pl.pallas_call(
        kernel,
        out_shape=jax.ShapeDtypeStruct((B, cout, mo), jnp.float32),
        grid_spec=pltpu.PrefetchScalarGridSpec(
            num_scalar_prefetch=0,
            grid=(B,),
            in_specs=[
                pl.BlockSpec((1, mk, kc), lambda b: (b, 0, 0)),   # zcol
                pl.BlockSpec((1, ms, kc), lambda b: (b, 0, 0)),   # xcol
                const((kc, hidden)), const((1, hidden)),          # conv_kernel W, b
                const((kc, hidden)), const((1, hidden)),          # conv_search W, b
                const((hidden, hidden + 1)), const((1, hidden + 1)),  # head-1 W, b
                const((cout, hidden + 1)),                        # head-2 W^T (+bias col)
            ],
            out_specs=pl.BlockSpec((1, cout, mo), lambda b: (b, 0, 0)),
            scratch_shapes=[
                pltpu.VMEM((mk, hidden), jnp.float32),        # template features
                pltpu.VMEM((sh, sw, hidden), jnp.float32),    # search features (spatial)
                pltpu.VMEM((mo, hidden), jnp.float32),        # xcorr feature (flat)
            ]),
        compiler_params=pltpu.CompilerParams(
            dimension_semantics=("parallel",)),
    )(zcol, xcol,
      wk_m, bk.reshape(1, hidden).astype(jnp.float32),
      ws_m, bs.reshape(1, hidden).astype(jnp.float32),
      w1_aug, b1_aug.astype(jnp.float32),
      w2t_aug)

    # Kernel output is already channel-major (B, cout, oh*ow): NCHW is a free reshape.
    return out.reshape(B, cout, oh, ow)


# ---------------------------------------------------------------------------
# Pure-JAX NCHW reference (mirrors the PyTorch module, eval-mode BN).
# ---------------------------------------------------------------------------
def _reference_forward(z, x, params):
    hi = jax.lax.Precision.HIGHEST

    def conv3x3_bn_relu(inp, w, bn):
        B, C, H, W = inp.shape
        out = jnp.zeros((B, w.shape[0], H - 2, W - 2), jnp.float32)
        for p in range(3):
            for q in range(3):
                patch = inp[:, :, p:p + H - 2, q:q + W - 2]
                out = out + jnp.einsum('bchw,oc->bohw', patch, w[:, :, p, q],
                                       precision=hi)
        g, beta, m, v = bn
        scale = g / jnp.sqrt(v + _EPS)
        bias = beta - m * scale
        return jnp.maximum(out * scale[None, :, None, None]
                           + bias[None, :, None, None], 0.0)

    kf = conv3x3_bn_relu(z, params["wk"], params["bnk"])
    sf = conv3x3_bn_relu(x, params["ws"], params["bns"])

    B, C, Hk, Wk = kf.shape
    Hs, Ws = sf.shape[2], sf.shape[3]
    Ho, Wo = Hs - Hk + 1, Ws - Wk + 1
    feat = jnp.zeros((B, C, Ho, Wo), jnp.float32)
    for p in range(Hk):
        for q in range(Wk):
            feat = feat + sf[:, :, p:p + Ho, q:q + Wo] * kf[:, :, p:p + 1, q:q + 1]

    g, beta, m, v = params["bnh1"]
    scale = g / jnp.sqrt(v + _EPS)
    bias = beta - m * scale
    h = jnp.einsum('bchw,oc->bohw', feat, params["wh1"][:, :, 0, 0], precision=hi)
    h = jnp.maximum(h * scale[None, :, None, None] + bias[None, :, None, None], 0.0)
    out = jnp.einsum('bchw,oc->bohw', h, params["wh2"][:, :, 0, 0], precision=hi)
    return out + params["bh2"][None, :, None, None]


# ---------------------------------------------------------------------------
# Deterministic synthetic parameters (eval-mode BatchNorm statistics).
# ---------------------------------------------------------------------------
def _init_bn(key, c):
    k1, k2, k3, k4 = jax.random.split(key, 4)
    gamma = 1.0 + 0.1 * jax.random.normal(k1, (c,), jnp.float32)
    beta = 0.1 * jax.random.normal(k2, (c,), jnp.float32)
    mean = 0.05 * jax.random.normal(k3, (c,), jnp.float32)
    var = 0.5 + 0.1 * jnp.abs(jax.random.normal(k4, (c,), jnp.float32))
    return (gamma, beta, mean, var)


def init_depth_corr_params(key, in_channels, hidden, out_channels):
    ks = jax.random.split(key, 8)
    return {
        "wk": 0.05 * jax.random.normal(ks[0], (hidden, in_channels, 3, 3), jnp.float32),
        "bnk": _init_bn(ks[1], hidden),
        "ws": 0.05 * jax.random.normal(ks[2], (hidden, in_channels, 3, 3), jnp.float32),
        "bns": _init_bn(ks[3], hidden),
        "wh1": 0.05 * jax.random.normal(ks[4], (hidden, hidden, 1, 1), jnp.float32),
        "bnh1": _init_bn(ks[5], hidden),
        "wh2": 0.05 * jax.random.normal(ks[6], (out_channels, hidden, 1, 1), jnp.float32),
        "bh2": 0.05 * jax.random.normal(ks[7], (out_channels,), jnp.float32),
    }


if __name__ == "__main__":
    B, in_channels, hidden = 2, 4, 32
    Hz, Hx = 8, 16                    # template / search spatial size
    out_channels = 63 * 63            # SiamMask mask head

    key = jax.random.PRNGKey(0)
    kp, kd = jax.random.split(key)
    params = init_depth_corr_params(kp, in_channels, hidden, out_channels)
    kz, kx = jax.random.split(kd)
    z = jax.random.normal(kz, (B, in_channels, Hz, Hz), jnp.float32)   # "kernel"
    x = jax.random.normal(kx, (B, in_channels, Hx, Hx), jnp.float32)   # "search"

    out = jax.block_until_ready(jax.jit(depth_corr_forward)(z, x, params))

    oh = (Hx - 2) - (Hz - 2) + 1
    assert out.shape == (B, out_channels, oh, oh), out.shape
    assert out.dtype == jnp.float32
    assert bool(jnp.all(jnp.isfinite(out)))

    ref = _reference_forward(z, x, params)
    err = float(jnp.max(jnp.abs(out - ref)))
    assert err < 2e-2, f"max abs error vs reference: {err}"

    print("KERNEL_OK")
</pallas_src>

<mosaic_0001>
module attributes {stable_mosaic.version = 11 : i64} {
  func.func @_depth_corr_kernel(%arg0: i32, %arg1: memref<1x36x36xbf16, #tpu.memory_space<vmem>>, %arg2: memref<1x196x36xbf16, #tpu.memory_space<vmem>>, %arg3: memref<36x32xbf16, #tpu.memory_space<vmem>>, %arg4: memref<1x32xf32, #tpu.memory_space<vmem>>, %arg5: memref<36x32xbf16, #tpu.memory_space<vmem>>, %arg6: memref<1x32xf32, #tpu.memory_space<vmem>>, %arg7: memref<32x33xbf16, #tpu.memory_space<vmem>>, %arg8: memref<1x33xf32, #tpu.memory_space<vmem>>, %arg9: memref<3969x33xbf16, #tpu.memory_space<vmem>>, %arg10: memref<1x3969x81xf32, #tpu.memory_space<vmem>>, %arg11: memref<36x32xf32, #tpu.memory_space<vmem>>, %arg12: memref<14x14x32xf32, #tpu.memory_space<vmem>>, %arg13: memref<81x32xf32, #tpu.memory_space<vmem>>) attributes {dimension_semantics = [#tpu.dimension_semantics<parallel>], iteration_bounds = array<i64: 2>, scalar_prefetch = 0 : i64, scratch_operands = 3 : i64, tpu.core_type = #tpu.core_type<tc>, window_params = [{transform_indices = @transform_0, window_bounds = array<i64: 1, 36, 36>}, {transform_indices = @transform_1, window_bounds = array<i64: 1, 196, 36>}, {pipeline_mode = #tpu.pipeline_mode<synchronous>, transform_indices = @transform_2, window_bounds = array<i64: 36, 32>}, {pipeline_mode = #tpu.pipeline_mode<synchronous>, transform_indices = @transform_3, window_bounds = array<i64: 1, 32>}, {pipeline_mode = #tpu.pipeline_mode<synchronous>, transform_indices = @transform_4, window_bounds = array<i64: 36, 32>}, {pipeline_mode = #tpu.pipeline_mode<synchronous>, transform_indices = @transform_5, window_bounds = array<i64: 1, 32>}, {pipeline_mode = #tpu.pipeline_mode<synchronous>, transform_indices = @transform_6, window_bounds = array<i64: 32, 33>}, {pipeline_mode = #tpu.pipeline_mode<synchronous>, transform_indices = @transform_7, window_bounds = array<i64: 1, 33>}, {pipeline_mode = #tpu.pipeline_mode<synchronous>, transform_indices = @transform_8, window_bounds = array<i64: 3969, 33>}, {transform_indices = @transform_9, window_bounds = array<i64: 1, 3969, 81>}]} {
    %c0 = arith.constant 0 : index
    %c0_0 = arith.constant 0 : index
    %c0_1 = arith.constant 0 : index
    %0 = vector.load %arg1[%c0, %c0_0, %c0_1] : memref<1x36x36xbf16, #tpu.memory_space<vmem>>, vector<1x36x36xbf16>
    %1 = vector.shape_cast %0 : vector<1x36x36xbf16> to vector<36x36xbf16>
    %c0_2 = arith.constant 0 : index
    %c0_3 = arith.constant 0 : index
    %2 = vector.load %arg3[%c0_2, %c0_3] : memref<36x32xbf16, #tpu.memory_space<vmem>>, vector<36x32xbf16>
    %cst = arith.constant dense<0.000000e+00> : vector<36x32xf32>
    %3 = tpu.matmul %1, %2, %cst {dimension_numbers = #tpu.dot_dimension_numbers<[1], [0], [0], [1], [0, 0, 1, 1], [], []>} : vector<36x36xbf16>, vector<36x32xbf16>, vector<36x32xf32> -> vector<36x32xf32>
    %c0_4 = arith.constant 0 : index
    %c0_5 = arith.constant 0 : index
    %4 = vector.load %arg4[%c0_4, %c0_5] : memref<1x32xf32, #tpu.memory_space<vmem>>, vector<1x32xf32>
    %5 = vector.broadcast %4 : vector<1x32xf32> to vector<36x32xf32>
    %6 = arith.addf %3, %5 : vector<36x32xf32>
    %cst_6 = arith.constant 0.000000e+00 : f32
    %7 = vector.broadcast %cst_6 : f32 to vector<36x32xf32>
    %8 = arith.maximumf %6, %7 : vector<36x32xf32>
    %c0_7 = arith.constant 0 : index
    %c0_8 = arith.constant 0 : index
    %9 = vector.load %arg11[%c0_7, %c0_8] : memref<36x32xf32, #tpu.memory_space<vmem>>, vector<36x32xf32>
    tpu.vector_store %arg11[%c0_7, %c0_8], %8 {strides = array<i32>} : memref<36x32xf32, #tpu.memory_space<vmem>>, vector<36x32xf32>,
    %c0_9 = arith.constant 0 : index
    %c0_10 = arith.constant 0 : index
    %c0_11 = arith.constant 0 : index
    %10 = vector.load %arg2[%c0_9, %c0_10, %c0_11] : memref<1x196x36xbf16, #tpu.memory_space<vmem>>, vector<1x14x36xbf16>
    %11 = vector.shape_cast %10 : vector<1x14x36xbf16> to vector<14x36xbf16>
    %c0_12 = arith.constant 0 : index
    %c0_13 = arith.constant 0 : index
    %12 = vector.load %arg5[%c0_12, %c0_13] : memref<36x32xbf16, #tpu.memory_space<vmem>>, vector<36x32xbf16>
    %cst_14 = arith.constant dense<0.000000e+00> : vector<14x32xf32>
    %13 = tpu.matmul %11, %12, %cst_14 {dimension_numbers = #tpu.dot_dimension_numbers<[1], [0], [0], [1], [0, 0, 1, 1], [], []>} : vector<14x36xbf16>, vector<36x32xbf16>, vector<14x32xf32> -> vector<14x32xf32>
    %c0_15 = arith.constant 0 : index
    %c0_16 = arith.constant 0 : index
    %14 = vector.load %arg6[%c0_15, %c0_16] : memref<1x32xf32, #tpu.memory_space<vmem>>, vector<1x32xf32>
    %15 = vector.broadcast %14 : vector<1x32xf32> to vector<14x32xf32>
    %16 = arith.addf %13, %15 : vector<14x32xf32>
    %cst_17 = arith.constant 0.000000e+00 : f32
    %17 = vector.broadcast %cst_17 : f32 to vector<14x32xf32>
    %18 = arith.maximumf %16, %17 : vector<14x32xf32>
    %c0_18 = arith.constant 0 : index
    %c0_19 = arith.constant 0 : index
    %c0_20 = arith.constant 0 : index
    %19 = vector.load %arg12[%c0_18, %c0_19, %c0_20] : memref<14x14x32xf32, #tpu.memory_space<vmem>>, vector<1x14x32xf32>
    %20 = vector.shape_cast %19 : vector<1x14x32xf32> to vector<14x32xf32>
    %21 = vector.shape_cast %18 : vector<14x32xf32> to vector<1x14x32xf32>
    tpu.vector_store %arg12[%c0_18, %c0_19, %c0_20], %21 {strides = array<i32>} : memref<14x14x32xf32, #tpu.memory_space<vmem>>, vector<1x14x32xf32>,
    %c0_21 = arith.constant 0 : index
    %c14 = arith.constant 14 : index
    %c0_22 = arith.constant 0 : index
    %22 = vector.load %arg2[%c0_21, %c14, %c0_22] : memref<1x196x36xbf16, #tpu.memory_space<vmem>>, vector<1x14x36xbf16>
    %23 = vector.shape_cast %22 : vector<1x14x36xbf16> to vector<14x36xbf16>
    %c0_23 = arith.constant 0 : index
    %c0_24 = arith.constant 0 : index
    %24 = vector.load %arg5[%c0_23, %c0_24] : memref<36x32xbf16, #tpu.memory_space<vmem>>, vector<36x32xbf16>
    %cst_25 = arith.constant dense<0.000000e+00> : vector<14x32xf32>
    %25 = tpu.matmul %23, %24, %cst_25 {dimension_numbers = #tpu.dot_dimension_numbers<[1], [0], [0], [1], [0, 0, 1, 1], [], []>} : vector<14x36xbf16>, vector<36x32xbf16>, vector<14x32xf32> -> vector<14x32xf32>
    %c0_26 = arith.constant 0 : index
    %c0_27 = arith.constant 0 : index
    %26 = vector.load %arg6[%c0_26, %c0_27] : memref<1x32xf32, #tpu.memory_space<vmem>>, vector<1x32xf32>
    %27 = vector.broadcast %26 : vector<1x32xf32> to vector<14x32xf32>
    %28 = arith.addf %25, %27 : vector<14x32xf32>
    %cst_28 = arith.constant 0.000000e+00 : f32
    %29 = vector.broadcast %cst_28 : f32 to vector<14x32xf32>
    %30 = arith.maximumf %28, %29 : vector<14x32xf32>
    %c1 = arith.constant 1 : index
    %c0_29 = arith.constant 0 : index
    %c0_30 = arith.constant 0 : index
    %31 = vector.load %arg12[%c1, %c0_29, %c0_30] : memref<14x14x32xf32, #tpu.memory_space<vmem>>, vector<1x14x32xf32>
    %32 = vector.shape_cast %31 : vector<1x14x32xf32> to vector<14x32xf32>
    %33 = vector.shape_cast %30 : vector<14x32xf32> to vector<1x14x32xf32>
    tpu.vector_store %arg12[%c1, %c0_29, %c0_30], %33 {strides = array<i32>} : memref<14x14x32xf32, #tpu.memory_space<vmem>>, vector<1x14x32xf32>,
    %c0_31 = arith.constant 0 : index
    %c28 = arith.constant 28 : index
    %c0_32 = arith.constant 0 : index
    %34 = vector.load %arg2[%c0_31, %c28, %c0_32] : memref<1x196x36xbf16, #tpu.memory_space<vmem>>, vector<1x14x36xbf16>
    %35 = vector.shape_cast %34 : vector<1x14x36xbf16> to vector<14x36xbf16>
    %c0_33 = arith.constant 0 : index
    %c0_34 = arith.constant 0 : index
    %36 = vector.load %arg5[%c0_33, %c0_34] : memref<36x32xbf16, #tpu.memory_space<vmem>>, vector<36x32xbf16>
    %cst_35 = arith.constant dense<0.000000e+00> : vector<14x32xf32>
    %37 = tpu.matmul %35, %36, %cst_35 {dimension_numbers = #tpu.dot_dimension_numbers<[1], [0], [0], [1], [0, 0, 1, 1], [], []>} : vector<14x36xbf16>, vector<36x32xbf16>, vector<14x32xf32> -> vector<14x32xf32>
    %c0_36 = arith.constant 0 : index
    %c0_37 = arith.constant 0 : index
    %38 = vector.load %arg6[%c0_36, %c0_37] : memref<1x32xf32, #tpu.memory_space<vmem>>, vector<1x32xf32>
    %39 = vector.broadcast %38 : vector<1x32xf32> to vector<14x32xf32>
    %40 = arith.addf %37, %39 : vector<14x32xf32>
    %cst_38 = arith.constant 0.000000e+00 : f32
    %41 = vector.broadcast %cst_38 : f32 to vector<14x32xf32>
    %42 = arith.maximumf %40, %41 : vector<14x32xf32>
    %c2 = arith.constant 2 : index
    %c0_39 = arith.constant 0 : index
    %c0_40 = arith.constant 0 : index
    %43 = vector.load %arg12[%c2, %c0_39, %c0_40] : memref<14x14x32xf32, #tpu.memory_space<vmem>>, vector<1x14x32xf32>
    %44 = vector.shape_cast %43 : vector<1x14x32xf32> to vector<14x32xf32>
    %45 = vector.shape_cast %42 : vector<14x32xf32> to vector<1x14x32xf32>
    tpu.vector_store %arg12[%c2, %c0_39, %c0_40], %45 {strides = array<i32>} : memref<14x14x32xf32, #tpu.memory_space<vmem>>, vector<1x14x32xf32>,
    %c0_41 = arith.constant 0 : index
    %c42 = arith.constant 42 : index
    %c0_42 = arith.constant 0 : index
    %46 = vector.load %arg2[%c0_41, %c42, %c0_42] : memref<1x196x36xbf16, #tpu.memory_space<vmem>>, vector<1x14x36xbf16>
    %47 = vector.shape_cast %46 : vector<1x14x36xbf16> to vector<14x36xbf16>
    %c0_43 = arith.constant 0 : index
    %c0_44 = arith.constant 0 : index
    %48 = vector.load %arg5[%c0_43, %c0_44] : memref<36x32xbf16, #tpu.memory_space<vmem>>, vector<36x32xbf16>
    %cst_45 = arith.constant dense<0.000000e+00> : vector<14x32xf32>
    %49 = tpu.matmul %47, %48, %cst_45 {dimension_numbers = #tpu.dot_dimension_numbers<[1], [0], [0], [1], [0, 0, 1, 1], [], []>} : vector<14x36xbf16>, vector<36x32xbf16>, vector<14x32xf32> -> vector<14x32xf32>
    %c0_46 = arith.constant 0 : index
    %c0_47 = arith.constant 0 : index
    %50 = vector.load %arg6[%c0_46, %c0_47] : memref<1x32xf32, #tpu.memory_space<vmem>>, vector<1x32xf32>
    %51 = vector.broadcast %50 : vector<1x32xf32> to vector<14x32xf32>
    %52 = arith.addf %49, %51 : vector<14x32xf32>
    %cst_48 = arith.constant 0.000000e+00 : f32
    %53 = vector.broadcast %cst_48 : f32 to vector<14x32xf32>
    %54 = arith.maximumf %52, %53 : vector<14x32xf32>
    %c3 = arith.constant 3 : index
    %c0_49 = arith.constant 0 : index
    %c0_50 = arith.constant 0 : index
    %55 = vector.load %arg12[%c3, %c0_49, %c0_50] : memref<14x14x32xf32, #tpu.memory_space<vmem>>, vector<1x14x32xf32>
    %56 = vector.shape_cast %55 : vector<1x14x32xf32> to vector<14x32xf32>
    %57 = vector.shape_cast %54 : vector<14x32xf32> to vector<1x14x32xf32>
    tpu.vector_store %arg12[%c3, %c0_49, %c0_50], %57 {strides = array<i32>} : memref<14x14x32xf32, #tpu.memory_space<vmem>>, vector<1x14x32xf32>,
    %c0_51 = arith.constant 0 : index
    %c56 = arith.constant 56 : index
    %c0_52 = arith.constant 0 : index
    %58 = vector.load %arg2[%c0_51, %c56, %c0_52] : memref<1x196x36xbf16, #tpu.memory_space<vmem>>, vector<1x14x36xbf16>
    %59 = vector.shape_cast %58 : vector<1x14x36xbf16> to vector<14x36xbf16>
    %c0_53 = arith.constant 0 : index
    %c0_54 = arith.constant 0 : index
    %60 = vector.load %arg5[%c0_53, %c0_54] : memref<36x32xbf16, #tpu.memory_space<vmem>>, vector<36x32xbf16>
    %cst_55 = arith.constant dense<0.000000e+00> : vector<14x32xf32>
    %61 = tpu.matmul %59, %60, %cst_55 {dimension_numbers = #tpu.dot_dimension_numbers<[1], [0], [0], [1], [0, 0, 1, 1], [], []>} : vector<14x36xbf16>, vector<36x32xbf16>, vector<14x32xf32> -> vector<14x32xf32>
    %c0_56 = arith.constant 0 : index
    %c0_57 = arith.constant 0 : index
    %62 = vector.load %arg6[%c0_56, %c0_57] : memref<1x32xf32, #tpu.memory_space<vmem>>, vector<1x32xf32>
    %63 = vector.broadcast %62 : vector<1x32xf32> to vector<14x32xf32>
    %64 = arith.addf %61, %63 : vector<14x32xf32>
    %cst_58 = arith.constant 0.000000e+00 : f32
    %65 = vector.broadcast %cst_58 : f32 to vector<14x32xf32>
    %66 = arith.maximumf %64, %65 : vector<14x32xf32>
    %c4 = arith.constant 4 : index
    %c0_59 = arith.constant 0 : index
    %c0_60 = arith.constant 0 : index
    %67 = vector.load %arg12[%c4, %c0_59, %c0_60] : memref<14x14x32xf32, #tpu.memory_space<vmem>>, vector<1x14x32xf32>
    %68 = vector.shape_cast %67 : vector<1x14x32xf32> to vector<14x32xf32>
    %69 = vector.shape_cast %66 : vector<14x32xf32> to vector<1x14x32xf32>
    tpu.vector_store %arg12[%c4, %c0_59, %c0_60], %69 {strides = array<i32>} : memref<14x14x32xf32, #tpu.memory_space<vmem>>, vector<1x14x32xf32>,
    %c0_61 = arith.constant 0 : index
    %c70 = arith.constant 70 : index
    %c0_62 = arith.constant 0 : index
    %70 = vector.load %arg2[%c0_61, %c70, %c0_62] : memref<1x196x36xbf16, #tpu.memory_space<vmem>>, vector<1x14x36xbf16>
    %71 = vector.shape_cast %70 : vector<1x14x36xbf16> to vector<14x36xbf16>
    %c0_63 = arith.constant 0 : index
    %c0_64 = arith.constant 0 : index
    %72 = vector.load %arg5[%c0_63, %c0_64] : memref<36x32xbf16, #tpu.memory_space<vmem>>, vector<36x32xbf16>
    %cst_65 = arith.constant dense<0.000000e+00> : vector<14x32xf32>
    %73 = tpu.matmul %71, %72, %cst_65 {dimension_numbers = #tpu.dot_dimension_numbers<[1], [0], [0], [1], [0, 0, 1, 1], [], []>} : vector<14x36xbf16>, vector<36x32xbf16>, vector<14x32xf32> -> vector<14x32xf32>
    %c0_66 = arith.constant 0 : index
    %c0_67 = arith.constant 0 : index
    %74 = vector.load %arg6[%c0_66, %c0_67] : memref<1x32xf32, #tpu.memory_space<vmem>>, vector<1x32xf32>
    %75 = vector.broadcast %74 : vector<1x32xf32> to vector<14x32xf32>
    %76 = arith.addf %73, %75 : vector<14x32xf32>
    %cst_68 = arith.constant 0.000000e+00 : f32
    %77 = vector.broadcast %cst_68 : f32 to vector<14x32xf32>
    %78 = arith.maximumf %76, %77 : vector<14x32xf32>
    %c5 = arith.constant 5 : index
    %c0_69 = arith.constant 0 : index
    %c0_70 = arith.constant 0 : index
    %79 = vector.load %arg12[%c5, %c0_69, %c0_70] : memref<14x14x32xf32, #tpu.memory_space<vmem>>, vector<1x14x32xf32>
    %80 = vector.shape_cast %79 : vector<1x14x32xf32> to vector<14x32xf32>
    %81 = vector.shape_cast %78 : vector<14x32xf32> to vector<1x14x32xf32>
    tpu.vector_store %arg12[%c5, %c0_69, %c0_70], %81 {strides = array<i32>} : memref<14x14x32xf32, #tpu.memory_space<vmem>>, vector<1x14x32xf32>,
    %c0_71 = arith.constant 0 : index
    %c84 = arith.constant 84 : index
    %c0_72 = arith.constant 0 : index
    %82 = vector.load %arg2[%c0_71, %c84, %c0_72] : memref<1x196x36xbf16, #tpu.memory_space<vmem>>, vector<1x14x36xbf16>
    %83 = vector.shape_cast %82 : vector<1x14x36xbf16> to vector<14x36xbf16>
    %c0_73 = arith.constant 0 : index
    %c0_74 = arith.constant 0 : index
    %84 = vector.load %arg5[%c0_73, %c0_74] : memref<36x32xbf16, #tpu.memory_space<vmem>>, vector<36x32xbf16>
    %cst_75 = arith.constant dense<0.000000e+00> : vector<14x32xf32>
    %85 = tpu.matmul %83, %84, %cst_75 {dimension_numbers = #tpu.dot_dimension_numbers<[1], [0], [0], [1], [0, 0, 1, 1], [], []>} : vector<14x36xbf16>, vector<36x32xbf16>, vector<14x32xf32> -> vector<14x32xf32>
    %c0_76 = arith.constant 0 : index
    %c0_77 = arith.constant 0 : index
    %86 = vector.load %arg6[%c0_76, %c0_77] : memref<1x32xf32, #tpu.memory_space<vmem>>, vector<1x32xf32>
    %87 = vector.broadcast %86 : vector<1x32xf32> to vector<14x32xf32>
    %88 = arith.addf %85, %87 : vector<14x32xf32>
    %cst_78 = arith.constant 0.000000e+00 : f32
    %89 = vector.broadcast %cst_78 : f32 to vector<14x32xf32>
    %90 = arith.maximumf %88, %89 : vector<14x32xf32>
    %c6 = arith.constant 6 : index
    %c0_79 = arith.constant 0 : index
    %c0_80 = arith.constant 0 : index
    %91 = vector.load %arg12[%c6, %c0_79, %c0_80] : memref<14x14x32xf32, #tpu.memory_space<vmem>>, vector<1x14x32xf32>
    %92 = vector.shape_cast %91 : vector<1x14x32xf32> to vector<14x32xf32>
    %93 = vector.shape_cast %90 : vector<14x32xf32> to vector<1x14x32xf32>
    tpu.vector_store %arg12[%c6, %c0_79, %c0_80], %93 {strides = array<i32>} : memref<14x14x32xf32, #tpu.memory_space<vmem>>, vector<1x14x32xf32>,
    %c0_81 = arith.constant 0 : index
    %c98 = arith.constant 98 : index
    %c0_82 = arith.constant 0 : index
    %94 = vector.load %arg2[%c0_81, %c98, %c0_82] : memref<1x196x36xbf16, #tpu.memory_space<vmem>>, vector<1x14x36xbf16>
    %95 = vector.shape_cast %94 : vector<1x14x36xbf16> to vector<14x36xbf16>
    %c0_83 = arith.constant 0 : index
    %c0_84 = arith.constant 0 : index
    %96 = vector.load %arg5[%c0_83, %c0_84] : memref<36x32xbf16, #tpu.memory_space<vmem>>, vector<36x32xbf16>
    %cst_85 = arith.constant dense<0.000000e+00> : vector<14x32xf32>
    %97 = tpu.matmul %95, %96, %cst_85 {dimension_numbers = #tpu.dot_dimension_numbers<[1], [0], [0], [1], [0, 0, 1, 1], [], []>} : vector<14x36xbf16>, vector<36x32xbf16>, vector<14x32xf32> -> vector<14x32xf32>
    %c0_86 = arith.constant 0 : index
    %c0_87 = arith.constant 0 : index
    %98 = vector.load %arg6[%c0_86, %c0_87] : memref<1x32xf32, #tpu.memory_space<vmem>>, vector<1x32xf32>
    %99 = vector.broadcast %98 : vector<1x32xf32> to vector<14x32xf32>
    %100 = arith.addf %97, %99 : vector<14x32xf32>
    %cst_88 = arith.constant 0.000000e+00 : f32
    %101 = vector.broadcast %cst_88 : f32 to vector<14x32xf32>
    %102 = arith.maximumf %100, %101 : vector<14x32xf32>
    %c7 = arith.constant 7 : index
    %c0_89 = arith.constant 0 : index
    %c0_90 = arith.constant 0 : index
    %103 = vector.load %arg12[%c7, %c0_89, %c0_90] : memref<14x14x32xf32, #tpu.memory_space<vmem>>, vector<1x14x32xf32>
    %104 = vector.shape_cast %103 : vector<1x14x32xf32> to vector<14x32xf32>
    %105 = vector.shape_cast %102 : vector<14x32xf32> to vector<1x14x32xf32>
    tpu.vector_store %arg12[%c7, %c0_89, %c0_90], %105 {strides = array<i32>} : memref<14x14x32xf32, #tpu.memory_space<vmem>>, vector<1x14x32xf32>,
    %c0_91 = arith.constant 0 : index
    %c112 = arith.constant 112 : index
    %c0_92 = arith.constant 0 : index
    %106 = vector.load %arg2[%c0_91, %c112, %c0_92] : memref<1x196x36xbf16, #tpu.memory_space<vmem>>, vector<1x14x36xbf16>
    %107 = vector.shape_cast %106 : vector<1x14x36xbf16> to vector<14x36xbf16>
    %c0_93 = arith.constant 0 : index
    %c0_94 = arith.constant 0 : index
    %108 = vector.load %arg5[%c0_93, %c0_94] : memref<36x32xbf16, #tpu.memory_space<vmem>>, vector<36x32xbf16>
    %cst_95 = arith.constant dense<0.000000e+00> : vector<14x32xf32>
    %109 = tpu.matmul %107, %108, %cst_95 {dimension_numbers = #tpu.dot_dimension_numbers<[1], [0], [0], [1], [0, 0, 1, 1], [], []>} : vector<14x36xbf16>, vector<36x32xbf16>, vector<14x32xf32> -> vector<14x32xf32>
    %c0_96 = arith.constant 0 : index
    %c0_97 = arith.constant 0 : index
    %110 = vector.load %arg6[%c0_96, %c0_97] : memref<1x32xf32, #tpu.memory_space<vmem>>, vector<1x32xf32>
    %111 = vector.broadcast %110 : vector<1x32xf32> to vector<14x32xf32>
    %112 = arith.addf %109, %111 : vector<14x32xf32>
    %cst_98 = arith.constant 0.000000e+00 : f32
    %113 = vector.broadcast %cst_98 : f32 to vector<14x32xf32>
    %114 = arith.maximumf %112, %113 : vector<14x32xf32>
    %c8 = arith.constant 8 : index
    %c0_99 = arith.constant 0 : index
    %c0_100 = arith.constant 0 : index
    %115 = vector.load %arg12[%c8, %c0_99, %c0_100] : memref<14x14x32xf32, #tpu.memory_space<vmem>>, vector<1x14x32xf32>
    %116 = vector.shape_cast %115 : vector<1x14x32xf32> to vector<14x32xf32>
    %117 = vector.shape_cast %114 : vector<14x32xf32> to vector<1x14x32xf32>
    tpu.vector_store %arg12[%c8, %c0_99, %c0_100], %117 {strides = array<i32>} : memref<14x14x32xf32, #tpu.memory_space<vmem>>, vector<1x14x32xf32>,
    %c0_101 = arith.constant 0 : index
    %c126 = arith.constant 126 : index
    %c0_102 = arith.constant 0 : index
    %118 = vector.load %arg2[%c0_101, %c126, %c0_102] : memref<1x196x36xbf16, #tpu.memory_space<vmem>>, vector<1x14x36xbf16>
    %119 = vector.shape_cast %118 : vector<1x14x36xbf16> to vector<14x36xbf16>
    %c0_103 = arith.constant 0 : index
    %c0_104 = arith.constant 0 : index
    %120 = vector.load %arg5[%c0_103, %c0_104] : memref<36x32xbf16, #tpu.memory_space<vmem>>, vector<36x32xbf16>
    %cst_105 = arith.constant dense<0.000000e+00> : vector<14x32xf32>
    %121 = tpu.matmul %119, %120, %cst_105 {dimension_numbers = #tpu.dot_dimension_numbers<[1], [0], [0], [1], [0, 0, 1, 1], [], []>} : vector<14x36xbf16>, vector<36x32xbf16>, vector<14x32xf32> -> vector<14x32xf32>
    %c0_106 = arith.constant 0 : index
    %c0_107 = arith.constant 0 : index
    %122 = vector.load %arg6[%c0_106, %c0_107] : memref<1x32xf32, #tpu.memory_space<vmem>>, vector<1x32xf32>
    %123 = vector.broadcast %122 : vector<1x32xf32> to vector<14x32xf32>
    %124 = arith.addf %121, %123 : vector<14x32xf32>
    %cst_108 = arith.constant 0.000000e+00 : f32
    %125 = vector.broadcast %cst_108 : f32 to vector<14x32xf32>
    %126 = arith.maximumf %124, %125 : vector<14x32xf32>
    %c9 = arith.constant 9 : index
    %c0_109 = arith.constant 0 : index
    %c0_110 = arith.constant 0 : index
    %127 = vector.load %arg12[%c9, %c0_109, %c0_110] : memref<14x14x32xf32, #tpu.memory_space<vmem>>, vector<1x14x32xf32>
    %128 = vector.shape_cast %127 : vector<1x14x32xf32> to vector<14x32xf32>
    %129 = vector.shape_cast %126 : vector<14x32xf32> to vector<1x14x32xf32>
    tpu.vector_store %arg12[%c9, %c0_109, %c0_110], %129 {strides = array<i32>} : memref<14x14x32xf32, #tpu.memory_space<vmem>>, vector<1x14x32xf32>,
    %c0_111 = arith.constant 0 : index
    %c140 = arith.constant 140 : index
    %c0_112 = arith.constant 0 : index
    %130 = vector.load %arg2[%c0_111, %c140, %c0_112] : memref<1x196x36xbf16, #tpu.memory_space<vmem>>, vector<1x14x36xbf16>
    %131 = vector.shape_cast %130 : vector<1x14x36xbf16> to vector<14x36xbf16>
    %c0_113 = arith.constant 0 : index
    %c0_114 = arith.constant 0 : index
    %132 = vector.load %arg5[%c0_113, %c0_114] : memref<36x32xbf16, #tpu.memory_space<vmem>>, vector<36x32xbf16>
    %cst_115 = arith.constant dense<0.000000e+00> : vector<14x32xf32>
    %133 = tpu.matmul %131, %132, %cst_115 {dimension_numbers = #tpu.dot_dimension_numbers<[1], [0], [0], [1], [0, 0, 1, 1], [], []>} : vector<14x36xbf16>, vector<36x32xbf16>, vector<14x32xf32> -> vector<14x32xf32>
    %c0_116 = arith.constant 0 : index
    %c0_117 = arith.constant 0 : index
    %134 = vector.load %arg6[%c0_116, %c0_117] : memref<1x32xf32, #tpu.memory_space<vmem>>, vector<1x32xf32>
    %135 = vector.broadcast %134 : vector<1x32xf32> to vector<14x32xf32>
    %136 = arith.addf %133, %135 : vector<14x32xf32>
    %cst_118 = arith.constant 0.000000e+00 : f32
    %137 = vector.broadcast %cst_118 : f32 to vector<14x32xf32>
    %138 = arith.maximumf %136, %137 : vector<14x32xf32>
    %c10 = arith.constant 10 : index
    %c0_119 = arith.constant 0 : index
    %c0_120 = arith.constant 0 : index
    %139 = vector.load %arg12[%c10, %c0_119, %c0_120] : memref<14x14x32xf32, #tpu.memory_space<vmem>>, vector<1x14x32xf32>
    %140 = vector.shape_cast %139 : vector<1x14x32xf32> to vector<14x32xf32>
    %141 = vector.shape_cast %138 : vector<14x32xf32> to vector<1x14x32xf32>
    tpu.vector_store %arg12[%c10, %c0_119, %c0_120], %141 {strides = array<i32>} : memref<14x14x32xf32, #tpu.memory_space<vmem>>, vector<1x14x32xf32>,
    %c0_121 = arith.constant 0 : index
    %c154 = arith.constant 154 : index
    %c0_122 = arith.constant 0 : index
    %142 = vector.load %arg2[%c0_121, %c154, %c0_122] : memref<1x196x36xbf16, #tpu.memory_space<vmem>>, vector<1x14x36xbf16>
    %143 = vector.shape_cast %142 : vector<1x14x36xbf16> to vector<14x36xbf16>
    %c0_123 = arith.constant 0 : index
    %c0_124 = arith.constant 0 : index
    %144 = vector.load %arg5[%c0_123, %c0_124] : memref<36x32xbf16, #tpu.memory_space<vmem>>, vector<36x32xbf16>
    %cst_125 = arith.constant dense<0.000000e+00> : vector<14x32xf32>
    %145 = tpu.matmul %143, %144, %cst_125 {dimension_numbers = #tpu.dot_dimension_numbers<[1], [0], [0], [1], [0, 0, 1, 1], [], []>} : vector<14x36xbf16>, vector<36x32xbf16>, vector<14x32xf32> -> vector<14x32xf32>
    %c0_126 = arith.constant 0 : index
    %c0_127 = arith.constant 0 : index
    %146 = vector.load %arg6[%c0_126, %c0_127] : memref<1x32xf32, #tpu.memory_space<vmem>>, vector<1x32xf32>
    %147 = vector.broadcast %146 : vector<1x32xf32> to vector<14x32xf32>
    %148 = arith.addf %145, %147 : vector<14x32xf32>
    %cst_128 = arith.constant 0.000000e+00 : f32
    %149 = vector.broadcast %cst_128 : f32 to vector<14x32xf32>
    %150 = arith.maximumf %148, %149 : vector<14x32xf32>
    %c11 = arith.constant 11 : index
    %c0_129 = arith.constant 0 : index
    %c0_130 = arith.constant 0 : index
    %151 = vector.load %arg12[%c11, %c0_129, %c0_130] : memref<14x14x32xf32, #tpu.memory_space<vmem>>, vector<1x14x32xf32>
    %152 = vector.shape_cast %151 : vector<1x14x32xf32> to vector<14x32xf32>
    %153 = vector.shape_cast %150 : vector<14x32xf32> to vector<1x14x32xf32>
    tpu.vector_store %arg12[%c11, %c0_129, %c0_130], %153 {strides = array<i32>} : memref<14x14x32xf32, #tpu.memory_space<vmem>>, vector<1x14x32xf32>,
    %c0_131 = arith.constant 0 : index
    %c168 = arith.constant 168 : index
    %c0_132 = arith.constant 0 : index
    %154 = vector.load %arg2[%c0_131, %c168, %c0_132] : memref<1x196x36xbf16, #tpu.memory_space<vmem>>, vector<1x14x36xbf16>
    %155 = vector.shape_cast %154 : vector<1x14x36xbf16> to vector<14x36xbf16>
    %c0_133 = arith.constant 0 : index
    %c0_134 = arith.constant 0 : index
    %156 = vector.load %arg5[%c0_133, %c0_134] : memref<36x32xbf16, #tpu.memory_space<vmem>>, vector<36x32xbf16>
    %cst_135 = arith.constant dense<0.000000e+00> : vector<14x32xf32>
    %157 = tpu.matmul %155, %156, %cst_135 {dimension_numbers = #tpu.dot_dimension_numbers<[1], [0], [0], [1], [0, 0, 1, 1], [], []>} : vector<14x36xbf16>, vector<36x32xbf16>, vector<14x32xf32> -> vector<14x32xf32>
    %c0_136 = arith.constant 0 : index
    %c0_137 = arith.constant 0 : index
    %158 = vector.load %arg6[%c0_136, %c0_137] : memref<1x32xf32, #tpu.memory_space<vmem>>, vector<1x32xf32>
    %159 = vector.broadcast %158 : vector<1x32xf32> to vector<14x32xf32>
    %160 = arith.addf %157, %159 : vector<14x32xf32>
    %cst_138 = arith.constant 0.000000e+00 : f32
    %161 = vector.broadcast %cst_138 : f32 to vector<14x32xf32>
    %162 = arith.maximumf %160, %161 : vector<14x32xf32>
    %c12 = arith.constant 12 : index
    %c0_139 = arith.constant 0 : index
    %c0_140 = arith.constant 0 : index
    %163 = vector.load %arg12[%c12, %c0_139, %c0_140] : memref<14x14x32xf32, #tpu.memory_space<vmem>>, vector<1x14x32xf32>
    %164 = vector.shape_cast %163 : vector<1x14x32xf32> to vector<14x32xf32>
    %165 = vector.shape_cast %162 : vector<14x32xf32> to vector<1x14x32xf32>
    tpu.vector_store %arg12[%c12, %c0_139, %c0_140], %165 {strides = array<i32>} : memref<14x14x32xf32, #tpu.memory_space<vmem>>, vector<1x14x32xf32>,
    %c0_141 = arith.constant 0 : index
    %c182 = arith.constant 182 : index
    %c0_142 = arith.constant 0 : index
    %166 = vector.load %arg2[%c0_141, %c182, %c0_142] : memref<1x196x36xbf16, #tpu.memory_space<vmem>>, vector<1x14x36xbf16>
    %167 = vector.shape_cast %166 : vector<1x14x36xbf16> to vector<14x36xbf16>
    %c0_143 = arith.constant 0 : index
    %c0_144 = arith.constant 0 : index
    %168 = vector.load %arg5[%c0_143, %c0_144] : memref<36x32xbf16, #tpu.memory_space<vmem>>, vector<36x32xbf16>
    %cst_145 = arith.constant dense<0.000000e+00> : vector<14x32xf32>
    %169 = tpu.matmul %167, %168, %cst_145 {dimension_numbers = #tpu.dot_dimension_numbers<[1], [0], [0], [1], [0, 0, 1, 1], [], []>} : vector<14x36xbf16>, vector<36x32xbf16>, vector<14x32xf32> -> vector<14x32xf32>
    %c0_146 = arith.constant 0 : index
    %c0_147 = arith.constant 0 : index
    %170 = vector.load %arg6[%c0_146, %c0_147] : memref<1x32xf32, #tpu.memory_space<vmem>>, vector<1x32xf32>
    %171 = vector.broadcast %170 : vector<1x32xf32> to vector<14x32xf32>
    %172 = arith.addf %169, %171 : vector<14x32xf32>
    %cst_148 = arith.constant 0.000000e+00 : f32
    %173 = vector.broadcast %cst_148 : f32 to vector<14x32xf32>
    %174 = arith.maximumf %172, %173 : vector<14x32xf32>
    %c13 = arith.constant 13 : index
    %c0_149 = arith.constant 0 : index
    %c0_150 = arith.constant 0 : index
    %175 = vector.load %arg12[%c13, %c0_149, %c0_150] : memref<14x14x32xf32, #tpu.memory_space<vmem>>, vector<1x14x32xf32>
    %176 = vector.shape_cast %175 : vector<1x14x32xf32> to vector<14x32xf32>
    %177 = vector.shape_cast %174 : vector<14x32xf32> to vector<1x14x32xf32>
    tpu.vector_store %arg12[%c13, %c0_149, %c0_150], %177 {strides = array<i32>} : memref<14x14x32xf32, #tpu.memory_space<vmem>>, vector<1x14x32xf32>,
    %cst_151 = arith.constant 0.000000e+00 : f32
    %178 = vector.broadcast %cst_151 : f32 to vector<9x9x32xf32>
    %c0_152 = arith.constant 0 : index
    %c0_153 = arith.constant 0 : index
    %c0_154 = arith.constant 0 : index
    %179 = vector.load %arg12[%c0_152, %c0_153, %c0_154] : memref<14x14x32xf32, #tpu.memory_space<vmem>>, vector<9x9x32xf32>
    %c0_155 = arith.constant 0 : index
    %c0_156 = arith.constant 0 : index
    %180 = vector.load %arg11[%c0_155, %c0_156] : memref<36x32xf32, #tpu.memory_space<vmem>>, vector<1x32xf32>
    %181 = vector.shape_cast %180 : vector<1x32xf32> to vector<1x1x32xf32>
    %182 = vector.broadcast %181 : vector<1x1x32xf32> to vector<9x9x32xf32>
    %183 = arith.mulf %179, %182 : vector<9x9x32xf32>
    %184 = arith.addf %178, %183 : vector<9x9x32xf32>
    %c0_157 = arith.constant 0 : index
    %c1_158 = arith.constant 1 : index
    %c0_159 = arith.constant 0 : index
    %185 = vector.load %arg12[%c0_157, %c1_158, %c0_159] : memref<14x14x32xf32, #tpu.memory_space<vmem>>, vector<9x9x32xf32>
    %c1_160 = arith.constant 1 : index
    %c0_161 = arith.constant 0 : index
    %186 = vector.load %arg11[%c1_160, %c0_161] : memref<36x32xf32, #tpu.memory_space<vmem>>, vector<1x32xf32>
    %187 = vector.shape_cast %186 : vector<1x32xf32> to vector<1x1x32xf32>
    %188 = vector.broadcast %187 : vector<1x1x32xf32> to vector<9x9x32xf32>
    %189 = arith.mulf %185, %188 : vector<9x9x32xf32>
    %190 = arith.addf %184, %189 : vector<9x9x32xf32>
    %c0_162 = arith.constant 0 : index
    %c2_163 = arith.constant 2 : index
    %c0_164 = arith.constant 0 : index
    %191 = vector.load %arg12[%c0_162, %c2_163, %c0_164] : memref<14x14x32xf32, #tpu.memory_space<vmem>>, vector<9x9x32xf32>
    %c2_165 = arith.constant 2 : index
    %c0_166 = arith.constant 0 : index
    %192 = vector.load %arg11[%c2_165, %c0_166] : memref<36x32xf32, #tpu.memory_space<vmem>>, vector<1x32xf32>
    %193 = vector.shape_cast %192 : vector<1x32xf32> to vector<1x1x32xf32>
    %194 = vector.broadcast %193 : vector<1x1x32xf32> to vector<9x9x32xf32>
    %195 = arith.mulf %191, %194 : vector<9x9x32xf32>
    %196 = arith.addf %190, %195 : vector<9x9x32xf32>
    %c0_167 = arith.constant 0 : index
    %c3_168 = arith.constant 3 : index
    %c0_169 = arith.constant 0 : index
    %197 = vector.load %arg12[%c0_167, %c3_168, %c0_169] : memref<14x14x32xf32, #tpu.memory_space<vmem>>, vector<9x9x32xf32>
    %c3_170 = arith.constant 3 : index
    %c0_171 = arith.constant 0 : index
    %198 = vector.load %arg11[%c3_170, %c0_171] : memref<36x32xf32, #tpu.memory_space<vmem>>, vector<1x32xf32>
    %199 = vector.shape_cast %198 : vector<1x32xf32> to vector<1x1x32xf32>
    %200 = vector.broadcast %199 : vector<1x1x32xf32> to vector<9x9x32xf32>
    %201 = arith.mulf %197, %200 : vector<9x9x32xf32>
    %202 = arith.addf %196, %201 : vector<9x9x32xf32>
    %c0_172 = arith.constant 0 : index
    %c4_173 = arith.constant 4 : index
    %c0_174 = arith.constant 0 : index
    %203 = vector.load %arg12[%c0_172, %c4_173, %c0_174] : memref<14x14x32xf32, #tpu.memory_space<vmem>>, vector<9x9x32xf32>
    %c4_175 = arith.constant 4 : index
    %c0_176 = arith.constant 0 : index
    %204 = vector.load %arg11[%c4_175, %c0_176] : memref<36x32xf32, #tpu.memory_space<vmem>>, vector<1x32xf32>
    %205 = vector.shape_cast %204 : vector<1x32xf32> to vector<1x1x32xf32>
    %206 = vector.broadcast %205 : vector<1x1x32xf32> to vector<9x9x32xf32>
    %207 = arith.mulf %203, %206 : vector<9x9x32xf32>
    %208 = arith.addf %202, %207 : vector<9x9x32xf32>
    %c0_177 = arith.constant 0 : index
    %c5_178 = arith.constant 5 : index
    %c0_179 = arith.constant 0 : index
    %209 = vector.load %arg12[%c0_177, %c5_178, %c0_179] : memref<14x14x32xf32, #tpu.memory_space<vmem>>, vector<9x9x32xf32>
    %c5_180 = arith.constant 5 : index
    %c0_181 = arith.constant 0 : index
    %210 = vector.load %arg11[%c5_180, %c0_181] : memref<36x32xf32, #tpu.memory_space<vmem>>, vector<1x32xf32>
    %211 = vector.shape_cast %210 : vector<1x32xf32> to vector<1x1x32xf32>
    %212 = vector.broadcast %211 : vector<1x1x32xf32> to vector<9x9x32xf32>
    %213 = arith.mulf %209, %212 : vector<9x9x32xf32>
    %214 = arith.addf %208, %213 : vector<9x9x32xf32>
    %c1_182 = arith.constant 1 : index
    %c0_183 = arith.constant 0 : index
    %c0_184 = arith.constant 0 : index
    %215 = vector.load %arg12[%c1_182, %c0_183, %c0_184] : memref<14x14x32xf32, #tpu.memory_space<vmem>>, vector<9x9x32xf32>
    %c6_185 = arith.constant 6 : index
    %c0_186 = arith.constant 0 : index
    %216 = vector.load %arg11[%c6_185, %c0_186] : memref<36x32xf32, #tpu.memory_space<vmem>>, vector<1x32xf32>
    %217 = vector.shape_cast %216 : vector<1x32xf32> to vector<1x1x32xf32>
    %218 = vector.broadcast %217 : vector<1x1x32xf32> to vector<9x9x32xf32>
    %219 = arith.mulf %215, %218 : vector<9x9x32xf32>
    %220 = arith.addf %214, %219 : vector<9x9x32xf32>
    %c1_187 = arith.constant 1 : index
    %c1_188 = arith.constant 1 : index
    %c0_189 = arith.constant 0 : index
    %221 = vector.load %arg12[%c1_187, %c1_188, %c0_189] : memref<14x14x32xf32, #tpu.memory_space<vmem>>, vector<9x9x32xf32>
    %c7_190 = arith.constant 7 : index
    %c0_191 = arith.constant 0 : index
    %222 = vector.load %arg11[%c7_190, %c0_191] : memref<36x32xf32, #tpu.memory_space<vmem>>, vector<1x32xf32>
    %223 = vector.shape_cast %222 : vector<1x32xf32> to vector<1x1x32xf32>
    %224 = vector.broadcast %223 : vector<1x1x32xf32> to vector<9x9x32xf32>
    %225 = arith.mulf %221, %224 : vector<9x9x32xf32>
    %226 = arith.addf %220, %225 : vector<9x9x32xf32>
    %c1_192 = arith.constant 1 : index
    %c2_193 = arith.constant 2 : index
    %c0_194 = arith.constant 0 : index
    %227 = vector.load %arg12[%c1_192, %c2_193, %c0_194] : memref<14x14x32xf32, #tpu.memory_space<vmem>>, vector<9x9x32xf32>
    %c8_195 = arith.constant 8 : index
    %c0_196 = arith.constant 0 : index
    %228 = vector.load %arg11[%c8_195, %c0_196] : memref<36x32xf32, #tpu.memory_space<vmem>>, vector<1x32xf32>
    %229 = vector.shape_cast %228 : vector<1x32xf32> to vector<1x1x32xf32>
    %230 = vector.broadcast %229 : vector<1x1x32xf32> to vector<9x9x32xf32>
    %231 = arith.mulf %227, %230 : vector<9x9x32xf32>
    %232 = arith.addf %226, %231 : vector<9x9x32xf32>
    %c1_197 = arith.constant 1 : index
    %c3_198 = arith.constant 3 : index
    %c0_199 = arith.constant 0 : index
    %233 = vector.load %arg12[%c1_197, %c3_198, %c0_199] : memref<14x14x32xf32, #tpu.memory_space<vmem>>, vector<9x9x32xf32>
    %c9_200 = arith.constant 9 : index
    %c0_201 = arith.constant 0 : index
    %234 = vector.load %arg11[%c9_200, %c0_201] : memref<36x32xf32, #tpu.memory_space<vmem>>, vector<1x32xf32>
    %235 = vector.shape_cast %234 : vector<1x32xf32> to vector<1x1x32xf32>
    %236 = vector.broadcast %235 : vector<1x1x32xf32> to vector<9x9x32xf32>
    %237 = arith.mulf %233, %236 : vector<9x9x32xf32>
    %238 = arith.addf %232, %237 : vector<9x9x32xf32>
    %c1_202 = arith.constant 1 : index
    %c4_203 = arith.constant 4 : index
    %c0_204 = arith.constant 0 : index
    %239 = vector.load %arg12[%c1_202, %c4_203, %c0_204] : memref<14x14x32xf32, #tpu.memory_space<vmem>>, vector<9x9x32xf32>
    %c10_205 = arith.constant 10 : index
    %c0_206 = arith.constant 0 : index
    %240 = vector.load %arg11[%c10_205, %c0_206] : memref<36x32xf32, #tpu.memory_space<vmem>>, vector<1x32xf32>
    %241 = vector.shape_cast %240 : vector<1x32xf32> to vector<1x1x32xf32>
    %242 = vector.broadcast %241 : vector<1x1x32xf32> to vector<9x9x32xf32>
    %243 = arith.mulf %239, %242 : vector<9x9x32xf32>
    %244 = arith.addf %238, %243 : vector<9x9x32xf32>
    %c1_207 = arith.constant 1 : index
    %c5_208 = arith.constant 5 : index
    %c0_209 = arith.constant 0 : index
    %245 = vector.load %arg12[%c1_207, %c5_208, %c0_209] : memref<14x14x32xf32, #tpu.memory_space<vmem>>, vector<9x9x32xf32>
    %c11_210 = arith.constant 11 : index
    %c0_211 = arith.constant 0 : index
    %246 = vector.load %arg11[%c11_210, %c0_211] : memref<36x32xf32, #tpu.memory_space<vmem>>, vector<1x32xf32>
    %247 = vector.shape_cast %246 : vector<1x32xf32> to vector<1x1x32xf32>
    %248 = vector.broadcast %247 : vector<1x1x32xf32> to vector<9x9x32xf32>
    %249 = arith.mulf %245, %248 : vector<9x9x32xf32>
    %250 = arith.addf %244, %249 : vector<9x9x32xf32>
    %c2_212 = arith.constant 2 : index
    %c0_213 = arith.constant 0 : index
    %c0_214 = arith.constant 0 : index
    %251 = vector.load %arg12[%c2_212, %c0_213, %c0_214] : memref<14x14x32xf32, #tpu.memory_space<vmem>>, vector<9x9x32xf32>
    %c12_215 = arith.constant 12 : index
    %c0_216 = arith.constant 0 : index
    %252 = vector.load %arg11[%c12_215, %c0_216] : memref<36x32xf32, #tpu.memory_space<vmem>>, vector<1x32xf32>
    %253 = vector.shape_cast %252 : vector<1x32xf32> to vector<1x1x32xf32>
    %254 = vector.broadcast %253 : vector<1x1x32xf32> to vector<9x9x32xf32>
    %255 = arith.mulf %251, %254 : vector<9x9x32xf32>
    %256 = arith.addf %250, %255 : vector<9x9x32xf32>
    %c2_217 = arith.constant 2 : index
    %c1_218 = arith.constant 1 : index
    %c0_219 = arith.constant 0 : index
    %257 = vector.load %arg12[%c2_217, %c1_218, %c0_219] : memref<14x14x32xf32, #tpu.memory_space<vmem>>, vector<9x9x32xf32>
    %c13_220 = arith.constant 13 : index
    %c0_221 = arith.constant 0 : index
    %258 = vector.load %arg11[%c13_220, %c0_221] : memref<36x32xf32, #tpu.memory_space<vmem>>, vector<1x32xf32>
    %259 = vector.shape_cast %258 : vector<1x32xf32> to vector<1x1x32xf32>
    %260 = vector.broadcast %259 : vector<1x1x32xf32> to vector<9x9x32xf32>
    %261 = arith.mulf %257, %260 : vector<9x9x32xf32>
    %262 = arith.addf %256, %261 : vector<9x9x32xf32>
    %c2_222 = arith.constant 2 : index
    %c2_223 = arith.constant 2 : index
    %c0_224 = arith.constant 0 : index
    %263 = vector.load %arg12[%c2_222, %c2_223, %c0_224] : memref<14x14x32xf32, #tpu.memory_space<vmem>>, vector<9x9x32xf32>
    %c14_225 = arith.constant 14 : index
    %c0_226 = arith.constant 0 : index
    %264 = vector.load %arg11[%c14_225, %c0_226] : memref<36x32xf32, #tpu.memory_space<vmem>>, vector<1x32xf32>
    %265 = vector.shape_cast %264 : vector<1x32xf32> to vector<1x1x32xf32>
    %266 = vector.broadcast %265 : vector<1x1x32xf32> to vector<9x9x32xf32>
    %267 = arith.mulf %263, %266 : vector<9x9x32xf32>
    %268 = arith.addf %262, %267 : vector<9x9x32xf32>
    %c2_227 = arith.constant 2 : index
    %c3_228 = arith.constant 3 : index
    %c0_229 = arith.constant 0 : index
    %269 = vector.load %arg12[%c2_227, %c3_228, %c0_229] : memref<14x14x32xf32, #tpu.memory_space<vmem>>, vector<9x9x32xf32>
    %c15 = arith.constant 15 : index
    %c0_230 = arith.constant 0 : index
    %270 = vector.load %arg11[%c15, %c0_230] : memref<36x32xf32, #tpu.memory_space<vmem>>, vector<1x32xf32>
    %271 = vector.shape_cast %270 : vector<1x32xf32> to vector<1x1x32xf32>
    %272 = vector.broadcast %271 : vector<1x1x32xf32> to vector<9x9x32xf32>
    %273 = arith.mulf %269, %272 : vector<9x9x32xf32>
    %274 = arith.addf %268, %273 : vector<9x9x32xf32>
    %c2_231 = arith.constant 2 : index
    %c4_232 = arith.constant 4 : index
    %c0_233 = arith.constant 0 : index
    %275 = vector.load %arg12[%c2_231, %c4_232, %c0_233] : memref<14x14x32xf32, #tpu.memory_space<vmem>>, vector<9x9x32xf32>
    %c16 = arith.constant 16 : index
    %c0_234 = arith.constant 0 : index
    %276 = vector.load %arg11[%c16, %c0_234] : memref<36x32xf32, #tpu.memory_space<vmem>>, vector<1x32xf32>
    %277 = vector.shape_cast %276 : vector<1x32xf32> to vector<1x1x32xf32>
    %278 = vector.broadcast %277 : vector<1x1x32xf32> to vector<9x9x32xf32>
    %279 = arith.mulf %275, %278 : vector<9x9x32xf32>
    %280 = arith.addf %274, %279 : vector<9x9x32xf32>
    %c2_235 = arith.constant 2 : index
    %c5_236 = arith.constant 5 : index
    %c0_237 = arith.constant 0 : index
    %281 = vector.load %arg12[%c2_235, %c5_236, %c0_237] : memref<14x14x32xf32, #tpu.memory_space<vmem>>, vector<9x9x32xf32>
    %c17 = arith.constant 17 : index
    %c0_238 = arith.constant 0 : index
    %282 = vector.load %arg11[%c17, %c0_238] : memref<36x32xf32, #tpu.memory_space<vmem>>, vector<1x32xf32>
    %283 = vector.shape_cast %282 : vector<1x32xf32> to vector<1x1x32xf32>
    %284 = vector.broadcast %283 : vector<1x1x32xf32> to vector<9x9x32xf32>
    %285 = arith.mulf %281, %284 : vector<9x9x32xf32>
    %286 = arith.addf %280, %285 : vector<9x9x32xf32>
    %c3_239 = arith.constant 3 : index
    %c0_240 = arith.constant 0 : index
    %c0_241 = arith.constant 0 : index
    %287 = vector.load %arg12[%c3_239, %c0_240, %c0_241] : memref<14x14x32xf32, #tpu.memory_space<vmem>>, vector<9x9x32xf32>
    %c18 = arith.constant 18 : index
    %c0_242 = arith.constant 0 : index
    %288 = vector.load %arg11[%c18, %c0_242] : memref<36x32xf32, #tpu.memory_space<vmem>>, vector<1x32xf32>
    %289 = vector.shape_cast %288 : vector<1x32xf32> to vector<1x1x32xf32>
    %290 = vector.broadcast %289 : vector<1x1x32xf32> to vector<9x9x32xf32>
    %291 = arith.mulf %287, %290 : vector<9x9x32xf32>
    %292 = arith.addf %286, %291 : vector<9x9x32xf32>
    %c3_243 = arith.constant 3 : index
    %c1_244 = arith.constant 1 : index
    %c0_245 = arith.constant 0 : index
    %293 = vector.load %arg12[%c3_243, %c1_244, %c0_245] : memref<14x14x32xf32, #tpu.memory_space<vmem>>, vector<9x9x32xf32>
    %c19 = arith.constant 19 : index
    %c0_246 = arith.constant 0 : index
    %294 = vector.load %arg11[%c19, %c0_246] : memref<36x32xf32, #tpu.memory_space<vmem>>, vector<1x32xf32>
    %295 = vector.shape_cast %294 : vector<1x32xf32> to vector<1x1x32xf32>
    %296 = vector.broadcast %295 : vector<1x1x32xf32> to vector<9x9x32xf32>
    %297 = arith.mulf %293, %296 : vector<9x9x32xf32>
    %298 = arith.addf %292, %297 : vector<9x9x32xf32>
    %c3_247 = arith.constant 3 : index
    %c2_248 = arith.constant 2 : index
    %c0_249 = arith.constant 0 : index
    %299 = vector.load %arg12[%c3_247, %c2_248, %c0_249] : memref<14x14x32xf32, #tpu.memory_space<vmem>>, vector<9x9x32xf32>
    %c20 = arith.constant 20 : index
    %c0_250 = arith.constant 0 : index
    %300 = vector.load %arg11[%c20, %c0_250] : memref<36x32xf32, #tpu.memory_space<vmem>>, vector<1x32xf32>
    %301 = vector.shape_cast %300 : vector<1x32xf32> to vector<1x1x32xf32>
    %302 = vector.broadcast %301 : vector<1x1x32xf32> to vector<9x9x32xf32>
    %303 = arith.mulf %299, %302 : vector<9x9x32xf32>
    %304 = arith.addf %298, %303 : vector<9x9x32xf32>
    %c3_251 = arith.constant 3 : index
    %c3_252 = arith.constant 3 : index
    %c0_253 = arith.constant 0 : index
    %305 = vector.load %arg12[%c3_251, %c3_252, %c0_253] : memref<14x14x32xf32, #tpu.memory_space<vmem>>, vector<9x9x32xf32>
    %c21 = arith.constant 21 : index
    %c0_254 = arith.constant 0 : index
    %306 = vector.load %arg11[%c21, %c0_254] : memref<36x32xf32, #tpu.memory_space<vmem>>, vector<1x32xf32>
    %307 = vector.shape_cast %306 : vector<1x32xf32> to vector<1x1x32xf32>
    %308 = vector.broadcast %307 : vector<1x1x32xf32> to vector<9x9x32xf32>
    %309 = arith.mulf %305, %308 : vector<9x9x32xf32>
    %310 = arith.addf %304, %309 : vector<9x9x32xf32>
    %c3_255 = arith.constant 3 : index
    %c4_256 = arith.constant 4 : index
    %c0_257 = arith.constant 0 : index
    %311 = vector.load %arg12[%c3_255, %c4_256, %c0_257] : memref<14x14x32xf32, #tpu.memory_space<vmem>>, vector<9x9x32xf32>
    %c22 = arith.constant 22 : index
    %c0_258 = arith.constant 0 : index
    %312 = vector.load %arg11[%c22, %c0_258] : memref<36x32xf32, #tpu.memory_space<vmem>>, vector<1x32xf32>
    %313 = vector.shape_cast %312 : vector<1x32xf32> to vector<1x1x32xf32>
    %314 = vector.broadcast %313 : vector<1x1x32xf32> to vector<9x9x32xf32>
    %315 = arith.mulf %311, %314 : vector<9x9x32xf32>
    %316 = arith.addf %310, %315 : vector<9x9x32xf32>
    %c3_259 = arith.constant 3 : index
    %c5_260 = arith.constant 5 : index
    %c0_261 = arith.constant 0 : index
    %317 = vector.load %arg12[%c3_259, %c5_260, %c0_261] : memref<14x14x32xf32, #tpu.memory_space<vmem>>, vector<9x9x32xf32>
    %c23 = arith.constant 23 : index
    %c0_262 = arith.constant 0 : index
    %318 = vector.load %arg11[%c23, %c0_262] : memref<36x32xf32, #tpu.memory_space<vmem>>, vector<1x32xf32>
    %319 = vector.shape_cast %318 : vector<1x32xf32> to vector<1x1x32xf32>
    %320 = vector.broadcast %319 : vector<1x1x32xf32> to vector<9x9x32xf32>
    %321 = arith.mulf %317, %320 : vector<9x9x32xf32>
    %322 = arith.addf %316, %321 : vector<9x9x32xf32>
    %c4_263 = arith.constant 4 : index
    %c0_264 = arith.constant 0 : index
    %c0_265 = arith.constant 0 : index
    %323 = vector.load %arg12[%c4_263, %c0_264, %c0_265] : memref<14x14x32xf32, #tpu.memory_space<vmem>>, vector<9x9x32xf32>
    %c24 = arith.constant 24 : index
    %c0_266 = arith.constant 0 : index
    %324 = vector.load %arg11[%c24, %c0_266] : memref<36x32xf32, #tpu.memory_space<vmem>>, vector<1x32xf32>
    %325 = vector.shape_cast %324 : vector<1x32xf32> to vector<1x1x32xf32>
    %326 = vector.broadcast %325 : vector<1x1x32xf32> to vector<9x9x32xf32>
    %327 = arith.mulf %323, %326 : vector<9x9x32xf32>
    %328 = arith.addf %322, %327 : vector<9x9x32xf32>
    %c4_267 = arith.constant 4 : index
    %c1_268 = arith.constant 1 : index
    %c0_269 = arith.constant 0 : index
    %329 = vector.load %arg12[%c4_267, %c1_268, %c0_269] : memref<14x14x32xf32, #tpu.memory_space<vmem>>, vector<9x9x32xf32>
    %c25 = arith.constant 25 : index
    %c0_270 = arith.constant 0 : index
    %330 = vector.load %arg11[%c25, %c0_270] : memref<36x32xf32, #tpu.memory_space<vmem>>, vector<1x32xf32>
    %331 = vector.shape_cast %330 : vector<1x32xf32> to vector<1x1x32xf32>
    %332 = vector.broadcast %331 : vector<1x1x32xf32> to vector<9x9x32xf32>
    %333 = arith.mulf %329, %332 : vector<9x9x32xf32>
    %334 = arith.addf %328, %333 : vector<9x9x32xf32>
    %c4_271 = arith.constant 4 : index
    %c2_272 = arith.constant 2 : index
    %c0_273 = arith.constant 0 : index
    %335 = vector.load %arg12[%c4_271, %c2_272, %c0_273] : memref<14x14x32xf32, #tpu.memory_space<vmem>>, vector<9x9x32xf32>
    %c26 = arith.constant 26 : index
    %c0_274 = arith.constant 0 : index
    %336 = vector.load %arg11[%c26, %c0_274] : memref<36x32xf32, #tpu.memory_space<vmem>>, vector<1x32xf32>
    %337 = vector.shape_cast %336 : vector<1x32xf32> to vector<1x1x32xf32>
    %338 = vector.broadcast %337 : vector<1x1x32xf32> to vector<9x9x32xf32>
    %339 = arith.mulf %335, %338 : vector<9x9x32xf32>
    %340 = arith.addf %334, %339 : vector<9x9x32xf32>
    %c4_275 = arith.constant 4 : index
    %c3_276 = arith.constant 3 : index
    %c0_277 = arith.constant 0 : index
    %341 = vector.load %arg12[%c4_275, %c3_276, %c0_277] : memref<14x14x32xf32, #tpu.memory_space<vmem>>, vector<9x9x32xf32>
    %c27 = arith.constant 27 : index
    %c0_278 = arith.constant 0 : index
    %342 = vector.load %arg11[%c27, %c0_278] : memref<36x32xf32, #tpu.memory_space<vmem>>, vector<1x32xf32>
    %343 = vector.shape_cast %342 : vector<1x32xf32> to vector<1x1x32xf32>
    %344 = vector.broadcast %343 : vector<1x1x32xf32> to vector<9x9x32xf32>
    %345 = arith.mulf %341, %344 : vector<9x9x32xf32>
    %346 = arith.addf %340, %345 : vector<9x9x32xf32>
    %c4_279 = arith.constant 4 : index
    %c4_280 = arith.constant 4 : index
    %c0_281 = arith.constant 0 : index
    %347 = vector.load %arg12[%c4_279, %c4_280, %c0_281] : memref<14x14x32xf32, #tpu.memory_space<vmem>>, vector<9x9x32xf32>
    %c28_282 = arith.constant 28 : index
    %c0_283 = arith.constant 0 : index
    %348 = vector.load %arg11[%c28_282, %c0_283] : memref<36x32xf32, #tpu.memory_space<vmem>>, vector<1x32xf32>
    %349 = vector.shape_cast %348 : vector<1x32xf32> to vector<1x1x32xf32>
    %350 = vector.broadcast %349 : vector<1x1x32xf32> to vector<9x9x32xf32>
    %351 = arith.mulf %347, %350 : vector<9x9x32xf32>
    %352 = arith.addf %346, %351 : vector<9x9x32xf32>
    %c4_284 = arith.constant 4 : index
    %c5_285 = arith.constant 5 : index
    %c0_286 = arith.constant 0 : index
    %353 = vector.load %arg12[%c4_284, %c5_285, %c0_286] : memref<14x14x32xf32, #tpu.memory_space<vmem>>, vector<9x9x32xf32>
    %c29 = arith.constant 29 : index
    %c0_287 = arith.constant 0 : index
    %354 = vector.load %arg11[%c29, %c0_287] : memref<36x32xf32, #tpu.memory_space<vmem>>, vector<1x32xf32>
    %355 = vector.shape_cast %354 : vector<1x32xf32> to vector<1x1x32xf32>
    %356 = vector.broadcast %355 : vector<1x1x32xf32> to vector<9x9x32xf32>
    %357 = arith.mulf %353, %356 : vector<9x9x32xf32>
    %358 = arith.addf %352, %357 : vector<9x9x32xf32>
    %c5_288 = arith.constant 5 : index
    %c0_289 = arith.constant 0 : index
    %c0_290 = arith.constant 0 : index
    %359 = vector.load %arg12[%c5_288, %c0_289, %c0_290] : memref<14x14x32xf32, #tpu.memory_space<vmem>>, vector<9x9x32xf32>
    %c30 = arith.constant 30 : index
    %c0_291 = arith.constant 0 : index
    %360 = vector.load %arg11[%c30, %c0_291] : memref<36x32xf32, #tpu.memory_space<vmem>>, vector<1x32xf32>
    %361 = vector.shape_cast %360 : vector<1x32xf32> to vector<1x1x32xf32>
    %362 = vector.broadcast %361 : vector<1x1x32xf32> to vector<9x9x32xf32>
    %363 = arith.mulf %359, %362 : vector<9x9x32xf32>
    %364 = arith.addf %358, %363 : vector<9x9x32xf32>
    %c5_292 = arith.constant 5 : index
    %c1_293 = arith.constant 1 : index
    %c0_294 = arith.constant 0 : index
    %365 = vector.load %arg12[%c5_292, %c1_293, %c0_294] : memref<14x14x32xf32, #tpu.memory_space<vmem>>, vector<9x9x32xf32>
    %c31 = arith.constant 31 : index
    %c0_295 = arith.constant 0 : index
    %366 = vector.load %arg11[%c31, %c0_295] : memref<36x32xf32, #tpu.memory_space<vmem>>, vector<1x32xf32>
    %367 = vector.shape_cast %366 : vector<1x32xf32> to vector<1x1x32xf32>
    %368 = vector.broadcast %367 : vector<1x1x32xf32> to vector<9x9x32xf32>
    %369 = arith.mulf %365, %368 : vector<9x9x32xf32>
    %370 = arith.addf %364, %369 : vector<9x9x32xf32>
    %c5_296 = arith.constant 5 : index
    %c2_297 = arith.constant 2 : index
    %c0_298 = arith.constant 0 : index
    %371 = vector.load %arg12[%c5_296, %c2_297, %c0_298] : memref<14x14x32xf32, #tpu.memory_space<vmem>>, vector<9x9x32xf32>
    %c32 = arith.constant 32 : index
    %c0_299 = arith.constant 0 : index
    %372 = vector.load %arg11[%c32, %c0_299] : memref<36x32xf32, #tpu.memory_space<vmem>>, vector<1x32xf32>
    %373 = vector.shape_cast %372 : vector<1x32xf32> to vector<1x1x32xf32>
    %374 = vector.broadcast %373 : vector<1x1x32xf32> to vector<9x9x32xf32>
    %375 = arith.mulf %371, %374 : vector<9x9x32xf32>
    %376 = arith.addf %370, %375 : vector<9x9x32xf32>
    %c5_300 = arith.constant 5 : index
    %c3_301 = arith.constant 3 : index
    %c0_302 = arith.constant 0 : index
    %377 = vector.load %arg12[%c5_300, %c3_301, %c0_302] : memref<14x14x32xf32, #tpu.memory_space<vmem>>, vector<9x9x32xf32>
    %c33 = arith.constant 33 : index
    %c0_303 = arith.constant 0 : index
    %378 = vector.load %arg11[%c33, %c0_303] : memref<36x32xf32, #tpu.memory_space<vmem>>, vector<1x32xf32>
    %379 = vector.shape_cast %378 : vector<1x32xf32> to vector<1x1x32xf32>
    %380 = vector.broadcast %379 : vector<1x1x32xf32> to vector<9x9x32xf32>
    %381 = arith.mulf %377, %380 : vector<9x9x32xf32>
    %382 = arith.addf %376, %381 : vector<9x9x32xf32>
    %c5_304 = arith.constant 5 : index
    %c4_305 = arith.constant 4 : index
    %c0_306 = arith.constant 0 : index
    %383 = vector.load %arg12[%c5_304, %c4_305, %c0_306] : memref<14x14x32xf32, #tpu.memory_space<vmem>>, vector<9x9x32xf32>
    %c34 = arith.constant 34 : index
    %c0_307 = arith.constant 0 : index
    %384 = vector.load %arg11[%c34, %c0_307] : memref<36x32xf32, #tpu.memory_space<vmem>>, vector<1x32xf32>
    %385 = vector.shape_cast %384 : vector<1x32xf32> to vector<1x1x32xf32>
    %386 = vector.broadcast %385 : vector<1x1x32xf32> to vector<9x9x32xf32>
    %387 = arith.mulf %383, %386 : vector<9x9x32xf32>
    %388 = arith.addf %382, %387 : vector<9x9x32xf32>
    %c5_308 = arith.constant 5 : index
    %c5_309 = arith.constant 5 : index
    %c0_310 = arith.constant 0 : index
    %389 = vector.load %arg12[%c5_308, %c5_309, %c0_310] : memref<14x14x32xf32, #tpu.memory_space<vmem>>, vector<9x9x32xf32>
    %c35 = arith.constant 35 : index
    %c0_311 = arith.constant 0 : index
    %390 = vector.load %arg11[%c35, %c0_311] : memref<36x32xf32, #tpu.memory_space<vmem>>, vector<1x32xf32>
    %391 = vector.shape_cast %390 : vector<1x32xf32> to vector<1x1x32xf32>
    %392 = vector.broadcast %391 : vector<1x1x32xf32> to vector<9x9x32xf32>
    %393 = arith.mulf %389, %392 : vector<9x9x32xf32>
    %394 = arith.addf %388, %393 : vector<9x9x32xf32>
    %395 = vector.extract_strided_slice %394 {offsets = [0, 0, 0], sizes = [1, 9, 32], strides = [1, 1, 1]} : vector<9x9x32xf32> to vector<1x9x32xf32>
    %396 = vector.shape_cast %395 : vector<1x9x32xf32> to vector<9x32xf32>
    %c0_312 = arith.constant 0 : index
    %c0_313 = arith.constant 0 : index
    %397 = vector.load %arg13[%c0_312, %c0_313] : memref<81x32xf32, #tpu.memory_space<vmem>>, vector<9x32xf32>
    tpu.vector_store %arg13[%c0_312, %c0_313], %396 {strides = array<i32>} : memref<81x32xf32, #tpu.memory_space<vmem>>, vector<9x32xf32>,
    %398 = vector.extract_strided_slice %394 {offsets = [1, 0, 0], sizes = [1, 9, 32], strides = [1, 1, 1]} : vector<9x9x32xf32> to vector<1x9x32xf32>
    %399 = vector.shape_cast %398 : vector<1x9x32xf32> to vector<9x32xf32>
    %c9_314 = arith.constant 9 : index
    %c0_315 = arith.constant 0 : index
    %400 = vector.load %arg13[%c9_314, %c0_315] : memref<81x32xf32, #tpu.memory_space<vmem>>, vector<9x32xf32>
    tpu.vector_store %arg13[%c9_314, %c0_315], %399 {strides = array<i32>} : memref<81x32xf32, #tpu.memory_space<vmem>>, vector<9x32xf32>,
    %401 = vector.extract_strided_slice %394 {offsets = [2, 0, 0], sizes = [1, 9, 32], strides = [1, 1, 1]} : vector<9x9x32xf32> to vector<1x9x32xf32>
    %402 = vector.shape_cast %401 : vector<1x9x32xf32> to vector<9x32xf32>
    %c18_316 = arith.constant 18 : index
    %c0_317 = arith.constant 0 : index
    %403 = vector.load %arg13[%c18_316, %c0_317] : memref<81x32xf32, #tpu.memory_space<vmem>>, vector<9x32xf32>
    tpu.vector_store %arg13[%c18_316, %c0_317], %402 {strides = array<i32>} : memref<81x32xf32, #tpu.memory_space<vmem>>, vector<9x32xf32>,
    %404 = vector.extract_strided_slice %394 {offsets = [3, 0, 0], sizes = [1, 9, 32], strides = [1, 1, 1]} : vector<9x9x32xf32> to vector<1x9x32xf32>
    %405 = vector.shape_cast %404 : vector<1x9x32xf32> to vector<9x32xf32>
    %c27_318 = arith.constant 27 : index
    %c0_319 = arith.constant 0 : index
    %406 = vector.load %arg13[%c27_318, %c0_319] : memref<81x32xf32, #tpu.memory_space<vmem>>, vector<9x32xf32>
    tpu.vector_store %arg13[%c27_318, %c0_319], %405 {strides = array<i32>} : memref<81x32xf32, #tpu.memory_space<vmem>>, vector<9x32xf32>,
    %407 = vector.extract_strided_slice %394 {offsets = [4, 0, 0], sizes = [1, 9, 32], strides = [1, 1, 1]} : vector<9x9x32xf32> to vector<1x9x32xf32>
    %408 = vector.shape_cast %407 : vector<1x9x32xf32> to vector<9x32xf32>
    %c36 = arith.constant 36 : index
    %c0_320 = arith.constant 0 : index
    %409 = vector.load %arg13[%c36, %c0_320] : memref<81x32xf32, #tpu.memory_space<vmem>>, vector<9x32xf32>
    tpu.vector_store %arg13[%c36, %c0_320], %408 {strides = array<i32>} : memref<81x32xf32, #tpu.memory_space<vmem>>, vector<9x32xf32>,
    %410 = vector.extract_strided_slice %394 {offsets = [5, 0, 0], sizes = [1, 9, 32], strides = [1, 1, 1]} : vector<9x9x32xf32> to vector<1x9x32xf32>
    %411 = vector.shape_cast %410 : vector<1x9x32xf32> to vector<9x32xf32>
    %c45 = arith.constant 45 : index
    %c0_321 = arith.constant 0 : index
    %412 = vector.load %arg13[%c45, %c0_321] : memref<81x32xf32, #tpu.memory_space<vmem>>, vector<9x32xf32>
    tpu.vector_store %arg13[%c45, %c0_321], %411 {strides = array<i32>} : memref<81x32xf32, #tpu.memory_space<vmem>>, vector<9x32xf32>,
    %413 = vector.extract_strided_slice %394 {offsets = [6, 0, 0], sizes = [1, 9, 32], strides = [1, 1, 1]} : vector<9x9x32xf32> to vector<1x9x32xf32>
    %414 = vector.shape_cast %413 : vector<1x9x32xf32> to vector<9x32xf32>
    %c54 = arith.constant 54 : index
    %c0_322 = arith.constant 0 : index
    %415 = vector.load %arg13[%c54, %c0_322] : memref<81x32xf32, #tpu.memory_space<vmem>>, vector<9x32xf32>
    tpu.vector_store %arg13[%c54, %c0_322], %414 {strides = array<i32>} : memref<81x32xf32, #tpu.memory_space<vmem>>, vector<9x32xf32>,
    %416 = vector.extract_strided_slice %394 {offsets = [7, 0, 0], sizes = [1, 9, 32], strides = [1, 1, 1]} : vector<9x9x32xf32> to vector<1x9x32xf32>
    %417 = vector.shape_cast %416 : vector<1x9x32xf32> to vector<9x32xf32>
    %c63 = arith.constant 63 : index
    %c0_323 = arith.constant 0 : index
    %418 = vector.load %arg13[%c63, %c0_323] : memref<81x32xf32, #tpu.memory_space<vmem>>, vector<9x32xf32>
    tpu.vector_store %arg13[%c63, %c0_323], %417 {strides = array<i32>} : memref<81x32xf32, #tpu.memory_space<vmem>>, vector<9x32xf32>,
    %419 = vector.extract_strided_slice %394 {offsets = [8, 0, 0], sizes = [1, 9, 32], strides = [1, 1, 1]} : vector<9x9x32xf32> to vector<1x9x32xf32>
    %420 = vector.shape_cast %419 : vector<1x9x32xf32> to vector<9x32xf32>
    %c72 = arith.constant 72 : index
    %c0_324 = arith.constant 0 : index
    %421 = vector.load %arg13[%c72, %c0_324] : memref<81x32xf32, #tpu.memory_space<vmem>>, vector<9x32xf32>
    tpu.vector_store %arg13[%c72, %c0_324], %420 {strides = array<i32>} : memref<81x32xf32, #tpu.memory_space<vmem>>, vector<9x32xf32>,
    %c0_325 = arith.constant 0 : index
    %c0_326 = arith.constant 0 : index
    %422 = vector.load %arg13[%c0_325, %c0_326] : memref<81x32xf32, #tpu.memory_space<vmem>>, vector<81x32xf32>
    %423 = arith.truncf %422 : vector<81x32xf32> to vector<81x32xbf16>
    %c0_327 = arith.constant 0 : index
    %c0_328 = arith.constant 0 : index
    %424 = vector.load %arg7[%c0_327, %c0_328] : memref<32x33xbf16, #tpu.memory_space<vmem>>, vector<32x33xbf16>
    %cst_329 = arith.constant dense<0.000000e+00> : vector<81x33xf32>
    %425 = tpu.matmul %423, %424, %cst_329 {dimension_numbers = #tpu.dot_dimension_numbers<[1], [0], [0], [1], [0, 0, 1, 1], [], []>} : vector<81x32xbf16>, vector<32x33xbf16>, vector<81x33xf32> -> vector<81x33xf32>
    %c0_330 = arith.constant 0 : index
    %c0_331 = arith.constant 0 : index
    %426 = vector.load %arg8[%c0_330, %c0_331] : memref<1x33xf32, #tpu.memory_space<vmem>>, vector<1x33xf32>
    %427 = vector.broadcast %426 : vector<1x33xf32> to vector<81x33xf32>
    %428 = arith.addf %425, %427 : vector<81x33xf32>
    %cst_332 = arith.constant 0.000000e+00 : f32
    %429 = vector.broadcast %cst_332 : f32 to vector<81x33xf32>
    %430 = arith.maximumf %428, %429 : vector<81x33xf32>
    %431 = arith.truncf %430 : vector<81x33xf32> to vector<81x33xbf16>
    %c0_333 = arith.constant 0 : index
    %c0_334 = arith.constant 0 : index
    %432 = vector.load %arg9[%c0_333, %c0_334] : memref<3969x33xbf16, #tpu.memory_space<vmem>>, vector<256x33xbf16>
    %cst_335 = arith.constant dense<0.000000e+00> : vector<256x81xf32>
    %433 = tpu.matmul %432, %431, %cst_335 {dimension_numbers = #tpu.dot_dimension_numbers<[1], [1], [0], [0], [0, 0, 1, 0], [], []>} : vector<256x33xbf16>, vector<81x33xbf16>, vector<256x81xf32> -> vector<256x81xf32>
    %c0_336 = arith.constant 0 : index
    %c0_337 = arith.constant 0 : index
    %c0_338 = arith.constant 0 : index
    %434 = vector.load %arg10[%c0_336, %c0_337, %c0_338] : memref<1x3969x81xf32, #tpu.memory_space<vmem>>, vector<1x256x81xf32>
    %435 = vector.shape_cast %434 : vector<1x256x81xf32> to vector<256x81xf32>
    %436 = vector.shape_cast %433 : vector<256x81xf32> to vector<1x256x81xf32>
    tpu.vector_store %arg10[%c0_336, %c0_337, %c0_338], %436 {strides = array<i32>} : memref<1x3969x81xf32, #tpu.memory_space<vmem>>, vector<1x256x81xf32>,
    %c256 = arith.constant 256 : index
    %c0_339 = arith.constant 0 : index
    %437 = vector.load %arg9[%c256, %c0_339] : memref<3969x33xbf16, #tpu.memory_space<vmem>>, vector<256x33xbf16>
    %cst_340 = arith.constant dense<0.000000e+00> : vector<256x81xf32>
    %438 = tpu.matmul %437, %431, %cst_340 {dimension_numbers = #tpu.dot_dimension_numbers<[1], [1], [0], [0], [0, 0, 1, 0], [], []>} : vector<256x33xbf16>, vector<81x33xbf16>, vector<256x81xf32> -> vector<256x81xf32>
    %c0_341 = arith.constant 0 : index
    %c256_342 = arith.constant 256 : index
    %c0_343 = arith.constant 0 : index
    %439 = vector.load %arg10[%c0_341, %c256_342, %c0_343] : memref<1x3969x81xf32, #tpu.memory_space<vmem>>, vector<1x256x81xf32>
    %440 = vector.shape_cast %439 : vector<1x256x81xf32> to vector<256x81xf32>
    %441 = vector.shape_cast %438 : vector<256x81xf32> to vector<1x256x81xf32>
    tpu.vector_store %arg10[%c0_341, %c256_342, %c0_343], %441 {strides = array<i32>} : memref<1x3969x81xf32, #tpu.memory_space<vmem>>, vector<1x256x81xf32>,
    %c512 = arith.constant 512 : index
    %c0_344 = arith.constant 0 : index
    %442 = vector.load %arg9[%c512, %c0_344] : memref<3969x33xbf16, #tpu.memory_space<vmem>>, vector<256x33xbf16>
    %cst_345 = arith.constant dense<0.000000e+00> : vector<256x81xf32>
    %443 = tpu.matmul %442, %431, %cst_345 {dimension_numbers = #tpu.dot_dimension_numbers<[1], [1], [0], [0], [0, 0, 1, 0], [], []>} : vector<256x33xbf16>, vector<81x33xbf16>, vector<256x81xf32> -> vector<256x81xf32>
    %c0_346 = arith.constant 0 : index
    %c512_347 = arith.constant 512 : index
    %c0_348 = arith.constant 0 : index
    %444 = vector.load %arg10[%c0_346, %c512_347, %c0_348] : memref<1x3969x81xf32, #tpu.memory_space<vmem>>, vector<1x256x81xf32>
    %445 = vector.shape_cast %444 : vector<1x256x81xf32> to vector<256x81xf32>
    %446 = vector.shape_cast %443 : vector<256x81xf32> to vector<1x256x81xf32>
    tpu.vector_store %arg10[%c0_346, %c512_347, %c0_348], %446 {strides = array<i32>} : memref<1x3969x81xf32, #tpu.memory_space<vmem>>, vector<1x256x81xf32>,
    %c768 = arith.constant 768 : index
    %c0_349 = arith.constant 0 : index
    %447 = vector.load %arg9[%c768, %c0_349] : memref<3969x33xbf16, #tpu.memory_space<vmem>>, vector<256x33xbf16>
    %cst_350 = arith.constant dense<0.000000e+00> : vector<256x81xf32>
    %448 = tpu.matmul %447, %431, %cst_350 {dimension_numbers = #tpu.dot_dimension_numbers<[1], [1], [0], [0], [0, 0, 1, 0], [], []>} : vector<256x33xbf16>, vector<81x33xbf16>, vector<256x81xf32> -> vector<256x81xf32>
    %c0_351 = arith.constant 0 : index
    %c768_352 = arith.constant 768 : index
    %c0_353 = arith.constant 0 : index
    %449 = vector.load %arg10[%c0_351, %c768_352, %c0_353] : memref<1x3969x81xf32, #tpu.memory_space<vmem>>, vector<1x256x81xf32>
    %450 = vector.shape_cast %449 : vector<1x256x81xf32> to vector<256x81xf32>
    %451 = vector.shape_cast %448 : vector<256x81xf32> to vector<1x256x81xf32>
    tpu.vector_store %arg10[%c0_351, %c768_352, %c0_353], %451 {strides = array<i32>} : memref<1x3969x81xf32, #tpu.memory_space<vmem>>, vector<1x256x81xf32>,
    %c1024 = arith.constant 1024 : index
    %c0_354 = arith.constant 0 : index
    %452 = vector.load %arg9[%c1024, %c0_354] : memref<3969x33xbf16, #tpu.memory_space<vmem>>, vector<256x33xbf16>
    %cst_355 = arith.constant dense<0.000000e+00> : vector<256x81xf32>
    %453 = tpu.matmul %452, %431, %cst_355 {dimension_numbers = #tpu.dot_dimension_numbers<[1], [1], [0], [0], [0, 0, 1, 0], [], []>} : vector<256x33xbf16>, vector<81x33xbf16>, vector<256x81xf32> -> vector<256x81xf32>
    %c0_356 = arith.constant 0 : index
    %c1024_357 = arith.constant 1024 : index
    %c0_358 = arith.constant 0 : index
    %454 = vector.load %arg10[%c0_356, %c1024_357, %c0_358] : memref<1x3969x81xf32, #tpu.memory_space<vmem>>, vector<1x256x81xf32>
    %455 = vector.shape_cast %454 : vector<1x256x81xf32> to vector<256x81xf32>
    %456 = vector.shape_cast %453 : vector<256x81xf32> to vector<1x256x81xf32>
    tpu.vector_store %arg10[%c0_356, %c1024_357, %c0_358], %456 {strides = array<i32>} : memref<1x3969x81xf32, #tpu.memory_space<vmem>>, vector<1x256x81xf32>,
    %c1280 = arith.constant 1280 : index
    %c0_359 = arith.constant 0 : index
    %457 = vector.load %arg9[%c1280, %c0_359] : memref<3969x33xbf16, #tpu.memory_space<vmem>>, vector<256x33xbf16>
    %cst_360 = arith.constant dense<0.000000e+00> : vector<256x81xf32>
    %458 = tpu.matmul %457, %431, %cst_360 {dimension_numbers = #tpu.dot_dimension_numbers<[1], [1], [0], [0], [0, 0, 1, 0], [], []>} : vector<256x33xbf16>, vector<81x33xbf16>, vector<256x81xf32> -> vector<256x81xf32>
    %c0_361 = arith.constant 0 : index
    %c1280_362 = arith.constant 1280 : index
    %c0_363 = arith.constant 0 : index
    %459 = vector.load %arg10[%c0_361, %c1280_362, %c0_363] : memref<1x3969x81xf32, #tpu.memory_space<vmem>>, vector<1x256x81xf32>
    %460 = vector.shape_cast %459 : vector<1x256x81xf32> to vector<256x81xf32>
    %461 = vector.shape_cast %458 : vector<256x81xf32> to vector<1x256x81xf32>
    tpu.vector_store %arg10[%c0_361, %c1280_362, %c0_363], %461 {strides = array<i32>} : memref<1x3969x81xf32, #tpu.memory_space<vmem>>, vector<1x256x81xf32>,
    %c1536 = arith.constant 1536 : index
    %c0_364 = arith.constant 0 : index
    %462 = vector.load %arg9[%c1536, %c0_364] : memref<3969x33xbf16, #tpu.memory_space<vmem>>, vector<256x33xbf16>
    %cst_365 = arith.constant dense<0.000000e+00> : vector<256x81xf32>
    %463 = tpu.matmul %462, %431, %cst_365 {dimension_numbers = #tpu.dot_dimension_numbers<[1], [1], [0], [0], [0, 0, 1, 0], [], []>} : vector<256x33xbf16>, vector<81x33xbf16>, vector<256x81xf32> -> vector<256x81xf32>
    %c0_366 = arith.constant 0 : index
    %c1536_367 = arith.constant 1536 : index
    %c0_368 = arith.constant 0 : index
    %464 = vector.load %arg10[%c0_366, %c1536_367, %c0_368] : memref<1x3969x81xf32, #tpu.memory_space<vmem>>, vector<1x256x81xf32>
    %465 = vector.shape_cast %464 : vector<1x256x81xf32> to vector<256x81xf32>
    %466 = vector.shape_cast %463 : vector<256x81xf32> to vector<1x256x81xf32>
    tpu.vector_store %arg10[%c0_366, %c1536_367, %c0_368], %466 {strides = array<i32>} : memref<1x3969x81xf32, #tpu.memory_space<vmem>>, vector<1x256x81xf32>,
    %c1792 = arith.constant 1792 : index
    %c0_369 = arith.constant 0 : index
    %467 = vector.load %arg9[%c1792, %c0_369] : memref<3969x33xbf16, #tpu.memory_space<vmem>>, vector<256x33xbf16>
    %cst_370 = arith.constant dense<0.000000e+00> : vector<256x81xf32>
    %468 = tpu.matmul %467, %431, %cst_370 {dimension_numbers = #tpu.dot_dimension_numbers<[1], [1], [0], [0], [0, 0, 1, 0], [], []>} : vector<256x33xbf16>, vector<81x33xbf16>, vector<256x81xf32> -> vector<256x81xf32>
    %c0_371 = arith.constant 0 : index
    %c1792_372 = arith.constant 1792 : index
    %c0_373 = arith.constant 0 : index
    %469 = vector.load %arg10[%c0_371, %c1792_372, %c0_373] : memref<1x3969x81xf32, #tpu.memory_space<vmem>>, vector<1x256x81xf32>
    %470 = vector.shape_cast %469 : vector<1x256x81xf32> to vector<256x81xf32>
    %471 = vector.shape_cast %468 : vector<256x81xf32> to vector<1x256x81xf32>
    tpu.vector_store %arg10[%c0_371, %c1792_372, %c0_373], %471 {strides = array<i32>} : memref<1x3969x81xf32, #tpu.memory_space<vmem>>, vector<1x256x81xf32>,
    %c2048 = arith.constant 2048 : index
    %c0_374 = arith.constant 0 : index
    %472 = vector.load %arg9[%c2048, %c0_374] : memref<3969x33xbf16, #tpu.memory_space<vmem>>, vector<256x33xbf16>
    %cst_375 = arith.constant dense<0.000000e+00> : vector<256x81xf32>
    %473 = tpu.matmul %472, %431, %cst_375 {dimension_numbers = #tpu.dot_dimension_numbers<[1], [1], [0], [0], [0, 0, 1, 0], [], []>} : vector<256x33xbf16>, vector<81x33xbf16>, vector<256x81xf32> -> vector<256x81xf32>
    %c0_376 = arith.constant 0 : index
    %c2048_377 = arith.constant 2048 : index
    %c0_378 = arith.constant 0 : index
    %474 = vector.load %arg10[%c0_376, %c2048_377, %c0_378] : memref<1x3969x81xf32, #tpu.memory_space<vmem>>, vector<1x256x81xf32>
    %475 = vector.shape_cast %474 : vector<1x256x81xf32> to vector<256x81xf32>
    %476 = vector.shape_cast %473 : vector<256x81xf32> to vector<1x256x81xf32>
    tpu.vector_store %arg10[%c0_376, %c2048_377, %c0_378], %476 {strides = array<i32>} : memref<1x3969x81xf32, #tpu.memory_space<vmem>>, vector<1x256x81xf32>,
    %c2304 = arith.constant 2304 : index
    %c0_379 = arith.constant 0 : index
    %477 = vector.load %arg9[%c2304, %c0_379] : memref<3969x33xbf16, #tpu.memory_space<vmem>>, vector<256x33xbf16>
    %cst_380 = arith.constant dense<0.000000e+00> : vector<256x81xf32>
    %478 = tpu.matmul %477, %431, %cst_380 {dimension_numbers = #tpu.dot_dimension_numbers<[1], [1], [0], [0], [0, 0, 1, 0], [], []>} : vector<256x33xbf16>, vector<81x33xbf16>, vector<256x81xf32> -> vector<256x81xf32>
    %c0_381 = arith.constant 0 : index
    %c2304_382 = arith.constant 2304 : index
    %c0_383 = arith.constant 0 : index
    %479 = vector.load %arg10[%c0_381, %c2304_382, %c0_383] : memref<1x3969x81xf32, #tpu.memory_space<vmem>>, vector<1x256x81xf32>
    %480 = vector.shape_cast %479 : vector<1x256x81xf32> to vector<256x81xf32>
    %481 = vector.shape_cast %478 : vector<256x81xf32> to vector<1x256x81xf32>
    tpu.vector_store %arg10[%c0_381, %c2304_382, %c0_383], %481 {strides = array<i32>} : memref<1x3969x81xf32, #tpu.memory_space<vmem>>, vector<1x256x81xf32>,
    %c2560 = arith.constant 2560 : index
    %c0_384 = arith.constant 0 : index
    %482 = vector.load %arg9[%c2560, %c0_384] : memref<3969x33xbf16, #tpu.memory_space<vmem>>, vector<256x33xbf16>
    %cst_385 = arith.constant dense<0.000000e+00> : vector<256x81xf32>
    %483 = tpu.matmul %482, %431, %cst_385 {dimension_numbers = #tpu.dot_dimension_numbers<[1], [1], [0], [0], [0, 0, 1, 0], [], []>} : vector<256x33xbf16>, vector<81x33xbf16>, vector<256x81xf32> -> vector<256x81xf32>
    %c0_386 = arith.constant 0 : index
    %c2560_387 = arith.constant 2560 : index
    %c0_388 = arith.constant 0 : index
    %484 = vector.load %arg10[%c0_386, %c2560_387, %c0_388] : memref<1x3969x81xf32, #tpu.memory_space<vmem>>, vector<1x256x81xf32>
    %485 = vector.shape_cast %484 : vector<1x256x81xf32> to vector<256x81xf32>
    %486 = vector.shape_cast %483 : vector<256x81xf32> to vector<1x256x81xf32>
    tpu.vector_store %arg10[%c0_386, %c2560_387, %c0_388], %486 {strides = array<i32>} : memref<1x3969x81xf32, #tpu.memory_space<vmem>>, vector<1x256x81xf32>,
    %c2816 = arith.constant 2816 : index
    %c0_389 = arith.constant 0 : index
    %487 = vector.load %arg9[%c2816, %c0_389] : memref<3969x33xbf16, #tpu.memory_space<vmem>>, vector<256x33xbf16>
    %cst_390 = arith.constant dense<0.000000e+00> : vector<256x81xf32>
    %488 = tpu.matmul %487, %431, %cst_390 {dimension_numbers = #tpu.dot_dimension_numbers<[1], [1], [0], [0], [0, 0, 1, 0], [], []>} : vector<256x33xbf16>, vector<81x33xbf16>, vector<256x81xf32> -> vector<256x81xf32>
    %c0_391 = arith.constant 0 : index
    %c2816_392 = arith.constant 2816 : index
    %c0_393 = arith.constant 0 : index
    %489 = vector.load %arg10[%c0_391, %c2816_392, %c0_393] : memref<1x3969x81xf32, #tpu.memory_space<vmem>>, vector<1x256x81xf32>
    %490 = vector.shape_cast %489 : vector<1x256x81xf32> to vector<256x81xf32>
    %491 = vector.shape_cast %488 : vector<256x81xf32> to vector<1x256x81xf32>
    tpu.vector_store %arg10[%c0_391, %c2816_392, %c0_393], %491 {strides = array<i32>} : memref<1x3969x81xf32, #tpu.memory_space<vmem>>, vector<1x256x81xf32>,
    %c3072 = arith.constant 3072 : index
    %c0_394 = arith.constant 0 : index
    %492 = vector.load %arg9[%c3072, %c0_394] : memref<3969x33xbf16, #tpu.memory_space<vmem>>, vector<256x33xbf16>
    %cst_395 = arith.constant dense<0.000000e+00> : vector<256x81xf32>
    %493 = tpu.matmul %492, %431, %cst_395 {dimension_numbers = #tpu.dot_dimension_numbers<[1], [1], [0], [0], [0, 0, 1, 0], [], []>} : vector<256x33xbf16>, vector<81x33xbf16>, vector<256x81xf32> -> vector<256x81xf32>
    %c0_396 = arith.constant 0 : index
    %c3072_397 = arith.constant 3072 : index
    %c0_398 = arith.constant 0 : index
    %494 = vector.load %arg10[%c0_396, %c3072_397, %c0_398] : memref<1x3969x81xf32, #tpu.memory_space<vmem>>, vector<1x256x81xf32>
    %495 = vector.shape_cast %494 : vector<1x256x81xf32> to vector<256x81xf32>
    %496 = vector.shape_cast %493 : vector<256x81xf32> to vector<1x256x81xf32>
    tpu.vector_store %arg10[%c0_396, %c3072_397, %c0_398], %496 {strides = array<i32>} : memref<1x3969x81xf32, #tpu.memory_space<vmem>>, vector<1x256x81xf32>,
    %c3328 = arith.constant 3328 : index
    %c0_399 = arith.constant 0 : index
    %497 = vector.load %arg9[%c3328, %c0_399] : memref<3969x33xbf16, #tpu.memory_space<vmem>>, vector<256x33xbf16>
    %cst_400 = arith.constant dense<0.000000e+00> : vector<256x81xf32>
    %498 = tpu.matmul %497, %431, %cst_400 {dimension_numbers = #tpu.dot_dimension_numbers<[1], [1], [0], [0], [0, 0, 1, 0], [], []>} : vector<256x33xbf16>, vector<81x33xbf16>, vector<256x81xf32> -> vector<256x81xf32>
    %c0_401 = arith.constant 0 : index
    %c3328_402 = arith.constant 3328 : index
    %c0_403 = arith.constant 0 : index
    %499 = vector.load %arg10[%c0_401, %c3328_402, %c0_403] : memref<1x3969x81xf32, #tpu.memory_space<vmem>>, vector<1x256x81xf32>
    %500 = vector.shape_cast %499 : vector<1x256x81xf32> to vector<256x81xf32>
    %501 = vector.shape_cast %498 : vector<256x81xf32> to vector<1x256x81xf32>
    tpu.vector_store %arg10[%c0_401, %c3328_402, %c0_403], %501 {strides = array<i32>} : memref<1x3969x81xf32, #tpu.memory_space<vmem>>, vector<1x256x81xf32>,
    %c3584 = arith.constant 3584 : index
    %c0_404 = arith.constant 0 : index
    %502 = vector.load %arg9[%c3584, %c0_404] : memref<3969x33xbf16, #tpu.memory_space<vmem>>, vector<256x33xbf16>
    %cst_405 = arith.constant dense<0.000000e+00> : vector<256x81xf32>
    %503 = tpu.matmul %502, %431, %cst_405 {dimension_numbers = #tpu.dot_dimension_numbers<[1], [1], [0], [0], [0, 0, 1, 0], [], []>} : vector<256x33xbf16>, vector<81x33xbf16>, vector<256x81xf32> -> vector<256x81xf32>
    %c0_406 = arith.constant 0 : index
    %c3584_407 = arith.constant 3584 : index
    %c0_408 = arith.constant 0 : index
    %504 = vector.load %arg10[%c0_406, %c3584_407, %c0_408] : memref<1x3969x81xf32, #tpu.memory_space<vmem>>, vector<1x256x81xf32>
    %505 = vector.shape_cast %504 : vector<1x256x81xf32> to vector<256x81xf32>
    %506 = vector.shape_cast %503 : vector<256x81xf32> to vector<1x256x81xf32>
    tpu.vector_store %arg10[%c0_406, %c3584_407, %c0_408], %506 {strides = array<i32>} : memref<1x3969x81xf32, #tpu.memory_space<vmem>>, vector<1x256x81xf32>,
    %c3840 = arith.constant 3840 : index
    %c0_409 = arith.constant 0 : index
    %507 = vector.load %arg9[%c3840, %c0_409] : memref<3969x33xbf16, #tpu.memory_space<vmem>>, vector<129x33xbf16>
    %cst_410 = arith.constant dense<0.000000e+00> : vector<129x81xf32>
    %508 = tpu.matmul %507, %431, %cst_410 {dimension_numbers = #tpu.dot_dimension_numbers<[1], [1], [0], [0], [0, 0, 1, 0], [], []>} : vector<129x33xbf16>, vector<81x33xbf16>, vector<129x81xf32> -> vector<129x81xf32>
    %c0_411 = arith.constant 0 : index
    %c3840_412 = arith.constant 3840 : index
    %c0_413 = arith.constant 0 : index
    %509 = vector.load %arg10[%c0_411, %c3840_412, %c0_413] : memref<1x3969x81xf32, #tpu.memory_space<vmem>>, vector<1x129x81xf32>
    %510 = vector.shape_cast %509 : vector<1x129x81xf32> to vector<129x81xf32>
    %511 = vector.shape_cast %508 : vector<129x81xf32> to vector<1x129x81xf32>
    tpu.vector_store %arg10[%c0_411, %c3840_412, %c0_413], %511 {strides = array<i32>} : memref<1x3969x81xf32, #tpu.memory_space<vmem>>, vector<1x129x81xf32>,
    return
  }
  func.func @transform_0(%arg0: i32) -> (i32, i32, i32) {
    %c0_i32 = arith.constant 0 : i32
    %c0_i32_0 = arith.constant 0 : i32
    %c0_i32_1 = arith.constant 0 : i32
    return %arg0, %c0_i32, %c0_i32_0 : i32, i32, i32
  }
  func.func @transform_1(%arg0: i32) -> (i32, i32, i32) {
    %c0_i32 = arith.constant 0 : i32
    %c0_i32_0 = arith.constant 0 : i32
    %c0_i32_1 = arith.constant 0 : i32
    return %arg0, %c0_i32, %c0_i32_0 : i32, i32, i32
  }
  func.func @transform_2(%arg0: i32) -> (i32, i32) {
    %c0_i32 = arith.constant 0 : i32
    %c0_i32_0 = arith.constant 0 : i32
    %c0_i32_1 = arith.constant 0 : i32
    return %c0_i32, %c0_i32_0 : i32, i32
  }
  func.func @transform_3(%arg0: i32) -> (i32, i32) {
    %c0_i32 = arith.constant 0 : i32
    %c0_i32_0 = arith.constant 0 : i32
    %c0_i32_1 = arith.constant 0 : i32
    return %c0_i32, %c0_i32_0 : i32, i32
  }
  func.func @transform_4(%arg0: i32) -> (i32, i32) {
    %c0_i32 = arith.constant 0 : i32
    %c0_i32_0 = arith.constant 0 : i32
    %c0_i32_1 = arith.constant 0 : i32
    return %c0_i32, %c0_i32_0 : i32, i32
  }
  func.func @transform_5(%arg0: i32) -> (i32, i32) {
    %c0_i32 = arith.constant 0 : i32
    %c0_i32_0 = arith.constant 0 : i32
    %c0_i32_1 = arith.constant 0 : i32
    return %c0_i32, %c0_i32_0 : i32, i32
  }
  func.func @transform_6(%arg0: i32) -> (i32, i32) {
    %c0_i32 = arith.constant 0 : i32
    %c0_i32_0 = arith.constant 0 : i32
    %c0_i32_1 = arith.constant 0 : i32
    return %c0_i32, %c0_i32_0 : i32, i32
  }
  func.func @transform_7(%arg0: i32) -> (i32, i32) {
    %c0_i32 = arith.constant 0 : i32
    %c0_i32_0 = arith.constant 0 : i32
    %c0_i32_1 = arith.constant 0 : i32
    return %c0_i32, %c0_i32_0 : i32, i32
  }
  func.func @transform_8(%arg0: i32) -> (i32, i32) {
    %c0_i32 = arith.constant 0 : i32
    %c0_i32_0 = arith.constant 0 : i32
    %c0_i32_1 = arith.constant 0 : i32
    return %c0_i32, %c0_i32_0 : i32, i32
  }
  func.func @transform_9(%arg0: i32) -> (i32, i32, i32) {
    %c0_i32 = arith.constant 0 : i32
    %c0_i32_0 = arith.constant 0 : i32
    %c0_i32_1 = arith.constant 0 : i32
    return %arg0, %c0_i32, %c0_i32_0 : i32, i32, i32
  }
}

</mosaic_0001>

<llo_original>
// kernel: depth_corr_forward.1
$region0: #{depth_corr_forward.1}
  #allocation0 [shape = 'u32[]', space=smem, size = 0x4, offset = 0x4, fixed_abs, tag = 'smem constant byte address 0x4 - core index']
  #allocation1 [shape = 'u32[144,128]{1,0:T(1,128)}', space=vmem, size = 0x12000, scoped, tag = 'internal scratch']
  #allocation2 [shape = 'f32[36,32]{1,0:T(8,128)}', space=vmem, size = 0x5000, scoped, tag = 'scratch operand']
  #allocation3 [shape = 'f32[14,14,32]{2,1,0:T(8,128)}', space=vmem, size = 0x1c000, scoped, tag = 'scratch operand']
  #allocation4 [shape = 'f32[81,32]{1,0:T(8,128)}', space=vmem, size = 0xb000, scoped, tag = 'scratch operand']
  %s0 = inlined_call_operand.vmem [shape: bf16[2,36,36], index: 0, kind: input, shape index: {}]
  %s1 = inlined_call_operand.vmem [shape: bf16[2,196,36], index: 1, kind: input, shape index: {}]
  %s2 = inlined_call_operand.vmem [shape: bf16[36,32], index: 2, kind: input, shape index: {}]
  %s3 = inlined_call_operand.vmem [shape: f32[1,32], index: 3, kind: input, shape index: {}]
  %s4 = inlined_call_operand.vmem [shape: bf16[36,32], index: 4, kind: input, shape index: {}]
  %s5 = inlined_call_operand.vmem [shape: f32[1,32], index: 5, kind: input, shape index: {}]
  %s6 = inlined_call_operand.vmem [shape: bf16[32,33], index: 6, kind: input, shape index: {}]
  %s7 = inlined_call_operand.vmem [shape: f32[1,33], index: 7, kind: input, shape index: {}]
  %s8 = inlined_call_operand.vmem [shape: bf16[3969,33], index: 8, kind: input, shape index: {}]
  %s9 = inlined_call_operand.vmem [shape: f32[2,3969,81], index: 9, kind: output, shape index: {}]
  %s10 = sld [smem:[#allocation0]]
  $region69: #{depth_corr_forward.1} parent=0
    _
  %s12 = ssub.s32 1, %s10
  %s13 = scalar_select 0, %s12, %s10
  loop: start=0, step=1, limit=4
  $region2: #{depth_corr_forward.1} parent=0 // loop_pre_header
    _
  $region3: #{depth_corr_forward.1} parent=0 // loop_header
    %s15 = sphi 0, %s19
    %p16 = scmp.ge.s32.totalorder %s15, 4
    %s25 = sphi 0, %s27
    %s28 = sphi 0, %s25
    %s29 = sphi 0, %s28
    %s45 = sphi 0, %s29
    %s51 = sphi 0, %s53
    %s54 = sphi 0, %s51
    %s55 = sphi 0, %s54
    %s71 = sphi 0, %s55
    %s75 = sphi 0, %s75
    %s77 = sphi 0, %s75
    %s78 = sphi 0, %s77
    %s92 = sphi 0, %s78
    %s96 = sphi 0, %s96
    %s98 = sphi 0, %s96
    %s99 = sphi 0, %s98
    %s113 = sphi 0, %s99
    %s117 = sphi 0, %s117
    %s119 = sphi 0, %s117
    %s120 = sphi 0, %s119
    %s134 = sphi 0, %s120
    %s138 = sphi 0, %s138
    %s140 = sphi 0, %s138
    %s141 = sphi 0, %s140
    %s155 = sphi 0, %s141
    %s159 = sphi 0, %s159
    %s161 = sphi 0, %s159
    %s162 = sphi 0, %s161
    %s176 = sphi 0, %s162
    %s180 = sphi 0, %s180
    %s182 = sphi 0, %s180
    %s183 = sphi 0, %s182
    %s197 = sphi 0, %s183
    %s201 = sphi 0, %s201
    %s203 = sphi 0, %s201
    %s204 = sphi 0, %s203
    %s218 = sphi 0, %s204
    %s224 = sphi 0, %s226
    %s227 = sphi 0, %s224
    %s228 = sphi 0, %s227
    %s244 = sphi 0, %s228
  $region4: #{depth_corr_forward.1} parent=0 // loop_header_branch
    %18 = sbr.rel (%p16) target = $region8
  $region5: #{depth_corr_forward.1} parent=0 // loop_body
    %s20 = ssub.s32 %s15, 1
    %s21 = ssub.s32 %s15, 2
    %s22 = sadd.s32 %s15, 1
    %s23 = ssub.s32 %s15, %s22
    %p24 = scmp.eq.s32.totalorder %s23, 0
    %s26 = sadd.s32 %s25, 1
    %s27 = scalar_select %p24, %s25, %s26
    %p30 = pneg %p24
    %p31 = scmp.eq.s32.totalorder %s15, 1
    %p32 = por %p30, %p31
    %p33 = scmp.ne.s32.totalorder %s25, %s28
    %p34 = scmp.eq.s32.totalorder %s15, 0
    %p35 = por %p33, %p34
    %p36 = scmp.ne.s32.totalorder %s25, %s28
    %p37 = scmp.eq.s32.totalorder %s20, 1
    %p38 = por %p36, %p37
    %p39 = scmp.ne.s32.totalorder %s28, %s29
    %p40 = scmp.eq.s32.totalorder %s20, 0
    %p41 = por %p39, %p40
    %p42 = scmp.ne.s32.totalorder %s28, %s29
    %p43 = scmp.eq.s32.totalorder %s21, 1
    %p44 = por %p42, %p43
    %p46 = scmp.ne.s32.totalorder %s29, %s45
    %p47 = scmp.eq.s32.totalorder %s21, 0
    %p48 = por %p46, %p47
    %s49 = ssub.s32 %s15, %s22
    %p50 = scmp.eq.s32.totalorder %s49, 0
    %s52 = sadd.s32 %s51, 1
    %s53 = scalar_select %p50, %s51, %s52
    %p56 = pneg %p50
    %p57 = scmp.eq.s32.totalorder %s15, 1
    %p58 = por %p56, %p57
    %p59 = scmp.ne.s32.totalorder %s51, %s54
    %p60 = scmp.eq.s32.totalorder %s15, 0
    %p61 = por %p59, %p60
    %p62 = scmp.ne.s32.totalorder %s51, %s54
    %p63 = scmp.eq.s32.totalorder %s20, 1
    %p64 = por %p62, %p63
    %p65 = scmp.ne.s32.totalorder %s54, %s55
    %p66 = scmp.eq.s32.totalorder %s20, 0
    %p67 = por %p65, %p66
    %p68 = scmp.ne.s32.totalorder %s54, %s55
    %p69 = scmp.eq.s32.totalorder %s21, 1
    %p70 = por %p68, %p69
    %p72 = scmp.ne.s32.totalorder %s55, %s71
    %p73 = scmp.eq.s32.totalorder %s21, 0
    %p74 = por %p72, %p73
    %s76 = sadd.s32 %s75, 1
    %p79 = scmp.eq.s32.totalorder %s15, 1
    %p80 = scmp.ne.s32.totalorder %s75, %s77
    %p81 = scmp.eq.s32.totalorder %s15, 0
    %p82 = por %p80, %p81
    %p83 = scmp.ne.s32.totalorder %s75, %s77
    %p84 = scmp.eq.s32.totalorder %s20, 1
    %p85 = por %p83, %p84
    %p86 = scmp.ne.s32.totalorder %s77, %s78
    %p87 = scmp.eq.s32.totalorder %s20, 0
    %p88 = por %p86, %p87
    %p89 = scmp.ne.s32.totalorder %s77, %s78
    %p90 = scmp.eq.s32.totalorder %s21, 1
    %p91 = por %p89, %p90
    %p93 = scmp.ne.s32.totalorder %s78, %s92
    %p94 = scmp.eq.s32.totalorder %s21, 0
    %p95 = por %p93, %p94
    %s97 = sadd.s32 %s96, 1
    %p100 = scmp.eq.s32.totalorder %s15, 1
    %p101 = scmp.ne.s32.totalorder %s96, %s98
    %p102 = scmp.eq.s32.totalorder %s15, 0
    %p103 = por %p101, %p102
    %p104 = scmp.ne.s32.totalorder %s96, %s98
    %p105 = scmp.eq.s32.totalorder %s20, 1
    %p106 = por %p104, %p105
    %p107 = scmp.ne.s32.totalorder %s98, %s99
    %p108 = scmp.eq.s32.totalorder %s20, 0
    %p109 = por %p107, %p108
    %p110 = scmp.ne.s32.totalorder %s98, %s99
    %p111 = scmp.eq.s32.totalorder %s21, 1
    %p112 = por %p110, %p111
    %p114 = scmp.ne.s32.totalorder %s99, %s113
    %p115 = scmp.eq.s32.totalorder %s21, 0
    %p116 = por %p114, %p115
    %s118 = sadd.s32 %s117, 1
    %p121 = scmp.eq.s32.totalorder %s15, 1
    %p122 = scmp.ne.s32.totalorder %s117, %s119
    %p123 = scmp.eq.s32.totalorder %s15, 0
    %p124 = por %p122, %p123
    %p125 = scmp.ne.s32.totalorder %s117, %s119
    %p126 = scmp.eq.s32.totalorder %s20, 1
    %p127 = por %p125, %p126
    %p128 = scmp.ne.s32.totalorder %s119, %s120
    %p129 = scmp.eq.s32.totalorder %s20, 0
    %p130 = por %p128, %p129
    %p131 = scmp.ne.s32.totalorder %s119, %s120
    %p132 = scmp.eq.s32.totalorder %s21, 1
    %p133 = por %p131, %p132
    %p135 = scmp.ne.s32.totalorder %s120, %s134
    %p136 = scmp.eq.s32.totalorder %s21, 0
    %p137 = por %p135, %p136
    %s139 = sadd.s32 %s138, 1
    %p142 = scmp.eq.s32.totalorder %s15, 1
    %p143 = scmp.ne.s32.totalorder %s138, %s140
    %p144 = scmp.eq.s32.totalorder %s15, 0
    %p145 = por %p143, %p144
    %p146 = scmp.ne.s32.totalorder %s138, %s140
    %p147 = scmp.eq.s32.totalorder %s20, 1
    %p148 = por %p146, %p147
    %p149 = scmp.ne.s32.totalorder %s140, %s141
    %p150 = scmp.eq.s32.totalorder %s20, 0
    %p151 = por %p149, %p150
    %p152 = scmp.ne.s32.totalorder %s140, %s141
    %p153 = scmp.eq.s32.totalorder %s21, 1
    %p154 = por %p152, %p153
    %p156 = scmp.ne.s32.totalorder %s141, %s155
    %p157 = scmp.eq.s32.totalorder %s21, 0
    %p158 = por %p156, %p157
    %s160 = sadd.s32 %s159, 1
    %p163 = scmp.eq.s32.totalorder %s15, 1
    %p164 = scmp.ne.s32.totalorder %s159, %s161
    %p165 = scmp.eq.s32.totalorder %s15, 0
    %p166 = por %p164, %p165
    %p167 = scmp.ne.s32.totalorder %s159, %s161
    %p168 = scmp.eq.s32.totalorder %s20, 1
    %p169 = por %p167, %p168
    %p170 = scmp.ne.s32.totalorder %s161, %s162
    %p171 = scmp.eq.s32.totalorder %s20, 0
    %p172 = por %p170, %p171
    %p173 = scmp.ne.s32.totalorder %s161, %s162
    %p174 = scmp.eq.s32.totalorder %s21, 1
    %p175 = por %p173, %p174
    %p177 = scmp.ne.s32.totalorder %s162, %s176
    %p178 = scmp.eq.s32.totalorder %s21, 0
    %p179 = por %p177, %p178
    %s181 = sadd.s32 %s180, 1
    %p184 = scmp.eq.s32.totalorder %s15, 1
    %p185 = scmp.ne.s32.totalorder %s180, %s182
    %p186 = scmp.eq.s32.totalorder %s15, 0
    %p187 = por %p185, %p186
    %p188 = scmp.ne.s32.totalorder %s180, %s182
    %p189 = scmp.eq.s32.totalorder %s20, 1
    %p190 = por %p188, %p189
    %p191 = scmp.ne.s32.totalorder %s182, %s183
    %p192 = scmp.eq.s32.totalorder %s20, 0
    %p193 = por %p191, %p192
    %p194 = scmp.ne.s32.totalorder %s182, %s183
    %p195 = scmp.eq.s32.totalorder %s21, 1
    %p196 = por %p194, %p195
    %p198 = scmp.ne.s32.totalorder %s183, %s197
    %p199 = scmp.eq.s32.totalorder %s21, 0
    %p200 = por %p198, %p199
    %s202 = sadd.s32 %s201, 1
    %p205 = scmp.eq.s32.totalorder %s15, 1
    %p206 = scmp.ne.s32.totalorder %s201, %s203
    %p207 = scmp.eq.s32.totalorder %s15, 0
    %p208 = por %p206, %p207
    %p209 = scmp.ne.s32.totalorder %s201, %s203
    %p210 = scmp.eq.s32.totalorder %s20, 1
    %p211 = por %p209, %p210
    %p212 = scmp.ne.s32.totalorder %s203, %s204
    %p213 = scmp.eq.s32.totalorder %s20, 0
    %p214 = por %p212, %p213
    %p215 = scmp.ne.s32.totalorder %s203, %s204
    %p216 = scmp.eq.s32.totalorder %s21, 1
    %p217 = por %p215, %p216
    %p219 = scmp.ne.s32.totalorder %s204, %s218
    %p220 = scmp.eq.s32.totalorder %s21, 0
    %p221 = por %p219, %p220
    %s222 = ssub.s32 %s15, %s22
    %p223 = scmp.eq.s32.totalorder %s222, 0
    %s225 = sadd.s32 %s224, 1
    %s226 = scalar_select %p223, %s224, %s225
    %p229 = pneg %p223
    %p230 = scmp.eq.s32.totalorder %s15, 1
    %p231 = por %p229, %p230
    %p232 = scmp.ne.s32.totalorder %s224, %s227
    %p233 = scmp.eq.s32.totalorder %s15, 0
    %p234 = por %p232, %p233
    %p235 = scmp.ne.s32.totalorder %s224, %s227
    %p236 = scmp.eq.s32.totalorder %s20, 1
    %p237 = por %p235, %p236
    %p238 = scmp.ne.s32.totalorder %s227, %s228
    %p239 = scmp.eq.s32.totalorder %s20, 0
    %p240 = por %p238, %p239
    %p241 = scmp.ne.s32.totalorder %s227, %s228
    %p242 = scmp.eq.s32.totalorder %s21, 1
    %p243 = por %p241, %p242
    %p245 = scmp.ne.s32.totalorder %s228, %s244
    %p246 = scmp.eq.s32.totalorder %s21, 0
    %p247 = por %p245, %p246
    %p248 = scmp.le.s32.totalorder 1, %s15
    %p249 = scmp.lt.s32.totalorder %s15, 3
    %p250 = pnand %p248, %p249
    %p251 = pneg %p250
    // Predicated region
    $region9: #{depth_corr_forward.1} parent=5 // pred_check
      _
    $region10: #{depth_corr_forward.1} parent=5 // pred_check_branch
      %253 = sbr.rel (%p250) target = $region12
    $region11: #{depth_corr_forward.1} parent=5 // pred_region
      %s254 = ssub.s32 %s15, 1
      // Predicated region
      $region13: #{depth_corr_forward.1} parent=11 // pred_check
        %p255 = pneg %p88
      $region14: #{depth_corr_forward.1} parent=11 // pred_check_branch
        %257 = sbr.rel (%p255) target = $region16
      $region15: #{depth_corr_forward.1} parent=11 // pred_region
        _
      $region16: #{depth_corr_forward.1} parent=11 // pred_fallthru
        _
      // Predicated region
      $region17: #{depth_corr_forward.1} parent=11 // pred_check
        %p258 = pneg %p109
      $region18: #{depth_corr_forward.1} parent=11 // pred_check_branch
        %260 = sbr.rel (%p258) target = $region20
      $region19: #{depth_corr_forward.1} parent=11 // pred_region
        _
      $region20: #{depth_corr_forward.1} parent=11 // pred_fallthru
        _
      // Predicated region
      $region21: #{depth_corr_forward.1} parent=11 // pred_check
        %p261 = pneg %p130
      $region22: #{depth_corr_forward.1} parent=11 // pred_check_branch
        %263 = sbr.rel (%p261) target = $region24
      $region23: #{depth_corr_forward.1} parent=11 // pred_region
        _
      $region24: #{depth_corr_forward.1} parent=11 // pred_fallthru
        _
      // Predicated region
      $region25: #{depth_corr_forward.1} parent=11 // pred_check
        %p264 = pneg %p151
      $region26: #{depth_corr_forward.1} parent=11 // pred_check_branch
        %266 = sbr.rel (%p264) target = $region28
      $region27: #{depth_corr_forward.1} parent=11 // pred_region
        _
      $region28: #{depth_corr_forward.1} parent=11 // pred_fallthru
        _
      // Predicated region
      $region29: #{depth_corr_forward.1} parent=11 // pred_check
        %p267 = pneg %p172
      $region30: #{depth_corr_forward.1} parent=11 // pred_check_branch
        %269 = sbr.rel (%p267) target = $region32
      $region31: #{depth_corr_forward.1} parent=11 // pred_region
        _
      $region32: #{depth_corr_forward.1} parent=11 // pred_fallthru
        _
      // Predicated region
      $region33: #{depth_corr_forward.1} parent=11 // pred_check
        %p270 = pneg %p193
      $region34: #{depth_corr_forward.1} parent=11 // pred_check_branch
        %272 = sbr.rel (%p270) target = $region36
      $region35: #{depth_corr_forward.1} parent=11 // pred_region
        _
      $region36: #{depth_corr_forward.1} parent=11 // pred_fallthru
        _
      // Predicated region
      $region37: #{depth_corr_forward.1} parent=11 // pred_check
        %p273 = pneg %p214
      $region38: #{depth_corr_forward.1} parent=11 // pred_check_branch
        %275 = sbr.rel (%p273) target = $region40
      $region39: #{depth_corr_forward.1} parent=11 // pred_region
        _
      $region40: #{depth_corr_forward.1} parent=11 // pred_fallthru
        _
    $region12: #{depth_corr_forward.1} parent=5 // pred_fallthru
      _
    %p276 = scmp.lt.s32.totalorder %s15, 2
    // Predicated region
    $region41: #{depth_corr_forward.1} parent=5 // pred_check
      %p277 = pneg %p276
    $region42: #{depth_corr_forward.1} parent=5 // pred_check_branch
      %279 = sbr.rel (%p277) target = $region44
    $region43: #{depth_corr_forward.1} parent=5 // pred_region
      // Predicated region
      $region45: #{depth_corr_forward.1} parent=43 // pred_check
        %p280 = pneg %p35
      $region46: #{depth_corr_forward.1} parent=43 // pred_check_branch
        %282 = sbr.rel (%p280) target = $region48
      $region47: #{depth_corr_forward.1} parent=43 // pred_region
        %p283 = scmp.lt.s32.totalorder %s15, 1
        %s284 = scalar_select %p283, %s15, 1
        %s285 = smul.addr %s284, 5
        %s286 = smul.addr %s285, 4
        %s287 = scalar_lea.vmem %s0, %s286
      $region48: #{depth_corr_forward.1} parent=43 // pred_fallthru
        _
      // Predicated region
      $region49: #{depth_corr_forward.1} parent=43 // pred_check
        %p288 = pneg %p61
      $region50: #{depth_corr_forward.1} parent=43 // pred_check_branch
        %290 = sbr.rel (%p288) target = $region52
      $region51: #{depth_corr_forward.1} parent=43 // pred_region
        %p291 = scmp.lt.s32.totalorder %s15, 1
        %s292 = scalar_select %p291, %s15, 1
        %s293 = smul.addr %s292, 25
        %s294 = smul.addr %s293, 4
        %s295 = scalar_lea.vmem %s1, %s294
      $region52: #{depth_corr_forward.1} parent=43 // pred_fallthru
        _
    $region44: #{depth_corr_forward.1} parent=5 // pred_fallthru
      _
    %p296 = scmp.le.s32.totalorder 1, %s15
    %p297 = scmp.lt.s32.totalorder %s15, 3
    %p298 = pnand %p296, %p297
    %p299 = pneg %p298
    // Predicated region
    $region53: #{depth_corr_forward.1} parent=5 // pred_check
      _
    $region54: #{depth_corr_forward.1} parent=5 // pred_check_branch
      %301 = sbr.rel (%p298) target = $region56
    $region55: #{depth_corr_forward.1} parent=5 // pred_region
      %s302 = ssub.s32 %s15, 1
      %p303 = scmp.lt.s32.totalorder %s20, 1
      %s304 = scalar_select %p303, %s20, 1
      %s305 = smul.addr %s304, 5
      %s306 = smul.addr %s305, 4
      %s307 = scalar_lea.vmem %s0, %s306
      %p308 = pneg %p41
      %p309 = pneg %p38
      %p310 = scmp.lt.s32.totalorder %s20, 1
      %s311 = scalar_select %p310, %s20, 1
      %s312 = smul.addr %s311, 25
      %s313 = smul.addr %s312, 4
      %s314 = scalar_lea.vmem %s1, %s313
      %p315 = pneg %p67
      %p316 = pneg %p64
      %p317 = pneg %p88
      %p318 = pneg %p85
      %p319 = pneg %p109
      %p320 = pneg %p106
      %p321 = pneg %p130
      %p322 = pneg %p127
      %p323 = pneg %p151
      %p324 = pneg %p148
      %p325 = pneg %p172
      %p326 = pneg %p169
      %p327 = pneg %p193
      %p328 = pneg %p190
      %p329 = pneg %p214
      %p330 = pneg %p211
      %p331 = pneg %p240
      %p332 = pneg %p237
      %p333 = scmp.lt.s32.totalorder %s20, 1
      %s334 = scalar_select %p333, %s20, 1
      %s335 = smul.addr %s334, 497
      %s336 = smul.addr %s335, 8
      %s337 = scalar_lea.vmem %s9, %s336
      %p338 = scmp.lt.s32.totalorder %s20, 1
      %s339 = scalar_select %p338, %s20, 1
      %s340 = smul.addr %s339, 5
      %s341 = smul.addr %s340, 4
      %s342 = scalar_lea.vmem %s0, %s341
      %p343 = scmp.lt.s32.totalorder %s20, 1
      %s344 = scalar_select %p343, %s20, 1
      %s345 = smul.addr %s344, 25
      %s346 = smul.addr %s345, 4
      %s347 = scalar_lea.vmem %s1, %s346
      %p348 = scmp.lt.s32.totalorder %s20, 1
      %s349 = scalar_select %p348, %s20, 1
      %s350 = smul.addr %s349, 497
      %s351 = smul.addr %s350, 8
      %s352 = scalar_lea.vmem %s9, %s351
      %v354 = vld [vmem:[%s342] sm:$0xf]
      %v355 = vld [vmem:[%s342 + $0x4] sm:$0xf]
      %v356 = vld [vmem:[%s342 + $0x8] sm:$0xf]
      %v357 = vld [vmem:[%s342 + $0xc] sm:$0xf]
      %v358 = vld [vmem:[%s342 + $0x10] sm:$0x3]
      %v359 = vld [vmem:[%s2] sm:$0xf]
      %v360 = vld [vmem:[%s2 + $0x4] sm:$0xf]
      %v361 = vld [vmem:[%s2 + $0x8] sm:$0xf]
      %v362 = vld [vmem:[%s2 + $0xc] sm:$0xf]
      %v363 = vld [vmem:[%s2 + $0x10] sm:$0x3]
      %v364 = vld [vmem:[%s3] sm:$0x1]
      %v366 = vlaneseq
      %v367 = vshrl.u32 %v366, 7
      %v368 = vsub.s32 0, %v367
      %v369 = vrot.slane %v364, %v368
      %v376 = vunpack.c.l.b16 %v354
      %v377 = vunpack.c.l.b16 %v355
      %v378 = vunpack.c.l.b16 %v356
      %v379 = vunpack.c.l.b16 %v357
      %v380 = vunpack.c.l.b16 %v358
      %v381 = vpack.c.b16 %v377, %v376
      %v382 = vpack.c.b16 %v379, %v378
      %v383 = vpack.c.b16 %v380, %v380
      %v389 = vunpack.c.l.b16 %v359
      %v390 = vunpack.c.l.b16 %v360
      %v391 = vunpack.c.l.b16 %v361
      %v392 = vunpack.c.l.b16 %v362
      %v393 = vunpack.c.l.b16 %v363
      %v394 = vpack.c.b16 %v390, %v389
      %v395 = vpack.c.b16 %v392, %v391
      %v396 = vpack.c.b16 %v393, %v393
      %vm399 = vcmask 293888
      %v401 = vsel %vm399, %v381, 0
      %v404 = vsel %vm399, %v382, 0
      %v407 = vsel %vm399, %v383, 0
      %vm409 = vcmask 1041408
      %v411 = vsel %vm409, %v396, 0
      %413 = vmatprep.subr.bf16.mxu0 0
      %414 = vmatpush1.bf16.msra.mxu0 %v394
      %415 = vmatprep.subr.bf16.mxu0 0
      %416 = vmatpush1.bf16.msra.mxu0 %v395
      %417 = vmatprep.subr.bf16.mxu0 0
      %418 = vmatpush1.bf16.msra.mxu0 %v411
      %419 = vmatprep.subr.bf16.mxu0 0
      %420 = vmatpush1.bf16.msra.mxu0 0
      %421 = vmatprep.subr.bf16.mxu0 0
      %422 = vmatpush1.bf16.msra.mxu0 0
      %423 = vmatprep.subr.bf16.mxu0 0
      %424 = vmatpush1.bf16.msra.mxu0 0
      %425 = vmatprep.subr.bf16.mxu0 0
      %426 = vmatpush1.bf16.msra.mxu0 0
      %427 = vmatprep.subr.bf16.mxu0 0
      %428 = vmatpush1.bf16.msra.mxu0 0
      %429 = vmatprep.subr.bf16.mxu0 0
      %430 = vmatpush1.bf16.msra.mxu0 0
      %431 = vmatprep.subr.bf16.mxu0 0
      %432 = vmatpush1.bf16.msra.mxu0 0
      %433 = vmatprep.subr.bf16.mxu0 0
      %434 = vmatpush1.bf16.msra.mxu0 0
      %435 = vmatprep.subr.bf16.mxu0 0
      %436 = vmatpush1.bf16.msra.mxu0 0
      %437 = vmatprep.subr.bf16.mxu0 0
      %438 = vmatpush1.bf16.msra.mxu0 0
      %439 = vmatprep.subr.bf16.mxu0 0
      %440 = vmatpush1.bf16.msra.mxu0 0
      %441 = vmatprep.subr.bf16.mxu0 0
      %442 = vmatpush1.bf16.msra.mxu0 0
      %443 = vmatprep.subr.bf16.mxu0 0
      %444 = vmatpush1.bf16.msra.mxu0 0
      %445 = vmatprep.mubr.bf16.mxu0 0
      %446 = vmatmul.mubr.bf16.gmra.mrb[0].mxu0 %v401
      %v447 = vpop.f32.mrb[0].mxu0
      %v448 = vadd.f32 %v369, %v447
      %v449 = vpop.f32.mrb[0].mxu0
      %v450 = vpop.f32.mrb[0].mxu0
      %v451 = vadd.f32 %v369, %v450
      %v452 = vpop.f32.mrb[0].mxu0
      %453 = vmatprep.mubr.bf16.mxu0 0
      %454 = vmatmul.mubr.bf16.gmra.mrb[0].mxu0 %v404
      %v455 = vpop.f32.mrb[0].mxu0
      %v456 = vadd.f32 %v369, %v455
      %v457 = vpop.f32.mrb[0].mxu0
      %v458 = vpop.f32.mrb[0].mxu0
      %v459 = vadd.f32 %v369, %v458
      %v460 = vpop.f32.mrb[0].mxu0
      %461 = vmatprep.mubr.bf16.mxu0 0
      %462 = vmatmul.mubr.bf16.gmra.mrb[0].mxu0 %v407
      %v463 = vpop.f32.mrb[0].mxu0
      %v464 = vadd.f32 %v369, %v463
      %v465 = vpop.f32.mrb[0].mxu0
      %v466 = vpop.f32.mrb[0].mxu0
      %v467 = vpop.f32.mrb[0].mxu0
      %468 = vdwg.mxu0
      %v469 = vmax.f32 %v448, 0.0
      %v470 = vmax.f32 %v451, 0.0
      %v471 = vmax.f32 %v456, 0.0
      %v472 = vmax.f32 %v459, 0.0
      %v473 = vmax.f32 %v464, 0.0
      %vm474 = vcmask 261120
      %475 = vst.msk [vmem:[#allocation2] sm:$0xff] %vm474, %v469
      %476 = vst.msk [vmem:[#allocation2 + $0x8] sm:$0xff] %vm474, %v470
      %477 = vst.msk [vmem:[#allocation2 + $0x10] sm:$0xff] %vm474, %v471
      %478 = vst.msk [vmem:[#allocation2 + $0x18] sm:$0xff] %vm474, %v472
      %vm479 = vcmask 257024
      %480 = vst.msk [vmem:[#allocation2 + $0x20] sm:$0xf] %vm479, %v473
      %v481 = vld [vmem:[%s347] sm:$0xf]
      %v482 = vld [vmem:[%s347 + $0x4] sm:$0x7]
      %v483 = vld [vmem:[%s4] sm:$0xf]
      %v484 = vld [vmem:[%s4 + $0x4] sm:$0xf]
      %v485 = vld [vmem:[%s4 + $0x8] sm:$0xf]
      %v486 = vld [vmem:[%s4 + $0xc] sm:$0xf]
      %v487 = vld [vmem:[%s4 + $0x10] sm:$0x3]
      %v488 = vld [vmem:[%s5] sm:$0x1]
      %v490 = vlaneseq
      %v491 = vshrl.u32 %v490, 7
      %v492 = vsub.s32 0, %v491
      %v493 = vrot.slane %v488, %v492
      %v497 = vunpack.c.l.b16 %v481
      %v498 = vunpack.c.l.b16 %v482
      %v499 = vpack.c.b16 %v498, %v497
      %v505 = vunpack.c.l.b16 %v483
      %v506 = vunpack.c.l.b16 %v484
      %v507 = vunpack.c.l.b16 %v485
      %v508 = vunpack.c.l.b16 %v486
      %v509 = vunpack.c.l.b16 %v487
      %v510 = vpack.c.b16 %v506, %v505
      %v511 = vpack.c.b16 %v508, %v507
      %v512 = vpack.c.b16 %v509, %v509
      %v516 = vsel %vm399, %v499, 0
      %v519 = vsel %vm409, %v512, 0
      %521 = vmatprep.subr.bf16.mxu0 0
      %522 = vmatpush1.bf16.msra.mxu0 %v510
      %523 = vmatprep.subr.bf16.mxu0 0
      %524 = vmatpush1.bf16.msra.mxu0 %v511
      %525 = vmatprep.subr.bf16.mxu0 0
      %526 = vmatpush1.bf16.msra.mxu0 %v519
      %527 = vmatprep.subr.bf16.mxu0 0
      %528 = vmatpush1.bf16.msra.mxu0 0
      %529 = vmatprep.subr.bf16.mxu0 0
      %530 = vmatpush1.bf16.msra.mxu0 0
      %531 = vmatprep.subr.bf16.mxu0 0
      %532 = vmatpush1.bf16.msra.mxu0 0
      %533 = vmatprep.subr.bf16.mxu0 0
      %534 = vmatpush1.bf16.msra.mxu0 0
      %535 = vmatprep.subr.bf16.mxu0 0
      %536 = vmatpush1.bf16.msra.mxu0 0
      %537 = vmatprep.subr.bf16.mxu0 0
      %538 = vmatpush1.bf16.msra.mxu0 0
      %539 = vmatprep.subr.bf16.mxu0 0
      %540 = vmatpush1.bf16.msra.mxu0 0
      %541 = vmatprep.subr.bf16.mxu0 0
      %542 = vmatpush1.bf16.msra.mxu0 0
      %543 = vmatprep.subr.bf16.mxu0 0
      %544 = vmatpush1.bf16.msra.mxu0 0
      %545 = vmatprep.subr.bf16.mxu0 0
      %546 = vmatpush1.bf16.msra.mxu0 0
      %547 = vmatprep.subr.bf16.mxu0 0
      %548 = vmatpush1.bf16.msra.mxu0 0
      %549 = vmatprep.subr.bf16.mxu0 0
      %550 = vmatpush1.bf16.msra.mxu0 0
      %551 = vmatprep.subr.bf16.mxu0 0
      %552 = vmatpush1.bf16.msra.mxu0 0
      %553 = vmatprep.mubr.bf16.mxu0 0
      %554 = vmatmul.mubr.bf16.gmra.mrb[0].mxu0 %v516
      %v555 = vpop.f32.mrb[0].mxu0
      %v556 = vadd.f32 %v493, %v555
      %v557 = vpop.f32.mrb[0].mxu0
      %v558 = vpop.f32.mrb[0].mxu0
      %v559 = vadd.f32 %v493, %v558
      %v560 = vpop.f32.mrb[0].mxu0
      %561 = vdwg.mxu0
      %v562 = vmax.f32 %v556, 0.0
      %v563 = vmax.f32 %v559, 0.0
      %564 = vst.msk [vmem:[#allocation3] sm:$0xff] %vm474, %v562
      %vm565 = vcmask 259072
      %566 = vst.msk [vmem:[#allocation3 + $0x8] sm:$0x3f] %vm565, %v563
      %v567 = vld [vmem:[%s347 + $0x4] sm:$0x8]
      %v568 = vld [vmem:[%s347 + $0x8] sm:$0xf]
      %v569 = vld [vmem:[%s347 + $0xc] sm:$0x3]
      %v570 = vld [vmem:[%s4] sm:$0xf]
      %v571 = vld [vmem:[%s4 + $0x4] sm:$0xf]
      %v572 = vld [vmem:[%s4 + $0x8] sm:$0xf]
      %v573 = vld [vmem:[%s4 + $0xc] sm:$0xf]
      %v574 = vld [vmem:[%s4 + $0x10] sm:$0x3]
      %v575 = vld [vmem:[%s5] sm:$0x1]
      %v577 = vlaneseq
      %v578 = vshrl.u32 %v577, 7
      %v579 = vsub.s32 0, %v578
      %v580 = vrot.slane %v575, %v579
      %v585 = vunpack.c.l.b16 %v567
      %v586 = vunpack.c.l.b16 %v568
      %v587 = vunpack.c.l.b16 %v569
      %v588 = vpack.c.b16 %v586, %v585
      %v589 = vpack.c.b16 %v587, %v587
      %vm590 = vcmask 1044480
      %v591 = vrot.slane %v588, 3
      %v592 = vrot.slane %v589, 3
      %v593 = vsel %vm590, %v591, %v592
      %v599 = vunpack.c.l.b16 %v570
      %v600 = vunpack.c.l.b16 %v571
      %v601 = vunpack.c.l.b16 %v572
      %v602 = vunpack.c.l.b16 %v573
      %v603 = vunpack.c.l.b16 %v574
      %v604 = vpack.c.b16 %v600, %v599
      %v605 = vpack.c.b16 %v602, %v601
      %v606 = vpack.c.b16 %v603, %v603
      %v610 = vsel %vm399, %v593, 0
      %v613 = vsel %vm409, %v606, 0
      %615 = vmatprep.subr.bf16.mxu0 0
      %616 = vmatpush1.bf16.msra.mxu0 %v604
      %617 = vmatprep.subr.bf16.mxu0 0
      %618 = vmatpush1.bf16.msra.mxu0 %v605
      %619 = vmatprep.subr.bf16.mxu0 0
      %620 = vmatpush1.bf16.msra.mxu0 %v613
      %621 = vmatprep.subr.bf16.mxu0 0
      %622 = vmatpush1.bf16.msra.mxu0 0
      %623 = vmatprep.subr.bf16.mxu0 0
      %624 = vmatpush1.bf16.msra.mxu0 0
      %625 = vmatprep.subr.bf16.mxu0 0
      %626 = vmatpush1.bf16.msra.mxu0 0
      %627 = vmatprep.subr.bf16.mxu0 0
      %628 = vmatpush1.bf16.msra.mxu0 0
      %629 = vmatprep.subr.bf16.mxu0 0
      %630 = vmatpush1.bf16.msra.mxu0 0
      %631 = vmatprep.subr.bf16.mxu0 0
      %632 = vmatpush1.bf16.msra.mxu0 0
      %633 = vmatprep.subr.bf16.mxu0 0
      %634 = vmatpush1.bf16.msra.mxu0 0
      %635 = vmatprep.subr.bf16.mxu0 0
      %636 = vmatpush1.bf16.msra.mxu0 0
      %637 = vmatprep.subr.bf16.mxu0 0
      %638 = vmatpush1.bf16.msra.mxu0 0
      %639 = vmatprep.subr.bf16.mxu0 0
      %640 = vmatpush1.bf16.msra.mxu0 0
      %641 = vmatprep.subr.bf16.mxu0 0
      %642 = vmatpush1.bf16.msra.mxu0 0
      %643 = vmatprep.subr.bf16.mxu0 0
      %644 = vmatpush1.bf16.msra.mxu0 0
      %645 = vmatprep.subr.bf16.mxu0 0
      %646 = vmatpush1.bf16.msra.mxu0 0
      %647 = vmatprep.mubr.bf16.mxu0 0
      %648 = vmatmul.mubr.bf16.gmra.mrb[0].mxu0 %v610
      %v649 = vpop.f32.mrb[0].mxu0
      %v650 = vadd.f32 %v580, %v649
      %v651 = vpop.f32.mrb[0].mxu0
      %v652 = vpop.f32.mrb[0].mxu0
      %v653 = vadd.f32 %v580, %v652
      %v654 = vpop.f32.mrb[0].mxu0
      %655 = vdwg.mxu0
      %v656 = vmax.f32 %v650, 0.0
      %v657 = vmax.f32 %v653, 0.0
      %s658 = scalar_lea.vmem [#allocation3], 16
      %659 = vst.msk [vmem:[%s658] sm:$0xff] %vm474, %v656
      %660 = vst.msk [vmem:[%s658 + $0x8] sm:$0x3f] %vm565, %v657
      %v661 = vld [vmem:[%s347 + $0xc] sm:$0xc]
      %v662 = vld [vmem:[%s347 + $0x10] sm:$0xf]
      %v663 = vld [vmem:[%s347 + $0x14] sm:$0x1]
      %v664 = vld [vmem:[%s4] sm:$0xf]
      %v665 = vld [vmem:[%s4 + $0x4] sm:$0xf]
      %v666 = vld [vmem:[%s4 + $0x8] sm:$0xf]
      %v667 = vld [vmem:[%s4 + $0xc] sm:$0xf]
      %v668 = vld [vmem:[%s4 + $0x10] sm:$0x3]
      %v669 = vld [vmem:[%s5] sm:$0x1]
      %v671 = vlaneseq
      %v672 = vshrl.u32 %v671, 7
      %v673 = vsub.s32 0, %v672
      %v674 = vrot.slane %v669, %v673
      %v679 = vunpack.c.l.b16 %v661
      %v680 = vunpack.c.l.b16 %v662
      %v681 = vunpack.c.l.b16 %v663
      %v682 = vpack.c.b16 %v680, %v679
      %v683 = vpack.c.b16 %v681, %v681
      %vm684 = vcmask 1045504
      %v685 = vrot.slane %v682, 2
      %v686 = vrot.slane %v683, 2
      %v687 = vsel %vm684, %v685, %v686
      %v693 = vunpack.c.l.b16 %v664
      %v694 = vunpack.c.l.b16 %v665
      %v695 = vunpack.c.l.b16 %v666
      %v696 = vunpack.c.l.b16 %v667
      %v697 = vunpack.c.l.b16 %v668
      %v698 = vpack.c.b16 %v694, %v693
      %v699 = vpack.c.b16 %v696, %v695
      %v700 = vpack.c.b16 %v697, %v697
      %v704 = vsel %vm399, %v687, 0
      %v707 = vsel %vm409, %v700, 0
      %709 = vmatprep.subr.bf16.mxu0 0
      %710 = vmatpush1.bf16.msra.mxu0 %v698
      %711 = vmatprep.subr.bf16.mxu0 0
      %712 = vmatpush1.bf16.msra.mxu0 %v699
      %713 = vmatprep.subr.bf16.mxu0 0
      %714 = vmatpush1.bf16.msra.mxu0 %v707
      %715 = vmatprep.subr.bf16.mxu0 0
      %716 = vmatpush1.bf16.msra.mxu0 0
      %717 = vmatprep.subr.bf16.mxu0 0
      %718 = vmatpush1.bf16.msra.mxu0 0
      %719 = vmatprep.subr.bf16.mxu0 0
      %720 = vmatpush1.bf16.msra.mxu0 0
      %721 = vmatprep.subr.bf16.mxu0 0
      %722 = vmatpush1.bf16.msra.mxu0 0
      %723 = vmatprep.subr.bf16.mxu0 0
      %724 = vmatpush1.bf16.msra.mxu0 0
      %725 = vmatprep.subr.bf16.mxu0 0
      %726 = vmatpush1.bf16.msra.mxu0 0
      %727 = vmatprep.subr.bf16.mxu0 0
      %728 = vmatpush1.bf16.msra.mxu0 0
      %729 = vmatprep.subr.bf16.mxu0 0
      %730 = vmatpush1.bf16.msra.mxu0 0
      %731 = vmatprep.subr.bf16.mxu0 0
      %732 = vmatpush1.bf16.msra.mxu0 0
      %733 = vmatprep.subr.bf16.mxu0 0
      %734 = vmatpush1.bf16.msra.mxu0 0
      %735 = vmatprep.subr.bf16.mxu0 0
      %736 = vmatpush1.bf16.msra.mxu0 0
      %737 = vmatprep.subr.bf16.mxu0 0
      %738 = vmatpush1.bf16.msra.mxu0 0
      %739 = vmatprep.subr.bf16.mxu0 0
      %740 = vmatpush1.bf16.msra.mxu0 0
      %741 = vmatprep.mubr.bf16.mxu0 0
      %742 = vmatmul.mubr.bf16.gmra.mrb[0].mxu0 %v704
      %v743 = vpop.f32.mrb[0].mxu0
      %v744 = vadd.f32 %v674, %v743
      %v745 = vpop.f32.mrb[0].mxu0
      %v746 = vpop.f32.mrb[0].mxu0
      %v747 = vadd.f32 %v674, %v746
      %v748 = vpop.f32.mrb[0].mxu0
      %749 = vdwg.mxu0
      %v750 = vmax.f32 %v744, 0.0
      %v751 = vmax.f32 %v747, 0.0
      %s752 = scalar_lea.vmem [#allocation3], 32
      %753 = vst.msk [vmem:[%s752] sm:$0xff] %vm474, %v750
      %754 = vst.msk [vmem:[%s752 + $0x8] sm:$0x3f] %vm565, %v751
      %v755 = vld [vmem:[%s347 + $0x14] sm:$0xe]
      %v756 = vld [vmem:[%s347 + $0x18] sm:$0xf]
      %v757 = vld [vmem:[%s4] sm:$0xf]
      %v758 = vld [vmem:[%s4 + $0x4] sm:$0xf]
      %v759 = vld [vmem:[%s4 + $0x8] sm:$0xf]
      %v760 = vld [vmem:[%s4 + $0xc] sm:$0xf]
      %v761 = vld [vmem:[%s4 + $0x10] sm:$0x3]
      %v762 = vld [vmem:[%s5] sm:$0x1]
      %v764 = vlaneseq
      %v765 = vshrl.u32 %v764, 7
      %v766 = vsub.s32 0, %v765
      %v767 = vrot.slane %v762, %v766
      %v771 = vunpack.c.l.b16 %v755
      %v772 = vunpack.c.l.b16 %v756
      %v773 = vpack.c.b16 %v772, %v771
      %v774 = vrot.slane %v773, 1
      %v780 = vunpack.c.l.b16 %v757
      %v781 = vunpack.c.l.b16 %v758
      %v782 = vunpack.c.l.b16 %v759
      %v783 = vunpack.c.l.b16 %v760
      %v784 = vunpack.c.l.b16 %v761
      %v785 = vpack.c.b16 %v781, %v780
      %v786 = vpack.c.b16 %v783, %v782
      %v787 = vpack.c.b16 %v784, %v784
      %v791 = vsel %vm399, %v774, 0
      %v794 = vsel %vm409, %v787, 0
      %796 = vmatprep.subr.bf16.mxu0 0
      %797 = vmatpush1.bf16.msra.mxu0 %v785
      %798 = vmatprep.subr.bf16.mxu0 0
      %799 = vmatpush1.bf16.msra.mxu0 %v786
      %800 = vmatprep.subr.bf16.mxu0 0
      %801 = vmatpush1.bf16.msra.mxu0 %v794
      %802 = vmatprep.subr.bf16.mxu0 0
      %803 = vmatpush1.bf16.msra.mxu0 0
      %804 = vmatprep.subr.bf16.mxu0 0
      %805 = vmatpush1.bf16.msra.mxu0 0
      %806 = vmatprep.subr.bf16.mxu0 0
      %807 = vmatpush1.bf16.msra.mxu0 0
      %808 = vmatprep.subr.bf16.mxu0 0
      %809 = vmatpush1.bf16.msra.mxu0 0
      %810 = vmatprep.subr.bf16.mxu0 0
      %811 = vmatpush1.bf16.msra.mxu0 0
      %812 = vmatprep.subr.bf16.mxu0 0
      %813 = vmatpush1.bf16.msra.mxu0 0
      %814 = vmatprep.subr.bf16.mxu0 0
      %815 = vmatpush1.bf16.msra.mxu0 0
      %816 = vmatprep.subr.bf16.mxu0 0
      %817 = vmatpush1.bf16.msra.mxu0 0
      %818 = vmatprep.subr.bf16.mxu0 0
      %819 = vmatpush1.bf16.msra.mxu0 0
      %820 = vmatprep.subr.bf16.mxu0 0
      %821 = vmatpush1.bf16.msra.mxu0 0
      %822 = vmatprep.subr.bf16.mxu0 0
      %823 = vmatpush1.bf16.msra.mxu0 0
      %824 = vmatprep.subr.bf16.mxu0 0
      %825 = vmatpush1.bf16.msra.mxu0 0
      %826 = vmatprep.subr.bf16.mxu0 0
      %827 = vmatpush1.bf16.msra.mxu0 0
      %828 = vmatprep.mubr.bf16.mxu0 0
      %829 = vmatmul.mubr.bf16.gmra.mrb[0].mxu0 %v791
      %v830 = vpop.f32.mrb[0].mxu0
      %v831 = vadd.f32 %v767, %v830
      %v832 = vpop.f32.mrb[0].mxu0
      %v833 = vpop.f32.mrb[0].mxu0
      %v834 = vadd.f32 %v767, %v833
      %v835 = vpop.f32.mrb[0].mxu0
      %836 = vdwg.mxu0
      %v837 = vmax.f32 %v831, 0.0
      %v838 = vmax.f32 %v834, 0.0
      %s839 = scalar_lea.vmem [#allocation3], 48
      %840 = vst.msk [vmem:[%s839] sm:$0xff] %vm474, %v837
      %841 = vst.msk [vmem:[%s839 + $0x8] sm:$0x3f] %vm565, %v838
      %v842 = vld [vmem:[%s347 + $0x1c] sm:$0xf]
      %v843 = vld [vmem:[%s347 + $0x20] sm:$0x7]
      %v844 = vld [vmem:[%s4] sm:$0xf]
      %v845 = vld [vmem:[%s4 + $0x4] sm:$0xf]
      %v846 = vld [vmem:[%s4 + $0x8] sm:$0xf]
      %v847 = vld [vmem:[%s4 + $0xc] sm:$0xf]
      %v848 = vld [vmem:[%s4 + $0x10] sm:$0x3]
      %v849 = vld [vmem:[%s5] sm:$0x1]
      %v851 = vlaneseq
      %v852 = vshrl.u32 %v851, 7
      %v853 = vsub.s32 0, %v852
      %v854 = vrot.slane %v849, %v853
      %v858 = vunpack.c.l.b16 %v842
      %v859 = vunpack.c.l.b16 %v843
      %v860 = vpack.c.b16 %v859, %v858
      %v866 = vunpack.c.l.b16 %v844
      %v867 = vunpack.c.l.b16 %v845
      %v868 = vunpack.c.l.b16 %v846
      %v869 = vunpack.c.l.b16 %v847
      %v870 = vunpack.c.l.b16 %v848
      %v871 = vpack.c.b16 %v867, %v866
      %v872 = vpack.c.b16 %v869, %v868
      %v873 = vpack.c.b16 %v870, %v870
      %v877 = vsel %vm399, %v860, 0
      %v880 = vsel %vm409, %v873, 0
      %882 = vmatprep.subr.bf16.mxu0 0
      %883 = vmatpush1.bf16.msra.mxu0 %v871
      %884 = vmatprep.subr.bf16.mxu0 0
      %885 = vmatpush1.bf16.msra.mxu0 %v872
      %886 = vmatprep.subr.bf16.mxu0 0
      %887 = vmatpush1.bf16.msra.mxu0 %v880
      %888 = vmatprep.subr.bf16.mxu0 0
      %889 = vmatpush1.bf16.msra.mxu0 0
      %890 = vmatprep.subr.bf16.mxu0 0
      %891 = vmatpush1.bf16.msra.mxu0 0
      %892 = vmatprep.subr.bf16.mxu0 0
      %893 = vmatpush1.bf16.msra.mxu0 0
      %894 = vmatprep.subr.bf16.mxu0 0
      %895 = vmatpush1.bf16.msra.mxu0 0
      %896 = vmatprep.subr.bf16.mxu0 0
      %897 = vmatpush1.bf16.msra.mxu0 0
      %898 = vmatprep.subr.bf16.mxu0 0
      %899 = vmatpush1.bf16.msra.mxu0 0
      %900 = vmatprep.subr.bf16.mxu0 0
      %901 = vmatpush1.bf16.msra.mxu0 0
      %902 = vmatprep.subr.bf16.mxu0 0
      %903 = vmatpush1.bf16.msra.mxu0 0
      %904 = vmatprep.subr.bf16.mxu0 0
      %905 = vmatpush1.bf16.msra.mxu0 0
      %906 = vmatprep.subr.bf16.mxu0 0
      %907 = vmatpush1.bf16.msra.mxu0 0
      %908 = vmatprep.subr.bf16.mxu0 0
      %909 = vmatpush1.bf16.msra.mxu0 0
      %910 = vmatprep.subr.bf16.mxu0 0
      %911 = vmatpush1.bf16.msra.mxu0 0
      %912 = vmatprep.subr.bf16.mxu0 0
      %913 = vmatpush1.bf16.msra.mxu0 0
      %914 = vmatprep.mubr.bf16.mxu0 0
      %915 = vmatmul.mubr.bf16.gmra.mrb[0].mxu0 %v877
      %v916 = vpop.f32.mrb[0].mxu0
      %v917 = vadd.f32 %v854, %v916
      %v918 = vpop.f32.mrb[0].mxu0
      %v919 = vpop.f32.mrb[0].mxu0
      %v920 = vadd.f32 %v854, %v919
      %v921 = vpop.f32.mrb[0].mxu0
      %922 = vdwg.mxu0
      %v923 = vmax.f32 %v917, 0.0
      %v924 = vmax.f32 %v920, 0.0
      %s925 = scalar_lea.vmem [#allocation3], 64
      %926 = vst.msk [vmem:[%s925] sm:$0xff] %vm474, %v923
      %927 = vst.msk [vmem:[%s925 + $0x8] sm:$0x3f] %vm565, %v924
      %v928 = vld [vmem:[%s347 + $0x20] sm:$0x8]
      %v929 = vld [vmem:[%s347 + $0x24] sm:$0xf]
      %v930 = vld [vmem:[%s347 + $0x28] sm:$0x3]
      %v931 = vld [vmem:[%s4] sm:$0xf]
      %v932 = vld [vmem:[%s4 + $0x4] sm:$0xf]
      %v933 = vld [vmem:[%s4 + $0x8] sm:$0xf]
      %v934 = vld [vmem:[%s4 + $0xc] sm:$0xf]
      %v935 = vld [vmem:[%s4 + $0x10] sm:$0x3]
      %v936 = vld [vmem:[%s5] sm:$0x1]
      %v938 = vlaneseq
      %v939 = vshrl.u32 %v938, 7
      %v940 = vsub.s32 0, %v939
      %v941 = vrot.slane %v936, %v940
      %v946 = vunpack.c.l.b16 %v928
      %v947 = vunpack.c.l.b16 %v929
      %v948 = vunpack.c.l.b16 %v930
      %v949 = vpack.c.b16 %v947, %v946
      %v950 = vpack.c.b16 %v948, %v948
      %v951 = vrot.slane %v949, 3
      %v952 = vrot.slane %v950, 3
      %v953 = vsel %vm590, %v951, %v952
      %v959 = vunpack.c.l.b16 %v931
      %v960 = vunpack.c.l.b16 %v932
      %v961 = vunpack.c.l.b16 %v933
      %v962 = vunpack.c.l.b16 %v934
      %v963 = vunpack.c.l.b16 %v935
      %v964 = vpack.c.b16 %v960, %v959
      %v965 = vpack.c.b16 %v962, %v961
      %v966 = vpack.c.b16 %v963, %v963
      %v970 = vsel %vm399, %v953, 0
      %v973 = vsel %vm409, %v966, 0
      %975 = vmatprep.subr.bf16.mxu0 0
      %976 = vmatpush1.bf16.msra.mxu0 %v964
      %977 = vmatprep.subr.bf16.mxu0 0
      %978 = vmatpush1.bf16.msra.mxu0 %v965
      %979 = vmatprep.subr.bf16.mxu0 0
      %980 = vmatpush1.bf16.msra.mxu0 %v973
      %981 = vmatprep.subr.bf16.mxu0 0
      %982 = vmatpush1.bf16.msra.mxu0 0
      %983 = vmatprep.subr.bf16.mxu0 0
      %984 = vmatpush1.bf16.msra.mxu0 0
      %985 = vmatprep.subr.bf16.mxu0 0
      %986 = vmatpush1.bf16.msra.mxu0 0
      %987 = vmatprep.subr.bf16.mxu0 0
      %988 = vmatpush1.bf16.msra.mxu0 0
      %989 = vmatprep.subr.bf16.mxu0 0
      %990 = vmatpush1.bf16.msra.mxu0 0
      %991 = vmatprep.subr.bf16.mxu0 0
      %992 = vmatpush1.bf16.msra.mxu0 0
      %993 = vmatprep.subr.bf16.mxu0 0
      %994 = vmatpush1.bf16.msra.mxu0 0
      %995 = vmatprep.subr.bf16.mxu0 0
      %996 = vmatpush1.bf16.msra.mxu0 0
      %997 = vmatprep.subr.bf16.mxu0 0
      %998 = vmatpush1.bf16.msra.mxu0 0
      %999 = vmatprep.subr.bf16.mxu0 0
      %1000 = vmatpush1.bf16.msra.mxu0 0
      %1001 = vmatprep.subr.bf16.mxu0 0
      %1002 = vmatpush1.bf16.msra.mxu0 0
      %1003 = vmatprep.subr.bf16.mxu0 0
      %1004 = vmatpush1.bf16.msra.mxu0 0
      %1005 = vmatprep.subr.bf16.mxu0 0
      %1006 = vmatpush1.bf16.msra.mxu0 0
      %1007 = vmatprep.mubr.bf16.mxu0 0
      %1008 = vmatmul.mubr.bf16.gmra.mrb[0].mxu0 %v970
      %v1009 = vpop.f32.mrb[0].mxu0
      %v1010 = vadd.f32 %v941, %v1009
      %v1011 = vpop.f32.mrb[0].mxu0
      %v1012 = vpop.f32.mrb[0].mxu0
      %v1013 = vadd.f32 %v941, %v1012
      %v1014 = vpop.f32.mrb[0].mxu0
      %1015 = vdwg.mxu0
      %v1016 = vmax.f32 %v1010, 0.0
      %v1017 = vmax.f32 %v1013, 0.0
      %s1018 = scalar_lea.vmem [#allocation3], 80
      %1019 = vst.msk [vmem:[%s1018] sm:$0xff] %vm474, %v1016
      %1020 = vst.msk [vmem:[%s1018 + $0x8] sm:$0x3f] %vm565, %v1017
      %v1021 = vld [vmem:[%s347 + $0x28] sm:$0xc]
      %v1022 = vld [vmem:[%s347 + $0x2c] sm:$0xf]
      %v1023 = vld [vmem:[%s347 + $0x30] sm:$0x1]
      %v1024 = vld [vmem:[%s4] sm:$0xf]
      %v1025 = vld [vmem:[%s4 + $0x4] sm:$0xf]
      %v1026 = vld [vmem:[%s4 + $0x8] sm:$0xf]
      %v1027 = vld [vmem:[%s4 + $0xc] sm:$0xf]
      %v1028 = vld [vmem:[%s4 + $0x10] sm:$0x3]
      %v1029 = vld [vmem:[%s5] sm:$0x1]
      %v1031 = vlaneseq
      %v1032 = vshrl.u32 %v1031, 7
      %v1033 = vsub.s32 0, %v1032
      %v1034 = vrot.slane %v1029, %v1033
      %v1039 = vunpack.c.l.b16 %v1021
      %v1040 = vunpack.c.l.b16 %v1022
      %v1041 = vunpack.c.l.b16 %v1023
      %v1042 = vpack.c.b16 %v1040, %v1039
      %v1043 = vpack.c.b16 %v1041, %v1041
      %v1044 = vrot.slane %v1042, 2
      %v1045 = vrot.slane %v1043, 2
      %v1046 = vsel %vm684, %v1044, %v1045
      %v1052 = vunpack.c.l.b16 %v1024
      %v1053 = vunpack.c.l.b16 %v1025
      %v1054 = vunpack.c.l.b16 %v1026
      %v1055 = vunpack.c.l.b16 %v1027
      %v1056 = vunpack.c.l.b16 %v1028
      %v1057 = vpack.c.b16 %v1053, %v1052
      %v1058 = vpack.c.b16 %v1055, %v1054
      %v1059 = vpack.c.b16 %v1056, %v1056
      %v1063 = vsel %vm399, %v1046, 0
      %v1066 = vsel %vm409, %v1059, 0
      %1068 = vmatprep.subr.bf16.mxu0 0
      %1069 = vmatpush1.bf16.msra.mxu0 %v1057
      %1070 = vmatprep.subr.bf16.mxu0 0
      %1071 = vmatpush1.bf16.msra.mxu0 %v1058
      %1072 = vmatprep.subr.bf16.mxu0 0
      %1073 = vmatpush1.bf16.msra.mxu0 %v1066
      %1074 = vmatprep.subr.bf16.mxu0 0
      %1075 = vmatpush1.bf16.msra.mxu0 0
      %1076 = vmatprep.subr.bf16.mxu0 0
      %1077 = vmatpush1.bf16.msra.mxu0 0
      %1078 = vmatprep.subr.bf16.mxu0 0
      %1079 = vmatpush1.bf16.msra.mxu0 0
      %1080 = vmatprep.subr.bf16.mxu0 0
      %1081 = vmatpush1.bf16.msra.mxu0 0
      %1082 = vmatprep.subr.bf16.mxu0 0
      %1083 = vmatpush1.bf16.msra.mxu0 0
      %1084 = vmatprep.subr.bf16.mxu0 0
      %1085 = vmatpush1.bf16.msra.mxu0 0
      %1086 = vmatprep.subr.bf16.mxu0 0
      %1087 = vmatpush1.bf16.msra.mxu0 0
      %1088 = vmatprep.subr.bf16.mxu0 0
      %1089 = vmatpush1.bf16.msra.mxu0 0
      %1090 = vmatprep.subr.bf16.mxu0 0
      %1091 = vmatpush1.bf16.msra.mxu0 0
      %1092 = vmatprep.subr.bf16.mxu0 0
      %1093 = vmatpush1.bf16.msra.mxu0 0
      %1094 = vmatprep.subr.bf16.mxu0 0
      %1095 = vmatpush1.bf16.msra.mxu0 0
      %1096 = vmatprep.subr.bf16.mxu0 0
      %1097 = vmatpush1.bf16.msra.mxu0 0
      %1098 = vmatprep.subr.bf16.mxu0 0
      %1099 = vmatpush1.bf16.msra.mxu0 0
      %1100 = vmatprep.mubr.bf16.mxu0 0
      %1101 = vmatmul.mubr.bf16.gmra.mrb[0].mxu0 %v1063
      %v1102 = vpop.f32.mrb[0].mxu0
      %v1103 = vadd.f32 %v1034, %v1102
      %v1104 = vpop.f32.mrb[0].mxu0
      %v1105 = vpop.f32.mrb[0].mxu0
      %v1106 = vadd.f32 %v1034, %v1105
      %v1107 = vpop.f32.mrb[0].mxu0
      %1108 = vdwg.mxu0
      %v1109 = vmax.f32 %v1103, 0.0
      %v1110 = vmax.f32 %v1106, 0.0
      %s1111 = scalar_lea.vmem [#allocation3], 96
      %1112 = vst.msk [vmem:[%s1111] sm:$0xff] %vm474, %v1109
      %1113 = vst.msk [vmem:[%s1111 + $0x8] sm:$0x3f] %vm565, %v1110
      %v1114 = vld [vmem:[%s347 + $0x30] sm:$0xe]
      %v1115 = vld [vmem:[%s347 + $0x34] sm:$0xf]
      %v1116 = vld [vmem:[%s4] sm:$0xf]
      %v1117 = vld [vmem:[%s4 + $0x4] sm:$0xf]
      %v1118 = vld [vmem:[%s4 + $0x8] sm:$0xf]
      %v1119 = vld [vmem:[%s4 + $0xc] sm:$0xf]
      %v1120 = vld [vmem:[%s4 + $0x10] sm:$0x3]
      %v1121 = vld [vmem:[%s5] sm:$0x1]
      %v1123 = vlaneseq
      %v1124 = vshrl.u32 %v1123, 7
      %v1125 = vsub.s32 0, %v1124
      %v1126 = vrot.slane %v1121, %v1125
      %v1130 = vunpack.c.l.b16 %v1114
      %v1131 = vunpack.c.l.b16 %v1115
      %v1132 = vpack.c.b16 %v1131, %v1130
      %v1133 = vrot.slane %v1132, 1
      %v1139 = vunpack.c.l.b16 %v1116
      %v1140 = vunpack.c.l.b16 %v1117
      %v1141 = vunpack.c.l.b16 %v1118
      %v1142 = vunpack.c.l.b16 %v1119
      %v1143 = vunpack.c.l.b16 %v1120
      %v1144 = vpack.c.b16 %v1140, %v1139
      %v1145 = vpack.c.b16 %v1142, %v1141
      %v1146 = vpack.c.b16 %v1143, %v1143
      %v1150 = vsel %vm399, %v1133, 0
      %v1153 = vsel %vm409, %v1146, 0
      %1155 = vmatprep.subr.bf16.mxu0 0
      %1156 = vmatpush1.bf16.msra.mxu0 %v1144
      %1157 = vmatprep.subr.bf16.mxu0 0
      %1158 = vmatpush1.bf16.msra.mxu0 %v1145
      %1159 = vmatprep.subr.bf16.mxu0 0
      %1160 = vmatpush1.bf16.msra.mxu0 %v1153
      %1161 = vmatprep.subr.bf16.mxu0 0
      %1162 = vmatpush1.bf16.msra.mxu0 0
      %1163 = vmatprep.subr.bf16.mxu0 0
      %1164 = vmatpush1.bf16.msra.mxu0 0
      %1165 = vmatprep.subr.bf16.mxu0 0
      %1166 = vmatpush1.bf16.msra.mxu0 0
      %1167 = vmatprep.subr.bf16.mxu0 0
      %1168 = vmatpush1.bf16.msra.mxu0 0
      %1169 = vmatprep.subr.bf16.mxu0 0
      %1170 = vmatpush1.bf16.msra.mxu0 0
      %1171 = vmatprep.subr.bf16.mxu0 0
      %1172 = vmatpush1.bf16.msra.mxu0 0
      %1173 = vmatprep.subr.bf16.mxu0 0
      %1174 = vmatpush1.bf16.msra.mxu0 0
      %1175 = vmatprep.subr.bf16.mxu0 0
      %1176 = vmatpush1.bf16.msra.mxu0 0
      %1177 = vmatprep.subr.bf16.mxu0 0
      %1178 = vmatpush1.bf16.msra.mxu0 0
      %1179 = vmatprep.subr.bf16.mxu0 0
      %1180 = vmatpush1.bf16.msra.mxu0 0
      %1181 = vmatprep.subr.bf16.mxu0 0
      %1182 = vmatpush1.bf16.msra.mxu0 0
      %1183 = vmatprep.subr.bf16.mxu0 0
      %1184 = vmatpush1.bf16.msra.mxu0 0
      %1185 = vmatprep.subr.bf16.mxu0 0
      %1186 = vmatpush1.bf16.msra.mxu0 0
      %1187 = vmatprep.mubr.bf16.mxu0 0
      %1188 = vmatmul.mubr.bf16.gmra.mrb[0].mxu0 %v1150
      %v1189 = vpop.f32.mrb[0].mxu0
      %v1190 = vadd.f32 %v1126, %v1189
      %v1191 = vpop.f32.mrb[0].mxu0
      %v1192 = vpop.f32.mrb[0].mxu0
      %v1193 = vadd.f32 %v1126, %v1192
      %v1194 = vpop.f32.mrb[0].mxu0
      %1195 = vdwg.mxu0
      %v1196 = vmax.f32 %v1190, 0.0
      %v1197 = vmax.f32 %v1193, 0.0
      %s1198 = scalar_lea.vmem [#allocation3], 112
      %1199 = vst.msk [vmem:[%s1198] sm:$0xff] %vm474, %v1196
      %1200 = vst.msk [vmem:[%s1198 + $0x8] sm:$0x3f] %vm565, %v1197
      %v1201 = vld [vmem:[%s347 + $0x38] sm:$0xf]
      %v1202 = vld [vmem:[%s347 + $0x3c] sm:$0x7]
      %v1203 = vld [vmem:[%s4] sm:$0xf]
      %v1204 = vld [vmem:[%s4 + $0x4] sm:$0xf]
      %v1205 = vld [vmem:[%s4 + $0x8] sm:$0xf]
      %v1206 = vld [vmem:[%s4 + $0xc] sm:$0xf]
      %v1207 = vld [vmem:[%s4 + $0x10] sm:$0x3]
      %v1208 = vld [vmem:[%s5] sm:$0x1]
      %v1210 = vlaneseq
      %v1211 = vshrl.u32 %v1210, 7
      %v1212 = vsub.s32 0, %v1211
      %v1213 = vrot.slane %v1208, %v1212
      %v1217 = vunpack.c.l.b16 %v1201
      %v1218 = vunpack.c.l.b16 %v1202
      %v1219 = vpack.c.b16 %v1218, %v1217
      %v1225 = vunpack.c.l.b16 %v1203
      %v1226 = vunpack.c.l.b16 %v1204
      %v1227 = vunpack.c.l.b16 %v1205
      %v1228 = vunpack.c.l.b16 %v1206
      %v1229 = vunpack.c.l.b16 %v1207
      %v1230 = vpack.c.b16 %v1226, %v1225
      %v1231 = vpack.c.b16 %v1228, %v1227
      %v1232 = vpack.c.b16 %v1229, %v1229
      %v1236 = vsel %vm399, %v1219, 0
      %v1239 = vsel %vm409, %v1232, 0
      %1241 = vmatprep.subr.bf16.mxu0 0
      %1242 = vmatpush1.bf16.msra.mxu0 %v1230
      %1243 = vmatprep.subr.bf16.mxu0 0
      %1244 = vmatpush1.bf16.msra.mxu0 %v1231
      %1245 = vmatprep.subr.bf16.mxu0 0
      %1246 = vmatpush1.bf16.msra.mxu0 %v1239
      %1247 = vmatprep.subr.bf16.mxu0 0
      %1248 = vmatpush1.bf16.msra.mxu0 0
      %1249 = vmatprep.subr.bf16.mxu0 0
      %1250 = vmatpush1.bf16.msra.mxu0 0
      %1251 = vmatprep.subr.bf16.mxu0 0
      %1252 = vmatpush1.bf16.msra.mxu0 0
      %1253 = vmatprep.subr.bf16.mxu0 0
      %1254 = vmatpush1.bf16.msra.mxu0 0
      %1255 = vmatprep.subr.bf16.mxu0 0
      %1256 = vmatpush1.bf16.msra.mxu0 0
      %1257 = vmatprep.subr.bf16.mxu0 0
      %1258 = vmatpush1.bf16.msra.mxu0 0
      %1259 = vmatprep.subr.bf16.mxu0 0
      %1260 = vmatpush1.bf16.msra.mxu0 0
      %1261 = vmatprep.subr.bf16.mxu0 0
      %1262 = vmatpush1.bf16.msra.mxu0 0
      %1263 = vmatprep.subr.bf16.mxu0 0
      %1264 = vmatpush1.bf16.msra.mxu0 0
      %1265 = vmatprep.subr.bf16.mxu0 0
      %1266 = vmatpush1.bf16.msra.mxu0 0
      %1267 = vmatprep.subr.bf16.mxu0 0
      %1268 = vmatpush1.bf16.msra.mxu0 0
      %1269 = vmatprep.subr.bf16.mxu0 0
      %1270 = vmatpush1.bf16.msra.mxu0 0
      %1271 = vmatprep.subr.bf16.mxu0 0
      %1272 = vmatpush1.bf16.msra.mxu0 0
      %1273 = vmatprep.mubr.bf16.mxu0 0
      %1274 = vmatmul.mubr.bf16.gmra.mrb[0].mxu0 %v1236
      %v1275 = vpop.f32.mrb[0].mxu0
      %v1276 = vadd.f32 %v1213, %v1275
      %v1277 = vpop.f32.mrb[0].mxu0
      %v1278 = vpop.f32.mrb[0].mxu0
      %v1279 = vadd.f32 %v1213, %v1278
      %v1280 = vpop.f32.mrb[0].mxu0
      %1281 = vdwg.mxu0
      %v1282 = vmax.f32 %v1276, 0.0
      %v1283 = vmax.f32 %v1279, 0.0
      %s1284 = scalar_lea.vmem [#allocation3], 128
      %1285 = vst.msk [vmem:[%s1284] sm:$0xff] %vm474, %v1282
      %1286 = vst.msk [vmem:[%s1284 + $0x8] sm:$0x3f] %vm565, %v1283
      %v1287 = vld [vmem:[%s347 + $0x3c] sm:$0x8]
      %v1288 = vld [vmem:[%s347 + $0x40] sm:$0xf]
      %v1289 = vld [vmem:[%s347 + $0x44] sm:$0x3]
      %v1290 = vld [vmem:[%s4] sm:$0xf]
      %v1291 = vld [vmem:[%s4 + $0x4] sm:$0xf]
      %v1292 = vld [vmem:[%s4 + $0x8] sm:$0xf]
      %v1293 = vld [vmem:[%s4 + $0xc] sm:$0xf]
      %v1294 = vld [vmem:[%s4 + $0x10] sm:$0x3]
      %v1295 = vld [vmem:[%s5] sm:$0x1]
      %v1297 = vlaneseq
      %v1298 = vshrl.u32 %v1297, 7
      %v1299 = vsub.s32 0, %v1298
      %v1300 = vrot.slane %v1295, %v1299
      %v1305 = vunpack.c.l.b16 %v1287
      %v1306 = vunpack.c.l.b16 %v1288
      %v1307 = vunpack.c.l.b16 %v1289
      %v1308 = vpack.c.b16 %v1306, %v1305
      %v1309 = vpack.c.b16 %v1307, %v1307
      %v1310 = vrot.slane %v1308, 3
      %v1311 = vrot.slane %v1309, 3
      %v1312 = vsel %vm590, %v1310, %v1311
      %v1318 = vunpack.c.l.b16 %v1290
      %v1319 = vunpack.c.l.b16 %v1291
      %v1320 = vunpack.c.l.b16 %v1292
      %v1321 = vunpack.c.l.b16 %v1293
      %v1322 = vunpack.c.l.b16 %v1294
      %v1323 = vpack.c.b16 %v1319, %v1318
      %v1324 = vpack.c.b16 %v1321, %v1320
      %v1325 = vpack.c.b16 %v1322, %v1322
      %v1329 = vsel %vm399, %v1312, 0
      %v1332 = vsel %vm409, %v1325, 0
      %1334 = vmatprep.subr.bf16.mxu0 0
      %1335 = vmatpush1.bf16.msra.mxu0 %v1323
      %1336 = vmatprep.subr.bf16.mxu0 0
      %1337 = vmatpush1.bf16.msra.mxu0 %v1324
      %1338 = vmatprep.subr.bf16.mxu0 0
      %1339 = vmatpush1.bf16.msra.mxu0 %v1332
      %1340 = vmatprep.subr.bf16.mxu0 0
      %1341 = vmatpush1.bf16.msra.mxu0 0
      %1342 = vmatprep.subr.bf16.mxu0 0
      %1343 = vmatpush1.bf16.msra.mxu0 0
      %1344 = vmatprep.subr.bf16.mxu0 0
      %1345 = vmatpush1.bf16.msra.mxu0 0
      %1346 = vmatprep.subr.bf16.mxu0 0
      %1347 = vmatpush1.bf16.msra.mxu0 0
      %1348 = vmatprep.subr.bf16.mxu0 0
      %1349 = vmatpush1.bf16.msra.mxu0 0
      %1350 = vmatprep.subr.bf16.mxu0 0
      %1351 = vmatpush1.bf16.msra.mxu0 0
      %1352 = vmatprep.subr.bf16.mxu0 0
      %1353 = vmatpush1.bf16.msra.mxu0 0
      %1354 = vmatprep.subr.bf16.mxu0 0
      %1355 = vmatpush1.bf16.msra.mxu0 0
      %1356 = vmatprep.subr.bf16.mxu0 0
      %1357 = vmatpush1.bf16.msra.mxu0 0
      %1358 = vmatprep.subr.bf16.mxu0 0
      %1359 = vmatpush1.bf16.msra.mxu0 0
      %1360 = vmatprep.subr.bf16.mxu0 0
      %1361 = vmatpush1.bf16.msra.mxu0 0
      %1362 = vmatprep.subr.bf16.mxu0 0
      %1363 = vmatpush1.bf16.msra.mxu0 0
      %1364 = vmatprep.subr.bf16.mxu0 0
      %1365 = vmatpush1.bf16.msra.mxu0 0
      %1366 = vmatprep.mubr.bf16.mxu0 0
      %1367 = vmatmul.mubr.bf16.gmra.mrb[0].mxu0 %v1329
      %v1368 = vpop.f32.mrb[0].mxu0
      %v1369 = vadd.f32 %v1300, %v1368
      %v1370 = vpop.f32.mrb[0].mxu0
      %v1371 = vpop.f32.mrb[0].mxu0
      %v1372 = vadd.f32 %v1300, %v1371
      %v1373 = vpop.f32.mrb[0].mxu0
      %1374 = vdwg.mxu0
      %v1375 = vmax.f32 %v1369, 0.0
      %v1376 = vmax.f32 %v1372, 0.0
      %s1377 = scalar_lea.vmem [#allocation3], 144
      %1378 = vst.msk [vmem:[%s1377] sm:$0xff] %vm474, %v1375
      %1379 = vst.msk [vmem:[%s1377 + $0x8] sm:$0x3f] %vm565, %v1376
      %v1380 = vld [vmem:[%s347 + $0x44] sm:$0xc]
      %v1381 = vld [vmem:[%s347 + $0x48] sm:$0xf]
      %v1382 = vld [vmem:[%s347 + $0x4c] sm:$0x1]
      %v1383 = vld [vmem:[%s4] sm:$0xf]
      %v1384 = vld [vmem:[%s4 + $0x4] sm:$0xf]
      %v1385 = vld [vmem:[%s4 + $0x8] sm:$0xf]
      %v1386 = vld [vmem:[%s4 + $0xc] sm:$0xf]
      %v1387 = vld [vmem:[%s4 + $0x10] sm:$0x3]
      %v1388 = vld [vmem:[%s5] sm:$0x1]
      %v1390 = vlaneseq
      %v1391 = vshrl.u32 %v1390, 7
      %v1392 = vsub.s32 0, %v1391
      %v1393 = vrot.slane %v1388, %v1392
      %v1398 = vunpack.c.l.b16 %v1380
      %v1399 = vunpack.c.l.b16 %v1381
      %v1400 = vunpack.c.l.b16 %v1382
      %v1401 = vpack.c.b16 %v1399, %v1398
      %v1402 = vpack.c.b16 %v1400, %v1400
      %v1403 = vrot.slane %v1401, 2
      %v1404 = vrot.slane %v1402, 2
      %v1405 = vsel %vm684, %v1403, %v1404
      %v1411 = vunpack.c.l.b16 %v1383
      %v1412 = vunpack.c.l.b16 %v1384
      %v1413 = vunpack.c.l.b16 %v1385
      %v1414 = vunpack.c.l.b16 %v1386
      %v1415 = vunpack.c.l.b16 %v1387
      %v1416 = vpack.c.b16 %v1412, %v1411
      %v1417 = vpack.c.b16 %v1414, %v1413
      %v1418 = vpack.c.b16 %v1415, %v1415
      %v1422 = vsel %vm399, %v1405, 0
      %v1425 = vsel %vm409, %v1418, 0
      %1427 = vmatprep.subr.bf16.mxu0 0
      %1428 = vmatpush1.bf16.msra.mxu0 %v1416
      %1429 = vmatprep.subr.bf16.mxu0 0
      %1430 = vmatpush1.bf16.msra.mxu0 %v1417
      %1431 = vmatprep.subr.bf16.mxu0 0
      %1432 = vmatpush1.bf16.msra.mxu0 %v1425
      %1433 = vmatprep.subr.bf16.mxu0 0
      %1434 = vmatpush1.bf16.msra.mxu0 0
      %1435 = vmatprep.subr.bf16.mxu0 0
      %1436 = vmatpush1.bf16.msra.mxu0 0
      %1437 = vmatprep.subr.bf16.mxu0 0
      %1438 = vmatpush1.bf16.msra.mxu0 0
      %1439 = vmatprep.subr.bf16.mxu0 0
      %1440 = vmatpush1.bf16.msra.mxu0 0
      %1441 = vmatprep.subr.bf16.mxu0 0
      %1442 = vmatpush1.bf16.msra.mxu0 0
      %1443 = vmatprep.subr.bf16.mxu0 0
      %1444 = vmatpush1.bf16.msra.mxu0 0
      %1445 = vmatprep.subr.bf16.mxu0 0
      %1446 = vmatpush1.bf16.msra.mxu0 0
      %1447 = vmatprep.subr.bf16.mxu0 0
      %1448 = vmatpush1.bf16.msra.mxu0 0
      %1449 = vmatprep.subr.bf16.mxu0 0
      %1450 = vmatpush1.bf16.msra.mxu0 0
      %1451 = vmatprep.subr.bf16.mxu0 0
      %1452 = vmatpush1.bf16.msra.mxu0 0
      %1453 = vmatprep.subr.bf16.mxu0 0
      %1454 = vmatpush1.bf16.msra.mxu0 0
      %1455 = vmatprep.subr.bf16.mxu0 0
      %1456 = vmatpush1.bf16.msra.mxu0 0
      %1457 = vmatprep.subr.bf16.mxu0 0
      %1458 = vmatpush1.bf16.msra.mxu0 0
      %1459 = vmatprep.mubr.bf16.mxu0 0
      %1460 = vmatmul.mubr.bf16.gmra.mrb[0].mxu0 %v1422
      %v1461 = vpop.f32.mrb[0].mxu0
      %v1462 = vadd.f32 %v1393, %v1461
      %v1463 = vpop.f32.mrb[0].mxu0
      %v1464 = vpop.f32.mrb[0].mxu0
      %v1465 = vadd.f32 %v1393, %v1464
      %v1466 = vpop.f32.mrb[0].mxu0
      %1467 = vdwg.mxu0
      %v1468 = vmax.f32 %v1462, 0.0
      %v1469 = vmax.f32 %v1465, 0.0
      %s1470 = scalar_lea.vmem [#allocation3], 160
      %1471 = vst.msk [vmem:[%s1470] sm:$0xff] %vm474, %v1468
      %1472 = vst.msk [vmem:[%s1470 + $0x8] sm:$0x3f] %vm565, %v1469
      %v1473 = vld [vmem:[%s347 + $0x4c] sm:$0xe]
      %v1474 = vld [vmem:[%s347 + $0x50] sm:$0xf]
      %v1475 = vld [vmem:[%s4] sm:$0xf]
      %v1476 = vld [vmem:[%s4 + $0x4] sm:$0xf]
      %v1477 = vld [vmem:[%s4 + $0x8] sm:$0xf]
      %v1478 = vld [vmem:[%s4 + $0xc] sm:$0xf]
      %v1479 = vld [vmem:[%s4 + $0x10] sm:$0x3]
      %v1480 = vld [vmem:[%s5] sm:$0x1]
      %v1482 = vlaneseq
      %v1483 = vshrl.u32 %v1482, 7
      %v1484 = vsub.s32 0, %v1483
      %v1485 = vrot.slane %v1480, %v1484
      %v1489 = vunpack.c.l.b16 %v1473
      %v1490 = vunpack.c.l.b16 %v1474
      %v1491 = vpack.c.b16 %v1490, %v1489
      %v1492 = vrot.slane %v1491, 1
      %v1498 = vunpack.c.l.b16 %v1475
      %v1499 = vunpack.c.l.b16 %v1476
      %v1500 = vunpack.c.l.b16 %v1477
      %v1501 = vunpack.c.l.b16 %v1478
      %v1502 = vunpack.c.l.b16 %v1479
      %v1503 = vpack.c.b16 %v1499, %v1498
      %v1504 = vpack.c.b16 %v1501, %v1500
      %v1505 = vpack.c.b16 %v1502, %v1502
      %v1509 = vsel %vm399, %v1492, 0
      %v1512 = vsel %vm409, %v1505, 0
      %1514 = vmatprep.subr.bf16.mxu0 0
      %1515 = vmatpush1.bf16.msra.mxu0 %v1503
      %1516 = vmatprep.subr.bf16.mxu0 0
      %1517 = vmatpush1.bf16.msra.mxu0 %v1504
      %1518 = vmatprep.subr.bf16.mxu0 0
      %1519 = vmatpush1.bf16.msra.mxu0 %v1512
      %1520 = vmatprep.subr.bf16.mxu0 0
      %1521 = vmatpush1.bf16.msra.mxu0 0
      %1522 = vmatprep.subr.bf16.mxu0 0
      %1523 = vmatpush1.bf16.msra.mxu0 0
      %1524 = vmatprep.subr.bf16.mxu0 0
      %1525 = vmatpush1.bf16.msra.mxu0 0
      %1526 = vmatprep.subr.bf16.mxu0 0
      %1527 = vmatpush1.bf16.msra.mxu0 0
      %1528 = vmatprep.subr.bf16.mxu0 0
      %1529 = vmatpush1.bf16.msra.mxu0 0
      %1530 = vmatprep.subr.bf16.mxu0 0
      %1531 = vmatpush1.bf16.msra.mxu0 0
      %1532 = vmatprep.subr.bf16.mxu0 0
      %1533 = vmatpush1.bf16.msra.mxu0 0
      %1534 = vmatprep.subr.bf16.mxu0 0
      %1535 = vmatpush1.bf16.msra.mxu0 0
      %1536 = vmatprep.subr.bf16.mxu0 0
      %1537 = vmatpush1.bf16.msra.mxu0 0
      %1538 = vmatprep.subr.bf16.mxu0 0
      %1539 = vmatpush1.bf16.msra.mxu0 0
      %1540 = vmatprep.subr.bf16.mxu0 0
      %1541 = vmatpush1.bf16.msra.mxu0 0
      %1542 = vmatprep.subr.bf16.mxu0 0
      %1543 = vmatpush1.bf16.msra.mxu0 0
      %1544 = vmatprep.subr.bf16.mxu0 0
      %1545 = vmatpush1.bf16.msra.mxu0 0
      %1546 = vmatprep.mubr.bf16.mxu0 0
      %1547 = vmatmul.mubr.bf16.gmra.mrb[0].mxu0 %v1509
      %v1548 = vpop.f32.mrb[0].mxu0
      %v1549 = vadd.f32 %v1485, %v1548
      %v1550 = vpop.f32.mrb[0].mxu0
      %v1551 = vpop.f32.mrb[0].mxu0
      %v1552 = vadd.f32 %v1485, %v1551
      %v1553 = vpop.f32.mrb[0].mxu0
      %1554 = vdwg.mxu0
      %v1555 = vmax.f32 %v1549, 0.0
      %v1556 = vmax.f32 %v1552, 0.0
      %s1557 = scalar_lea.vmem [#allocation3], 176
      %1558 = vst.msk [vmem:[%s1557] sm:$0xff] %vm474, %v1555
      %1559 = vst.msk [vmem:[%s1557 + $0x8] sm:$0x3f] %vm565, %v1556
      %v1560 = vld [vmem:[%s347 + $0x54] sm:$0xf]
      %v1561 = vld [vmem:[%s347 + $0x58] sm:$0x7]
      %v1562 = vld [vmem:[%s4] sm:$0xf]
      %v1563 = vld [vmem:[%s4 + $0x4] sm:$0xf]
      %v1564 = vld [vmem:[%s4 + $0x8] sm:$0xf]
      %v1565 = vld [vmem:[%s4 + $0xc] sm:$0xf]
      %v1566 = vld [vmem:[%s4 + $0x10] sm:$0x3]
      %v1567 = vld [vmem:[%s5] sm:$0x1]
      %v1569 = vlaneseq
      %v1570 = vshrl.u32 %v1569, 7
      %v1571 = vsub.s32 0, %v1570
      %v1572 = vrot.slane %v1567, %v1571
      %v1576 = vunpack.c.l.b16 %v1560
      %v1577 = vunpack.c.l.b16 %v1561
      %v1578 = vpack.c.b16 %v1577, %v1576
      %v1584 = vunpack.c.l.b16 %v1562
      %v1585 = vunpack.c.l.b16 %v1563
      %v1586 = vunpack.c.l.b16 %v1564
      %v1587 = vunpack.c.l.b16 %v1565
      %v1588 = vunpack.c.l.b16 %v1566
      %v1589 = vpack.c.b16 %v1585, %v1584
      %v1590 = vpack.c.b16 %v1587, %v1586
      %v1591 = vpack.c.b16 %v1588, %v1588
      %v1595 = vsel %vm399, %v1578, 0
      %v1598 = vsel %vm409, %v1591, 0
      %1600 = vmatprep.subr.bf16.mxu0 0
      %1601 = vmatpush1.bf16.msra.mxu0 %v1589
      %1602 = vmatprep.subr.bf16.mxu0 0
      %1603 = vmatpush1.bf16.msra.mxu0 %v1590
      %1604 = vmatprep.subr.bf16.mxu0 0
      %1605 = vmatpush1.bf16.msra.mxu0 %v1598
      %1606 = vmatprep.subr.bf16.mxu0 0
      %1607 = vmatpush1.bf16.msra.mxu0 0
      %1608 = vmatprep.subr.bf16.mxu0 0
      %1609 = vmatpush1.bf16.msra.mxu0 0
      %1610 = vmatprep.subr.bf16.mxu0 0
      %1611 = vmatpush1.bf16.msra.mxu0 0
      %1612 = vmatprep.subr.bf16.mxu0 0
      %1613 = vmatpush1.bf16.msra.mxu0 0
      %1614 = vmatprep.subr.bf16.mxu0 0
      %1615 = vmatpush1.bf16.msra.mxu0 0
      %1616 = vmatprep.subr.bf16.mxu0 0
      %1617 = vmatpush1.bf16.msra.mxu0 0
      %1618 = vmatprep.subr.bf16.mxu0 0
      %1619 = vmatpush1.bf16.msra.mxu0 0
      %1620 = vmatprep.subr.bf16.mxu0 0
      %1621 = vmatpush1.bf16.msra.mxu0 0
      %1622 = vmatprep.subr.bf16.mxu0 0
      %1623 = vmatpush1.bf16.msra.mxu0 0
      %1624 = vmatprep.subr.bf16.mxu0 0
      %1625 = vmatpush1.bf16.msra.mxu0 0
      %1626 = vmatprep.subr.bf16.mxu0 0
      %1627 = vmatpush1.bf16.msra.mxu0 0
      %1628 = vmatprep.subr.bf16.mxu0 0
      %1629 = vmatpush1.bf16.msra.mxu0 0
      %1630 = vmatprep.subr.bf16.mxu0 0
      %1631 = vmatpush1.bf16.msra.mxu0 0
      %1632 = vmatprep.mubr.bf16.mxu0 0
      %1633 = vmatmul.mubr.bf16.gmra.mrb[0].mxu0 %v1595
      %v1634 = vpop.f32.mrb[0].mxu0
      %v1635 = vadd.f32 %v1572, %v1634
      %v1636 = vpop.f32.mrb[0].mxu0
      %v1637 = vpop.f32.mrb[0].mxu0
      %v1638 = vadd.f32 %v1572, %v1637
      %v1639 = vpop.f32.mrb[0].mxu0
      %1640 = vdwg.mxu0
      %v1641 = vmax.f32 %v1635, 0.0
      %v1642 = vmax.f32 %v1638, 0.0
      %s1643 = scalar_lea.vmem [#allocation3], 192
      %1644 = vst.msk [vmem:[%s1643] sm:$0xff] %vm474, %v1641
      %1645 = vst.msk [vmem:[%s1643 + $0x8] sm:$0x3f] %vm565, %v1642
      %v1646 = vld [vmem:[%s347 + $0x58] sm:$0x8]
      %v1647 = vld [vmem:[%s347 + $0x5c] sm:$0xf]
      %v1648 = vld [vmem:[%s347 + $0x60] sm:$0x3]
      %v1649 = vld [vmem:[%s4] sm:$0xf]
      %v1650 = vld [vmem:[%s4 + $0x4] sm:$0xf]
      %v1651 = vld [vmem:[%s4 + $0x8] sm:$0xf]
      %v1652 = vld [vmem:[%s4 + $0xc] sm:$0xf]
      %v1653 = vld [vmem:[%s4 + $0x10] sm:$0x3]
      %v1654 = vld [vmem:[%s5] sm:$0x1]
      %v1656 = vlaneseq
      %v1657 = vshrl.u32 %v1656, 7
      %v1658 = vsub.s32 0, %v1657
      %v1659 = vrot.slane %v1654, %v1658
      %v1664 = vunpack.c.l.b16 %v1646
      %v1665 = vunpack.c.l.b16 %v1647
      %v1666 = vunpack.c.l.b16 %v1648
      %v1667 = vpack.c.b16 %v1665, %v1664
      %v1668 = vpack.c.b16 %v1666, %v1666
      %v1669 = vrot.slane %v1667, 3
      %v1670 = vrot.slane %v1668, 3
      %v1671 = vsel %vm590, %v1669, %v1670
      %v1677 = vunpack.c.l.b16 %v1649
      %v1678 = vunpack.c.l.b16 %v1650
      %v1679 = vunpack.c.l.b16 %v1651
      %v1680 = vunpack.c.l.b16 %v1652
      %v1681 = vunpack.c.l.b16 %v1653
      %v1682 = vpack.c.b16 %v1678, %v1677
      %v1683 = vpack.c.b16 %v1680, %v1679
      %v1684 = vpack.c.b16 %v1681, %v1681
      %v1688 = vsel %vm399, %v1671, 0
      %v1691 = vsel %vm409, %v1684, 0
      %1693 = vmatprep.subr.bf16.mxu0 0
      %1694 = vmatpush1.bf16.msra.mxu0 %v1682
      %1695 = vmatprep.subr.bf16.mxu0 0
      %1696 = vmatpush1.bf16.msra.mxu0 %v1683
      %1697 = vmatprep.subr.bf16.mxu0 0
      %1698 = vmatpush1.bf16.msra.mxu0 %v1691
      %1699 = vmatprep.subr.bf16.mxu0 0
      %1700 = vmatpush1.bf16.msra.mxu0 0
      %1701 = vmatprep.subr.bf16.mxu0 0
      %1702 = vmatpush1.bf16.msra.mxu0 0
      %1703 = vmatprep.subr.bf16.mxu0 0
      %1704 = vmatpush1.bf16.msra.mxu0 0
      %1705 = vmatprep.subr.bf16.mxu0 0
      %1706 = vmatpush1.bf16.msra.mxu0 0
      %1707 = vmatprep.subr.bf16.mxu0 0
      %1708 = vmatpush1.bf16.msra.mxu0 0
      %1709 = vmatprep.subr.bf16.mxu0 0
      %1710 = vmatpush1.bf16.msra.mxu0 0
      %1711 = vmatprep.subr.bf16.mxu0 0
      %1712 = vmatpush1.bf16.msra.mxu0 0
      %1713 = vmatprep.subr.bf16.mxu0 0
      %1714 = vmatpush1.bf16.msra.mxu0 0
      %1715 = vmatprep.subr.bf16.mxu0 0
      %1716 = vmatpush1.bf16.msra.mxu0 0
      %1717 = vmatprep.subr.bf16.mxu0 0
      %1718 = vmatpush1.bf16.msra.mxu0 0
      %1719 = vmatprep.subr.bf16.mxu0 0
      %1720 = vmatpush1.bf16.msra.mxu0 0
      %1721 = vmatprep.subr.bf16.mxu0 0
      %1722 = vmatpush1.bf16.msra.mxu0 0
      %1723 = vmatprep.subr.bf16.mxu0 0
      %1724 = vmatpush1.bf16.msra.mxu0 0
      %1725 = vmatprep.mubr.bf16.mxu0 0
      %1726 = vmatmul.mubr.bf16.gmra.mrb[0].mxu0 %v1688
      %v1727 = vpop.f32.mrb[0].mxu0
      %v1728 = vadd.f32 %v1659, %v1727
      %v1729 = vpop.f32.mrb[0].mxu0
      %v1730 = vpop.f32.mrb[0].mxu0
      %v1731 = vadd.f32 %v1659, %v1730
      %v1732 = vpop.f32.mrb[0].mxu0
      %1733 = vdwg.mxu0
      %v1734 = vmax.f32 %v1728, 0.0
      %v1735 = vmax.f32 %v1731, 0.0
      %s1736 = scalar_lea.vmem [#allocation3], 208
      %1737 = vst.msk [vmem:[%s1736] sm:$0xff] %vm474, %v1734
      %1738 = vst.msk [vmem:[%s1736 + $0x8] sm:$0x3f] %vm565, %v1735
      %v1739 = vld [vmem:[#allocation3] sm:$0xff]
      %v1740 = vld [vmem:[#allocation3 + $0x8] sm:$0x1]
      %v1741 = vld [vmem:[#allocation3 + $0x10] sm:$0xff]
      %v1742 = vld [vmem:[#allocation3 + $0x18] sm:$0x1]
      %v1743 = vld [vmem:[#allocation3 + $0x20] sm:$0xff]
      %v1744 = vld [vmem:[#allocation3 + $0x28] sm:$0x1]
      %v1745 = vld [vmem:[#allocation3 + $0x30] sm:$0xff]
      %v1746 = vld [vmem:[#allocation3 + $0x38] sm:$0x1]
      %v1747 = vld [vmem:[#allocation3 + $0x40] sm:$0xff]
      %v1748 = vld [vmem:[#allocation3 + $0x48] sm:$0x1]
      %v1749 = vld [vmem:[#allocation3 + $0x50] sm:$0xff]
      %v1750 = vld [vmem:[#allocation3 + $0x58] sm:$0x1]
      %v1751 = vld [vmem:[#allocation3 + $0x60] sm:$0xff]
      %v1752 = vld [vmem:[#allocation3 + $0x68] sm:$0x1]
      %v1753 = vld [vmem:[#allocation3 + $0x70] sm:$0xff]
      %v1754 = vld [vmem:[#allocation3 + $0x78] sm:$0x1]
      %v1755 = vld [vmem:[#allocation3 + $0x80] sm:$0xff]
      %v1756 = vld [vmem:[#allocation3 + $0x88] sm:$0x1]
      %v1757 = vld [vmem:[#allocation2] sm:$0x1]
      %v1758 = vlaneseq
      %v1759 = vshrl.u32 %v1758, 7
      %v1760 = vsub.s32 0, %v1759
      %v1761 = vrot.slane %v1757, %v1760
      %v1762 = vmul.f32 %v1739, %v1761
      %v1763 = vmul.f32 %v1740, %v1761
      %v1764 = vmul.f32 %v1741, %v1761
      %v1765 = vmul.f32 %v1742, %v1761
      %v1766 = vmul.f32 %v1743, %v1761
      %v1767 = vmul.f32 %v1744, %v1761
      %v1768 = vmul.f32 %v1745, %v1761
      %v1769 = vmul.f32 %v1746, %v1761
      %v1770 = vmul.f32 %v1747, %v1761
      %v1771 = vmul.f32 %v1748, %v1761
      %v1772 = vmul.f32 %v1749, %v1761
      %v1773 = vmul.f32 %v1750, %v1761
      %v1774 = vmul.f32 %v1751, %v1761
      %v1775 = vmul.f32 %v1752, %v1761
      %v1776 = vmul.f32 %v1753, %v1761
      %v1777 = vmul.f32 %v1754, %v1761
      %v1778 = vmul.f32 %v1755, %v1761
      %v1779 = vmul.f32 %v1756, %v1761
      %v1780 = vadd.f32 %v1762, 0.0
      %v1781 = vadd.f32 %v1763, 0.0
      %v1782 = vadd.f32 %v1764, 0.0
      %v1783 = vadd.f32 %v1765, 0.0
      %v1784 = vadd.f32 %v1766, 0.0
      %v1785 = vadd.f32 %v1767, 0.0
      %v1786 = vadd.f32 %v1768, 0.0
      %v1787 = vadd.f32 %v1769, 0.0
      %v1788 = vadd.f32 %v1770, 0.0
      %v1789 = vadd.f32 %v1771, 0.0
      %v1790 = vadd.f32 %v1772, 0.0
      %v1791 = vadd.f32 %v1773, 0.0
      %v1792 = vadd.f32 %v1774, 0.0
      %v1793 = vadd.f32 %v1775, 0.0
      %v1794 = vadd.f32 %v1776, 0.0
      %v1795 = vadd.f32 %v1777, 0.0
      %v1796 = vadd.f32 %v1778, 0.0
      %v1797 = vadd.f32 %v1779, 0.0
      %v1798 = vld [vmem:[#allocation3 + $0x1] sm:$0xff]
      %v1799 = vld [vmem:[#allocation3 + $0x9] sm:$0x1]
      %v1800 = vld [vmem:[#allocation3 + $0x11] sm:$0xff]
      %v1801 = vld [vmem:[#allocation3 + $0x19] sm:$0x1]
      %v1802 = vld [vmem:[#allocation3 + $0x21] sm:$0xff]
      %v1803 = vld [vmem:[#allocation3 + $0x29] sm:$0x1]
      %v1804 = vld [vmem:[#allocation3 + $0x31] sm:$0xff]
      %v1805 = vld [vmem:[#allocation3 + $0x39] sm:$0x1]
      %v1806 = vld [vmem:[#allocation3 + $0x41] sm:$0xff]
      %v1807 = vld [vmem:[#allocation3 + $0x49] sm:$0x1]
      %v1808 = vld [vmem:[#allocation3 + $0x51] sm:$0xff]
      %v1809 = vld [vmem:[#allocation3 + $0x59] sm:$0x1]
      %v1810 = vld [vmem:[#allocation3 + $0x61] sm:$0xff]
      %v1811 = vld [vmem:[#allocation3 + $0x69] sm:$0x1]
      %v1812 = vld [vmem:[#allocation3 + $0x71] sm:$0xff]
      %v1813 = vld [vmem:[#allocation3 + $0x79] sm:$0x1]
      %v1814 = vld [vmem:[#allocation3 + $0x81] sm:$0xff]
      %v1815 = vld [vmem:[#allocation3 + $0x89] sm:$0x1]
      %v1816 = vld [vmem:[#allocation2 + $0x1] sm:$0x1]
      %v1817 = vlaneseq
      %v1818 = vshrl.u32 %v1817, 7
      %v1819 = vsub.s32 0, %v1818
      %v1820 = vrot.slane %v1816, %v1819
      %v1821 = vmul.f32 %v1798, %v1820
      %v1822 = vmul.f32 %v1799, %v1820
      %v1823 = vmul.f32 %v1800, %v1820
      %v1824 = vmul.f32 %v1801, %v1820
      %v1825 = vmul.f32 %v1802, %v1820
      %v1826 = vmul.f32 %v1803, %v1820
      %v1827 = vmul.f32 %v1804, %v1820
      %v1828 = vmul.f32 %v1805, %v1820
      %v1829 = vmul.f32 %v1806, %v1820
      %v1830 = vmul.f32 %v1807, %v1820
      %v1831 = vmul.f32 %v1808, %v1820
      %v1832 = vmul.f32 %v1809, %v1820
      %v1833 = vmul.f32 %v1810, %v1820
      %v1834 = vmul.f32 %v1811, %v1820
      %v1835 = vmul.f32 %v1812, %v1820
      %v1836 = vmul.f32 %v1813, %v1820
      %v1837 = vmul.f32 %v1814, %v1820
      %v1838 = vmul.f32 %v1815, %v1820
      %v1839 = vadd.f32 %v1780, %v1821
      %v1840 = vadd.f32 %v1781, %v1822
      %v1841 = vadd.f32 %v1782, %v1823
      %v1842 = vadd.f32 %v1783, %v1824
      %v1843 = vadd.f32 %v1784, %v1825
      %v1844 = vadd.f32 %v1785, %v1826
      %v1845 = vadd.f32 %v1786, %v1827
      %v1846 = vadd.f32 %v1787, %v1828
      %v1847 = vadd.f32 %v1788, %v1829
      %v1848 = vadd.f32 %v1789, %v1830
      %v1849 = vadd.f32 %v1790, %v1831
      %v1850 = vadd.f32 %v1791, %v1832
      %v1851 = vadd.f32 %v1792, %v1833
      %v1852 = vadd.f32 %v1793, %v1834
      %v1853 = vadd.f32 %v1794, %v1835
      %v1854 = vadd.f32 %v1795, %v1836
      %v1855 = vadd.f32 %v1796, %v1837
      %v1856 = vadd.f32 %v1797, %v1838
      %v1857 = vld [vmem:[#allocation3 + $0x2] sm:$0xff]
      %v1858 = vld [vmem:[#allocation3 + $0xa] sm:$0x1]
      %v1859 = vld [vmem:[#allocation3 + $0x12] sm:$0xff]
      %v1860 = vld [vmem:[#allocation3 + $0x1a] sm:$0x1]
      %v1861 = vld [vmem:[#allocation3 + $0x22] sm:$0xff]
      %v1862 = vld [vmem:[#allocation3 + $0x2a] sm:$0x1]
      %v1863 = vld [vmem:[#allocation3 + $0x32] sm:$0xff]
      %v1864 = vld [vmem:[#allocation3 + $0x3a] sm:$0x1]
      %v1865 = vld [vmem:[#allocation3 + $0x42] sm:$0xff]
      %v1866 = vld [vmem:[#allocation3 + $0x4a] sm:$0x1]
      %v1867 = vld [vmem:[#allocation3 + $0x52] sm:$0xff]
      %v1868 = vld [vmem:[#allocation3 + $0x5a] sm:$0x1]
      %v1869 = vld [vmem:[#allocation3 + $0x62] sm:$0xff]
      %v1870 = vld [vmem:[#allocation3 + $0x6a] sm:$0x1]
      %v1871 = vld [vmem:[#allocation3 + $0x72] sm:$0xff]
      %v1872 = vld [vmem:[#allocation3 + $0x7a] sm:$0x1]
      %v1873 = vld [vmem:[#allocation3 + $0x82] sm:$0xff]
      %v1874 = vld [vmem:[#allocation3 + $0x8a] sm:$0x1]
      %v1875 = vld [vmem:[#allocation2 + $0x2] sm:$0x1]
      %v1876 = vlaneseq
      %v1877 = vshrl.u32 %v1876, 7
      %v1878 = vsub.s32 0, %v1877
      %v1879 = vrot.slane %v1875, %v1878
      %v1880 = vmul.f32 %v1857, %v1879
      %v1881 = vmul.f32 %v1858, %v1879
      %v1882 = vmul.f32 %v1859, %v1879
      %v1883 = vmul.f32 %v1860, %v1879
      %v1884 = vmul.f32 %v1861, %v1879
      %v1885 = vmul.f32 %v1862, %v1879
      %v1886 = vmul.f32 %v1863, %v1879
      %v1887 = vmul.f32 %v1864, %v1879
      %v1888 = vmul.f32 %v1865, %v1879
      %v1889 = vmul.f32 %v1866, %v1879
      %v1890 = vmul.f32 %v1867, %v1879
      %v1891 = vmul.f32 %v1868, %v1879
      %v1892 = vmul.f32 %v1869, %v1879
      %v1893 = vmul.f32 %v1870, %v1879
      %v1894 = vmul.f32 %v1871, %v1879
      %v1895 = vmul.f32 %v1872, %v1879
      %v1896 = vmul.f32 %v1873, %v1879
      %v1897 = vmul.f32 %v1874, %v1879
      %v1898 = vadd.f32 %v1839, %v1880
      %v1899 = vadd.f32 %v1840, %v1881
      %v1900 = vadd.f32 %v1841, %v1882
      %v1901 = vadd.f32 %v1842, %v1883
      %v1902 = vadd.f32 %v1843, %v1884
      %v1903 = vadd.f32 %v1844, %v1885
      %v1904 = vadd.f32 %v1845, %v1886
      %v1905 = vadd.f32 %v1846, %v1887
      %v1906 = vadd.f32 %v1847, %v1888
      %v1907 = vadd.f32 %v1848, %v1889
      %v1908 = vadd.f32 %v1849, %v1890
      %v1909 = vadd.f32 %v1850, %v1891
      %v1910 = vadd.f32 %v1851, %v1892
      %v1911 = vadd.f32 %v1852, %v1893
      %v1912 = vadd.f32 %v1853, %v1894
      %v1913 = vadd.f32 %v1854, %v1895
      %v1914 = vadd.f32 %v1855, %v1896
      %v1915 = vadd.f32 %v1856, %v1897
      %v1916 = vld [vmem:[#allocation3 + $0x3] sm:$0xff]
      %v1917 = vld [vmem:[#allocation3 + $0xb] sm:$0x1]
      %v1918 = vld [vmem:[#allocation3 + $0x13] sm:$0xff]
      %v1919 = vld [vmem:[#allocation3 + $0x1b] sm:$0x1]
      %v1920 = vld [vmem:[#allocation3 + $0x23] sm:$0xff]
      %v1921 = vld [vmem:[#allocation3 + $0x2b] sm:$0x1]
      %v1922 = vld [vmem:[#allocation3 + $0x33] sm:$0xff]
      %v1923 = vld [vmem:[#allocation3 + $0x3b] sm:$0x1]
      %v1924 = vld [vmem:[#allocation3 + $0x43] sm:$0xff]
      %v1925 = vld [vmem:[#allocation3 + $0x4b] sm:$0x1]
      %v1926 = vld [vmem:[#allocation3 + $0x53] sm:$0xff]
      %v1927 = vld [vmem:[#allocation3 + $0x5b] sm:$0x1]
      %v1928 = vld [vmem:[#allocation3 + $0x63] sm:$0xff]
      %v1929 = vld [vmem:[#allocation3 + $0x6b] sm:$0x1]
      %v1930 = vld [vmem:[#allocation3 + $0x73] sm:$0xff]
      %v1931 = vld [vmem:[#allocation3 + $0x7b] sm:$0x1]
      %v1932 = vld [vmem:[#allocation3 + $0x83] sm:$0xff]
      %v1933 = vld [vmem:[#allocation3 + $0x8b] sm:$0x1]
      %v1934 = vld [vmem:[#allocation2 + $0x3] sm:$0x1]
      %v1935 = vlaneseq
      %v1936 = vshrl.u32 %v1935, 7
      %v1937 = vsub.s32 0, %v1936
      %v1938 = vrot.slane %v1934, %v1937
      %v1939 = vmul.f32 %v1916, %v1938
      %v1940 = vmul.f32 %v1917, %v1938
      %v1941 = vmul.f32 %v1918, %v1938
      %v1942 = vmul.f32 %v1919, %v1938
      %v1943 = vmul.f32 %v1920, %v1938
      %v1944 = vmul.f32 %v1921, %v1938
      %v1945 = vmul.f32 %v1922, %v1938
      %v1946 = vmul.f32 %v1923, %v1938
      %v1947 = vmul.f32 %v1924, %v1938
      %v1948 = vmul.f32 %v1925, %v1938
      %v1949 = vmul.f32 %v1926, %v1938
      %v1950 = vmul.f32 %v1927, %v1938
      %v1951 = vmul.f32 %v1928, %v1938
      %v1952 = vmul.f32 %v1929, %v1938
      %v1953 = vmul.f32 %v1930, %v1938
      %v1954 = vmul.f32 %v1931, %v1938
      %v1955 = vmul.f32 %v1932, %v1938
      %v1956 = vmul.f32 %v1933, %v1938
      %v1957 = vadd.f32 %v1898, %v1939
      %v1958 = vadd.f32 %v1899, %v1940
      %v1959 = vadd.f32 %v1900, %v1941
      %v1960 = vadd.f32 %v1901, %v1942
      %v1961 = vadd.f32 %v1902, %v1943
      %v1962 = vadd.f32 %v1903, %v1944
      %v1963 = vadd.f32 %v1904, %v1945
      %v1964 = vadd.f32 %v1905, %v1946
      %v1965 = vadd.f32 %v1906, %v1947
      %v1966 = vadd.f32 %v1907, %v1948
      %v1967 = vadd.f32 %v1908, %v1949
      %v1968 = vadd.f32 %v1909, %v1950
      %v1969 = vadd.f32 %v1910, %v1951
      %v1970 = vadd.f32 %v1911, %v1952
      %v1971 = vadd.f32 %v1912, %v1953
      %v1972 = vadd.f32 %v1913, %v1954
      %v1973 = vadd.f32 %v1914, %v1955
      %v1974 = vadd.f32 %v1915, %v1956
      %v1975 = vld [vmem:[#allocation3 + $0x4] sm:$0xff]
      %v1976 = vld [vmem:[#allocation3 + $0xc] sm:$0x1]
      %v1977 = vld [vmem:[#allocation3 + $0x14] sm:$0xff]
      %v1978 = vld [vmem:[#allocation3 + $0x1c] sm:$0x1]
      %v1979 = vld [vmem:[#allocation3 + $0x24] sm:$0xff]
      %v1980 = vld [vmem:[#allocation3 + $0x2c] sm:$0x1]
      %v1981 = vld [vmem:[#allocation3 + $0x34] sm:$0xff]
      %v1982 = vld [vmem:[#allocation3 + $0x3c] sm:$0x1]
      %v1983 = vld [vmem:[#allocation3 + $0x44] sm:$0xff]
      %v1984 = vld [vmem:[#allocation3 + $0x4c] sm:$0x1]
      %v1985 = vld [vmem:[#allocation3 + $0x54] sm:$0xff]
      %v1986 = vld [vmem:[#allocation3 + $0x5c] sm:$0x1]
      %v1987 = vld [vmem:[#allocation3 + $0x64] sm:$0xff]
      %v1988 = vld [vmem:[#allocation3 + $0x6c] sm:$0x1]
      %v1989 = vld [vmem:[#allocation3 + $0x74] sm:$0xff]
      %v1990 = vld [vmem:[#allocation3 + $0x7c] sm:$0x1]
      %v1991 = vld [vmem:[#allocation3 + $0x84] sm:$0xff]
      %v1992 = vld [vmem:[#allocation3 + $0x8c] sm:$0x1]
      %v1993 = vld [vmem:[#allocation2 + $0x4] sm:$0x1]
      %v1994 = vlaneseq
      %v1995 = vshrl.u32 %v1994, 7
      %v1996 = vsub.s32 0, %v1995
      %v1997 = vrot.slane %v1993, %v1996
      %v1998 = vmul.f32 %v1975, %v1997
      %v1999 = vmul.f32 %v1976, %v1997
      %v2000 = vmul.f32 %v1977, %v1997
      %v2001 = vmul.f32 %v1978, %v1997
      %v2002 = vmul.f32 %v1979, %v1997
      %v2003 = vmul.f32 %v1980, %v1997
      %v2004 = vmul.f32 %v1981, %v1997
      %v2005 = vmul.f32 %v1982, %v1997
      %v2006 = vmul.f32 %v1983, %v1997
      %v2007 = vmul.f32 %v1984, %v1997
      %v2008 = vmul.f32 %v1985, %v1997
      %v2009 = vmul.f32 %v1986, %v1997
      %v2010 = vmul.f32 %v1987, %v1997
      %v2011 = vmul.f32 %v1988, %v1997
      %v2012 = vmul.f32 %v1989, %v1997
      %v2013 = vmul.f32 %v1990, %v1997
      %v2014 = vmul.f32 %v1991, %v1997
      %v2015 = vmul.f32 %v1992, %v1997
      %v2016 = vadd.f32 %v1957, %v1998
      %v2017 = vadd.f32 %v1958, %v1999
      %v2018 = vadd.f32 %v1959, %v2000
      %v2019 = vadd.f32 %v1960, %v2001
      %v2020 = vadd.f32 %v1961, %v2002
      %v2021 = vadd.f32 %v1962, %v2003
      %v2022 = vadd.f32 %v1963, %v2004
      %v2023 = vadd.f32 %v1964, %v2005
      %v2024 = vadd.f32 %v1965, %v2006
      %v2025 = vadd.f32 %v1966, %v2007
      %v2026 = vadd.f32 %v1967, %v2008
      %v2027 = vadd.f32 %v1968, %v2009
      %v2028 = vadd.f32 %v1969, %v2010
      %v2029 = vadd.f32 %v1970, %v2011
      %v2030 = vadd.f32 %v1971, %v2012
      %v2031 = vadd.f32 %v1972, %v2013
      %v2032 = vadd.f32 %v1973, %v2014
      %v2033 = vadd.f32 %v1974, %v2015
      %v2034 = vld [vmem:[#allocation3 + $0x5] sm:$0xff]
      %v2035 = vld [vmem:[#allocation3 + $0xd] sm:$0x1]
      %v2036 = vld [vmem:[#allocation3 + $0x15] sm:$0xff]
      %v2037 = vld [vmem:[#allocation3 + $0x1d] sm:$0x1]
      %v2038 = vld [vmem:[#allocation3 + $0x25] sm:$0xff]
      %v2039 = vld [vmem:[#allocation3 + $0x2d] sm:$0x1]
      %v2040 = vld [vmem:[#allocation3 + $0x35] sm:$0xff]
      %v2041 = vld [vmem:[#allocation3 + $0x3d] sm:$0x1]
      %v2042 = vld [vmem:[#allocation3 + $0x45] sm:$0xff]
      %v2043 = vld [vmem:[#allocation3 + $0x4d] sm:$0x1]
      %v2044 = vld [vmem:[#allocation3 + $0x55] sm:$0xff]
      %v2045 = vld [vmem:[#allocation3 + $0x5d] sm:$0x1]
      %v2046 = vld [vmem:[#allocation3 + $0x65] sm:$0xff]
      %v2047 = vld [vmem:[#allocation3 + $0x6d] sm:$0x1]
      %v2048 = vld [vmem:[#allocation3 + $0x75] sm:$0xff]
      %v2049 = vld [vmem:[#allocation3 + $0x7d] sm:$0x1]
      %v2050 = vld [vmem:[#allocation3 + $0x85] sm:$0xff]
      %v2051 = vld [vmem:[#allocation3 + $0x8d] sm:$0x1]
      %v2052 = vld [vmem:[#allocation2 + $0x5] sm:$0x1]
      %v2053 = vlaneseq
      %v2054 = vshrl.u32 %v2053, 7
      %v2055 = vsub.s32 0, %v2054
      %v2056 = vrot.slane %v2052, %v2055
      %v2057 = vmul.f32 %v2034, %v2056
      %v2058 = vmul.f32 %v2035, %v2056
      %v2059 = vmul.f32 %v2036, %v2056
      %v2060 = vmul.f32 %v2037, %v2056
      %v2061 = vmul.f32 %v2038, %v2056
      %v2062 = vmul.f32 %v2039, %v2056
      %v2063 = vmul.f32 %v2040, %v2056
      %v2064 = vmul.f32 %v2041, %v2056
      %v2065 = vmul.f32 %v2042, %v2056
      %v2066 = vmul.f32 %v2043, %v2056
      %v2067 = vmul.f32 %v2044, %v2056
      %v2068 = vmul.f32 %v2045, %v2056
      %v2069 = vmul.f32 %v2046, %v2056
      %v2070 = vmul.f32 %v2047, %v2056
      %v2071 = vmul.f32 %v2048, %v2056
      %v2072 = vmul.f32 %v2049, %v2056
      %v2073 = vmul.f32 %v2050, %v2056
      %v2074 = vmul.f32 %v2051, %v2056
      %v2075 = vadd.f32 %v2016, %v2057
      %v2076 = vadd.f32 %v2017, %v2058
      %v2077 = vadd.f32 %v2018, %v2059
      %v2078 = vadd.f32 %v2019, %v2060
      %v2079 = vadd.f32 %v2020, %v2061
      %v2080 = vadd.f32 %v2021, %v2062
      %v2081 = vadd.f32 %v2022, %v2063
      %v2082 = vadd.f32 %v2023, %v2064
      %v2083 = vadd.f32 %v2024, %v2065
      %v2084 = vadd.f32 %v2025, %v2066
      %v2085 = vadd.f32 %v2026, %v2067
      %v2086 = vadd.f32 %v2027, %v2068
      %v2087 = vadd.f32 %v2028, %v2069
      %v2088 = vadd.f32 %v2029, %v2070
      %v2089 = vadd.f32 %v2030, %v2071
      %v2090 = vadd.f32 %v2031, %v2072
      %v2091 = vadd.f32 %v2032, %v2073
      %v2092 = vadd.f32 %v2033, %v2074
      %v2093 = vld [vmem:[%s658] sm:$0xff]
      %v2094 = vld [vmem:[%s658 + $0x8] sm:$0x1]
      %v2095 = vld [vmem:[%s658 + $0x10] sm:$0xff]
      %v2096 = vld [vmem:[%s658 + $0x18] sm:$0x1]
      %v2097 = vld [vmem:[%s658 + $0x20] sm:$0xff]
      %v2098 = vld [vmem:[%s658 + $0x28] sm:$0x1]
      %v2099 = vld [vmem:[%s658 + $0x30] sm:$0xff]
      %v2100 = vld [vmem:[%s658 + $0x38] sm:$0x1]
      %v2101 = vld [vmem:[%s658 + $0x40] sm:$0xff]
      %v2102 = vld [vmem:[%s658 + $0x48] sm:$0x1]
      %v2103 = vld [vmem:[%s658 + $0x50] sm:$0xff]
      %v2104 = vld [vmem:[%s658 + $0x58] sm:$0x1]
      %v2105 = vld [vmem:[%s658 + $0x60] sm:$0xff]
      %v2106 = vld [vmem:[%s658 + $0x68] sm:$0x1]
      %v2107 = vld [vmem:[%s658 + $0x70] sm:$0xff]
      %v2108 = vld [vmem:[%s658 + $0x78] sm:$0x1]
      %v2109 = vld [vmem:[%s658 + $0x80] sm:$0xff]
      %v2110 = vld [vmem:[%s658 + $0x88] sm:$0x1]
      %v2111 = vld [vmem:[#allocation2 + $0x6] sm:$0x1]
      %v2112 = vlaneseq
      %v2113 = vshrl.u32 %v2112, 7
      %v2114 = vsub.s32 0, %v2113
      %v2115 = vrot.slane %v2111, %v2114
      %v2116 = vmul.f32 %v2093, %v2115
      %v2117 = vmul.f32 %v2094, %v2115
      %v2118 = vmul.f32 %v2095, %v2115
      %v2119 = vmul.f32 %v2096, %v2115
      %v2120 = vmul.f32 %v2097, %v2115
      %v2121 = vmul.f32 %v2098, %v2115
      %v2122 = vmul.f32 %v2099, %v2115
      %v2123 = vmul.f32 %v2100, %v2115
      %v2124 = vmul.f32 %v2101, %v2115
      %v2125 = vmul.f32 %v2102, %v2115
      %v2126 = vmul.f32 %v2103, %v2115
      %v2127 = vmul.f32 %v2104, %v2115
      %v2128 = vmul.f32 %v2105, %v2115
      %v2129 = vmul.f32 %v2106, %v2115
      %v2130 = vmul.f32 %v2107, %v2115
      %v2131 = vmul.f32 %v2108, %v2115
      %v2132 = vmul.f32 %v2109, %v2115
      %v2133 = vmul.f32 %v2110, %v2115
      %v2134 = vadd.f32 %v2075, %v2116
      %v2135 = vadd.f32 %v2076, %v2117
      %v2136 = vadd.f32 %v2077, %v2118
      %v2137 = vadd.f32 %v2078, %v2119
      %v2138 = vadd.f32 %v2079, %v2120
      %v2139 = vadd.f32 %v2080, %v2121
      %v2140 = vadd.f32 %v2081, %v2122
      %v2141 = vadd.f32 %v2082, %v2123
      %v2142 = vadd.f32 %v2083, %v2124
      %v2143 = vadd.f32 %v2084, %v2125
      %v2144 = vadd.f32 %v2085, %v2126
      %v2145 = vadd.f32 %v2086, %v2127
      %v2146 = vadd.f32 %v2087, %v2128
      %v2147 = vadd.f32 %v2088, %v2129
      %v2148 = vadd.f32 %v2089, %v2130
      %v2149 = vadd.f32 %v2090, %v2131
      %v2150 = vadd.f32 %v2091, %v2132
      %v2151 = vadd.f32 %v2092, %v2133
      %v2152 = vld [vmem:[%s658 + $0x1] sm:$0xff]
      %v2153 = vld [vmem:[%s658 + $0x9] sm:$0x1]
      %v2154 = vld [vmem:[%s658 + $0x11] sm:$0xff]
      %v2155 = vld [vmem:[%s658 + $0x19] sm:$0x1]
      %v2156 = vld [vmem:[%s658 + $0x21] sm:$0xff]
      %v2157 = vld [vmem:[%s658 + $0x29] sm:$0x1]
      %v2158 = vld [vmem:[%s658 + $0x31] sm:$0xff]
      %v2159 = vld [vmem:[%s658 + $0x39] sm:$0x1]
      %v2160 = vld [vmem:[%s658 + $0x41] sm:$0xff]
      %v2161 = vld [vmem:[%s658 + $0x49] sm:$0x1]
      %v2162 = vld [vmem:[%s658 + $0x51] sm:$0xff]
      %v2163 = vld [vmem:[%s658 + $0x59] sm:$0x1]
      %v2164 = vld [vmem:[%s658 + $0x61] sm:$0xff]
      %v2165 = vld [vmem:[%s658 + $0x69] sm:$0x1]
      %v2166 = vld [vmem:[%s658 + $0x71] sm:$0xff]
      %v2167 = vld [vmem:[%s658 + $0x79] sm:$0x1]
      %v2168 = vld [vmem:[%s658 + $0x81] sm:$0xff]
      %v2169 = vld [vmem:[%s658 + $0x89] sm:$0x1]
      %v2170 = vld [vmem:[#allocation2 + $0x7] sm:$0x1]
      %v2171 = vlaneseq
      %v2172 = vshrl.u32 %v2171, 7
      %v2173 = vsub.s32 0, %v2172
      %v2174 = vrot.slane %v2170, %v2173
      %v2175 = vmul.f32 %v2152, %v2174
      %v2176 = vmul.f32 %v2153, %v2174
      %v2177 = vmul.f32 %v2154, %v2174
      %v2178 = vmul.f32 %v2155, %v2174
      %v2179 = vmul.f32 %v2156, %v2174
      %v2180 = vmul.f32 %v2157, %v2174
      %v2181 = vmul.f32 %v2158, %v2174
      %v2182 = vmul.f32 %v2159, %v2174
      %v2183 = vmul.f32 %v2160, %v2174
      %v2184 = vmul.f32 %v2161, %v2174
      %v2185 = vmul.f32 %v2162, %v2174
      %v2186 = vmul.f32 %v2163, %v2174
      %v2187 = vmul.f32 %v2164, %v2174
      %v2188 = vmul.f32 %v2165, %v2174
      %v2189 = vmul.f32 %v2166, %v2174
      %v2190 = vmul.f32 %v2167, %v2174
      %v2191 = vmul.f32 %v2168, %v2174
      %v2192 = vmul.f32 %v2169, %v2174
      %v2193 = vadd.f32 %v2134, %v2175
      %v2194 = vadd.f32 %v2135, %v2176
      %v2195 = vadd.f32 %v2136, %v2177
      %v2196 = vadd.f32 %v2137, %v2178
      %v2197 = vadd.f32 %v2138, %v2179
      %v2198 = vadd.f32 %v2139, %v2180
      %v2199 = vadd.f32 %v2140, %v2181
      %v2200 = vadd.f32 %v2141, %v2182
      %v2201 = vadd.f32 %v2142, %v2183
      %v2202 = vadd.f32 %v2143, %v2184
      %v2203 = vadd.f32 %v2144, %v2185
      %v2204 = vadd.f32 %v2145, %v2186
      %v2205 = vadd.f32 %v2146, %v2187
      %v2206 = vadd.f32 %v2147, %v2188
      %v2207 = vadd.f32 %v2148, %v2189
      %v2208 = vadd.f32 %v2149, %v2190
      %v2209 = vadd.f32 %v2150, %v2191
      %v2210 = vadd.f32 %v2151, %v2192
      %v2211 = vld [vmem:[%s658 + $0x2] sm:$0xff]
      %v2212 = vld [vmem:[%s658 + $0xa] sm:$0x1]
      %v2213 = vld [vmem:[%s658 + $0x12] sm:$0xff]
      %v2214 = vld [vmem:[%s658 + $0x1a] sm:$0x1]
      %v2215 = vld [vmem:[%s658 + $0x22] sm:$0xff]
      %v2216 = vld [vmem:[%s658 + $0x2a] sm:$0x1]
      %v2217 = vld [vmem:[%s658 + $0x32] sm:$0xff]
      %v2218 = vld [vmem:[%s658 + $0x3a] sm:$0x1]
      %v2219 = vld [vmem:[%s658 + $0x42] sm:$0xff]
      %v2220 = vld [vmem:[%s658 + $0x4a] sm:$0x1]
      %v2221 = vld [vmem:[%s658 + $0x52] sm:$0xff]
      %v2222 = vld [vmem:[%s658 + $0x5a] sm:$0x1]
      %v2223 = vld [vmem:[%s658 + $0x62] sm:$0xff]
      %v2224 = vld [vmem:[%s658 + $0x6a] sm:$0x1]
      %v2225 = vld [vmem:[%s658 + $0x72] sm:$0xff]
      %v2226 = vld [vmem:[%s658 + $0x7a] sm:$0x1]
      %v2227 = vld [vmem:[%s658 + $0x82] sm:$0xff]
      %v2228 = vld [vmem:[%s658 + $0x8a] sm:$0x1]
      %v2229 = vld [vmem:[#allocation2 + $0x8] sm:$0x1]
      %v2230 = vlaneseq
      %v2231 = vshrl.u32 %v2230, 7
      %v2232 = vsub.s32 0, %v2231
      %v2233 = vrot.slane %v2229, %v2232
      %v2234 = vmul.f32 %v2211, %v2233
      %v2235 = vmul.f32 %v2212, %v2233
      %v2236 = vmul.f32 %v2213, %v2233
      %v2237 = vmul.f32 %v2214, %v2233
      %v2238 = vmul.f32 %v2215, %v2233
      %v2239 = vmul.f32 %v2216, %v2233
      %v2240 = vmul.f32 %v2217, %v2233
      %v2241 = vmul.f32 %v2218, %v2233
      %v2242 = vmul.f32 %v2219, %v2233
      %v2243 = vmul.f32 %v2220, %v2233
      %v2244 = vmul.f32 %v2221, %v2233
      %v2245 = vmul.f32 %v2222, %v2233
      %v2246 = vmul.f32 %v2223, %v2233
      %v2247 = vmul.f32 %v2224, %v2233
      %v2248 = vmul.f32 %v2225, %v2233
      %v2249 = vmul.f32 %v2226, %v2233
      %v2250 = vmul.f32 %v2227, %v2233
      %v2251 = vmul.f32 %v2228, %v2233
      %v2252 = vadd.f32 %v2193, %v2234
      %v2253 = vadd.f32 %v2194, %v2235
      %v2254 = vadd.f32 %v2195, %v2236
      %v2255 = vadd.f32 %v2196, %v2237
      %v2256 = vadd.f32 %v2197, %v2238
      %v2257 = vadd.f32 %v2198, %v2239
      %v2258 = vadd.f32 %v2199, %v2240
      %v2259 = vadd.f32 %v2200, %v2241
      %v2260 = vadd.f32 %v2201, %v2242
      %v2261 = vadd.f32 %v2202, %v2243
      %v2262 = vadd.f32 %v2203, %v2244
      %v2263 = vadd.f32 %v2204, %v2245
      %v2264 = vadd.f32 %v2205, %v2246
      %v2265 = vadd.f32 %v2206, %v2247
      %v2266 = vadd.f32 %v2207, %v2248
      %v2267 = vadd.f32 %v2208, %v2249
      %v2268 = vadd.f32 %v2209, %v2250
      %v2269 = vadd.f32 %v2210, %v2251
      %v2270 = vld [vmem:[%s658 + $0x3] sm:$0xff]
      %v2271 = vld [vmem:[%s658 + $0xb] sm:$0x1]
      %v2272 = vld [vmem:[%s658 + $0x13] sm:$0xff]
      %v2273 = vld [vmem:[%s658 + $0x1b] sm:$0x1]
      %v2274 = vld [vmem:[%s658 + $0x23] sm:$0xff]
      %v2275 = vld [vmem:[%s658 + $0x2b] sm:$0x1]
      %v2276 = vld [vmem:[%s658 + $0x33] sm:$0xff]
      %v2277 = vld [vmem:[%s658 + $0x3b] sm:$0x1]
      %v2278 = vld [vmem:[%s658 + $0x43] sm:$0xff]
      %v2279 = vld [vmem:[%s658 + $0x4b] sm:$0x1]
      %v2280 = vld [vmem:[%s658 + $0x53] sm:$0xff]
      %v2281 = vld [vmem:[%s658 + $0x5b] sm:$0x1]
      %v2282 = vld [vmem:[%s658 + $0x63] sm:$0xff]
      %v2283 = vld [vmem:[%s658 + $0x6b] sm:$0x1]
      %v2284 = vld [vmem:[%s658 + $0x73] sm:$0xff]
      %v2285 = vld [vmem:[%s658 + $0x7b] sm:$0x1]
      %v2286 = vld [vmem:[%s658 + $0x83] sm:$0xff]
      %v2287 = vld [vmem:[%s658 + $0x8b] sm:$0x1]
      %v2288 = vld [vmem:[#allocation2 + $0x9] sm:$0x1]
      %v2289 = vlaneseq
      %v2290 = vshrl.u32 %v2289, 7
      %v2291 = vsub.s32 0, %v2290
      %v2292 = vrot.slane %v2288, %v2291
      %v2293 = vmul.f32 %v2270, %v2292
      %v2294 = vmul.f32 %v2271, %v2292
      %v2295 = vmul.f32 %v2272, %v2292
      %v2296 = vmul.f32 %v2273, %v2292
      %v2297 = vmul.f32 %v2274, %v2292
      %v2298 = vmul.f32 %v2275, %v2292
      %v2299 = vmul.f32 %v2276, %v2292
      %v2300 = vmul.f32 %v2277, %v2292
      %v2301 = vmul.f32 %v2278, %v2292
      %v2302 = vmul.f32 %v2279, %v2292
      %v2303 = vmul.f32 %v2280, %v2292
      %v2304 = vmul.f32 %v2281, %v2292
      %v2305 = vmul.f32 %v2282, %v2292
      %v2306 = vmul.f32 %v2283, %v2292
      %v2307 = vmul.f32 %v2284, %v2292
      %v2308 = vmul.f32 %v2285, %v2292
      %v2309 = vmul.f32 %v2286, %v2292
      %v2310 = vmul.f32 %v2287, %v2292
      %v2311 = vadd.f32 %v2252, %v2293
      %v2312 = vadd.f32 %v2253, %v2294
      %v2313 = vadd.f32 %v2254, %v2295
      %v2314 = vadd.f32 %v2255, %v2296
      %v2315 = vadd.f32 %v2256, %v2297
      %v2316 = vadd.f32 %v2257, %v2298
      %v2317 = vadd.f32 %v2258, %v2299
      %v2318 = vadd.f32 %v2259, %v2300
      %v2319 = vadd.f32 %v2260, %v2301
      %v2320 = vadd.f32 %v2261, %v2302
      %v2321 = vadd.f32 %v2262, %v2303
      %v2322 = vadd.f32 %v2263, %v2304
      %v2323 = vadd.f32 %v2264, %v2305
      %v2324 = vadd.f32 %v2265, %v2306
      %v2325 = vadd.f32 %v2266, %v2307
      %v2326 = vadd.f32 %v2267, %v2308
      %v2327 = vadd.f32 %v2268, %v2309
      %v2328 = vadd.f32 %v2269, %v2310
      %v2329 = vld [vmem:[%s658 + $0x4] sm:$0xff]
      %v2330 = vld [vmem:[%s658 + $0xc] sm:$0x1]
      %v2331 = vld [vmem:[%s658 + $0x14] sm:$0xff]
      %v2332 = vld [vmem:[%s658 + $0x1c] sm:$0x1]
      %v2333 = vld [vmem:[%s658 + $0x24] sm:$0xff]
      %v2334 = vld [vmem:[%s658 + $0x2c] sm:$0x1]
      %v2335 = vld [vmem:[%s658 + $0x34] sm:$0xff]
      %v2336 = vld [vmem:[%s658 + $0x3c] sm:$0x1]
      %v2337 = vld [vmem:[%s658 + $0x44] sm:$0xff]
      %v2338 = vld [vmem:[%s658 + $0x4c] sm:$0x1]
      %v2339 = vld [vmem:[%s658 + $0x54] sm:$0xff]
      %v2340 = vld [vmem:[%s658 + $0x5c] sm:$0x1]
      %v2341 = vld [vmem:[%s658 + $0x64] sm:$0xff]
      %v2342 = vld [vmem:[%s658 + $0x6c] sm:$0x1]
      %v2343 = vld [vmem:[%s658 + $0x74] sm:$0xff]
      %v2344 = vld [vmem:[%s658 + $0x7c] sm:$0x1]
      %v2345 = vld [vmem:[%s658 + $0x84] sm:$0xff]
      %v2346 = vld [vmem:[%s658 + $0x8c] sm:$0x1]
      %v2347 = vld [vmem:[#allocation2 + $0xa] sm:$0x1]
      %v2348 = vlaneseq
      %v2349 = vshrl.u32 %v2348, 7
      %v2350 = vsub.s32 0, %v2349
      %v2351 = vrot.slane %v2347, %v2350
      %v2352 = vmul.f32 %v2329, %v2351
      %v2353 = vmul.f32 %v2330, %v2351
      %v2354 = vmul.f32 %v2331, %v2351
      %v2355 = vmul.f32 %v2332, %v2351
      %v2356 = vmul.f32 %v2333, %v2351
      %v2357 = vmul.f32 %v2334, %v2351
      %v2358 = vmul.f32 %v2335, %v2351
      %v2359 = vmul.f32 %v2336, %v2351
      %v2360 = vmul.f32 %v2337, %v2351
      %v2361 = vmul.f32 %v2338, %v2351
      %v2362 = vmul.f32 %v2339, %v2351
      %v2363 = vmul.f32 %v2340, %v2351
      %v2364 = vmul.f32 %v2341, %v2351
      %v2365 = vmul.f32 %v2342, %v2351
      %v2366 = vmul.f32 %v2343, %v2351
      %v2367 = vmul.f32 %v2344, %v2351
      %v2368 = vmul.f32 %v2345, %v2351
      %v2369 = vmul.f32 %v2346, %v2351
      %v2370 = vadd.f32 %v2311, %v2352
      %v2371 = vadd.f32 %v2312, %v2353
      %v2372 = vadd.f32 %v2313, %v2354
      %v2373 = vadd.f32 %v2314, %v2355
      %v2374 = vadd.f32 %v2315, %v2356
      %v2375 = vadd.f32 %v2316, %v2357
      %v2376 = vadd.f32 %v2317, %v2358
      %v2377 = vadd.f32 %v2318, %v2359
      %v2378 = vadd.f32 %v2319, %v2360
      %v2379 = vadd.f32 %v2320, %v2361
      %v2380 = vadd.f32 %v2321, %v2362
      %v2381 = vadd.f32 %v2322, %v2363
      %v2382 = vadd.f32 %v2323, %v2364
      %v2383 = vadd.f32 %v2324, %v2365
      %v2384 = vadd.f32 %v2325, %v2366
      %v2385 = vadd.f32 %v2326, %v2367
      %v2386 = vadd.f32 %v2327, %v2368
      %v2387 = vadd.f32 %v2328, %v2369
      %v2388 = vld [vmem:[%s658 + $0x5] sm:$0xff]
      %v2389 = vld [vmem:[%s658 + $0xd] sm:$0x1]
      %v2390 = vld [vmem:[%s658 + $0x15] sm:$0xff]
      %v2391 = vld [vmem:[%s658 + $0x1d] sm:$0x1]
      %v2392 = vld [vmem:[%s658 + $0x25] sm:$0xff]
      %v2393 = vld [vmem:[%s658 + $0x2d] sm:$0x1]
      %v2394 = vld [vmem:[%s658 + $0x35] sm:$0xff]
      %v2395 = vld [vmem:[%s658 + $0x3d] sm:$0x1]
      %v2396 = vld [vmem:[%s658 + $0x45] sm:$0xff]
      %v2397 = vld [vmem:[%s658 + $0x4d] sm:$0x1]
      %v2398 = vld [vmem:[%s658 + $0x55] sm:$0xff]
      %v2399 = vld [vmem:[%s658 + $0x5d] sm:$0x1]
      %v2400 = vld [vmem:[%s658 + $0x65] sm:$0xff]
      %v2401 = vld [vmem:[%s658 + $0x6d] sm:$0x1]
      %v2402 = vld [vmem:[%s658 + $0x75] sm:$0xff]
      %v2403 = vld [vmem:[%s658 + $0x7d] sm:$0x1]
      %v2404 = vld [vmem:[%s658 + $0x85] sm:$0xff]
      %v2405 = vld [vmem:[%s658 + $0x8d] sm:$0x1]
      %v2406 = vld [vmem:[#allocation2 + $0xb] sm:$0x1]
      %v2407 = vlaneseq
      %v2408 = vshrl.u32 %v2407, 7
      %v2409 = vsub.s32 0, %v2408
      %v2410 = vrot.slane %v2406, %v2409
      %v2411 = vmul.f32 %v2388, %v2410
      %v2412 = vmul.f32 %v2389, %v2410
      %v2413 = vmul.f32 %v2390, %v2410
      %v2414 = vmul.f32 %v2391, %v2410
      %v2415 = vmul.f32 %v2392, %v2410
      %v2416 = vmul.f32 %v2393, %v2410
      %v2417 = vmul.f32 %v2394, %v2410
      %v2418 = vmul.f32 %v2395, %v2410
      %v2419 = vmul.f32 %v2396, %v2410
      %v2420 = vmul.f32 %v2397, %v2410
      %v2421 = vmul.f32 %v2398, %v2410
      %v2422 = vmul.f32 %v2399, %v2410
      %v2423 = vmul.f32 %v2400, %v2410
      %v2424 = vmul.f32 %v2401, %v2410
      %v2425 = vmul.f32 %v2402, %v2410
      %v2426 = vmul.f32 %v2403, %v2410
      %v2427 = vmul.f32 %v2404, %v2410
      %v2428 = vmul.f32 %v2405, %v2410
      %v2429 = vadd.f32 %v2370, %v2411
      %v2430 = vadd.f32 %v2371, %v2412
      %v2431 = vadd.f32 %v2372, %v2413
      %v2432 = vadd.f32 %v2373, %v2414
      %v2433 = vadd.f32 %v2374, %v2415
      %v2434 = vadd.f32 %v2375, %v2416
      %v2435 = vadd.f32 %v2376, %v2417
      %v2436 = vadd.f32 %v2377, %v2418
      %v2437 = vadd.f32 %v2378, %v2419
      %v2438 = vadd.f32 %v2379, %v2420
      %v2439 = vadd.f32 %v2380, %v2421
      %v2440 = vadd.f32 %v2381, %v2422
      %v2441 = vadd.f32 %v2382, %v2423
      %v2442 = vadd.f32 %v2383, %v2424
      %v2443 = vadd.f32 %v2384, %v2425
      %v2444 = vadd.f32 %v2385, %v2426
      %v2445 = vadd.f32 %v2386, %v2427
      %v2446 = vadd.f32 %v2387, %v2428
      %v2447 = vld [vmem:[%s752] sm:$0xff]
      %v2448 = vld [vmem:[%s752 + $0x8] sm:$0x1]
      %v2449 = vld [vmem:[%s752 + $0x10] sm:$0xff]
      %v2450 = vld [vmem:[%s752 + $0x18] sm:$0x1]
      %v2451 = vld [vmem:[%s752 + $0x20] sm:$0xff]
      %v2452 = vld [vmem:[%s752 + $0x28] sm:$0x1]
      %v2453 = vld [vmem:[%s752 + $0x30] sm:$0xff]
      %v2454 = vld [vmem:[%s752 + $0x38] sm:$0x1]
      %v2455 = vld [vmem:[%s752 + $0x40] sm:$0xff]
      %v2456 = vld [vmem:[%s752 + $0x48] sm:$0x1]
      %v2457 = vld [vmem:[%s752 + $0x50] sm:$0xff]
      %v2458 = vld [vmem:[%s752 + $0x58] sm:$0x1]
      %v2459 = vld [vmem:[%s752 + $0x60] sm:$0xff]
      %v2460 = vld [vmem:[%s752 + $0x68] sm:$0x1]
      %v2461 = vld [vmem:[%s752 + $0x70] sm:$0xff]
      %v2462 = vld [vmem:[%s752 + $0x78] sm:$0x1]
      %v2463 = vld [vmem:[%s752 + $0x80] sm:$0xff]
      %v2464 = vld [vmem:[%s752 + $0x88] sm:$0x1]
      %v2465 = vld [vmem:[#allocation2 + $0xc] sm:$0x1]
      %v2466 = vlaneseq
      %v2467 = vshrl.u32 %v2466, 7
      %v2468 = vsub.s32 0, %v2467
      %v2469 = vrot.slane %v2465, %v2468
      %v2470 = vmul.f32 %v2447, %v2469
      %v2471 = vmul.f32 %v2448, %v2469
      %v2472 = vmul.f32 %v2449, %v2469
      %v2473 = vmul.f32 %v2450, %v2469
      %v2474 = vmul.f32 %v2451, %v2469
      %v2475 = vmul.f32 %v2452, %v2469
      %v2476 = vmul.f32 %v2453, %v2469
      %v2477 = vmul.f32 %v2454, %v2469
      %v2478 = vmul.f32 %v2455, %v2469
      %v2479 = vmul.f32 %v2456, %v2469
      %v2480 = vmul.f32 %v2457, %v2469
      %v2481 = vmul.f32 %v2458, %v2469
      %v2482 = vmul.f32 %v2459, %v2469
      %v2483 = vmul.f32 %v2460, %v2469
      %v2484 = vmul.f32 %v2461, %v2469
      %v2485 = vmul.f32 %v2462, %v2469
      %v2486 = vmul.f32 %v2463, %v2469
      %v2487 = vmul.f32 %v2464, %v2469
      %v2488 = vadd.f32 %v2429, %v2470
      %v2489 = vadd.f32 %v2430, %v2471
      %v2490 = vadd.f32 %v2431, %v2472
      %v2491 = vadd.f32 %v2432, %v2473
      %v2492 = vadd.f32 %v2433, %v2474
      %v2493 = vadd.f32 %v2434, %v2475
      %v2494 = vadd.f32 %v2435, %v2476
      %v2495 = vadd.f32 %v2436, %v2477
      %v2496 = vadd.f32 %v2437, %v2478
      %v2497 = vadd.f32 %v2438, %v2479
      %v2498 = vadd.f32 %v2439, %v2480
      %v2499 = vadd.f32 %v2440, %v2481
      %v2500 = vadd.f32 %v2441, %v2482
      %v2501 = vadd.f32 %v2442, %v2483
      %v2502 = vadd.f32 %v2443, %v2484
      %v2503 = vadd.f32 %v2444, %v2485
      %v2504 = vadd.f32 %v2445, %v2486
      %v2505 = vadd.f32 %v2446, %v2487
      %v2506 = vld [vmem:[%s752 + $0x1] sm:$0xff]
      %v2507 = vld [vmem:[%s752 + $0x9] sm:$0x1]
      %v2508 = vld [vmem:[%s752 + $0x11] sm:$0xff]
      %v2509 = vld [vmem:[%s752 + $0x19] sm:$0x1]
      %v2510 = vld [vmem:[%s752 + $0x21] sm:$0xff]
      %v2511 = vld [vmem:[%s752 + $0x29] sm:$0x1]
      %v2512 = vld [vmem:[%s752 + $0x31] sm:$0xff]
      %v2513 = vld [vmem:[%s752 + $0x39] sm:$0x1]
      %v2514 = vld [vmem:[%s752 + $0x41] sm:$0xff]
      %v2515 = vld [vmem:[%s752 + $0x49] sm:$0x1]
      %v2516 = vld [vmem:[%s752 + $0x51] sm:$0xff]
      %v2517 = vld [vmem:[%s752 + $0x59] sm:$0x1]
      %v2518 = vld [vmem:[%s752 + $0x61] sm:$0xff]
      %v2519 = vld [vmem:[%s752 + $0x69] sm:$0x1]
      %v2520 = vld [vmem:[%s752 + $0x71] sm:$0xff]
      %v2521 = vld [vmem:[%s752 + $0x79] sm:$0x1]
      %v2522 = vld [vmem:[%s752 + $0x81] sm:$0xff]
      %v2523 = vld [vmem:[%s752 + $0x89] sm:$0x1]
      %v2524 = vld [vmem:[#allocation2 + $0xd] sm:$0x1]
      %v2525 = vlaneseq
      %v2526 = vshrl.u32 %v2525, 7
      %v2527 = vsub.s32 0, %v2526
      %v2528 = vrot.slane %v2524, %v2527
      %v2529 = vmul.f32 %v2506, %v2528
      %v2530 = vmul.f32 %v2507, %v2528
      %v2531 = vmul.f32 %v2508, %v2528
      %v2532 = vmul.f32 %v2509, %v2528
      %v2533 = vmul.f32 %v2510, %v2528
      %v2534 = vmul.f32 %v2511, %v2528
      %v2535 = vmul.f32 %v2512, %v2528
      %v2536 = vmul.f32 %v2513, %v2528
      %v2537 = vmul.f32 %v2514, %v2528
      %v2538 = vmul.f32 %v2515, %v2528
      %v2539 = vmul.f32 %v2516, %v2528
      %v2540 = vmul.f32 %v2517, %v2528
      %v2541 = vmul.f32 %v2518, %v2528
      %v2542 = vmul.f32 %v2519, %v2528
      %v2543 = vmul.f32 %v2520, %v2528
      %v2544 = vmul.f32 %v2521, %v2528
      %v2545 = vmul.f32 %v2522, %v2528
      %v2546 = vmul.f32 %v2523, %v2528
      %v2547 = vadd.f32 %v2488, %v2529
      %v2548 = vadd.f32 %v2489, %v2530
      %v2549 = vadd.f32 %v2490, %v2531
      %v2550 = vadd.f32 %v2491, %v2532
      %v2551 = vadd.f32 %v2492, %v2533
      %v2552 = vadd.f32 %v2493, %v2534
      %v2553 = vadd.f32 %v2494, %v2535
      %v2554 = vadd.f32 %v2495, %v2536
      %v2555 = vadd.f32 %v2496, %v2537
      %v2556 = vadd.f32 %v2497, %v2538
      %v2557 = vadd.f32 %v2498, %v2539
      %v2558 = vadd.f32 %v2499, %v2540
      %v2559 = vadd.f32 %v2500, %v2541
      %v2560 = vadd.f32 %v2501, %v2542
      %v2561 = vadd.f32 %v2502, %v2543
      %v2562 = vadd.f32 %v2503, %v2544
      %v2563 = vadd.f32 %v2504, %v2545
      %v2564 = vadd.f32 %v2505, %v2546
      %v2565 = vld [vmem:[%s752 + $0x2] sm:$0xff]
      %v2566 = vld [vmem:[%s752 + $0xa] sm:$0x1]
      %v2567 = vld [vmem:[%s752 + $0x12] sm:$0xff]
      %v2568 = vld [vmem:[%s752 + $0x1a] sm:$0x1]
      %v2569 = vld [vmem:[%s752 + $0x22] sm:$0xff]
      %v2570 = vld [vmem:[%s752 + $0x2a] sm:$0x1]
      %v2571 = vld [vmem:[%s752 + $0x32] sm:$0xff]
      %v2572 = vld [vmem:[%s752 + $0x3a] sm:$0x1]
      %v2573 = vld [vmem:[%s752 + $0x42] sm:$0xff]
      %v2574 = vld [vmem:[%s752 + $0x4a] sm:$0x1]
      %v2575 = vld [vmem:[%s752 + $0x52] sm:$0xff]
      %v2576 = vld [vmem:[%s752 + $0x5a] sm:$0x1]
      %v2577 = vld [vmem:[%s752 + $0x62] sm:$0xff]
      %v2578 = vld [vmem:[%s752 + $0x6a] sm:$0x1]
      %v2579 = vld [vmem:[%s752 + $0x72] sm:$0xff]
      %v2580 = vld [vmem:[%s752 + $0x7a] sm:$0x1]
      %v2581 = vld [vmem:[%s752 + $0x82] sm:$0xff]
      %v2582 = vld [vmem:[%s752 + $0x8a] sm:$0x1]
      %v2583 = vld [vmem:[#allocation2 + $0xe] sm:$0x1]
      %v2584 = vlaneseq
      %v2585 = vshrl.u32 %v2584, 7
      %v2586 = vsub.s32 0, %v2585
      %v2587 = vrot.slane %v2583, %v2586
      %v2588 = vmul.f32 %v2565, %v2587
      %v2589 = vmul.f32 %v2566, %v2587
      %v2590 = vmul.f32 %v2567, %v2587
      %v2591 = vmul.f32 %v2568, %v2587
      %v2592 = vmul.f32 %v2569, %v2587
      %v2593 = vmul.f32 %v2570, %v2587
      %v2594 = vmul.f32 %v2571, %v2587
      %v2595 = vmul.f32 %v2572, %v2587
      %v2596 = vmul.f32 %v2573, %v2587
      %v2597 = vmul.f32 %v2574, %v2587
      %v2598 = vmul.f32 %v2575, %v2587
      %v2599 = vmul.f32 %v2576, %v2587
      %v2600 = vmul.f32 %v2577, %v2587
      %v2601 = vmul.f32 %v2578, %v2587
      %v2602 = vmul.f32 %v2579, %v2587
      %v2603 = vmul.f32 %v2580, %v2587
      %v2604 = vmul.f32 %v2581, %v2587
      %v2605 = vmul.f32 %v2582, %v2587
      %v2606 = vadd.f32 %v2547, %v2588
      %v2607 = vadd.f32 %v2548, %v2589
      %v2608 = vadd.f32 %v2549, %v2590
      %v2609 = vadd.f32 %v2550, %v2591
      %v2610 = vadd.f32 %v2551, %v2592
      %v2611 = vadd.f32 %v2552, %v2593
      %v2612 = vadd.f32 %v2553, %v2594
      %v2613 = vadd.f32 %v2554, %v2595
      %v2614 = vadd.f32 %v2555, %v2596
      %v2615 = vadd.f32 %v2556, %v2597
      %v2616 = vadd.f32 %v2557, %v2598
      %v2617 = vadd.f32 %v2558, %v2599
      %v2618 = vadd.f32 %v2559, %v2600
      %v2619 = vadd.f32 %v2560, %v2601
      %v2620 = vadd.f32 %v2561, %v2602
      %v2621 = vadd.f32 %v2562, %v2603
      %v2622 = vadd.f32 %v2563, %v2604
      %v2623 = vadd.f32 %v2564, %v2605
      %v2624 = vld [vmem:[%s752 + $0x3] sm:$0xff]
      %v2625 = vld [vmem:[%s752 + $0xb] sm:$0x1]
      %v2626 = vld [vmem:[%s752 + $0x13] sm:$0xff]
      %v2627 = vld [vmem:[%s752 + $0x1b] sm:$0x1]
      %v2628 = vld [vmem:[%s752 + $0x23] sm:$0xff]
      %v2629 = vld [vmem:[%s752 + $0x2b] sm:$0x1]
      %v2630 = vld [vmem:[%s752 + $0x33] sm:$0xff]
      %v2631 = vld [vmem:[%s752 + $0x3b] sm:$0x1]
      %v2632 = vld [vmem:[%s752 + $0x43] sm:$0xff]
      %v2633 = vld [vmem:[%s752 + $0x4b] sm:$0x1]
      %v2634 = vld [vmem:[%s752 + $0x53] sm:$0xff]
      %v2635 = vld [vmem:[%s752 + $0x5b] sm:$0x1]
      %v2636 = vld [vmem:[%s752 + $0x63] sm:$0xff]
      %v2637 = vld [vmem:[%s752 + $0x6b] sm:$0x1]
      %v2638 = vld [vmem:[%s752 + $0x73] sm:$0xff]
      %v2639 = vld [vmem:[%s752 + $0x7b] sm:$0x1]
      %v2640 = vld [vmem:[%s752 + $0x83] sm:$0xff]
      %v2641 = vld [vmem:[%s752 + $0x8b] sm:$0x1]
      %v2642 = vld [vmem:[#allocation2 + $0xf] sm:$0x1]
      %v2643 = vlaneseq
      %v2644 = vshrl.u32 %v2643, 7
      %v2645 = vsub.s32 0, %v2644
      %v2646 = vrot.slane %v2642, %v2645
      %v2647 = vmul.f32 %v2624, %v2646
      %v2648 = vmul.f32 %v2625, %v2646
      %v2649 = vmul.f32 %v2626, %v2646
      %v2650 = vmul.f32 %v2627, %v2646
      %v2651 = vmul.f32 %v2628, %v2646
      %v2652 = vmul.f32 %v2629, %v2646
      %v2653 = vmul.f32 %v2630, %v2646
      %v2654 = vmul.f32 %v2631, %v2646
      %v2655 = vmul.f32 %v2632, %v2646
      %v2656 = vmul.f32 %v2633, %v2646
      %v2657 = vmul.f32 %v2634, %v2646
      %v2658 = vmul.f32 %v2635, %v2646
      %v2659 = vmul.f32 %v2636, %v2646
      %v2660 = vmul.f32 %v2637, %v2646
      %v2661 = vmul.f32 %v2638, %v2646
      %v2662 = vmul.f32 %v2639, %v2646
      %v2663 = vmul.f32 %v2640, %v2646
      %v2664 = vmul.f32 %v2641, %v2646
      %v2665 = vadd.f32 %v2606, %v2647
      %v2666 = vadd.f32 %v2607, %v2648
      %v2667 = vadd.f32 %v2608, %v2649
      %v2668 = vadd.f32 %v2609, %v2650
      %v2669 = vadd.f32 %v2610, %v2651
      %v2670 = vadd.f32 %v2611, %v2652
      %v2671 = vadd.f32 %v2612, %v2653
      %v2672 = vadd.f32 %v2613, %v2654
      %v2673 = vadd.f32 %v2614, %v2655
      %v2674 = vadd.f32 %v2615, %v2656
      %v2675 = vadd.f32 %v2616, %v2657
      %v2676 = vadd.f32 %v2617, %v2658
      %v2677 = vadd.f32 %v2618, %v2659
      %v2678 = vadd.f32 %v2619, %v2660
      %v2679 = vadd.f32 %v2620, %v2661
      %v2680 = vadd.f32 %v2621, %v2662
      %v2681 = vadd.f32 %v2622, %v2663
      %v2682 = vadd.f32 %v2623, %v2664
      %v2683 = vld [vmem:[%s752 + $0x4] sm:$0xff]
      %v2684 = vld [vmem:[%s752 + $0xc] sm:$0x1]
      %v2685 = vld [vmem:[%s752 + $0x14] sm:$0xff]
      %v2686 = vld [vmem:[%s752 + $0x1c] sm:$0x1]
      %v2687 = vld [vmem:[%s752 + $0x24] sm:$0xff]
      %v2688 = vld [vmem:[%s752 + $0x2c] sm:$0x1]
      %v2689 = vld [vmem:[%s752 + $0x34] sm:$0xff]
      %v2690 = vld [vmem:[%s752 + $0x3c] sm:$0x1]
      %v2691 = vld [vmem:[%s752 + $0x44] sm:$0xff]
      %v2692 = vld [vmem:[%s752 + $0x4c] sm:$0x1]
      %v2693 = vld [vmem:[%s752 + $0x54] sm:$0xff]
      %v2694 = vld [vmem:[%s752 + $0x5c] sm:$0x1]
      %v2695 = vld [vmem:[%s752 + $0x64] sm:$0xff]
      %v2696 = vld [vmem:[%s752 + $0x6c] sm:$0x1]
      %v2697 = vld [vmem:[%s752 + $0x74] sm:$0xff]
      %v2698 = vld [vmem:[%s752 + $0x7c] sm:$0x1]
      %v2699 = vld [vmem:[%s752 + $0x84] sm:$0xff]
      %v2700 = vld [vmem:[%s752 + $0x8c] sm:$0x1]
      %v2701 = vld [vmem:[#allocation2 + $0x10] sm:$0x1]
      %v2702 = vlaneseq
      %v2703 = vshrl.u32 %v2702, 7
      %v2704 = vsub.s32 0, %v2703
      %v2705 = vrot.slane %v2701, %v2704
      %v2706 = vmul.f32 %v2683, %v2705
      %v2707 = vmul.f32 %v2684, %v2705
      %v2708 = vmul.f32 %v2685, %v2705
      %v2709 = vmul.f32 %v2686, %v2705
      %v2710 = vmul.f32 %v2687, %v2705
      %v2711 = vmul.f32 %v2688, %v2705
      %v2712 = vmul.f32 %v2689, %v2705
      %v2713 = vmul.f32 %v2690, %v2705
      %v2714 = vmul.f32 %v2691, %v2705
      %v2715 = vmul.f32 %v2692, %v2705
      %v2716 = vmul.f32 %v2693, %v2705
      %v2717 = vmul.f32 %v2694, %v2705
      %v2718 = vmul.f32 %v2695, %v2705
      %v2719 = vmul.f32 %v2696, %v2705
      %v2720 = vmul.f32 %v2697, %v2705
      %v2721 = vmul.f32 %v2698, %v2705
      %v2722 = vmul.f32 %v2699, %v2705
      %v2723 = vmul.f32 %v2700, %v2705
      %v2724 = vadd.f32 %v2665, %v2706
      %v2725 = vadd.f32 %v2666, %v2707
      %v2726 = vadd.f32 %v2667, %v2708
      %v2727 = vadd.f32 %v2668, %v2709
      %v2728 = vadd.f32 %v2669, %v2710
      %v2729 = vadd.f32 %v2670, %v2711
      %v2730 = vadd.f32 %v2671, %v2712
      %v2731 = vadd.f32 %v2672, %v2713
      %v2732 = vadd.f32 %v2673, %v2714
      %v2733 = vadd.f32 %v2674, %v2715
      %v2734 = vadd.f32 %v2675, %v2716
      %v2735 = vadd.f32 %v2676, %v2717
      %v2736 = vadd.f32 %v2677, %v2718
      %v2737 = vadd.f32 %v2678, %v2719
      %v2738 = vadd.f32 %v2679, %v2720
      %v2739 = vadd.f32 %v2680, %v2721
      %v2740 = vadd.f32 %v2681, %v2722
      %v2741 = vadd.f32 %v2682, %v2723
      %v2742 = vld [vmem:[%s752 + $0x5] sm:$0xff]
      %v2743 = vld [vmem:[%s752 + $0xd] sm:$0x1]
      %v2744 = vld [vmem:[%s752 + $0x15] sm:$0xff]
      %v2745 = vld [vmem:[%s752 + $0x1d] sm:$0x1]
      %v2746 = vld [vmem:[%s752 + $0x25] sm:$0xff]
      %v2747 = vld [vmem:[%s752 + $0x2d] sm:$0x1]
      %v2748 = vld [vmem:[%s752 + $0x35] sm:$0xff]
      %v2749 = vld [vmem:[%s752 + $0x3d] sm:$0x1]
      %v2750 = vld [vmem:[%s752 + $0x45] sm:$0xff]
      %v2751 = vld [vmem:[%s752 + $0x4d] sm:$0x1]
      %v2752 = vld [vmem:[%s752 + $0x55] sm:$0xff]
      %v2753 = vld [vmem:[%s752 + $0x5d] sm:$0x1]
      %v2754 = vld [vmem:[%s752 + $0x65] sm:$0xff]
      %v2755 = vld [vmem:[%s752 + $0x6d] sm:$0x1]
      %v2756 = vld [vmem:[%s752 + $0x75] sm:$0xff]
      %v2757 = vld [vmem:[%s752 + $0x7d] sm:$0x1]
      %v2758 = vld [vmem:[%s752 + $0x85] sm:$0xff]
      %v2759 = vld [vmem:[%s752 + $0x8d] sm:$0x1]
      %v2760 = vld [vmem:[#allocation2 + $0x11] sm:$0x1]
      %v2761 = vlaneseq
      %v2762 = vshrl.u32 %v2761, 7
      %v2763 = vsub.s32 0, %v2762
      %v2764 = vrot.slane %v2760, %v2763
      %v2765 = vmul.f32 %v2742, %v2764
      %v2766 = vmul.f32 %v2743, %v2764
      %v2767 = vmul.f32 %v2744, %v2764
      %v2768 = vmul.f32 %v2745, %v2764
      %v2769 = vmul.f32 %v2746, %v2764
      %v2770 = vmul.f32 %v2747, %v2764
      %v2771 = vmul.f32 %v2748, %v2764
      %v2772 = vmul.f32 %v2749, %v2764
      %v2773 = vmul.f32 %v2750, %v2764
      %v2774 = vmul.f32 %v2751, %v2764
      %v2775 = vmul.f32 %v2752, %v2764
      %v2776 = vmul.f32 %v2753, %v2764
      %v2777 = vmul.f32 %v2754, %v2764
      %v2778 = vmul.f32 %v2755, %v2764
      %v2779 = vmul.f32 %v2756, %v2764
      %v2780 = vmul.f32 %v2757, %v2764
      %v2781 = vmul.f32 %v2758, %v2764
      %v2782 = vmul.f32 %v2759, %v2764
      %v2783 = vadd.f32 %v2724, %v2765
      %v2784 = vadd.f32 %v2725, %v2766
      %v2785 = vadd.f32 %v2726, %v2767
      %v2786 = vadd.f32 %v2727, %v2768
      %v2787 = vadd.f32 %v2728, %v2769
      %v2788 = vadd.f32 %v2729, %v2770
      %v2789 = vadd.f32 %v2730, %v2771
      %v2790 = vadd.f32 %v2731, %v2772
      %v2791 = vadd.f32 %v2732, %v2773
      %v2792 = vadd.f32 %v2733, %v2774
      %v2793 = vadd.f32 %v2734, %v2775
      %v2794 = vadd.f32 %v2735, %v2776
      %v2795 = vadd.f32 %v2736, %v2777
      %v2796 = vadd.f32 %v2737, %v2778
      %v2797 = vadd.f32 %v2738, %v2779
      %v2798 = vadd.f32 %v2739, %v2780
      %v2799 = vadd.f32 %v2740, %v2781
      %v2800 = vadd.f32 %v2741, %v2782
      %v2801 = vld [vmem:[%s839] sm:$0xff]
      %v2802 = vld [vmem:[%s839 + $0x8] sm:$0x1]
      %v2803 = vld [vmem:[%s839 + $0x10] sm:$0xff]
      %v2804 = vld [vmem:[%s839 + $0x18] sm:$0x1]
      %v2805 = vld [vmem:[%s839 + $0x20] sm:$0xff]
      %v2806 = vld [vmem:[%s839 + $0x28] sm:$0x1]
      %v2807 = vld [vmem:[%s839 + $0x30] sm:$0xff]
      %v2808 = vld [vmem:[%s839 + $0x38] sm:$0x1]
      %v2809 = vld [vmem:[%s839 + $0x40] sm:$0xff]
      %v2810 = vld [vmem:[%s839 + $0x48] sm:$0x1]
      %v2811 = vld [vmem:[%s839 + $0x50] sm:$0xff]
      %v2812 = vld [vmem:[%s839 + $0x58] sm:$0x1]
      %v2813 = vld [vmem:[%s839 + $0x60] sm:$0xff]
      %v2814 = vld [vmem:[%s839 + $0x68] sm:$0x1]
      %v2815 = vld [vmem:[%s839 + $0x70] sm:$0xff]
      %v2816 = vld [vmem:[%s839 + $0x78] sm:$0x1]
      %v2817 = vld [vmem:[%s839 + $0x80] sm:$0xff]
      %v2818 = vld [vmem:[%s839 + $0x88] sm:$0x1]
      %v2819 = vld [vmem:[#allocation2 + $0x12] sm:$0x1]
      %v2820 = vlaneseq
      %v2821 = vshrl.u32 %v2820, 7
      %v2822 = vsub.s32 0, %v2821
      %v2823 = vrot.slane %v2819, %v2822
      %v2824 = vmul.f32 %v2801, %v2823
      %v2825 = vmul.f32 %v2802, %v2823
      %v2826 = vmul.f32 %v2803, %v2823
      %v2827 = vmul.f32 %v2804, %v2823
      %v2828 = vmul.f32 %v2805, %v2823
      %v2829 = vmul.f32 %v2806, %v2823
      %v2830 = vmul.f32 %v2807, %v2823
      %v2831 = vmul.f32 %v2808, %v2823
      %v2832 = vmul.f32 %v2809, %v2823
      %v2833 = vmul.f32 %v2810, %v2823
      %v2834 = vmul.f32 %v2811, %v2823
      %v2835 = vmul.f32 %v2812, %v2823
      %v2836 = vmul.f32 %v2813, %v2823
      %v2837 = vmul.f32 %v2814, %v2823
      %v2838 = vmul.f32 %v2815, %v2823
      %v2839 = vmul.f32 %v2816, %v2823
      %v2840 = vmul.f32 %v2817, %v2823
      %v2841 = vmul.f32 %v2818, %v2823
      %v2842 = vadd.f32 %v2783, %v2824
      %v2843 = vadd.f32 %v2784, %v2825
      %v2844 = vadd.f32 %v2785, %v2826
      %v2845 = vadd.f32 %v2786, %v2827
      %v2846 = vadd.f32 %v2787, %v2828
      %v2847 = vadd.f32 %v2788, %v2829
      %v2848 = vadd.f32 %v2789, %v2830
      %v2849 = vadd.f32 %v2790, %v2831
      %v2850 = vadd.f32 %v2791, %v2832
      %v2851 = vadd.f32 %v2792, %v2833
      %v2852 = vadd.f32 %v2793, %v2834
      %v2853 = vadd.f32 %v2794, %v2835
      %v2854 = vadd.f32 %v2795, %v2836
      %v2855 = vadd.f32 %v2796, %v2837
      %v2856 = vadd.f32 %v2797, %v2838
      %v2857 = vadd.f32 %v2798, %v2839
      %v2858 = vadd.f32 %v2799, %v2840
      %v2859 = vadd.f32 %v2800, %v2841
      %v2860 = vld [vmem:[%s839 + $0x1] sm:$0xff]
      %v2861 = vld [vmem:[%s839 + $0x9] sm:$0x1]
      %v2862 = vld [vmem:[%s839 + $0x11] sm:$0xff]
      %v2863 = vld [vmem:[%s839 + $0x19] sm:$0x1]
      %v2864 = vld [vmem:[%s839 + $0x21] sm:$0xff]
      %v2865 = vld [vmem:[%s839 + $0x29] sm:$0x1]
      %v2866 = vld [vmem:[%s839 + $0x31] sm:$0xff]
      %v2867 = vld [vmem:[%s839 + $0x39] sm:$0x1]
      %v2868 = vld [vmem:[%s839 + $0x41] sm:$0xff]
      %v2869 = vld [vmem:[%s839 + $0x49] sm:$0x1]
      %v2870 = vld [vmem:[%s839 + $0x51] sm:$0xff]
      %v2871 = vld [vmem:[%s839 + $0x59] sm:$0x1]
      %v2872 = vld [vmem:[%s839 + $0x61] sm:$0xff]
      %v2873 = vld [vmem:[%s839 + $0x69] sm:$0x1]
      %v2874 = vld [vmem:[%s839 + $0x71] sm:$0xff]
      %v2875 = vld [vmem:[%s839 + $0x79] sm:$0x1]
      %v2876 = vld [vmem:[%s839 + $0x81] sm:$0xff]
      %v2877 = vld [vmem:[%s839 + $0x89] sm:$0x1]
      %v2878 = vld [vmem:[#allocation2 + $0x13] sm:$0x1]
      %v2879 = vlaneseq
      %v2880 = vshrl.u32 %v2879, 7
      %v2881 = vsub.s32 0, %v2880
      %v2882 = vrot.slane %v2878, %v2881
      %v2883 = vmul.f32 %v2860, %v2882
      %v2884 = vmul.f32 %v2861, %v2882
      %v2885 = vmul.f32 %v2862, %v2882
      %v2886 = vmul.f32 %v2863, %v2882
      %v2887 = vmul.f32 %v2864, %v2882
      %v2888 = vmul.f32 %v2865, %v2882
      %v2889 = vmul.f32 %v2866, %v2882
      %v2890 = vmul.f32 %v2867, %v2882
      %v2891 = vmul.f32 %v2868, %v2882
      %v2892 = vmul.f32 %v2869, %v2882
      %v2893 = vmul.f32 %v2870, %v2882
      %v2894 = vmul.f32 %v2871, %v2882
      %v2895 = vmul.f32 %v2872, %v2882
      %v2896 = vmul.f32 %v2873, %v2882
      %v2897 = vmul.f32 %v2874, %v2882
      %v2898 = vmul.f32 %v2875, %v2882
      %v2899 = vmul.f32 %v2876, %v2882
      %v2900 = vmul.f32 %v2877, %v2882
      %v2901 = vadd.f32 %v2842, %v2883
      %v2902 = vadd.f32 %v2843, %v2884
      %v2903 = vadd.f32 %v2844, %v2885
      %v2904 = vadd.f32 %v2845, %v2886
      %v2905 = vadd.f32 %v2846, %v2887
      %v2906 = vadd.f32 %v2847, %v2888
      %v2907 = vadd.f32 %v2848, %v2889
      %v2908 = vadd.f32 %v2849, %v2890
      %v2909 = vadd.f32 %v2850, %v2891
      %v2910 = vadd.f32 %v2851, %v2892
      %v2911 = vadd.f32 %v2852, %v2893
      %v2912 = vadd.f32 %v2853, %v2894
      %v2913 = vadd.f32 %v2854, %v2895
      %v2914 = vadd.f32 %v2855, %v2896
      %v2915 = vadd.f32 %v2856, %v2897
      %v2916 = vadd.f32 %v2857, %v2898
      %v2917 = vadd.f32 %v2858, %v2899
      %v2918 = vadd.f32 %v2859, %v2900
      %v2919 = vld [vmem:[%s839 + $0x2] sm:$0xff]
      %v2920 = vld [vmem:[%s839 + $0xa] sm:$0x1]
      %v2921 = vld [vmem:[%s839 + $0x12] sm:$0xff]
      %v2922 = vld [vmem:[%s839 + $0x1a] sm:$0x1]
      %v2923 = vld [vmem:[%s839 + $0x22] sm:$0xff]
      %v2924 = vld [vmem:[%s839 + $0x2a] sm:$0x1]
      %v2925 = vld [vmem:[%s839 + $0x32] sm:$0xff]
      %v2926 = vld [vmem:[%s839 + $0x3a] sm:$0x1]
      %v2927 = vld [vmem:[%s839 + $0x42] sm:$0xff]
      %v2928 = vld [vmem:[%s839 + $0x4a] sm:$0x1]
      %v2929 = vld [vmem:[%s839 + $0x52] sm:$0xff]
      %v2930 = vld [vmem:[%s839 + $0x5a] sm:$0x1]
      %v2931 = vld [vmem:[%s839 + $0x62] sm:$0xff]
      %v2932 = vld [vmem:[%s839 + $0x6a] sm:$0x1]
      %v2933 = vld [vmem:[%s839 + $0x72] sm:$0xff]
      %v2934 = vld [vmem:[%s839 + $0x7a] sm:$0x1]
      %v2935 = vld [vmem:[%s839 + $0x82] sm:$0xff]
      %v2936 = vld [vmem:[%s839 + $0x8a] sm:$0x1]
      %v2937 = vld [vmem:[#allocation2 + $0x14] sm:$0x1]
      %v2938 = vlaneseq
      %v2939 = vshrl.u32 %v2938, 7
      %v2940 = vsub.s32 0, %v2939
      %v2941 = vrot.slane %v2937, %v2940
      %v2942 = vmul.f32 %v2919, %v2941
      %v2943 = vmul.f32 %v2920, %v2941
      %v2944 = vmul.f32 %v2921, %v2941
      %v2945 = vmul.f32 %v2922, %v2941
      %v2946 = vmul.f32 %v2923, %v2941
      %v2947 = vmul.f32 %v2924, %v2941
      %v2948 = vmul.f32 %v2925, %v2941
      %v2949 = vmul.f32 %v2926, %v2941
      %v2950 = vmul.f32 %v2927, %v2941
      %v2951 = vmul.f32 %v2928, %v2941
      %v2952 = vmul.f32 %v2929, %v2941
      %v2953 = vmul.f32 %v2930, %v2941
      %v2954 = vmul.f32 %v2931, %v2941
      %v2955 = vmul.f32 %v2932, %v2941
      %v2956 = vmul.f32 %v2933, %v2941
      %v2957 = vmul.f32 %v2934, %v2941
      %v2958 = vmul.f32 %v2935, %v2941
      %v2959 = vmul.f32 %v2936, %v2941
      %v2960 = vadd.f32 %v2901, %v2942
      %v2961 = vadd.f32 %v2902, %v2943
      %v2962 = vadd.f32 %v2903, %v2944
      %v2963 = vadd.f32 %v2904, %v2945
      %v2964 = vadd.f32 %v2905, %v2946
      %v2965 = vadd.f32 %v2906, %v2947
      %v2966 = vadd.f32 %v2907, %v2948
      %v2967 = vadd.f32 %v2908, %v2949
      %v2968 = vadd.f32 %v2909, %v2950
      %v2969 = vadd.f32 %v2910, %v2951
      %v2970 = vadd.f32 %v2911, %v2952
      %v2971 = vadd.f32 %v2912, %v2953
      %v2972 = vadd.f32 %v2913, %v2954
      %v2973 = vadd.f32 %v2914, %v2955
      %v2974 = vadd.f32 %v2915, %v2956
      %v2975 = vadd.f32 %v2916, %v2957
      %v2976 = vadd.f32 %v2917, %v2958
      %v2977 = vadd.f32 %v2918, %v2959
      %v2978 = vld [vmem:[%s839 + $0x3] sm:$0xff]
      %v2979 = vld [vmem:[%s839 + $0xb] sm:$0x1]
      %v2980 = vld [vmem:[%s839 + $0x13] sm:$0xff]
      %v2981 = vld [vmem:[%s839 + $0x1b] sm:$0x1]
      %v2982 = vld [vmem:[%s839 + $0x23] sm:$0xff]
      %v2983 = vld [vmem:[%s839 + $0x2b] sm:$0x1]
      %v2984 = vld [vmem:[%s839 + $0x33] sm:$0xff]
      %v2985 = vld [vmem:[%s839 + $0x3b] sm:$0x1]
      %v2986 = vld [vmem:[%s839 + $0x43] sm:$0xff]
      %v2987 = vld [vmem:[%s839 + $0x4b] sm:$0x1]
      %v2988 = vld [vmem:[%s839 + $0x53] sm:$0xff]
      %v2989 = vld [vmem:[%s839 + $0x5b] sm:$0x1]
      %v2990 = vld [vmem:[%s839 + $0x63] sm:$0xff]
      %v2991 = vld [vmem:[%s839 + $0x6b] sm:$0x1]
      %v2992 = vld [vmem:[%s839 + $0x73] sm:$0xff]
      %v2993 = vld [vmem:[%s839 + $0x7b] sm:$0x1]
      %v2994 = vld [vmem:[%s839 + $0x83] sm:$0xff]
      %v2995 = vld [vmem:[%s839 + $0x8b] sm:$0x1]
      %v2996 = vld [vmem:[#allocation2 + $0x15] sm:$0x1]
      %v2997 = vlaneseq
      %v2998 = vshrl.u32 %v2997, 7
      %v2999 = vsub.s32 0, %v2998
      %v3000 = vrot.slane %v2996, %v2999
      %v3001 = vmul.f32 %v2978, %v3000
      %v3002 = vmul.f32 %v2979, %v3000
      %v3003 = vmul.f32 %v2980, %v3000
      %v3004 = vmul.f32 %v2981, %v3000
      %v3005 = vmul.f32 %v2982, %v3000
      %v3006 = vmul.f32 %v2983, %v3000
      %v3007 = vmul.f32 %v2984, %v3000
      %v3008 = vmul.f32 %v2985, %v3000
      %v3009 = vmul.f32 %v2986, %v3000
      %v3010 = vmul.f32 %v2987, %v3000
      %v3011 = vmul.f32 %v2988, %v3000
      %v3012 = vmul.f32 %v2989, %v3000
      %v3013 = vmul.f32 %v2990, %v3000
      %v3014 = vmul.f32 %v2991, %v3000
      %v3015 = vmul.f32 %v2992, %v3000
      %v3016 = vmul.f32 %v2993, %v3000
      %v3017 = vmul.f32 %v2994, %v3000
      %v3018 = vmul.f32 %v2995, %v3000
      %v3019 = vadd.f32 %v2960, %v3001
      %v3020 = vadd.f32 %v2961, %v3002
      %v3021 = vadd.f32 %v2962, %v3003
      %v3022 = vadd.f32 %v2963, %v3004
      %v3023 = vadd.f32 %v2964, %v3005
      %v3024 = vadd.f32 %v2965, %v3006
      %v3025 = vadd.f32 %v2966, %v3007
      %v3026 = vadd.f32 %v2967, %v3008
      %v3027 = vadd.f32 %v2968, %v3009
      %v3028 = vadd.f32 %v2969, %v3010
      %v3029 = vadd.f32 %v2970, %v3011
      %v3030 = vadd.f32 %v2971, %v3012
      %v3031 = vadd.f32 %v2972, %v3013
      %v3032 = vadd.f32 %v2973, %v3014
      %v3033 = vadd.f32 %v2974, %v3015
      %v3034 = vadd.f32 %v2975, %v3016
      %v3035 = vadd.f32 %v2976, %v3017
      %v3036 = vadd.f32 %v2977, %v3018
      %v3037 = vld [vmem:[%s839 + $0x4] sm:$0xff]
      %v3038 = vld [vmem:[%s839 + $0xc] sm:$0x1]
      %v3039 = vld [vmem:[%s839 + $0x14] sm:$0xff]
      %v3040 = vld [vmem:[%s839 + $0x1c] sm:$0x1]
      %v3041 = vld [vmem:[%s839 + $0x24] sm:$0xff]
      %v3042 = vld [vmem:[%s839 + $0x2c] sm:$0x1]
      %v3043 = vld [vmem:[%s839 + $0x34] sm:$0xff]
      %v3044 = vld [vmem:[%s839 + $0x3c] sm:$0x1]
      %v3045 = vld [vmem:[%s839 + $0x44] sm:$0xff]
      %v3046 = vld [vmem:[%s839 + $0x4c] sm:$0x1]
      %v3047 = vld [vmem:[%s839 + $0x54] sm:$0xff]
      %v3048 = vld [vmem:[%s839 + $0x5c] sm:$0x1]
      %v3049 = vld [vmem:[%s839 + $0x64] sm:$0xff]
      %v3050 = vld [vmem:[%s839 + $0x6c] sm:$0x1]
      %v3051 = vld [vmem:[%s839 + $0x74] sm:$0xff]
      %v3052 = vld [vmem:[%s839 + $0x7c] sm:$0x1]
      %v3053 = vld [vmem:[%s839 + $0x84] sm:$0xff]
      %v3054 = vld [vmem:[%s839 + $0x8c] sm:$0x1]
      %v3055 = vld [vmem:[#allocation2 + $0x16] sm:$0x1]
      %v3056 = vlaneseq
      %v3057 = vshrl.u32 %v3056, 7
      %v3058 = vsub.s32 0, %v3057
      %v3059 = vrot.slane %v3055, %v3058
      %v3060 = vmul.f32 %v3037, %v3059
      %v3061 = vmul.f32 %v3038, %v3059
      %v3062 = vmul.f32 %v3039, %v3059
      %v3063 = vmul.f32 %v3040, %v3059
      %v3064 = vmul.f32 %v3041, %v3059
      %v3065 = vmul.f32 %v3042, %v3059
      %v3066 = vmul.f32 %v3043, %v3059
      %v3067 = vmul.f32 %v3044, %v3059
      %v3068 = vmul.f32 %v3045, %v3059
      %v3069 = vmul.f32 %v3046, %v3059
      %v3070 = vmul.f32 %v3047, %v3059
      %v3071 = vmul.f32 %v3048, %v3059
      %v3072 = vmul.f32 %v3049, %v3059
      %v3073 = vmul.f32 %v3050, %v3059
      %v3074 = vmul.f32 %v3051, %v3059
      %v3075 = vmul.f32 %v3052, %v3059
      %v3076 = vmul.f32 %v3053, %v3059
      %v3077 = vmul.f32 %v3054, %v3059
      %v3078 = vadd.f32 %v3019, %v3060
      %v3079 = vadd.f32 %v3020, %v3061
      %v3080 = vadd.f32 %v3021, %v3062
      %v3081 = vadd.f32 %v3022, %v3063
      %v3082 = vadd.f32 %v3023, %v3064
      %v3083 = vadd.f32 %v3024, %v3065
      %v3084 = vadd.f32 %v3025, %v3066
      %v3085 = vadd.f32 %v3026, %v3067
      %v3086 = vadd.f32 %v3027, %v3068
      %v3087 = vadd.f32 %v3028, %v3069
      %v3088 = vadd.f32 %v3029, %v3070
      %v3089 = vadd.f32 %v3030, %v3071
      %v3090 = vadd.f32 %v3031, %v3072
      %v3091 = vadd.f32 %v3032, %v3073
      %v3092 = vadd.f32 %v3033, %v3074
      %v3093 = vadd.f32 %v3034, %v3075
      %v3094 = vadd.f32 %v3035, %v3076
      %v3095 = vadd.f32 %v3036, %v3077
      %v3096 = vld [vmem:[%s839 + $0x5] sm:$0xff]
      %v3097 = vld [vmem:[%s839 + $0xd] sm:$0x1]
      %v3098 = vld [vmem:[%s839 + $0x15] sm:$0xff]
      %v3099 = vld [vmem:[%s839 + $0x1d] sm:$0x1]
      %v3100 = vld [vmem:[%s839 + $0x25] sm:$0xff]
      %v3101 = vld [vmem:[%s839 + $0x2d] sm:$0x1]
      %v3102 = vld [vmem:[%s839 + $0x35] sm:$0xff]
      %v3103 = vld [vmem:[%s839 + $0x3d] sm:$0x1]
      %v3104 = vld [vmem:[%s839 + $0x45] sm:$0xff]
      %v3105 = vld [vmem:[%s839 + $0x4d] sm:$0x1]
      %v3106 = vld [vmem:[%s839 + $0x55] sm:$0xff]
      %v3107 = vld [vmem:[%s839 + $0x5d] sm:$0x1]
      %v3108 = vld [vmem:[%s839 + $0x65] sm:$0xff]
      %v3109 = vld [vmem:[%s839 + $0x6d] sm:$0x1]
      %v3110 = vld [vmem:[%s839 + $0x75] sm:$0xff]
      %v3111 = vld [vmem:[%s839 + $0x7d] sm:$0x1]
      %v3112 = vld [vmem:[%s839 + $0x85] sm:$0xff]
      %v3113 = vld [vmem:[%s839 + $0x8d] sm:$0x1]
      %v3114 = vld [vmem:[#allocation2 + $0x17] sm:$0x1]
      %v3115 = vlaneseq
      %v3116 = vshrl.u32 %v3115, 7
      %v3117 = vsub.s32 0, %v3116
      %v3118 = vrot.slane %v3114, %v3117
      %v3119 = vmul.f32 %v3096, %v3118
      %v3120 = vmul.f32 %v3097, %v3118
      %v3121 = vmul.f32 %v3098, %v3118
      %v3122 = vmul.f32 %v3099, %v3118
      %v3123 = vmul.f32 %v3100, %v3118
      %v3124 = vmul.f32 %v3101, %v3118
      %v3125 = vmul.f32 %v3102, %v3118
      %v3126 = vmul.f32 %v3103, %v3118
      %v3127 = vmul.f32 %v3104, %v3118
      %v3128 = vmul.f32 %v3105, %v3118
      %v3129 = vmul.f32 %v3106, %v3118
      %v3130 = vmul.f32 %v3107, %v3118
      %v3131 = vmul.f32 %v3108, %v3118
      %v3132 = vmul.f32 %v3109, %v3118
      %v3133 = vmul.f32 %v3110, %v3118
      %v3134 = vmul.f32 %v3111, %v3118
      %v3135 = vmul.f32 %v3112, %v3118
      %v3136 = vmul.f32 %v3113, %v3118
      %v3137 = vadd.f32 %v3078, %v3119
      %v3138 = vadd.f32 %v3079, %v3120
      %v3139 = vadd.f32 %v3080, %v3121
      %v3140 = vadd.f32 %v3081, %v3122
      %v3141 = vadd.f32 %v3082, %v3123
      %v3142 = vadd.f32 %v3083, %v3124
      %v3143 = vadd.f32 %v3084, %v3125
      %v3144 = vadd.f32 %v3085, %v3126
      %v3145 = vadd.f32 %v3086, %v3127
      %v3146 = vadd.f32 %v3087, %v3128
      %v3147 = vadd.f32 %v3088, %v3129
      %v3148 = vadd.f32 %v3089, %v3130
      %v3149 = vadd.f32 %v3090, %v3131
      %v3150 = vadd.f32 %v3091, %v3132
      %v3151 = vadd.f32 %v3092, %v3133
      %v3152 = vadd.f32 %v3093, %v3134
      %v3153 = vadd.f32 %v3094, %v3135
      %v3154 = vadd.f32 %v3095, %v3136
      %v3155 = vld [vmem:[%s925] sm:$0xff]
      %v3156 = vld [vmem:[%s925 + $0x8] sm:$0x1]
      %v3157 = vld [vmem:[%s925 + $0x10] sm:$0xff]
      %v3158 = vld [vmem:[%s925 + $0x18] sm:$0x1]
      %v3159 = vld [vmem:[%s925 + $0x20] sm:$0xff]
      %v3160 = vld [vmem:[%s925 + $0x28] sm:$0x1]
      %v3161 = vld [vmem:[%s925 + $0x30] sm:$0xff]
      %v3162 = vld [vmem:[%s925 + $0x38] sm:$0x1]
      %v3163 = vld [vmem:[%s925 + $0x40] sm:$0xff]
      %v3164 = vld [vmem:[%s925 + $0x48] sm:$0x1]
      %v3165 = vld [vmem:[%s925 + $0x50] sm:$0xff]
      %v3166 = vld [vmem:[%s925 + $0x58] sm:$0x1]
      %v3167 = vld [vmem:[%s925 + $0x60] sm:$0xff]
      %v3168 = vld [vmem:[%s925 + $0x68] sm:$0x1]
      %v3169 = vld [vmem:[%s925 + $0x70] sm:$0xff]
      %v3170 = vld [vmem:[%s925 + $0x78] sm:$0x1]
      %v3171 = vld [vmem:[%s925 + $0x80] sm:$0xff]
      %v3172 = vld [vmem:[%s925 + $0x88] sm:$0x1]
      %v3173 = vld [vmem:[#allocation2 + $0x18] sm:$0x1]
      %v3174 = vlaneseq
      %v3175 = vshrl.u32 %v3174, 7
      %v3176 = vsub.s32 0, %v3175
      %v3177 = vrot.slane %v3173, %v3176
      %v3178 = vmul.f32 %v3155, %v3177
      %v3179 = vmul.f32 %v3156, %v3177
      %v3180 = vmul.f32 %v3157, %v3177
      %v3181 = vmul.f32 %v3158, %v3177
      %v3182 = vmul.f32 %v3159, %v3177
      %v3183 = vmul.f32 %v3160, %v3177
      %v3184 = vmul.f32 %v3161, %v3177
      %v3185 = vmul.f32 %v3162, %v3177
      %v3186 = vmul.f32 %v3163, %v3177
      %v3187 = vmul.f32 %v3164, %v3177
      %v3188 = vmul.f32 %v3165, %v3177
      %v3189 = vmul.f32 %v3166, %v3177
      %v3190 = vmul.f32 %v3167, %v3177
      %v3191 = vmul.f32 %v3168, %v3177
      %v3192 = vmul.f32 %v3169, %v3177
      %v3193 = vmul.f32 %v3170, %v3177
      %v3194 = vmul.f32 %v3171, %v3177
      %v3195 = vmul.f32 %v3172, %v3177
      %v3196 = vadd.f32 %v3137, %v3178
      %v3197 = vadd.f32 %v3138, %v3179
      %v3198 = vadd.f32 %v3139, %v3180
      %v3199 = vadd.f32 %v3140, %v3181
      %v3200 = vadd.f32 %v3141, %v3182
      %v3201 = vadd.f32 %v3142, %v3183
      %v3202 = vadd.f32 %v3143, %v3184
      %v3203 = vadd.f32 %v3144, %v3185
      %v3204 = vadd.f32 %v3145, %v3186
      %v3205 = vadd.f32 %v3146, %v3187
      %v3206 = vadd.f32 %v3147, %v3188
      %v3207 = vadd.f32 %v3148, %v3189
      %v3208 = vadd.f32 %v3149, %v3190
      %v3209 = vadd.f32 %v3150, %v3191
      %v3210 = vadd.f32 %v3151, %v3192
      %v3211 = vadd.f32 %v3152, %v3193
      %v3212 = vadd.f32 %v3153, %v3194
      %v3213 = vadd.f32 %v3154, %v3195
      %v3214 = vld [vmem:[%s925 + $0x1] sm:$0xff]
      %v3215 = vld [vmem:[%s925 + $0x9] sm:$0x1]
      %v3216 = vld [vmem:[%s925 + $0x11] sm:$0xff]
      %v3217 = vld [vmem:[%s925 + $0x19] sm:$0x1]
      %v3218 = vld [vmem:[%s925 + $0x21] sm:$0xff]
      %v3219 = vld [vmem:[%s925 + $0x29] sm:$0x1]
      %v3220 = vld [vmem:[%s925 + $0x31] sm:$0xff]
      %v3221 = vld [vmem:[%s925 + $0x39] sm:$0x1]
      %v3222 = vld [vmem:[%s925 + $0x41] sm:$0xff]
      %v3223 = vld [vmem:[%s925 + $0x49] sm:$0x1]
      %v3224 = vld [vmem:[%s925 + $0x51] sm:$0xff]
      %v3225 = vld [vmem:[%s925 + $0x59] sm:$0x1]
      %v3226 = vld [vmem:[%s925 + $0x61] sm:$0xff]
      %v3227 = vld [vmem:[%s925 + $0x69] sm:$0x1]
      %v3228 = vld [vmem:[%s925 + $0x71] sm:$0xff]
      %v3229 = vld [vmem:[%s925 + $0x79] sm:$0x1]
      %v3230 = vld [vmem:[%s925 + $0x81] sm:$0xff]
      %v3231 = vld [vmem:[%s925 + $0x89] sm:$0x1]
      %v3232 = vld [vmem:[#allocation2 + $0x19] sm:$0x1]
      %v3233 = vlaneseq
      %v3234 = vshrl.u32 %v3233, 7
      %v3235 = vsub.s32 0, %v3234
      %v3236 = vrot.slane %v3232, %v3235
      %v3237 = vmul.f32 %v3214, %v3236
      %v3238 = vmul.f32 %v3215, %v3236
      %v3239 = vmul.f32 %v3216, %v3236
      %v3240 = vmul.f32 %v3217, %v3236
      %v3241 = vmul.f32 %v3218, %v3236
      %v3242 = vmul.f32 %v3219, %v3236
      %v3243 = vmul.f32 %v3220, %v3236
      %v3244 = vmul.f32 %v3221, %v3236
      %v3245 = vmul.f32 %v3222, %v3236
      %v3246 = vmul.f32 %v3223, %v3236
      %v3247 = vmul.f32 %v3224, %v3236
      %v3248 = vmul.f32 %v3225, %v3236
      %v3249 = vmul.f32 %v3226, %v3236
      %v3250 = vmul.f32 %v3227, %v3236
      %v3251 = vmul.f32 %v3228, %v3236
      %v3252 = vmul.f32 %v3229, %v3236
      %v3253 = vmul.f32 %v3230, %v3236
      %v3254 = vmul.f32 %v3231, %v3236
      %v3255 = vadd.f32 %v3196, %v3237
      %v3256 = vadd.f32 %v3197, %v3238
      %v3257 = vadd.f32 %v3198, %v3239
      %v3258 = vadd.f32 %v3199, %v3240
      %v3259 = vadd.f32 %v3200, %v3241
      %v3260 = vadd.f32 %v3201, %v3242
      %v3261 = vadd.f32 %v3202, %v3243
      %v3262 = vadd.f32 %v3203, %v3244
      %v3263 = vadd.f32 %v3204, %v3245
      %v3264 = vadd.f32 %v3205, %v3246
      %v3265 = vadd.f32 %v3206, %v3247
      %v3266 = vadd.f32 %v3207, %v3248
      %v3267 = vadd.f32 %v3208, %v3249
      %v3268 = vadd.f32 %v3209, %v3250
      %v3269 = vadd.f32 %v3210, %v3251
      %v3270 = vadd.f32 %v3211, %v3252
      %v3271 = vadd.f32 %v3212, %v3253
      %v3272 = vadd.f32 %v3213, %v3254
      %v3273 = vld [vmem:[%s925 + $0x2] sm:$0xff]
      %v3274 = vld [vmem:[%s925 + $0xa] sm:$0x1]
      %v3275 = vld [vmem:[%s925 + $0x12] sm:$0xff]
      %v3276 = vld [vmem:[%s925 + $0x1a] sm:$0x1]
      %v3277 = vld [vmem:[%s925 + $0x22] sm:$0xff]
      %v3278 = vld [vmem:[%s925 + $0x2a] sm:$0x1]
      %v3279 = vld [vmem:[%s925 + $0x32] sm:$0xff]
      %v3280 = vld [vmem:[%s925 + $0x3a] sm:$0x1]
      %v3281 = vld [vmem:[%s925 + $0x42] sm:$0xff]
      %v3282 = vld [vmem:[%s925 + $0x4a] sm:$0x1]
      %v3283 = vld [vmem:[%s925 + $0x52] sm:$0xff]
      %v3284 = vld [vmem:[%s925 + $0x5a] sm:$0x1]
      %v3285 = vld [vmem:[%s925 + $0x62] sm:$0xff]
      %v3286 = vld [vmem:[%s925 + $0x6a] sm:$0x1]
      %v3287 = vld [vmem:[%s925 + $0x72] sm:$0xff]
      %v3288 = vld [vmem:[%s925 + $0x7a] sm:$0x1]
      %v3289 = vld [vmem:[%s925 + $0x82] sm:$0xff]
      %v3290 = vld [vmem:[%s925 + $0x8a] sm:$0x1]
      %v3291 = vld [vmem:[#allocation2 + $0x1a] sm:$0x1]
      %v3292 = vlaneseq
      %v3293 = vshrl.u32 %v3292, 7
      %v3294 = vsub.s32 0, %v3293
      %v3295 = vrot.slane %v3291, %v3294
      %v3296 = vmul.f32 %v3273, %v3295
      %v3297 = vmul.f32 %v3274, %v3295
      %v3298 = vmul.f32 %v3275, %v3295
      %v3299 = vmul.f32 %v3276, %v3295
      %v3300 = vmul.f32 %v3277, %v3295
      %v3301 = vmul.f32 %v3278, %v3295
      %v3302 = vmul.f32 %v3279, %v3295
      %v3303 = vmul.f32 %v3280, %v3295
      %v3304 = vmul.f32 %v3281, %v3295
      %v3305 = vmul.f32 %v3282, %v3295
      %v3306 = vmul.f32 %v3283, %v3295
      %v3307 = vmul.f32 %v3284, %v3295
      %v3308 = vmul.f32 %v3285, %v3295
      %v3309 = vmul.f32 %v3286, %v3295
      %v3310 = vmul.f32 %v3287, %v3295
      %v3311 = vmul.f32 %v3288, %v3295
      %v3312 = vmul.f32 %v3289, %v3295
      %v3313 = vmul.f32 %v3290, %v3295
      %v3314 = vadd.f32 %v3255, %v3296
      %v3315 = vadd.f32 %v3256, %v3297
      %v3316 = vadd.f32 %v3257, %v3298
      %v3317 = vadd.f32 %v3258, %v3299
      %v3318 = vadd.f32 %v3259, %v3300
      %v3319 = vadd.f32 %v3260, %v3301
      %v3320 = vadd.f32 %v3261, %v3302
      %v3321 = vadd.f32 %v3262, %v3303
      %v3322 = vadd.f32 %v3263, %v3304
      %v3323 = vadd.f32 %v3264, %v3305
      %v3324 = vadd.f32 %v3265, %v3306
      %v3325 = vadd.f32 %v3266, %v3307
      %v3326 = vadd.f32 %v3267, %v3308
      %v3327 = vadd.f32 %v3268, %v3309
      %v3328 = vadd.f32 %v3269, %v3310
      %v3329 = vadd.f32 %v3270, %v3311
      %v3330 = vadd.f32 %v3271, %v3312
      %v3331 = vadd.f32 %v3272, %v3313
      %v3332 = vld [vmem:[%s925 + $0x3] sm:$0xff]
      %v3333 = vld [vmem:[%s925 + $0xb] sm:$0x1]
      %v3334 = vld [vmem:[%s925 + $0x13] sm:$0xff]
      %v3335 = vld [vmem:[%s925 + $0x1b] sm:$0x1]
      %v3336 = vld [vmem:[%s925 + $0x23] sm:$0xff]
      %v3337 = vld [vmem:[%s925 + $0x2b] sm:$0x1]
      %v3338 = vld [vmem:[%s925 + $0x33] sm:$0xff]
      %v3339 = vld [vmem:[%s925 + $0x3b] sm:$0x1]
      %v3340 = vld [vmem:[%s925 + $0x43] sm:$0xff]
      %v3341 = vld [vmem:[%s925 + $0x4b] sm:$0x1]
      %v3342 = vld [vmem:[%s925 + $0x53] sm:$0xff]
      %v3343 = vld [vmem:[%s925 + $0x5b] sm:$0x1]
      %v3344 = vld [vmem:[%s925 + $0x63] sm:$0xff]
      %v3345 = vld [vmem:[%s925 + $0x6b] sm:$0x1]
      %v3346 = vld [vmem:[%s925 + $0x73] sm:$0xff]
      %v3347 = vld [vmem:[%s925 + $0x7b] sm:$0x1]
      %v3348 = vld [vmem:[%s925 + $0x83] sm:$0xff]
      %v3349 = vld [vmem:[%s925 + $0x8b] sm:$0x1]
      %v3350 = vld [vmem:[#allocation2 + $0x1b] sm:$0x1]
      %v3351 = vlaneseq
      %v3352 = vshrl.u32 %v3351, 7
      %v3353 = vsub.s32 0, %v3352
      %v3354 = vrot.slane %v3350, %v3353
      %v3355 = vmul.f32 %v3332, %v3354
      %v3356 = vmul.f32 %v3333, %v3354
      %v3357 = vmul.f32 %v3334, %v3354
      %v3358 = vmul.f32 %v3335, %v3354
      %v3359 = vmul.f32 %v3336, %v3354
      %v3360 = vmul.f32 %v3337, %v3354
      %v3361 = vmul.f32 %v3338, %v3354
      %v3362 = vmul.f32 %v3339, %v3354
      %v3363 = vmul.f32 %v3340, %v3354
      %v3364 = vmul.f32 %v3341, %v3354
      %v3365 = vmul.f32 %v3342, %v3354
      %v3366 = vmul.f32 %v3343, %v3354
      %v3367 = vmul.f32 %v3344, %v3354
      %v3368 = vmul.f32 %v3345, %v3354
      %v3369 = vmul.f32 %v3346, %v3354
      %v3370 = vmul.f32 %v3347, %v3354
      %v3371 = vmul.f32 %v3348, %v3354
      %v3372 = vmul.f32 %v3349, %v3354
      %v3373 = vadd.f32 %v3314, %v3355
      %v3374 = vadd.f32 %v3315, %v3356
      %v3375 = vadd.f32 %v3316, %v3357
      %v3376 = vadd.f32 %v3317, %v3358
      %v3377 = vadd.f32 %v3318, %v3359
      %v3378 = vadd.f32 %v3319, %v3360
      %v3379 = vadd.f32 %v3320, %v3361
      %v3380 = vadd.f32 %v3321, %v3362
      %v3381 = vadd.f32 %v3322, %v3363
      %v3382 = vadd.f32 %v3323, %v3364
      %v3383 = vadd.f32 %v3324, %v3365
      %v3384 = vadd.f32 %v3325, %v3366
      %v3385 = vadd.f32 %v3326, %v3367
      %v3386 = vadd.f32 %v3327, %v3368
      %v3387 = vadd.f32 %v3328, %v3369
      %v3388 = vadd.f32 %v3329, %v3370
      %v3389 = vadd.f32 %v3330, %v3371
      %v3390 = vadd.f32 %v3331, %v3372
      %v3391 = vld [vmem:[%s925 + $0x4] sm:$0xff]
      %v3392 = vld [vmem:[%s925 + $0xc] sm:$0x1]
      %v3393 = vld [vmem:[%s925 + $0x14] sm:$0xff]
      %v3394 = vld [vmem:[%s925 + $0x1c] sm:$0x1]
      %v3395 = vld [vmem:[%s925 + $0x24] sm:$0xff]
      %v3396 = vld [vmem:[%s925 + $0x2c] sm:$0x1]
      %v3397 = vld [vmem:[%s925 + $0x34] sm:$0xff]
      %v3398 = vld [vmem:[%s925 + $0x3c] sm:$0x1]
      %v3399 = vld [vmem:[%s925 + $0x44] sm:$0xff]
      %v3400 = vld [vmem:[%s925 + $0x4c] sm:$0x1]
      %v3401 = vld [vmem:[%s925 + $0x54] sm:$0xff]
      %v3402 = vld [vmem:[%s925 + $0x5c] sm:$0x1]
      %v3403 = vld [vmem:[%s925 + $0x64] sm:$0xff]
      %v3404 = vld [vmem:[%s925 + $0x6c] sm:$0x1]
      %v3405 = vld [vmem:[%s925 + $0x74] sm:$0xff]
      %v3406 = vld [vmem:[%s925 + $0x7c] sm:$0x1]
      %v3407 = vld [vmem:[%s925 + $0x84] sm:$0xff]
      %v3408 = vld [vmem:[%s925 + $0x8c] sm:$0x1]
      %v3409 = vld [vmem:[#allocation2 + $0x1c] sm:$0x1]
      %v3410 = vlaneseq
      %v3411 = vshrl.u32 %v3410, 7
      %v3412 = vsub.s32 0, %v3411
      %v3413 = vrot.slane %v3409, %v3412
      %v3414 = vmul.f32 %v3391, %v3413
      %v3415 = vmul.f32 %v3392, %v3413
      %v3416 = vmul.f32 %v3393, %v3413
      %v3417 = vmul.f32 %v3394, %v3413
      %v3418 = vmul.f32 %v3395, %v3413
      %v3419 = vmul.f32 %v3396, %v3413
      %v3420 = vmul.f32 %v3397, %v3413
      %v3421 = vmul.f32 %v3398, %v3413
      %v3422 = vmul.f32 %v3399, %v3413
      %v3423 = vmul.f32 %v3400, %v3413
      %v3424 = vmul.f32 %v3401, %v3413
      %v3425 = vmul.f32 %v3402, %v3413
      %v3426 = vmul.f32 %v3403, %v3413
      %v3427 = vmul.f32 %v3404, %v3413
      %v3428 = vmul.f32 %v3405, %v3413
      %v3429 = vmul.f32 %v3406, %v3413
      %v3430 = vmul.f32 %v3407, %v3413
      %v3431 = vmul.f32 %v3408, %v3413
      %v3432 = vadd.f32 %v3373, %v3414
      %v3433 = vadd.f32 %v3374, %v3415
      %v3434 = vadd.f32 %v3375, %v3416
      %v3435 = vadd.f32 %v3376, %v3417
      %v3436 = vadd.f32 %v3377, %v3418
      %v3437 = vadd.f32 %v3378, %v3419
      %v3438 = vadd.f32 %v3379, %v3420
      %v3439 = vadd.f32 %v3380, %v3421
      %v3440 = vadd.f32 %v3381, %v3422
      %v3441 = vadd.f32 %v3382, %v3423
      %v3442 = vadd.f32 %v3383, %v3424
      %v3443 = vadd.f32 %v3384, %v3425
      %v3444 = vadd.f32 %v3385, %v3426
      %v3445 = vadd.f32 %v3386, %v3427
      %v3446 = vadd.f32 %v3387, %v3428
      %v3447 = vadd.f32 %v3388, %v3429
      %v3448 = vadd.f32 %v3389, %v3430
      %v3449 = vadd.f32 %v3390, %v3431
      %v3450 = vld [vmem:[%s925 + $0x5] sm:$0xff]
      %v3451 = vld [vmem:[%s925 + $0xd] sm:$0x1]
      %v3452 = vld [vmem:[%s925 + $0x15] sm:$0xff]
      %v3453 = vld [vmem:[%s925 + $0x1d] sm:$0x1]
      %v3454 = vld [vmem:[%s925 + $0x25] sm:$0xff]
      %v3455 = vld [vmem:[%s925 + $0x2d] sm:$0x1]
      %v3456 = vld [vmem:[%s925 + $0x35] sm:$0xff]
      %v3457 = vld [vmem:[%s925 + $0x3d] sm:$0x1]
      %v3458 = vld [vmem:[%s925 + $0x45] sm:$0xff]
      %v3459 = vld [vmem:[%s925 + $0x4d] sm:$0x1]
      %v3460 = vld [vmem:[%s925 + $0x55] sm:$0xff]
      %v3461 = vld [vmem:[%s925 + $0x5d] sm:$0x1]
      %v3462 = vld [vmem:[%s925 + $0x65] sm:$0xff]
      %v3463 = vld [vmem:[%s925 + $0x6d] sm:$0x1]
      %v3464 = vld [vmem:[%s925 + $0x75] sm:$0xff]
      %v3465 = vld [vmem:[%s925 + $0x7d] sm:$0x1]
      %v3466 = vld [vmem:[%s925 + $0x85] sm:$0xff]
      %v3467 = vld [vmem:[%s925 + $0x8d] sm:$0x1]
      %v3468 = vld [vmem:[#allocation2 + $0x1d] sm:$0x1]
      %v3469 = vlaneseq
      %v3470 = vshrl.u32 %v3469, 7
      %v3471 = vsub.s32 0, %v3470
      %v3472 = vrot.slane %v3468, %v3471
      %v3473 = vmul.f32 %v3450, %v3472
      %v3474 = vmul.f32 %v3451, %v3472
      %v3475 = vmul.f32 %v3452, %v3472
      %v3476 = vmul.f32 %v3453, %v3472
      %v3477 = vmul.f32 %v3454, %v3472
      %v3478 = vmul.f32 %v3455, %v3472
      %v3479 = vmul.f32 %v3456, %v3472
      %v3480 = vmul.f32 %v3457, %v3472
      %v3481 = vmul.f32 %v3458, %v3472
      %v3482 = vmul.f32 %v3459, %v3472
      %v3483 = vmul.f32 %v3460, %v3472
      %v3484 = vmul.f32 %v3461, %v3472
      %v3485 = vmul.f32 %v3462, %v3472
      %v3486 = vmul.f32 %v3463, %v3472
      %v3487 = vmul.f32 %v3464, %v3472
      %v3488 = vmul.f32 %v3465, %v3472
      %v3489 = vmul.f32 %v3466, %v3472
      %v3490 = vmul.f32 %v3467, %v3472
      %v3491 = vadd.f32 %v3432, %v3473
      %v3492 = vadd.f32 %v3433, %v3474
      %v3493 = vadd.f32 %v3434, %v3475
      %v3494 = vadd.f32 %v3435, %v3476
      %v3495 = vadd.f32 %v3436, %v3477
      %v3496 = vadd.f32 %v3437, %v3478
      %v3497 = vadd.f32 %v3438, %v3479
      %v3498 = vadd.f32 %v3439, %v3480
      %v3499 = vadd.f32 %v3440, %v3481
      %v3500 = vadd.f32 %v3441, %v3482
      %v3501 = vadd.f32 %v3442, %v3483
      %v3502 = vadd.f32 %v3443, %v3484
      %v3503 = vadd.f32 %v3444, %v3485
      %v3504 = vadd.f32 %v3445, %v3486
      %v3505 = vadd.f32 %v3446, %v3487
      %v3506 = vadd.f32 %v3447, %v3488
      %v3507 = vadd.f32 %v3448, %v3489
      %v3508 = vadd.f32 %v3449, %v3490
      %v3509 = vld [vmem:[%s1018] sm:$0xff]
      %v3510 = vld [vmem:[%s1018 + $0x8] sm:$0x1]
      %v3511 = vld [vmem:[%s1018 + $0x10] sm:$0xff]
      %v3512 = vld [vmem:[%s1018 + $0x18] sm:$0x1]
      %v3513 = vld [vmem:[%s1018 + $0x20] sm:$0xff]
      %v3514 = vld [vmem:[%s1018 + $0x28] sm:$0x1]
      %v3515 = vld [vmem:[%s1018 + $0x30] sm:$0xff]
      %v3516 = vld [vmem:[%s1018 + $0x38] sm:$0x1]
      %v3517 = vld [vmem:[%s1018 + $0x40] sm:$0xff]
      %v3518 = vld [vmem:[%s1018 + $0x48] sm:$0x1]
      %v3519 = vld [vmem:[%s1018 + $0x50] sm:$0xff]
      %v3520 = vld [vmem:[%s1018 + $0x58] sm:$0x1]
      %v3521 = vld [vmem:[%s1018 + $0x60] sm:$0xff]
      %v3522 = vld [vmem:[%s1018 + $0x68] sm:$0x1]
      %v3523 = vld [vmem:[%s1018 + $0x70] sm:$0xff]
      %v3524 = vld [vmem:[%s1018 + $0x78] sm:$0x1]
      %v3525 = vld [vmem:[%s1018 + $0x80] sm:$0xff]
      %v3526 = vld [vmem:[%s1018 + $0x88] sm:$0x1]
      %v3527 = vld [vmem:[#allocation2 + $0x1e] sm:$0x1]
      %v3528 = vlaneseq
      %v3529 = vshrl.u32 %v3528, 7
      %v3530 = vsub.s32 0, %v3529
      %v3531 = vrot.slane %v3527, %v3530
      %v3532 = vmul.f32 %v3509, %v3531
      %v3533 = vmul.f32 %v3510, %v3531
      %v3534 = vmul.f32 %v3511, %v3531
      %v3535 = vmul.f32 %v3512, %v3531
      %v3536 = vmul.f32 %v3513, %v3531
      %v3537 = vmul.f32 %v3514, %v3531
      %v3538 = vmul.f32 %v3515, %v3531
      %v3539 = vmul.f32 %v3516, %v3531
      %v3540 = vmul.f32 %v3517, %v3531
      %v3541 = vmul.f32 %v3518, %v3531
      %v3542 = vmul.f32 %v3519, %v3531
      %v3543 = vmul.f32 %v3520, %v3531
      %v3544 = vmul.f32 %v3521, %v3531
      %v3545 = vmul.f32 %v3522, %v3531
      %v3546 = vmul.f32 %v3523, %v3531
      %v3547 = vmul.f32 %v3524, %v3531
      %v3548 = vmul.f32 %v3525, %v3531
      %v3549 = vmul.f32 %v3526, %v3531
      %v3550 = vadd.f32 %v3491, %v3532
      %v3551 = vadd.f32 %v3492, %v3533
      %v3552 = vadd.f32 %v3493, %v3534
      %v3553 = vadd.f32 %v3494, %v3535
      %v3554 = vadd.f32 %v3495, %v3536
      %v3555 = vadd.f32 %v3496, %v3537
      %v3556 = vadd.f32 %v3497, %v3538
      %v3557 = vadd.f32 %v3498, %v3539
      %v3558 = vadd.f32 %v3499, %v3540
      %v3559 = vadd.f32 %v3500, %v3541
      %v3560 = vadd.f32 %v3501, %v3542
      %v3561 = vadd.f32 %v3502, %v3543
      %v3562 = vadd.f32 %v3503, %v3544
      %v3563 = vadd.f32 %v3504, %v3545
      %v3564 = vadd.f32 %v3505, %v3546
      %v3565 = vadd.f32 %v3506, %v3547
      %v3566 = vadd.f32 %v3507, %v3548
      %v3567 = vadd.f32 %v3508, %v3549
      %v3568 = vld [vmem:[%s1018 + $0x1] sm:$0xff]
      %v3569 = vld [vmem:[%s1018 + $0x9] sm:$0x1]
      %v3570 = vld [vmem:[%s1018 + $0x11] sm:$0xff]
      %v3571 = vld [vmem:[%s1018 + $0x19] sm:$0x1]
      %v3572 = vld [vmem:[%s1018 + $0x21] sm:$0xff]
      %v3573 = vld [vmem:[%s1018 + $0x29] sm:$0x1]
      %v3574 = vld [vmem:[%s1018 + $0x31] sm:$0xff]
      %v3575 = vld [vmem:[%s1018 + $0x39] sm:$0x1]
      %v3576 = vld [vmem:[%s1018 + $0x41] sm:$0xff]
      %v3577 = vld [vmem:[%s1018 + $0x49] sm:$0x1]
      %v3578 = vld [vmem:[%s1018 + $0x51] sm:$0xff]
      %v3579 = vld [vmem:[%s1018 + $0x59] sm:$0x1]
      %v3580 = vld [vmem:[%s1018 + $0x61] sm:$0xff]
      %v3581 = vld [vmem:[%s1018 + $0x69] sm:$0x1]
      %v3582 = vld [vmem:[%s1018 + $0x71] sm:$0xff]
      %v3583 = vld [vmem:[%s1018 + $0x79] sm:$0x1]
      %v3584 = vld [vmem:[%s1018 + $0x81] sm:$0xff]
      %v3585 = vld [vmem:[%s1018 + $0x89] sm:$0x1]
      %v3586 = vld [vmem:[#allocation2 + $0x1f] sm:$0x1]
      %v3587 = vlaneseq
      %v3588 = vshrl.u32 %v3587, 7
      %v3589 = vsub.s32 0, %v3588
      %v3590 = vrot.slane %v3586, %v3589
      %v3591 = vmul.f32 %v3568, %v3590
      %v3592 = vmul.f32 %v3569, %v3590
      %v3593 = vmul.f32 %v3570, %v3590
      %v3594 = vmul.f32 %v3571, %v3590
      %v3595 = vmul.f32 %v3572, %v3590
      %v3596 = vmul.f32 %v3573, %v3590
      %v3597 = vmul.f32 %v3574, %v3590
      %v3598 = vmul.f32 %v3575, %v3590
      %v3599 = vmul.f32 %v3576, %v3590
      %v3600 = vmul.f32 %v3577, %v3590
      %v3601 = vmul.f32 %v3578, %v3590
      %v3602 = vmul.f32 %v3579, %v3590
      %v3603 = vmul.f32 %v3580, %v3590
      %v3604 = vmul.f32 %v3581, %v3590
      %v3605 = vmul.f32 %v3582, %v3590
      %v3606 = vmul.f32 %v3583, %v3590
      %v3607 = vmul.f32 %v3584, %v3590
      %v3608 = vmul.f32 %v3585, %v3590
      %v3609 = vadd.f32 %v3550, %v3591
      %v3610 = vadd.f32 %v3551, %v3592
      %v3611 = vadd.f32 %v3552, %v3593
      %v3612 = vadd.f32 %v3553, %v3594
      %v3613 = vadd.f32 %v3554, %v3595
      %v3614 = vadd.f32 %v3555, %v3596
      %v3615 = vadd.f32 %v3556, %v3597
      %v3616 = vadd.f32 %v3557, %v3598
      %v3617 = vadd.f32 %v3558, %v3599
      %v3618 = vadd.f32 %v3559, %v3600
      %v3619 = vadd.f32 %v3560, %v3601
      %v3620 = vadd.f32 %v3561, %v3602
      %v3621 = vadd.f32 %v3562, %v3603
      %v3622 = vadd.f32 %v3563, %v3604
      %v3623 = vadd.f32 %v3564, %v3605
      %v3624 = vadd.f32 %v3565, %v3606
      %v3625 = vadd.f32 %v3566, %v3607
      %v3626 = vadd.f32 %v3567, %v3608
      %v3627 = vld [vmem:[%s1018 + $0x2] sm:$0xff]
      %v3628 = vld [vmem:[%s1018 + $0xa] sm:$0x1]
      %v3629 = vld [vmem:[%s1018 + $0x12] sm:$0xff]
      %v3630 = vld [vmem:[%s1018 + $0x1a] sm:$0x1]
      %v3631 = vld [vmem:[%s1018 + $0x22] sm:$0xff]
      %v3632 = vld [vmem:[%s1018 + $0x2a] sm:$0x1]
      %v3633 = vld [vmem:[%s1018 + $0x32] sm:$0xff]
      %v3634 = vld [vmem:[%s1018 + $0x3a] sm:$0x1]
      %v3635 = vld [vmem:[%s1018 + $0x42] sm:$0xff]
      %v3636 = vld [vmem:[%s1018 + $0x4a] sm:$0x1]
      %v3637 = vld [vmem:[%s1018 + $0x52] sm:$0xff]
      %v3638 = vld [vmem:[%s1018 + $0x5a] sm:$0x1]
      %v3639 = vld [vmem:[%s1018 + $0x62] sm:$0xff]
      %v3640 = vld [vmem:[%s1018 + $0x6a] sm:$0x1]
      %v3641 = vld [vmem:[%s1018 + $0x72] sm:$0xff]
      %v3642 = vld [vmem:[%s1018 + $0x7a] sm:$0x1]
      %v3643 = vld [vmem:[%s1018 + $0x82] sm:$0xff]
      %v3644 = vld [vmem:[%s1018 + $0x8a] sm:$0x1]
      %v3645 = vld [vmem:[#allocation2 + $0x20] sm:$0x1]
      %v3646 = vlaneseq
      %v3647 = vshrl.u32 %v3646, 7
      %v3648 = vsub.s32 0, %v3647
      %v3649 = vrot.slane %v3645, %v3648
      %v3650 = vmul.f32 %v3627, %v3649
      %v3651 = vmul.f32 %v3628, %v3649
      %v3652 = vmul.f32 %v3629, %v3649
      %v3653 = vmul.f32 %v3630, %v3649
      %v3654 = vmul.f32 %v3631, %v3649
      %v3655 = vmul.f32 %v3632, %v3649
      %v3656 = vmul.f32 %v3633, %v3649
      %v3657 = vmul.f32 %v3634, %v3649
      %v3658 = vmul.f32 %v3635, %v3649
      %v3659 = vmul.f32 %v3636, %v3649
      %v3660 = vmul.f32 %v3637, %v3649
      %v3661 = vmul.f32 %v3638, %v3649
      %v3662 = vmul.f32 %v3639, %v3649
      %v3663 = vmul.f32 %v3640, %v3649
      %v3664 = vmul.f32 %v3641, %v3649
      %v3665 = vmul.f32 %v3642, %v3649
      %v3666 = vmul.f32 %v3643, %v3649
      %v3667 = vmul.f32 %v3644, %v3649
      %v3668 = vadd.f32 %v3609, %v3650
      %v3669 = vadd.f32 %v3610, %v3651
      %v3670 = vadd.f32 %v3611, %v3652
      %v3671 = vadd.f32 %v3612, %v3653
      %v3672 = vadd.f32 %v3613, %v3654
      %v3673 = vadd.f32 %v3614, %v3655
      %v3674 = vadd.f32 %v3615, %v3656
      %v3675 = vadd.f32 %v3616, %v3657
      %v3676 = vadd.f32 %v3617, %v3658
      %v3677 = vadd.f32 %v3618, %v3659
      %v3678 = vadd.f32 %v3619, %v3660
      %v3679 = vadd.f32 %v3620, %v3661
      %v3680 = vadd.f32 %v3621, %v3662
      %v3681 = vadd.f32 %v3622, %v3663
      %v3682 = vadd.f32 %v3623, %v3664
      %v3683 = vadd.f32 %v3624, %v3665
      %v3684 = vadd.f32 %v3625, %v3666
      %v3685 = vadd.f32 %v3626, %v3667
      %v3686 = vld [vmem:[%s1018 + $0x3] sm:$0xff]
      %v3687 = vld [vmem:[%s1018 + $0xb] sm:$0x1]
      %v3688 = vld [vmem:[%s1018 + $0x13] sm:$0xff]
      %v3689 = vld [vmem:[%s1018 + $0x1b] sm:$0x1]
      %v3690 = vld [vmem:[%s1018 + $0x23] sm:$0xff]
      %v3691 = vld [vmem:[%s1018 + $0x2b] sm:$0x1]
      %v3692 = vld [vmem:[%s1018 + $0x33] sm:$0xff]
      %v3693 = vld [vmem:[%s1018 + $0x3b] sm:$0x1]
      %v3694 = vld [vmem:[%s1018 + $0x43] sm:$0xff]
      %v3695 = vld [vmem:[%s1018 + $0x4b] sm:$0x1]
      %v3696 = vld [vmem:[%s1018 + $0x53] sm:$0xff]
      %v3697 = vld [vmem:[%s1018 + $0x5b] sm:$0x1]
      %v3698 = vld [vmem:[%s1018 + $0x63] sm:$0xff]
      %v3699 = vld [vmem:[%s1018 + $0x6b] sm:$0x1]
      %v3700 = vld [vmem:[%s1018 + $0x73] sm:$0xff]
      %v3701 = vld [vmem:[%s1018 + $0x7b] sm:$0x1]
      %v3702 = vld [vmem:[%s1018 + $0x83] sm:$0xff]
      %v3703 = vld [vmem:[%s1018 + $0x8b] sm:$0x1]
      %v3704 = vld [vmem:[#allocation2 + $0x21] sm:$0x1]
      %v3705 = vlaneseq
      %v3706 = vshrl.u32 %v3705, 7
      %v3707 = vsub.s32 0, %v3706
      %v3708 = vrot.slane %v3704, %v3707
      %v3709 = vmul.f32 %v3686, %v3708
      %v3710 = vmul.f32 %v3687, %v3708
      %v3711 = vmul.f32 %v3688, %v3708
      %v3712 = vmul.f32 %v3689, %v3708
      %v3713 = vmul.f32 %v3690, %v3708
      %v3714 = vmul.f32 %v3691, %v3708
      %v3715 = vmul.f32 %v3692, %v3708
      %v3716 = vmul.f32 %v3693, %v3708
      %v3717 = vmul.f32 %v3694, %v3708
      %v3718 = vmul.f32 %v3695, %v3708
      %v3719 = vmul.f32 %v3696, %v3708
      %v3720 = vmul.f32 %v3697, %v3708
      %v3721 = vmul.f32 %v3698, %v3708
      %v3722 = vmul.f32 %v3699, %v3708
      %v3723 = vmul.f32 %v3700, %v3708
      %v3724 = vmul.f32 %v3701, %v3708
      %v3725 = vmul.f32 %v3702, %v3708
      %v3726 = vmul.f32 %v3703, %v3708
      %v3727 = vadd.f32 %v3668, %v3709
      %v3728 = vadd.f32 %v3669, %v3710
      %v3729 = vadd.f32 %v3670, %v3711
      %v3730 = vadd.f32 %v3671, %v3712
      %v3731 = vadd.f32 %v3672, %v3713
      %v3732 = vadd.f32 %v3673, %v3714
      %v3733 = vadd.f32 %v3674, %v3715
      %v3734 = vadd.f32 %v3675, %v3716
      %v3735 = vadd.f32 %v3676, %v3717
      %v3736 = vadd.f32 %v3677, %v3718
      %v3737 = vadd.f32 %v3678, %v3719
      %v3738 = vadd.f32 %v3679, %v3720
      %v3739 = vadd.f32 %v3680, %v3721
      %v3740 = vadd.f32 %v3681, %v3722
      %v3741 = vadd.f32 %v3682, %v3723
      %v3742 = vadd.f32 %v3683, %v3724
      %v3743 = vadd.f32 %v3684, %v3725
      %v3744 = vadd.f32 %v3685, %v3726
      %v3745 = vld [vmem:[%s1018 + $0x4] sm:$0xff]
      %v3746 = vld [vmem:[%s1018 + $0xc] sm:$0x1]
      %v3747 = vld [vmem:[%s1018 + $0x14] sm:$0xff]
      %v3748 = vld [vmem:[%s1018 + $0x1c] sm:$0x1]
      %v3749 = vld [vmem:[%s1018 + $0x24] sm:$0xff]
      %v3750 = vld [vmem:[%s1018 + $0x2c] sm:$0x1]
      %v3751 = vld [vmem:[%s1018 + $0x34] sm:$0xff]
      %v3752 = vld [vmem:[%s1018 + $0x3c] sm:$0x1]
      %v3753 = vld [vmem:[%s1018 + $0x44] sm:$0xff]
      %v3754 = vld [vmem:[%s1018 + $0x4c] sm:$0x1]
      %v3755 = vld [vmem:[%s1018 + $0x54] sm:$0xff]
      %v3756 = vld [vmem:[%s1018 + $0x5c] sm:$0x1]
      %v3757 = vld [vmem:[%s1018 + $0x64] sm:$0xff]
      %v3758 = vld [vmem:[%s1018 + $0x6c] sm:$0x1]
      %v3759 = vld [vmem:[%s1018 + $0x74] sm:$0xff]
      %v3760 = vld [vmem:[%s1018 + $0x7c] sm:$0x1]
      %v3761 = vld [vmem:[%s1018 + $0x84] sm:$0xff]
      %v3762 = vld [vmem:[%s1018 + $0x8c] sm:$0x1]
      %v3763 = vld [vmem:[#allocation2 + $0x22] sm:$0x1]
      %v3764 = vlaneseq
      %v3765 = vshrl.u32 %v3764, 7
      %v3766 = vsub.s32 0, %v3765
      %v3767 = vrot.slane %v3763, %v3766
      %v3768 = vmul.f32 %v3745, %v3767
      %v3769 = vmul.f32 %v3746, %v3767
      %v3770 = vmul.f32 %v3747, %v3767
      %v3771 = vmul.f32 %v3748, %v3767
      %v3772 = vmul.f32 %v3749, %v3767
      %v3773 = vmul.f32 %v3750, %v3767
      %v3774 = vmul.f32 %v3751, %v3767
      %v3775 = vmul.f32 %v3752, %v3767
      %v3776 = vmul.f32 %v3753, %v3767
      %v3777 = vmul.f32 %v3754, %v3767
      %v3778 = vmul.f32 %v3755, %v3767
      %v3779 = vmul.f32 %v3756, %v3767
      %v3780 = vmul.f32 %v3757, %v3767
      %v3781 = vmul.f32 %v3758, %v3767
      %v3782 = vmul.f32 %v3759, %v3767
      %v3783 = vmul.f32 %v3760, %v3767
      %v3784 = vmul.f32 %v3761, %v3767
      %v3785 = vmul.f32 %v3762, %v3767
      %v3786 = vadd.f32 %v3727, %v3768
      %v3787 = vadd.f32 %v3728, %v3769
      %v3788 = vadd.f32 %v3729, %v3770
      %v3789 = vadd.f32 %v3730, %v3771
      %v3790 = vadd.f32 %v3731, %v3772
      %v3791 = vadd.f32 %v3732, %v3773
      %v3792 = vadd.f32 %v3733, %v3774
      %v3793 = vadd.f32 %v3734, %v3775
      %v3794 = vadd.f32 %v3735, %v3776
      %v3795 = vadd.f32 %v3736, %v3777
      %v3796 = vadd.f32 %v3737, %v3778
      %v3797 = vadd.f32 %v3738, %v3779
      %v3798 = vadd.f32 %v3739, %v3780
      %v3799 = vadd.f32 %v3740, %v3781
      %v3800 = vadd.f32 %v3741, %v3782
      %v3801 = vadd.f32 %v3742, %v3783
      %v3802 = vadd.f32 %v3743, %v3784
      %v3803 = vadd.f32 %v3744, %v3785
      %v3804 = vld [vmem:[%s1018 + $0x5] sm:$0xff]
      %v3805 = vld [vmem:[%s1018 + $0xd] sm:$0x1]
      %v3806 = vld [vmem:[%s1018 + $0x15] sm:$0xff]
      %v3807 = vld [vmem:[%s1018 + $0x1d] sm:$0x1]
      %v3808 = vld [vmem:[%s1018 + $0x25] sm:$0xff]
      %v3809 = vld [vmem:[%s1018 + $0x2d] sm:$0x1]
      %v3810 = vld [vmem:[%s1018 + $0x35] sm:$0xff]
      %v3811 = vld [vmem:[%s1018 + $0x3d] sm:$0x1]
      %v3812 = vld [vmem:[%s1018 + $0x45] sm:$0xff]
      %v3813 = vld [vmem:[%s1018 + $0x4d] sm:$0x1]
      %v3814 = vld [vmem:[%s1018 + $0x55] sm:$0xff]
      %v3815 = vld [vmem:[%s1018 + $0x5d] sm:$0x1]
      %v3816 = vld [vmem:[%s1018 + $0x65] sm:$0xff]
      %v3817 = vld [vmem:[%s1018 + $0x6d] sm:$0x1]
      %v3818 = vld [vmem:[%s1018 + $0x75] sm:$0xff]
      %v3819 = vld [vmem:[%s1018 + $0x7d] sm:$0x1]
      %v3820 = vld [vmem:[%s1018 + $0x85] sm:$0xff]
      %v3821 = vld [vmem:[%s1018 + $0x8d] sm:$0x1]
      %v3822 = vld [vmem:[#allocation2 + $0x23] sm:$0x1]
      %v3823 = vlaneseq
      %v3824 = vshrl.u32 %v3823, 7
      %v3825 = vsub.s32 0, %v3824
      %v3826 = vrot.slane %v3822, %v3825
      %v3827 = vmul.f32 %v3804, %v3826
      %v3828 = vmul.f32 %v3805, %v3826
      %v3829 = vmul.f32 %v3806, %v3826
      %v3830 = vmul.f32 %v3807, %v3826
      %v3831 = vmul.f32 %v3808, %v3826
      %v3832 = vmul.f32 %v3809, %v3826
      %v3833 = vmul.f32 %v3810, %v3826
      %v3834 = vmul.f32 %v3811, %v3826
      %v3835 = vmul.f32 %v3812, %v3826
      %v3836 = vmul.f32 %v3813, %v3826
      %v3837 = vmul.f32 %v3814, %v3826
      %v3838 = vmul.f32 %v3815, %v3826
      %v3839 = vmul.f32 %v3816, %v3826
      %v3840 = vmul.f32 %v3817, %v3826
      %v3841 = vmul.f32 %v3818, %v3826
      %v3842 = vmul.f32 %v3819, %v3826
      %v3843 = vmul.f32 %v3820, %v3826
      %v3844 = vmul.f32 %v3821, %v3826
      %v3845 = vadd.f32 %v3786, %v3827
      %v3846 = vadd.f32 %v3787, %v3828
      %v3847 = vadd.f32 %v3788, %v3829
      %v3848 = vadd.f32 %v3789, %v3830
      %v3849 = vadd.f32 %v3790, %v3831
      %v3850 = vadd.f32 %v3791, %v3832
      %v3851 = vadd.f32 %v3792, %v3833
      %v3852 = vadd.f32 %v3793, %v3834
      %v3853 = vadd.f32 %v3794, %v3835
      %v3854 = vadd.f32 %v3795, %v3836
      %v3855 = vadd.f32 %v3796, %v3837
      %v3856 = vadd.f32 %v3797, %v3838
      %v3857 = vadd.f32 %v3798, %v3839
      %v3858 = vadd.f32 %v3799, %v3840
      %v3859 = vadd.f32 %v3800, %v3841
      %v3860 = vadd.f32 %v3801, %v3842
      %v3861 = vadd.f32 %v3802, %v3843
      %v3862 = vadd.f32 %v3803, %v3844
      %3863 = vst.msk [vmem:[#allocation4] sm:$0xff] %vm474, %v3845
      %vm3864 = vcmask 253952
      %3865 = vst.msk [vmem:[#allocation4 + $0x8] sm:$0x1] %vm3864, %v3846
      %3866 = vst.msk [vmem:[#allocation4 + $0x9] sm:$0xff] %vm474, %v3847
      %3867 = vst.msk [vmem:[#allocation4 + $0x11] sm:$0x1] %vm3864, %v3848
      %3868 = vst.msk [vmem:[#allocation4 + $0x12] sm:$0xff] %vm474, %v3849
      %3869 = vst.msk [vmem:[#allocation4 + $0x1a] sm:$0x1] %vm3864, %v3850
      %3870 = vst.msk [vmem:[#allocation4 + $0x1b] sm:$0xff] %vm474, %v3851
      %3871 = vst.msk [vmem:[#allocation4 + $0x23] sm:$0x1] %vm3864, %v3852
      %3872 = vst.msk [vmem:[#allocation4 + $0x24] sm:$0xff] %vm474, %v3853
      %3873 = vst.msk [vmem:[#allocation4 + $0x2c] sm:$0x1] %vm3864, %v3854
      %3874 = vst.msk [vmem:[#allocation4 + $0x2d] sm:$0xff] %vm474, %v3855
      %3875 = vst.msk [vmem:[#allocation4 + $0x35] sm:$0x1] %vm3864, %v3856
      %3876 = vst.msk [vmem:[#allocation4 + $0x36] sm:$0xff] %vm474, %v3857
      %3877 = vst.msk [vmem:[#allocation4 + $0x3e] sm:$0x1] %vm3864, %v3858
      %3878 = vst.msk [vmem:[#allocation4 + $0x3f] sm:$0xff] %vm474, %v3859
      %3879 = vst.msk [vmem:[#allocation4 + $0x47] sm:$0x1] %vm3864, %v3860
      %3880 = vst.msk [vmem:[#allocation4 + $0x48] sm:$0xff] %vm474, %v3861
      %3881 = vst.msk [vmem:[#allocation4 + $0x50] sm:$0x1] %vm3864, %v3862
      %v3882 = vld [vmem:[#allocation4] sm:$0xff]
      %v3883 = vld [vmem:[#allocation4 + $0x8] sm:$0xff]
      %v3884 = vld [vmem:[#allocation4 + $0x10] sm:$0xff]
      %v3885 = vld [vmem:[#allocation4 + $0x18] sm:$0xff]
      %v3886 = vld [vmem:[#allocation4 + $0x20] sm:$0xff]
      %v3887 = vld [vmem:[#allocation4 + $0x28] sm:$0xff]
      %v3888 = vld [vmem:[#allocation4 + $0x30] sm:$0xff]
      %v3889 = vld [vmem:[#allocation4 + $0x38] sm:$0xff]
      %v3890 = vld [vmem:[#allocation4 + $0x40] sm:$0xff]
      %v3891 = vld [vmem:[#allocation4 + $0x48] sm:$0xff]
      %v3892 = vld [vmem:[#allocation4 + $0x50] sm:$0x1]
      %v3893 = vpack.c.bf16 %v3883, %v3882
      %v3894 = vpack.c.bf16 %v3885, %v3884
      %v3895 = vpack.c.bf16 %v3887, %v3886
      %v3896 = vpack.c.bf16 %v3889, %v3888
      %v3897 = vpack.c.bf16 %v3891, %v3890
      %v3898 = vpack.c.bf16 %v3892, %v3892
      %v3899 = vld [vmem:[%s6] sm:$0xf]
      %v3900 = vld [vmem:[%s6 + $0x4] sm:$0xf]
      %v3901 = vld [vmem:[%s6 + $0x8] sm:$0xf]
      %v3902 = vld [vmem:[%s6 + $0xc] sm:$0xf]
      %v3903 = vld [vmem:[%s7] sm:$0x1]
      %v3905 = vlaneseq
      %v3906 = vshrl.u32 %v3905, 7
      %v3907 = vsub.s32 0, %v3906
      %v3908 = vrot.slane %v3903, %v3907
      %v3914 = vunpack.c.l.b16 %v3899
      %v3915 = vunpack.c.l.b16 %v3900
      %v3916 = vunpack.c.l.b16 %v3901
      %v3917 = vunpack.c.l.b16 %v3902
      %v3918 = vpack.c.b16 %v3915, %v3914
      %v3919 = vpack.c.b16 %v3917, %v3916
      %v3923 = vsel %vm474, %v3893, 0
      %v3926 = vsel %vm474, %v3894, 0
      %v3929 = vsel %vm474, %v3895, 0
      %v3932 = vsel %vm474, %v3896, 0
      %v3935 = vsel %vm474, %v3897, 0
      %v3938 = vsel %vm474, %v3898, 0
      %3940 = vmatprep.subr.bf16.mxu0 0
      %3941 = vmatpush1.bf16.msra.mxu0 %v3918
      %3942 = vmatprep.subr.bf16.mxu0 0
      %3943 = vmatpush1.bf16.msra.mxu0 %v3919
      %3944 = vmatprep.subr.bf16.mxu0 0
      %3945 = vmatpush1.bf16.msra.mxu0 0
      %3946 = vmatprep.subr.bf16.mxu0 0
      %3947 = vmatpush1.bf16.msra.mxu0 0
      %3948 = vmatprep.subr.bf16.mxu0 0
      %3949 = vmatpush1.bf16.msra.mxu0 0
      %3950 = vmatprep.subr.bf16.mxu0 0
      %3951 = vmatpush1.bf16.msra.mxu0 0
      %3952 = vmatprep.subr.bf16.mxu0 0
      %3953 = vmatpush1.bf16.msra.mxu0 0
      %3954 = vmatprep.subr.bf16.mxu0 0
      %3955 = vmatpush1.bf16.msra.mxu0 0
      %3956 = vmatprep.subr.bf16.mxu0 0
      %3957 = vmatpush1.bf16.msra.mxu0 0
      %3958 = vmatprep.subr.bf16.mxu0 0
      %3959 = vmatpush1.bf16.msra.mxu0 0
      %3960 = vmatprep.subr.bf16.mxu0 0
      %3961 = vmatpush1.bf16.msra.mxu0 0
      %3962 = vmatprep.subr.bf16.mxu0 0
      %3963 = vmatpush1.bf16.msra.mxu0 0
      %3964 = vmatprep.subr.bf16.mxu0 0
      %3965 = vmatpush1.bf16.msra.mxu0 0
      %3966 = vmatprep.subr.bf16.mxu0 0
      %3967 = vmatpush1.bf16.msra.mxu0 0
      %3968 = vmatprep.subr.bf16.mxu0 0
      %3969 = vmatpush1.bf16.msra.mxu0 0
      %3970 = vmatprep.subr.bf16.mxu0 0
      %3971 = vmatpush1.bf16.msra.mxu0 0
      %3972 = vmatprep.mubr.bf16.mxu0 0
      %3973 = vmatmul.mubr.bf16.gmra.mrb[0].mxu0 %v3923
      %v3974 = vpop.f32.mrb[0].mxu0
      %v3975 = vadd.f32 %v3908, %v3974
      %v3976 = vpop.f32.mrb[0].mxu0
      %v3977 = vpop.f32.mrb[0].mxu0
      %v3978 = vadd.f32 %v3908, %v3977
      %v3979 = vpop.f32.mrb[0].mxu0
      %3980 = vmatprep.mubr.bf16.mxu0 0
      %3981 = vmatmul.mubr.bf16.gmra.mrb[0].mxu0 %v3926
      %v3982 = vpop.f32.mrb[0].mxu0
      %v3983 = vadd.f32 %v3908, %v3982
      %v3984 = vpop.f32.mrb[0].mxu0
      %v3985 = vpop.f32.mrb[0].mxu0
      %v3986 = vadd.f32 %v3908, %v3985
      %v3987 = vpop.f32.mrb[0].mxu0
      %3988 = vmatprep.mubr.bf16.mxu0 0
      %3989 = vmatmul.mubr.bf16.gmra.mrb[0].mxu0 %v3929
      %v3990 = vpop.f32.mrb[0].mxu0
      %v3991 = vadd.f32 %v3908, %v3990
      %v3992 = vpop.f32.mrb[0].mxu0
      %v3993 = vpop.f32.mrb[0].mxu0
      %v3994 = vadd.f32 %v3908, %v3993
      %v3995 = vpop.f32.mrb[0].mxu0
      %3996 = vmatprep.mubr.bf16.mxu0 0
      %3997 = vmatmul.mubr.bf16.gmra.mrb[0].mxu0 %v3932
      %v3998 = vpop.f32.mrb[0].mxu0
      %v3999 = vadd.f32 %v3908, %v3998
      %v4000 = vpop.f32.mrb[0].mxu0
      %v4001 = vpop.f32.mrb[0].mxu0
      %v4002 = vadd.f32 %v3908, %v4001
      %v4003 = vpop.f32.mrb[0].mxu0
      %4004 = vmatprep.mubr.bf16.mxu0 0
      %4005 = vmatmul.mubr.bf16.gmra.mrb[0].mxu0 %v3935
      %v4006 = vpop.f32.mrb[0].mxu0
      %v4007 = vadd.f32 %v3908, %v4006
      %v4008 = vpop.f32.mrb[0].mxu0
      %v4009 = vpop.f32.mrb[0].mxu0
      %v4010 = vadd.f32 %v3908, %v4009
      %v4011 = vpop.f32.mrb[0].mxu0
      %4012 = vmatprep.mubr.bf16.mxu0 0
      %4013 = vmatmul.mubr.bf16.gmra.mrb[0].mxu0 %v3938
      %v4014 = vpop.f32.mrb[0].mxu0
      %v4015 = vadd.f32 %v3908, %v4014
      %v4016 = vpop.f32.mrb[0].mxu0
      %v4017 = vpop.f32.mrb[0].mxu0
      %v4018 = vpop.f32.mrb[0].mxu0
      %4019 = vdwg.mxu0
      %v4020 = vmax.f32 %v3975, 0.0
      %v4021 = vmax.f32 %v3978, 0.0
      %v4022 = vmax.f32 %v3983, 0.0
      %v4023 = vmax.f32 %v3986, 0.0
      %v4024 = vmax.f32 %v3991, 0.0
      %v4025 = vmax.f32 %v3994, 0.0
      %v4026 = vmax.f32 %v3999, 0.0
      %v4027 = vmax.f32 %v4002, 0.0
      %v4028 = vmax.f32 %v4007, 0.0
      %v4029 = vmax.f32 %v4010, 0.0
      %v4030 = vmax.f32 %v4015, 0.0
      %v4031 = vpack.c.bf16 %v4021, %v4020
      %v4032 = vpack.c.bf16 %v4023, %v4022
      %v4033 = vpack.c.bf16 %v4025, %v4024
      %v4034 = vpack.c.bf16 %v4027, %v4026
      %v4035 = vpack.c.bf16 %v4029, %v4028
      %v4036 = vpack.c.bf16 %v4030, %v4030
      %v4037 = vld [vmem:[%s8] sm:$0xf]
      %v4038 = vld [vmem:[%s8 + $0x4] sm:$0xf]
      %v4039 = vld [vmem:[%s8 + $0x8] sm:$0xf]
      %v4040 = vld [vmem:[%s8 + $0xc] sm:$0xf]
      %v4041 = vld [vmem:[%s8 + $0x10] sm:$0xf]
      %v4042 = vld [vmem:[%s8 + $0x14] sm:$0xf]
      %v4043 = vld [vmem:[%s8 + $0x18] sm:$0xf]
      %v4044 = vld [vmem:[%s8 + $0x1c] sm:$0xf]
      %v4045 = vld [vmem:[%s8 + $0x20] sm:$0xf]
      %v4046 = vld [vmem:[%s8 + $0x24] sm:$0xf]
      %v4047 = vld [vmem:[%s8 + $0x28] sm:$0xf]
      %v4048 = vld [vmem:[%s8 + $0x2c] sm:$0xf]
      %v4049 = vld [vmem:[%s8 + $0x30] sm:$0xf]
      %v4050 = vld [vmem:[%s8 + $0x34] sm:$0xf]
      %v4051 = vld [vmem:[%s8 + $0x38] sm:$0xf]
      %v4052 = vld [vmem:[%s8 + $0x3c] sm:$0xf]
      %v4053 = vld [vmem:[%s8 + $0x40] sm:$0xf]
      %v4054 = vld [vmem:[%s8 + $0x44] sm:$0xf]
      %v4055 = vld [vmem:[%s8 + $0x48] sm:$0xf]
      %v4056 = vld [vmem:[%s8 + $0x4c] sm:$0xf]
      %v4057 = vld [vmem:[%s8 + $0x50] sm:$0xf]
      %v4058 = vld [vmem:[%s8 + $0x54] sm:$0xf]
      %v4059 = vld [vmem:[%s8 + $0x58] sm:$0xf]
      %v4060 = vld [vmem:[%s8 + $0x5c] sm:$0xf]
      %v4061 = vld [vmem:[%s8 + $0x60] sm:$0xf]
      %v4062 = vld [vmem:[%s8 + $0x64] sm:$0xf]
      %v4063 = vld [vmem:[%s8 + $0x68] sm:$0xf]
      %v4064 = vld [vmem:[%s8 + $0x6c] sm:$0xf]
      %v4065 = vld [vmem:[%s8 + $0x70] sm:$0xf]
      %v4066 = vld [vmem:[%s8 + $0x74] sm:$0xf]
      %v4067 = vld [vmem:[%s8 + $0x78] sm:$0xf]
      %v4068 = vld [vmem:[%s8 + $0x7c] sm:$0xf]
      %v4101 = vunpack.c.l.b16 %v4037
      %v4102 = vunpack.c.l.b16 %v4038
      %v4103 = vunpack.c.l.b16 %v4039
      %v4104 = vunpack.c.l.b16 %v4040
      %v4105 = vunpack.c.l.b16 %v4041
      %v4106 = vunpack.c.l.b16 %v4042
      %v4107 = vunpack.c.l.b16 %v4043
      %v4108 = vunpack.c.l.b16 %v4044
      %v4109 = vunpack.c.l.b16 %v4045
      %v4110 = vunpack.c.l.b16 %v4046
      %v4111 = vunpack.c.l.b16 %v4047
      %v4112 = vunpack.c.l.b16 %v4048
      %v4113 = vunpack.c.l.b16 %v4049
      %v4114 = vunpack.c.l.b16 %v4050
      %v4115 = vunpack.c.l.b16 %v4051
      %v4116 = vunpack.c.l.b16 %v4052
      %v4117 = vunpack.c.l.b16 %v4053
      %v4118 = vunpack.c.l.b16 %v4054
      %v4119 = vunpack.c.l.b16 %v4055
      %v4120 = vunpack.c.l.b16 %v4056
      %v4121 = vunpack.c.l.b16 %v4057
      %v4122 = vunpack.c.l.b16 %v4058
      %v4123 = vunpack.c.l.b16 %v4059
      %v4124 = vunpack.c.l.b16 %v4060
      %v4125 = vunpack.c.l.b16 %v4061
      %v4126 = vunpack.c.l.b16 %v4062
      %v4127 = vunpack.c.l.b16 %v4063
      %v4128 = vunpack.c.l.b16 %v4064
      %v4129 = vunpack.c.l.b16 %v4065
      %v4130 = vunpack.c.l.b16 %v4066
      %v4131 = vunpack.c.l.b16 %v4067
      %v4132 = vunpack.c.l.b16 %v4068
      %v4133 = vpack.c.b16 %v4102, %v4101
      %v4134 = vpack.c.b16 %v4104, %v4103
      %v4135 = vpack.c.b16 %v4106, %v4105
      %v4136 = vpack.c.b16 %v4108, %v4107
      %v4137 = vpack.c.b16 %v4110, %v4109
      %v4138 = vpack.c.b16 %v4112, %v4111
      %v4139 = vpack.c.b16 %v4114, %v4113
      %v4140 = vpack.c.b16 %v4116, %v4115
      %v4141 = vpack.c.b16 %v4118, %v4117
      %v4142 = vpack.c.b16 %v4120, %v4119
      %v4143 = vpack.c.b16 %v4122, %v4121
      %v4144 = vpack.c.b16 %v4124, %v4123
      %v4145 = vpack.c.b16 %v4126, %v4125
      %v4146 = vpack.c.b16 %v4128, %v4127
      %v4147 = vpack.c.b16 %v4130, %v4129
      %v4148 = vpack.c.b16 %v4132, %v4131
      %vm4149 = vcmask 269312
      %v4151 = vsel %vm4149, %v4133, 0
      %v4154 = vsel %vm4149, %v4134, 0
      %v4157 = vsel %vm4149, %v4135, 0
      %v4160 = vsel %vm4149, %v4136, 0
      %v4163 = vsel %vm4149, %v4137, 0
      %v4166 = vsel %vm4149, %v4138, 0
      %v4169 = vsel %vm4149, %v4139, 0
      %v4172 = vsel %vm4149, %v4140, 0
      %v4175 = vsel %vm4149, %v4141, 0
      %v4178 = vsel %vm4149, %v4142, 0
      %v4181 = vsel %vm4149, %v4143, 0
      %v4184 = vsel %vm4149, %v4144, 0
      %v4187 = vsel %vm4149, %v4145, 0
      %v4190 = vsel %vm4149, %v4146, 0
      %v4193 = vsel %vm4149, %v4147, 0
      %v4196 = vsel %vm4149, %v4148, 0
      %v4199 = vsel %vm4149, %v4031, 0
      %v4202 = vsel %vm4149, %v4032, 0
      %v4205 = vsel %vm4149, %v4033, 0
      %v4208 = vsel %vm4149, %v4034, 0
      %v4211 = vsel %vm4149, %v4035, 0
      %v4214 = vsel %vm4149, %v4036, 0
      %4216 = vmatprep.subr.bf16.mxu0 0
      %4217 = vmatpush1.bf16.xpose.msra.mxu0 %v4199
      %4218 = vmatprep.subr.bf16.mxu0 0
      %4219 = vmatpush1.bf16.xpose.msra.mxu0 %v4202
      %4220 = vmatprep.subr.bf16.mxu0 0
      %4221 = vmatpush1.bf16.xpose.msra.mxu0 %v4205
      %4222 = vmatprep.subr.bf16.mxu0 0
      %4223 = vmatpush1.bf16.xpose.msra.mxu0 %v4208
      %4224 = vmatprep.subr.bf16.mxu0 0
      %4225 = vmatpush1.bf16.xpose.msra.mxu0 %v4211
      %4226 = vmatprep.subr.bf16.mxu0 0
      %4227 = vmatpush1.bf16.xpose.msra.mxu0 %v4214
      %4228 = vmatprep.subr.bf16.mxu0 0
      %4229 = vmatpush1.bf16.xpose.msra.mxu0 0
      %4230 = vmatprep.subr.bf16.mxu0 0
      %4231 = vmatpush1.bf16.xpose.msra.mxu0 0
      %4232 = vmatprep.subr.bf16.mxu0 0
      %4233 = vmatpush1.bf16.xpose.msra.mxu0 0
      %4234 = vmatprep.subr.bf16.mxu0 0
      %4235 = vmatpush1.bf16.xpose.msra.mxu0 0
      %4236 = vmatprep.subr.bf16.mxu0 0
      %4237 = vmatpush1.bf16.xpose.msra.mxu0 0
      %4238 = vmatprep.subr.bf16.mxu0 0
      %4239 = vmatpush1.bf16.xpose.msra.mxu0 0
      %4240 = vmatprep.subr.bf16.mxu0 0
      %4241 = vmatpush1.bf16.xpose.msra.mxu0 0
      %4242 = vmatprep.subr.bf16.mxu0 0
      %4243 = vmatpush1.bf16.xpose.msra.mxu0 0
      %4244 = vmatprep.subr.bf16.mxu0 0
      %4245 = vmatpush1.bf16.xpose.msra.mxu0 0
      %4246 = vmatprep.subr.bf16.mxu0 0
      %4247 = vmatpush1.bf16.xpose.msra.mxu0 0
      %4248 = vmatprep.mubr.bf16.mxu0 0
      %4249 = vmatmul.mubr.bf16.gmra.mrb[0].mxu0 %v4151
      %v4250 = vpop.f32.mrb[0].mxu0
      %v4251 = vadd.f32 0.0, %v4250
      %v4252 = vpop.f32.mrb[0].mxu0
      %v4253 = vpop.f32.mrb[0].mxu0
      %v4254 = vadd.f32 0.0, %v4253
      %v4255 = vpop.f32.mrb[0].mxu0
      %4256 = vmatprep.mubr.bf16.mxu0 0
      %4257 = vmatmul.mubr.bf16.gmra.mrb[0].mxu0 %v4154
      %v4258 = vpop.f32.mrb[0].mxu0
      %v4259 = vadd.f32 0.0, %v4258
      %v4260 = vpop.f32.mrb[0].mxu0
      %v4261 = vpop.f32.mrb[0].mxu0
      %v4262 = vadd.f32 0.0, %v4261
      %v4263 = vpop.f32.mrb[0].mxu0
      %4264 = vmatprep.mubr.bf16.mxu0 0
      %4265 = vmatmul.mubr.bf16.gmra.mrb[0].mxu0 %v4157
      %v4266 = vpop.f32.mrb[0].mxu0
      %v4267 = vadd.f32 0.0, %v4266
      %v4268 = vpop.f32.mrb[0].mxu0
      %v4269 = vpop.f32.mrb[0].mxu0
      %v4270 = vadd.f32 0.0, %v4269
      %v4271 = vpop.f32.mrb[0].mxu0
      %4272 = vmatprep.mubr.bf16.mxu0 0
      %4273 = vmatmul.mubr.bf16.gmra.mrb[0].mxu0 %v4160
      %v4274 = vpop.f32.mrb[0].mxu0
      %v4275 = vadd.f32 0.0, %v4274
      %v4276 = vpop.f32.mrb[0].mxu0
      %v4277 = vpop.f32.mrb[0].mxu0
      %v4278 = vadd.f32 0.0, %v4277
      %v4279 = vpop.f32.mrb[0].mxu0
      %4280 = vmatprep.mubr.bf16.mxu0 0
      %4281 = vmatmul.mubr.bf16.gmra.mrb[0].mxu0 %v4163
      %v4282 = vpop.f32.mrb[0].mxu0
      %v4283 = vadd.f32 0.0, %v4282
      %v4284 = vpop.f32.mrb[0].mxu0
      %v4285 = vpop.f32.mrb[0].mxu0
      %v4286 = vadd.f32 0.0, %v4285
      %v4287 = vpop.f32.mrb[0].mxu0
      %4288 = vmatprep.mubr.bf16.mxu0 0
      %4289 = vmatmul.mubr.bf16.gmra.mrb[0].mxu0 %v4166
      %v4290 = vpop.f32.mrb[0].mxu0
      %v4291 = vadd.f32 0.0, %v4290
      %v4292 = vpop.f32.mrb[0].mxu0
      %v4293 = vpop.f32.mrb[0].mxu0
      %v4294 = vadd.f32 0.0, %v4293
      %v4295 = vpop.f32.mrb[0].mxu0
      %4296 = vmatprep.mubr.bf16.mxu0 0
      %4297 = vmatmul.mubr.bf16.gmra.mrb[0].mxu0 %v4169
      %v4298 = vpop.f32.mrb[0].mxu0
      %v4299 = vadd.f32 0.0, %v4298
      %v4300 = vpop.f32.mrb[0].mxu0
      %v4301 = vpop.f32.mrb[0].mxu0
      %v4302 = vadd.f32 0.0, %v4301
      %v4303 = vpop.f32.mrb[0].mxu0
      %4304 = vmatprep.mubr.bf16.mxu0 0
      %4305 = vmatmul.mubr.bf16.gmra.mrb[0].mxu0 %v4172
      %v4306 = vpop.f32.mrb[0].mxu0
      %v4307 = vadd.f32 0.0, %v4306
      %v4308 = vpop.f32.mrb[0].mxu0
      %v4309 = vpop.f32.mrb[0].mxu0
      %v4310 = vadd.f32 0.0, %v4309
      %v4311 = vpop.f32.mrb[0].mxu0
      %4312 = vmatprep.mubr.bf16.mxu0 0
      %4313 = vmatmul.mubr.bf16.gmra.mrb[0].mxu0 %v4175
      %v4314 = vpop.f32.mrb[0].mxu0
      %v4315 = vadd.f32 0.0, %v4314
      %v4316 = vpop.f32.mrb[0].mxu0
      %v4317 = vpop.f32.mrb[0].mxu0
      %v4318 = vadd.f32 0.0, %v4317
      %v4319 = vpop.f32.mrb[0].mxu0
      %4320 = vmatprep.mubr.bf16.mxu0 0
      %4321 = vmatmul.mubr.bf16.gmra.mrb[0].mxu0 %v4178
      %v4322 = vpop.f32.mrb[0].mxu0
      %v4323 = vadd.f32 0.0, %v4322
      %v4324 = vpop.f32.mrb[0].mxu0
      %v4325 = vpop.f32.mrb[0].mxu0
      %v4326 = vadd.f32 0.0, %v4325
      %v4327 = vpop.f32.mrb[0].mxu0
      %4328 = vmatprep.mubr.bf16.mxu0 0
      %4329 = vmatmul.mubr.bf16.gmra.mrb[0].mxu0 %v4181
      %v4330 = vpop.f32.mrb[0].mxu0
      %v4331 = vadd.f32 0.0, %v4330
      %v4332 = vpop.f32.mrb[0].mxu0
      %v4333 = vpop.f32.mrb[0].mxu0
      %v4334 = vadd.f32 0.0, %v4333
      %v4335 = vpop.f32.mrb[0].mxu0
      %4336 = vmatprep.mubr.bf16.mxu0 0
      %4337 = vmatmul.mubr.bf16.gmra.mrb[0].mxu0 %v4184
      %v4338 = vpop.f32.mrb[0].mxu0
      %v4339 = vadd.f32 0.0, %v4338
      %v4340 = vpop.f32.mrb[0].mxu0
      %v4341 = vpop.f32.mrb[0].mxu0
      %v4342 = vadd.f32 0.0, %v4341
      %v4343 = vpop.f32.mrb[0].mxu0
      %4344 = vmatprep.mubr.bf16.mxu0 0
      %4345 = vmatmul.mubr.bf16.gmra.mrb[0].mxu0 %v4187
      %v4346 = vpop.f32.mrb[0].mxu0
      %v4347 = vadd.f32 0.0, %v4346
      %v4348 = vpop.f32.mrb[0].mxu0
      %v4349 = vpop.f32.mrb[0].mxu0
      %v4350 = vadd.f32 0.0, %v4349
      %v4351 = vpop.f32.mrb[0].mxu0
      %4352 = vmatprep.mubr.bf16.mxu0 0
      %4353 = vmatmul.mubr.bf16.gmra.mrb[0].mxu0 %v4190
      %v4354 = vpop.f32.mrb[0].mxu0
      %v4355 = vadd.f32 0.0, %v4354
      %v4356 = vpop.f32.mrb[0].mxu0
      %v4357 = vpop.f32.mrb[0].mxu0
      %v4358 = vadd.f32 0.0, %v4357
      %v4359 = vpop.f32.mrb[0].mxu0
      %4360 = vmatprep.mubr.bf16.mxu0 0
      %4361 = vmatmul.mubr.bf16.gmra.mrb[0].mxu0 %v4193
      %v4362 = vpop.f32.mrb[0].mxu0
      %v4363 = vadd.f32 0.0, %v4362
      %v4364 = vpop.f32.mrb[0].mxu0
      %v4365 = vpop.f32.mrb[0].mxu0
      %v4366 = vadd.f32 0.0, %v4365
      %v4367 = vpop.f32.mrb[0].mxu0
      %4368 = vmatprep.mubr.bf16.mxu0 0
      %4369 = vmatmul.mubr.bf16.gmra.mrb[0].mxu0 %v4196
      %v4370 = vpop.f32.mrb[0].mxu0
      %v4371 = vadd.f32 0.0, %v4370
      %v4372 = vpop.f32.mrb[0].mxu0
      %v4373 = vpop.f32.mrb[0].mxu0
      %v4374 = vadd.f32 0.0, %v4373
      %v4375 = vpop.f32.mrb[0].mxu0
      %4376 = vdwg.mxu0
      %vm4377 = vcmask 662528
      %4378 = vst.msk [vmem:[%s352] sm:$0xff] %vm4377, %v4251
      %4379 = vst.msk [vmem:[%s352 + $0x8] sm:$0xff] %vm4377, %v4254
      %4380 = vst.msk [vmem:[%s352 + $0x10] sm:$0xff] %vm4377, %v4259
      %4381 = vst.msk [vmem:[%s352 + $0x18] sm:$0xff] %vm4377, %v4262
      %4382 = vst.msk [vmem:[%s352 + $0x20] sm:$0xff] %vm4377, %v4267
      %4383 = vst.msk [vmem:[%s352 + $0x28] sm:$0xff] %vm4377, %v4270
      %4384 = vst.msk [vmem:[%s352 + $0x30] sm:$0xff] %vm4377, %v4275
      %4385 = vst.msk [vmem:[%s352 + $0x38] sm:$0xff] %vm4377, %v4278
      %4386 = vst.msk [vmem:[%s352 + $0x40] sm:$0xff] %vm4377, %v4283
      %4387 = vst.msk [vmem:[%s352 + $0x48] sm:$0xff] %vm4377, %v4286
      %4388 = vst.msk [vmem:[%s352 + $0x50] sm:$0xff] %vm4377, %v4291
      %4389 = vst.msk [vmem:[%s352 + $0x58] sm:$0xff] %vm4377, %v4294
      %4390 = vst.msk [vmem:[%s352 + $0x60] sm:$0xff] %vm4377, %v4299
      %4391 = vst.msk [vmem:[%s352 + $0x68] sm:$0xff] %vm4377, %v4302
      %4392 = vst.msk [vmem:[%s352 + $0x70] sm:$0xff] %vm4377, %v4307
      %4393 = vst.msk [vmem:[%s352 + $0x78] sm:$0xff] %vm4377, %v4310
      %4394 = vst.msk [vmem:[%s352 + $0x80] sm:$0xff] %vm4377, %v4315
      %4395 = vst.msk [vmem:[%s352 + $0x88] sm:$0xff] %vm4377, %v4318
      %4396 = vst.msk [vmem:[%s352 + $0x90] sm:$0xff] %vm4377, %v4323
      %4397 = vst.msk [vmem:[%s352 + $0x98] sm:$0xff] %vm4377, %v4326
      %4398 = vst.msk [vmem:[%s352 + $0xa0] sm:$0xff] %vm4377, %v4331
      %4399 = vst.msk [vmem:[%s352 + $0xa8] sm:$0xff] %vm4377, %v4334
      %4400 = vst.msk [vmem:[%s352 + $0xb0] sm:$0xff] %vm4377, %v4339
      %4401 = vst.msk [vmem:[%s352 + $0xb8] sm:$0xff] %vm4377, %v4342
      %4402 = vst.msk [vmem:[%s352 + $0xc0] sm:$0xff] %vm4377, %v4347
      %4403 = vst.msk [vmem:[%s352 + $0xc8] sm:$0xff] %vm4377, %v4350
      %4404 = vst.msk [vmem:[%s352 + $0xd0] sm:$0xff] %vm4377, %v4355
      %4405 = vst.msk [vmem:[%s352 + $0xd8] sm:$0xff] %vm4377, %v4358
      %4406 = vst.msk [vmem:[%s352 + $0xe0] sm:$0xff] %vm4377, %v4363
      %4407 = vst.msk [vmem:[%s352 + $0xe8] sm:$0xff] %vm4377, %v4366
      %4408 = vst.msk [vmem:[%s352 + $0xf0] sm:$0xff] %vm4377, %v4371
      %4409 = vst.msk [vmem:[%s352 + $0xf8] sm:$0xff] %vm4377, %v4374
      %v4410 = vld [vmem:[%s8 + $0x80] sm:$0xf]
      %v4411 = vld [vmem:[%s8 + $0x84] sm:$0xf]
      %v4412 = vld [vmem:[%s8 + $0x88] sm:$0xf]
      %v4413 = vld [vmem:[%s8 + $0x8c] sm:$0xf]
      %v4414 = vld [vmem:[%s8 + $0x90] sm:$0xf]
      %v4415 = vld [vmem:[%s8 + $0x94] sm:$0xf]
      %v4416 = vld [vmem:[%s8 + $0x98] sm:$0xf]
      %v4417 = vld [vmem:[%s8 + $0x9c] sm:$0xf]
      %v4418 = vld [vmem:[%s8 + $0xa0] sm:$0xf]
      %v4419 = vld [vmem:[%s8 + $0xa4] sm:$0xf]
      %v4420 = vld [vmem:[%s8 + $0xa8] sm:$0xf]
      %v4421 = vld [vmem:[%s8 + $0xac] sm:$0xf]
      %v4422 = vld [vmem:[%s8 + $0xb0] sm:$0xf]
      %v4423 = vld [vmem:[%s8 + $0xb4] sm:$0xf]
      %v4424 = vld [vmem:[%s8 + $0xb8] sm:$0xf]
      %v4425 = vld [vmem:[%s8 + $0xbc] sm:$0xf]
      %v4426 = vld [vmem:[%s8 + $0xc0] sm:$0xf]
      %v4427 = vld [vmem:[%s8 + $0xc4] sm:$0xf]
      %v4428 = vld [vmem:[%s8 + $0xc8] sm:$0xf]
      %v4429 = vld [vmem:[%s8 + $0xcc] sm:$0xf]
      %v4430 = vld [vmem:[%s8 + $0xd0] sm:$0xf]
      %v4431 = vld [vmem:[%s8 + $0xd4] sm:$0xf]
      %v4432 = vld [vmem:[%s8 + $0xd8] sm:$0xf]
      %v4433 = vld [vmem:[%s8 + $0xdc] sm:$0xf]
      %v4434 = vld [vmem:[%s8 + $0xe0] sm:$0xf]
      %v4435 = vld [vmem:[%s8 + $0xe4] sm:$0xf]
      %v4436 = vld [vmem:[%s8 + $0xe8] sm:$0xf]
      %v4437 = vld [vmem:[%s8 + $0xec] sm:$0xf]
      %v4438 = vld [vmem:[%s8 + $0xf0] sm:$0xf]
      %v4439 = vld [vmem:[%s8 + $0xf4] sm:$0xf]
      %v4440 = vld [vmem:[%s8 + $0xf8] sm:$0xf]
      %v4441 = vld [vmem:[%s8 + $0xfc] sm:$0xf]
      %v4474 = vunpack.c.l.b16 %v4410
      %v4475 = vunpack.c.l.b16 %v4411
      %v4476 = vunpack.c.l.b16 %v4412
      %v4477 = vunpack.c.l.b16 %v4413
      %v4478 = vunpack.c.l.b16 %v4414
      %v4479 = vunpack.c.l.b16 %v4415
      %v4480 = vunpack.c.l.b16 %v4416
      %v4481 = vunpack.c.l.b16 %v4417
      %v4482 = vunpack.c.l.b16 %v4418
      %v4483 = vunpack.c.l.b16 %v4419
      %v4484 = vunpack.c.l.b16 %v4420
      %v4485 = vunpack.c.l.b16 %v4421
      %v4486 = vunpack.c.l.b16 %v4422
      %v4487 = vunpack.c.l.b16 %v4423
      %v4488 = vunpack.c.l.b16 %v4424
      %v4489 = vunpack.c.l.b16 %v4425
      %v4490 = vunpack.c.l.b16 %v4426
      %v4491 = vunpack.c.l.b16 %v4427
      %v4492 = vunpack.c.l.b16 %v4428
      %v4493 = vunpack.c.l.b16 %v4429
      %v4494 = vunpack.c.l.b16 %v4430
      %v4495 = vunpack.c.l.b16 %v4431
      %v4496 = vunpack.c.l.b16 %v4432
      %v4497 = vunpack.c.l.b16 %v4433
      %v4498 = vunpack.c.l.b16 %v4434
      %v4499 = vunpack.c.l.b16 %v4435
      %v4500 = vunpack.c.l.b16 %v4436
      %v4501 = vunpack.c.l.b16 %v4437
      %v4502 = vunpack.c.l.b16 %v4438
      %v4503 = vunpack.c.l.b16 %v4439
      %v4504 = vunpack.c.l.b16 %v4440
      %v4505 = vunpack.c.l.b16 %v4441
      %v4506 = vpack.c.b16 %v4475, %v4474
      %v4507 = vpack.c.b16 %v4477, %v4476
      %v4508 = vpack.c.b16 %v4479, %v4478
      %v4509 = vpack.c.b16 %v4481, %v4480
      %v4510 = vpack.c.b16 %v4483, %v4482
      %v4511 = vpack.c.b16 %v4485, %v4484
      %v4512 = vpack.c.b16 %v4487, %v4486
      %v4513 = vpack.c.b16 %v4489, %v4488
      %v4514 = vpack.c.b16 %v4491, %v4490
      %v4515 = vpack.c.b16 %v4493, %v4492
      %v4516 = vpack.c.b16 %v4495, %v4494
      %v4517 = vpack.c.b16 %v4497, %v4496
      %v4518 = vpack.c.b16 %v4499, %v4498
      %v4519 = vpack.c.b16 %v4501, %v4500
      %v4520 = vpack.c.b16 %v4503, %v4502
      %v4521 = vpack.c.b16 %v4505, %v4504
      %v4523 = vsel %vm4149, %v4506, 0
      %v4526 = vsel %vm4149, %v4507, 0
      %v4529 = vsel %vm4149, %v4508, 0
      %v4532 = vsel %vm4149, %v4509, 0
      %v4535 = vsel %vm4149, %v4510, 0
      %v4538 = vsel %vm4149, %v4511, 0
      %v4541 = vsel %vm4149, %v4512, 0
      %v4544 = vsel %vm4149, %v4513, 0
      %v4547 = vsel %vm4149, %v4514, 0
      %v4550 = vsel %vm4149, %v4515, 0
      %v4553 = vsel %vm4149, %v4516, 0
      %v4556 = vsel %vm4149, %v4517, 0
      %v4559 = vsel %vm4149, %v4518, 0
      %v4562 = vsel %vm4149, %v4519, 0
      %v4565 = vsel %vm4149, %v4520, 0
      %v4568 = vsel %vm4149, %v4521, 0
      %4570 = vmatprep.subr.bf16.mxu0 0
      %4571 = vmatpush1.bf16.xpose.msra.mxu0 %v4199
      %4572 = vmatprep.subr.bf16.mxu0 0
      %4573 = vmatpush1.bf16.xpose.msra.mxu0 %v4202
      %4574 = vmatprep.subr.bf16.mxu0 0
      %4575 = vmatpush1.bf16.xpose.msra.mxu0 %v4205
      %4576 = vmatprep.subr.bf16.mxu0 0
      %4577 = vmatpush1.bf16.xpose.msra.mxu0 %v4208
      %4578 = vmatprep.subr.bf16.mxu0 0
      %4579 = vmatpush1.bf16.xpose.msra.mxu0 %v4211
      %4580 = vmatprep.subr.bf16.mxu0 0
      %4581 = vmatpush1.bf16.xpose.msra.mxu0 %v4214
      %4582 = vmatprep.subr.bf16.mxu0 0
      %4583 = vmatpush1.bf16.xpose.msra.mxu0 0
      %4584 = vmatprep.subr.bf16.mxu0 0
      %4585 = vmatpush1.bf16.xpose.msra.mxu0 0
      %4586 = vmatprep.subr.bf16.mxu0 0
      %4587 = vmatpush1.bf16.xpose.msra.mxu0 0
      %4588 = vmatprep.subr.bf16.mxu0 0
      %4589 = vmatpush1.bf16.xpose.msra.mxu0 0
      %4590 = vmatprep.subr.bf16.mxu0 0
      %4591 = vmatpush1.bf16.xpose.msra.mxu0 0
      %4592 = vmatprep.subr.bf16.mxu0 0
      %4593 = vmatpush1.bf16.xpose.msra.mxu0 0
      %4594 = vmatprep.subr.bf16.mxu0 0
      %4595 = vmatpush1.bf16.xpose.msra.mxu0 0
      %4596 = vmatprep.subr.bf16.mxu0 0
      %4597 = vmatpush1.bf16.xpose.msra.mxu0 0
      %4598 = vmatprep.subr.bf16.mxu0 0
      %4599 = vmatpush1.bf16.xpose.msra.mxu0 0
      %4600 = vmatprep.subr.bf16.mxu0 0
      %4601 = vmatpush1.bf16.xpose.msra.mxu0 0
      %4602 = vmatprep.mubr.bf16.mxu0 0
      %4603 = vmatmul.mubr.bf16.gmra.mrb[0].mxu0 %v4523
      %v4604 = vpop.f32.mrb[0].mxu0
      %v4605 = vadd.f32 0.0, %v4604
      %v4606 = vpop.f32.mrb[0].mxu0
      %v4607 = vpop.f32.mrb[0].mxu0
      %v4608 = vadd.f32 0.0, %v4607
      %v4609 = vpop.f32.mrb[0].mxu0
      %4610 = vmatprep.mubr.bf16.mxu0 0
      %4611 = vmatmul.mubr.bf16.gmra.mrb[0].mxu0 %v4526
      %v4612 = vpop.f32.mrb[0].mxu0
      %v4613 = vadd.f32 0.0, %v4612
      %v4614 = vpop.f32.mrb[0].mxu0
      %v4615 = vpop.f32.mrb[0].mxu0
      %v4616 = vadd.f32 0.0, %v4615
      %v4617 = vpop.f32.mrb[0].mxu0
      %4618 = vmatprep.mubr.bf16.mxu0 0
      %4619 = vmatmul.mubr.bf16.gmra.mrb[0].mxu0 %v4529
      %v4620 = vpop.f32.mrb[0].mxu0
      %v4621 = vadd.f32 0.0, %v4620
      %v4622 = vpop.f32.mrb[0].mxu0
      %v4623 = vpop.f32.mrb[0].mxu0
      %v4624 = vadd.f32 0.0, %v4623
      %v4625 = vpop.f32.mrb[0].mxu0
      %4626 = vmatprep.mubr.bf16.mxu0 0
      %4627 = vmatmul.mubr.bf16.gmra.mrb[0].mxu0 %v4532
      %v4628 = vpop.f32.mrb[0].mxu0
      %v4629 = vadd.f32 0.0, %v4628
      %v4630 = vpop.f32.mrb[0].mxu0
      %v4631 = vpop.f32.mrb[0].mxu0
      %v4632 = vadd.f32 0.0, %v4631
      %v4633 = vpop.f32.mrb[0].mxu0
      %4634 = vmatprep.mubr.bf16.mxu0 0
      %4635 = vmatmul.mubr.bf16.gmra.mrb[0].mxu0 %v4535
      %v4636 = vpop.f32.mrb[0].mxu0
      %v4637 = vadd.f32 0.0, %v4636
      %v4638 = vpop.f32.mrb[0].mxu0
      %v4639 = vpop.f32.mrb[0].mxu0
      %v4640 = vadd.f32 0.0, %v4639
      %v4641 = vpop.f32.mrb[0].mxu0
      %4642 = vmatprep.mubr.bf16.mxu0 0
      %4643 = vmatmul.mubr.bf16.gmra.mrb[0].mxu0 %v4538
      %v4644 = vpop.f32.mrb[0].mxu0
      %v4645 = vadd.f32 0.0, %v4644
      %v4646 = vpop.f32.mrb[0].mxu0
      %v4647 = vpop.f32.mrb[0].mxu0
      %v4648 = vadd.f32 0.0, %v4647
      %v4649 = vpop.f32.mrb[0].mxu0
      %4650 = vmatprep.mubr.bf16.mxu0 0
      %4651 = vmatmul.mubr.bf16.gmra.mrb[0].mxu0 %v4541
      %v4652 = vpop.f32.mrb[0].mxu0
      %v4653 = vadd.f32 0.0, %v4652
      %v4654 = vpop.f32.mrb[0].mxu0
      %v4655 = vpop.f32.mrb[0].mxu0
      %v4656 = vadd.f32 0.0, %v4655
      %v4657 = vpop.f32.mrb[0].mxu0
      %4658 = vmatprep.mubr.bf16.mxu0 0
      %4659 = vmatmul.mubr.bf16.gmra.mrb[0].mxu0 %v4544
      %v4660 = vpop.f32.mrb[0].mxu0
      %v4661 = vadd.f32 0.0, %v4660
      %v4662 = vpop.f32.mrb[0].mxu0
      %v4663 = vpop.f32.mrb[0].mxu0
      %v4664 = vadd.f32 0.0, %v4663
      %v4665 = vpop.f32.mrb[0].mxu0
      %4666 = vmatprep.mubr.bf16.mxu0 0
      %4667 = vmatmul.mubr.bf16.gmra.mrb[0].mxu0 %v4547
      %v4668 = vpop.f32.mrb[0].mxu0
      %v4669 = vadd.f32 0.0, %v4668
      %v4670 = vpop.f32.mrb[0].mxu0
      %v4671 = vpop.f32.mrb[0].mxu0
      %v4672 = vadd.f32 0.0, %v4671
      %v4673 = vpop.f32.mrb[0].mxu0
      %4674 = vmatprep.mubr.bf16.mxu0 0
      %4675 = vmatmul.mubr.bf16.gmra.mrb[0].mxu0 %v4550
      %v4676 = vpop.f32.mrb[0].mxu0
      %v4677 = vadd.f32 0.0, %v4676
      %v4678 = vpop.f32.mrb[0].mxu0
      %v4679 = vpop.f32.mrb[0].mxu0
      %v4680 = vadd.f32 0.0, %v4679
      %v4681 = vpop.f32.mrb[0].mxu0
      %4682 = vmatprep.mubr.bf16.mxu0 0
      %4683 = vmatmul.mubr.bf16.gmra.mrb[0].mxu0 %v4553
      %v4684 = vpop.f32.mrb[0].mxu0
      %v4685 = vadd.f32 0.0, %v4684
      %v4686 = vpop.f32.mrb[0].mxu0
      %v4687 = vpop.f32.mrb[0].mxu0
      %v4688 = vadd.f32 0.0, %v4687
      %v4689 = vpop.f32.mrb[0].mxu0
      %4690 = vmatprep.mubr.bf16.mxu0 0
      %4691 = vmatmul.mubr.bf16.gmra.mrb[0].mxu0 %v4556
      %v4692 = vpop.f32.mrb[0].mxu0
      %v4693 = vadd.f32 0.0, %v4692
      %v4694 = vpop.f32.mrb[0].mxu0
      %v4695 = vpop.f32.mrb[0].mxu0
      %v4696 = vadd.f32 0.0, %v4695
      %v4697 = vpop.f32.mrb[0].mxu0
      %4698 = vmatprep.mubr.bf16.mxu0 0
      %4699 = vmatmul.mubr.bf16.gmra.mrb[0].mxu0 %v4559
      %v4700 = vpop.f32.mrb[0].mxu0
      %v4701 = vadd.f32 0.0, %v4700
      %v4702 = vpop.f32.mrb[0].mxu0
      %v4703 = vpop.f32.mrb[0].mxu0
      %v4704 = vadd.f32 0.0, %v4703
      %v4705 = vpop.f32.mrb[0].mxu0
      %4706 = vmatprep.mubr.bf16.mxu0 0
      %4707 = vmatmul.mubr.bf16.gmra.mrb[0].mxu0 %v4562
      %v4708 = vpop.f32.mrb[0].mxu0
      %v4709 = vadd.f32 0.0, %v4708
      %v4710 = vpop.f32.mrb[0].mxu0
      %v4711 = vpop.f32.mrb[0].mxu0
      %v4712 = vadd.f32 0.0, %v4711
      %v4713 = vpop.f32.mrb[0].mxu0
      %4714 = vmatprep.mubr.bf16.mxu0 0
      %4715 = vmatmul.mubr.bf16.gmra.mrb[0].mxu0 %v4565
      %v4716 = vpop.f32.mrb[0].mxu0
      %v4717 = vadd.f32 0.0, %v4716
      %v4718 = vpop.f32.mrb[0].mxu0
      %v4719 = vpop.f32.mrb[0].mxu0
      %v4720 = vadd.f32 0.0, %v4719
      %v4721 = vpop.f32.mrb[0].mxu0
      %4722 = vmatprep.mubr.bf16.mxu0 0
      %4723 = vmatmul.mubr.bf16.gmra.mrb[0].mxu0 %v4568
      %v4724 = vpop.f32.mrb[0].mxu0
      %v4725 = vadd.f32 0.0, %v4724
      %v4726 = vpop.f32.mrb[0].mxu0
      %v4727 = vpop.f32.mrb[0].mxu0
      %v4728 = vadd.f32 0.0, %v4727
      %v4729 = vpop.f32.mrb[0].mxu0
      %4730 = vdwg.mxu0
      %4731 = vst.msk [vmem:[%s352 + $0x100] sm:$0xff] %vm4377, %v4605
      %4732 = vst.msk [vmem:[%s352 + $0x108] sm:$0xff] %vm4377, %v4608
      %4733 = vst.msk [vmem:[%s352 + $0x110] sm:$0xff] %vm4377, %v4613
      %4734 = vst.msk [vmem:[%s352 + $0x118] sm:$0xff] %vm4377, %v4616
      %4735 = vst.msk [vmem:[%s352 + $0x120] sm:$0xff] %vm4377, %v4621
      %4736 = vst.msk [vmem:[%s352 + $0x128] sm:$0xff] %vm4377, %v4624
      %4737 = vst.msk [vmem:[%s352 + $0x130] sm:$0xff] %vm4377, %v4629
      %4738 = vst.msk [vmem:[%s352 + $0x138] sm:$0xff] %vm4377, %v4632
      %4739 = vst.msk [vmem:[%s352 + $0x140] sm:$0xff] %vm4377, %v4637
      %4740 = vst.msk [vmem:[%s352 + $0x148] sm:$0xff] %vm4377, %v4640
      %4741 = vst.msk [vmem:[%s352 + $0x150] sm:$0xff] %vm4377, %v4645
      %4742 = vst.msk [vmem:[%s352 + $0x158] sm:$0xff] %vm4377, %v4648
      %4743 = vst.msk [vmem:[%s352 + $0x160] sm:$0xff] %vm4377, %v4653
      %4744 = vst.msk [vmem:[%s352 + $0x168] sm:$0xff] %vm4377, %v4656
      %4745 = vst.msk [vmem:[%s352 + $0x170] sm:$0xff] %vm4377, %v4661
      %4746 = vst.msk [vmem:[%s352 + $0x178] sm:$0xff] %vm4377, %v4664
      %4747 = vst.msk [vmem:[%s352 + $0x180] sm:$0xff] %vm4377, %v4669
      %4748 = vst.msk [vmem:[%s352 + $0x188] sm:$0xff] %vm4377, %v4672
      %4749 = vst.msk [vmem:[%s352 + $0x190] sm:$0xff] %vm4377, %v4677
      %4750 = vst.msk [vmem:[%s352 + $0x198] sm:$0xff] %vm4377, %v4680
      %4751 = vst.msk [vmem:[%s352 + $0x1a0] sm:$0xff] %vm4377, %v4685
      %4752 = vst.msk [vmem:[%s352 + $0x1a8] sm:$0xff] %vm4377, %v4688
      %4753 = vst.msk [vmem:[%s352 + $0x1b0] sm:$0xff] %vm4377, %v4693
      %4754 = vst.msk [vmem:[%s352 + $0x1b8] sm:$0xff] %vm4377, %v4696
      %4755 = vst.msk [vmem:[%s352 + $0x1c0] sm:$0xff] %vm4377, %v4701
      %4756 = vst.msk [vmem:[%s352 + $0x1c8] sm:$0xff] %vm4377, %v4704
      %4757 = vst.msk [vmem:[%s352 + $0x1d0] sm:$0xff] %vm4377, %v4709
      %4758 = vst.msk [vmem:[%s352 + $0x1d8] sm:$0xff] %vm4377, %v4712
      %4759 = vst.msk [vmem:[%s352 + $0x1e0] sm:$0xff] %vm4377, %v4717
      %4760 = vst.msk [vmem:[%s352 + $0x1e8] sm:$0xff] %vm4377, %v4720
      %4761 = vst.msk [vmem:[%s352 + $0x1f0] sm:$0xff] %vm4377, %v4725
      %4762 = vst.msk [vmem:[%s352 + $0x1f8] sm:$0xff] %vm4377, %v4728
      %v4763 = vld [vmem:[%s8 + $0x100] sm:$0xf]
      %v4764 = vld [vmem:[%s8 + $0x104] sm:$0xf]
      %v4765 = vld [vmem:[%s8 + $0x108] sm:$0xf]
      %v4766 = vld [vmem:[%s8 + $0x10c] sm:$0xf]
      %v4767 = vld [vmem:[%s8 + $0x110] sm:$0xf]
      %v4768 = vld [vmem:[%s8 + $0x114] sm:$0xf]
      %v4769 = vld [vmem:[%s8 + $0x118] sm:$0xf]
      %v4770 = vld [vmem:[%s8 + $0x11c] sm:$0xf]
      %v4771 = vld [vmem:[%s8 + $0x120] sm:$0xf]
      %v4772 = vld [vmem:[%s8 + $0x124] sm:$0xf]
      %v4773 = vld [vmem:[%s8 + $0x128] sm:$0xf]
      %v4774 = vld [vmem:[%s8 + $0x12c] sm:$0xf]
      %v4775 = vld [vmem:[%s8 + $0x130] sm:$0xf]
      %v4776 = vld [vmem:[%s8 + $0x134] sm:$0xf]
      %v4777 = vld [vmem:[%s8 + $0x138] sm:$0xf]
      %v4778 = vld [vmem:[%s8 + $0x13c] sm:$0xf]
      %v4779 = vld [vmem:[%s8 + $0x140] sm:$0xf]
      %v4780 = vld [vmem:[%s8 + $0x144] sm:$0xf]
      %v4781 = vld [vmem:[%s8 + $0x148] sm:$0xf]
      %v4782 = vld [vmem:[%s8 + $0x14c] sm:$0xf]
      %v4783 = vld [vmem:[%s8 + $0x150] sm:$0xf]
      %v4784 = vld [vmem:[%s8 + $0x154] sm:$0xf]
      %v4785 = vld [vmem:[%s8 + $0x158] sm:$0xf]
      %v4786 = vld [vmem:[%s8 + $0x15c] sm:$0xf]
      %v4787 = vld [vmem:[%s8 + $0x160] sm:$0xf]
      %v4788 = vld [vmem:[%s8 + $0x164] sm:$0xf]
      %v4789 = vld [vmem:[%s8 + $0x168] sm:$0xf]
      %v4790 = vld [vmem:[%s8 + $0x16c] sm:$0xf]
      %v4791 = vld [vmem:[%s8 + $0x170] sm:$0xf]
      %v4792 = vld [vmem:[%s8 + $0x174] sm:$0xf]
      %v4793 = vld [vmem:[%s8 + $0x178] sm:$0xf]
      %v4794 = vld [vmem:[%s8 + $0x17c] sm:$0xf]
      %v4827 = vunpack.c.l.b16 %v4763
      %v4828 = vunpack.c.l.b16 %v4764
      %v4829 = vunpack.c.l.b16 %v4765
      %v4830 = vunpack.c.l.b16 %v4766
      %v4831 = vunpack.c.l.b16 %v4767
      %v4832 = vunpack.c.l.b16 %v4768
      %v4833 = vunpack.c.l.b16 %v4769
      %v4834 = vunpack.c.l.b16 %v4770
      %v4835 = vunpack.c.l.b16 %v4771
      %v4836 = vunpack.c.l.b16 %v4772
      %v4837 = vunpack.c.l.b16 %v4773
      %v4838 = vunpack.c.l.b16 %v4774
      %v4839 = vunpack.c.l.b16 %v4775
      %v4840 = vunpack.c.l.b16 %v4776
      %v4841 = vunpack.c.l.b16 %v4777
      %v4842 = vunpack.c.l.b16 %v4778
      %v4843 = vunpack.c.l.b16 %v4779
      %v4844 = vunpack.c.l.b16 %v4780
      %v4845 = vunpack.c.l.b16 %v4781
      %v4846 = vunpack.c.l.b16 %v4782
      %v4847 = vunpack.c.l.b16 %v4783
      %v4848 = vunpack.c.l.b16 %v4784
      %v4849 = vunpack.c.l.b16 %v4785
      %v4850 = vunpack.c.l.b16 %v4786
      %v4851 = vunpack.c.l.b16 %v4787
      %v4852 = vunpack.c.l.b16 %v4788
      %v4853 = vunpack.c.l.b16 %v4789
      %v4854 = vunpack.c.l.b16 %v4790
      %v4855 = vunpack.c.l.b16 %v4791
      %v4856 = vunpack.c.l.b16 %v4792
      %v4857 = vunpack.c.l.b16 %v4793
      %v4858 = vunpack.c.l.b16 %v4794
      %v4859 = vpack.c.b16 %v4828, %v4827
      %v4860 = vpack.c.b16 %v4830, %v4829
      %v4861 = vpack.c.b16 %v4832, %v4831
      %v4862 = vpack.c.b16 %v4834, %v4833
      %v4863 = vpack.c.b16 %v4836, %v4835
      %v4864 = vpack.c.b16 %v4838, %v4837
      %v4865 = vpack.c.b16 %v4840, %v4839
      %v4866 = vpack.c.b16 %v4842, %v4841
      %v4867 = vpack.c.b16 %v4844, %v4843
      %v4868 = vpack.c.b16 %v4846, %v4845
      %v4869 = vpack.c.b16 %v4848, %v4847
      %v4870 = vpack.c.b16 %v4850, %v4849
      %v4871 = vpack.c.b16 %v4852, %v4851
      %v4872 = vpack.c.b16 %v4854, %v4853
      %v4873 = vpack.c.b16 %v4856, %v4855
      %v4874 = vpack.c.b16 %v4858, %v4857
      %v4876 = vsel %vm4149, %v4859, 0
      %v4879 = vsel %vm4149, %v4860, 0
      %v4882 = vsel %vm4149, %v4861, 0
      %v4885 = vsel %vm4149, %v4862, 0
      %v4888 = vsel %vm4149, %v4863, 0
      %v4891 = vsel %vm4149, %v4864, 0
      %v4894 = vsel %vm4149, %v4865, 0
      %v4897 = vsel %vm4149, %v4866, 0
      %v4900 = vsel %vm4149, %v4867, 0
      %v4903 = vsel %vm4149, %v4868, 0
      %v4906 = vsel %vm4149, %v4869, 0
      %v4909 = vsel %vm4149, %v4870, 0
      %v4912 = vsel %vm4149, %v4871, 0
      %v4915 = vsel %vm4149, %v4872, 0
      %v4918 = vsel %vm4149, %v4873, 0
      %v4921 = vsel %vm4149, %v4874, 0
      %4923 = vmatprep.subr.bf16.mxu0 0
      %4924 = vmatpush1.bf16.xpose.msra.mxu0 %v4199
      %4925 = vmatprep.subr.bf16.mxu0 0
      %4926 = vmatpush1.bf16.xpose.msra.mxu0 %v4202
      %4927 = vmatprep.subr.bf16.mxu0 0
      %4928 = vmatpush1.bf16.xpose.msra.mxu0 %v4205
      %4929 = vmatprep.subr.bf16.mxu0 0
      %4930 = vmatpush1.bf16.xpose.msra.mxu0 %v4208
      %4931 = vmatprep.subr.bf16.mxu0 0
      %4932 = vmatpush1.bf16.xpose.msra.mxu0 %v4211
      %4933 = vmatprep.subr.bf16.mxu0 0
      %4934 = vmatpush1.bf16.xpose.msra.mxu0 %v4214
      %4935 = vmatprep.subr.bf16.mxu0 0
      %4936 = vmatpush1.bf16.xpose.msra.mxu0 0
      %4937 = vmatprep.subr.bf16.mxu0 0
      %4938 = vmatpush1.bf16.xpose.msra.mxu0 0
      %4939 = vmatprep.subr.bf16.mxu0 0
      %4940 = vmatpush1.bf16.xpose.msra.mxu0 0
      %4941 = vmatprep.subr.bf16.mxu0 0
      %4942 = vmatpush1.bf16.xpose.msra.mxu0 0
      %4943 = vmatprep.subr.bf16.mxu0 0
      %4944 = vmatpush1.bf16.xpose.msra.mxu0 0
      %4945 = vmatprep.subr.bf16.mxu0 0
      %4946 = vmatpush1.bf16.xpose.msra.mxu0 0
      %4947 = vmatprep.subr.bf16.mxu0 0
      %4948 = vmatpush1.bf16.xpose.msra.mxu0 0
      %4949 = vmatprep.subr.bf16.mxu0 0
      %4950 = vmatpush1.bf16.xpose.msra.mxu0 0
      %4951 = vmatprep.subr.bf16.mxu0 0
      %4952 = vmatpush1.bf16.xpose.msra.mxu0 0
      %4953 = vmatprep.subr.bf16.mxu0 0
      %4954 = vmatpush1.bf16.xpose.msra.mxu0 0
      %4955 = vmatprep.mubr.bf16.mxu0 0
      %4956 = vmatmul.mubr.bf16.gmra.mrb[0].mxu0 %v4876
      %v4957 = vpop.f32.mrb[0].mxu0
      %v4958 = vadd.f32 0.0, %v4957
      %v4959 = vpop.f32.mrb[0].mxu0
      %v4960 = vpop.f32.mrb[0].mxu0
      %v4961 = vadd.f32 0.0, %v4960
      %v4962 = vpop.f32.mrb[0].mxu0
      %4963 = vmatprep.mubr.bf16.mxu0 0
      %4964 = vmatmul.mubr.bf16.gmra.mrb[0].mxu0 %v4879
      %v4965 = vpop.f32.mrb[0].mxu0
      %v4966 = vadd.f32 0.0, %v4965
      %v4967 = vpop.f32.mrb[0].mxu0
      %v4968 = vpop.f32.mrb[0].mxu0
      %v4969 = vadd.f32 0.0, %v4968
      %v4970 = vpop.f32.mrb[0].mxu0
      %4971 = vmatprep.mubr.bf16.mxu0 0
      %4972 = vmatmul.mubr.bf16.gmra.mrb[0].mxu0 %v4882
      %v4973 = vpop.f32.mrb[0].mxu0
      %v4974 = vadd.f32 0.0, %v4973
      %v4975 = vpop.f32.mrb[0].mxu0
      %v4976 = vpop.f32.mrb[0].mxu0
      %v4977 = vadd.f32 0.0, %v4976
      %v4978 = vpop.f32.mrb[0].mxu0
      %4979 = vmatprep.mubr.bf16.mxu0 0
      %4980 = vmatmul.mubr.bf16.gmra.mrb[0].mxu0 %v4885
      %v4981 = vpop.f32.mrb[0].mxu0
      %v4982 = vadd.f32 0.0, %v4981
      %v4983 = vpop.f32.mrb[0].mxu0
      %v4984 = vpop.f32.mrb[0].mxu0
      %v4985 = vadd.f32 0.0, %v4984
      %v4986 = vpop.f32.mrb[0].mxu0
      %4987 = vmatprep.mubr.bf16.mxu0 0
      %4988 = vmatmul.mubr.bf16.gmra.mrb[0].mxu0 %v4888
      %v4989 = vpop.f32.mrb[0].mxu0
      %v4990 = vadd.f32 0.0, %v4989
      %v4991 = vpop.f32.mrb[0].mxu0
      %v4992 = vpop.f32.mrb[0].mxu0
      %v4993 = vadd.f32 0.0, %v4992
      %v4994 = vpop.f32.mrb[0].mxu0
      %4995 = vmatprep.mubr.bf16.mxu0 0
      %4996 = vmatmul.mubr.bf16.gmra.mrb[0].mxu0 %v4891
      %v4997 = vpop.f32.mrb[0].mxu0
      %v4998 = vadd.f32 0.0, %v4997
      %v4999 = vpop.f32.mrb[0].mxu0
      %v5000 = vpop.f32.mrb[0].mxu0
      %v5001 = vadd.f32 0.0, %v5000
      %v5002 = vpop.f32.mrb[0].mxu0
      %5003 = vmatprep.mubr.bf16.mxu0 0
      %5004 = vmatmul.mubr.bf16.gmra.mrb[0].mxu0 %v4894
      %v5005 = vpop.f32.mrb[0].mxu0
      %v5006 = vadd.f32 0.0, %v5005
      %v5007 = vpop.f32.mrb[0].mxu0
      %v5008 = vpop.f32.mrb[0].mxu0
      %v5009 = vadd.f32 0.0, %v5008
      %v5010 = vpop.f32.mrb[0].mxu0
      %5011 = vmatprep.mubr.bf16.mxu0 0
      %5012 = vmatmul.mubr.bf16.gmra.mrb[0].mxu0 %v4897
      %v5013 = vpop.f32.mrb[0].mxu0
      %v5014 = vadd.f32 0.0, %v5013
      %v5015 = vpop.f32.mrb[0].mxu0
      %v5016 = vpop.f32.mrb[0].mxu0
      %v5017 = vadd.f32 0.0, %v5016
      %v5018 = vpop.f32.mrb[0].mxu0
      %5019 = vmatprep.mubr.bf16.mxu0 0
      %5020 = vmatmul.mubr.bf16.gmra.mrb[0].mxu0 %v4900
      %v5021 = vpop.f32.mrb[0].mxu0
      %v5022 = vadd.f32 0.0, %v5021
      %v5023 = vpop.f32.mrb[0].mxu0
      %v5024 = vpop.f32.mrb[0].mxu0
      %v5025 = vadd.f32 0.0, %v5024
      %v5026 = vpop.f32.mrb[0].mxu0
      %5027 = vmatprep.mubr.bf16.mxu0 0
      %5028 = vmatmul.mubr.bf16.gmra.mrb[0].mxu0 %v4903
      %v5029 = vpop.f32.mrb[0].mxu0
      %v5030 = vadd.f32 0.0, %v5029
      %v5031 = vpop.f32.mrb[0].mxu0
      %v5032 = vpop.f32.mrb[0].mxu0
      %v5033 = vadd.f32 0.0, %v5032
      %v5034 = vpop.f32.mrb[0].mxu0
      %5035 = vmatprep.mubr.bf16.mxu0 0
      %5036 = vmatmul.mubr.bf16.gmra.mrb[0].mxu0 %v4906
      %v5037 = vpop.f32.mrb[0].mxu0
      %v5038 = vadd.f32 0.0, %v5037
      %v5039 = vpop.f32.mrb[0].mxu0
      %v5040 = vpop.f32.mrb[0].mxu0
      %v5041 = vadd.f32 0.0, %v5040
      %v5042 = vpop.f32.mrb[0].mxu0
      %5043 = vmatprep.mubr.bf16.mxu0 0
      %5044 = vmatmul.mubr.bf16.gmra.mrb[0].mxu0 %v4909
      %v5045 = vpop.f32.mrb[0].mxu0
      %v5046 = vadd.f32 0.0, %v5045
      %v5047 = vpop.f32.mrb[0].mxu0
      %v5048 = vpop.f32.mrb[0].mxu0
      %v5049 = vadd.f32 0.0, %v5048
      %v5050 = vpop.f32.mrb[0].mxu0
      %5051 = vmatprep.mubr.bf16.mxu0 0
      %5052 = vmatmul.mubr.bf16.gmra.mrb[0].mxu0 %v4912
      %v5053 = vpop.f32.mrb[0].mxu0
      %v5054 = vadd.f32 0.0, %v5053
      %v5055 = vpop.f32.mrb[0].mxu0
      %v5056 = vpop.f32.mrb[0].mxu0
      %v5057 = vadd.f32 0.0, %v5056
      %v5058 = vpop.f32.mrb[0].mxu0
      %5059 = vmatprep.mubr.bf16.mxu0 0
      %5060 = vmatmul.mubr.bf16.gmra.mrb[0].mxu0 %v4915
      %v5061 = vpop.f32.mrb[0].mxu0
      %v5062 = vadd.f32 0.0, %v5061
      %v5063 = vpop.f32.mrb[0].mxu0
      %v5064 = vpop.f32.mrb[0].mxu0
      %v5065 = vadd.f32 0.0, %v5064
      %v5066 = vpop.f32.mrb[0].mxu0
      %5067 = vmatprep.mubr.bf16.mxu0 0
      %5068 = vmatmul.mubr.bf16.gmra.mrb[0].mxu0 %v4918
      %v5069 = vpop.f32.mrb[0].mxu0
      %v5070 = vadd.f32 0.0, %v5069
      %v5071 = vpop.f32.mrb[0].mxu0
      %v5072 = vpop.f32.mrb[0].mxu0
      %v5073 = vadd.f32 0.0, %v5072
      %v5074 = vpop.f32.mrb[0].mxu0
      %5075 = vmatprep.mubr.bf16.mxu0 0
      %5076 = vmatmul.mubr.bf16.gmra.mrb[0].mxu0 %v4921
      %v5077 = vpop.f32.mrb[0].mxu0
      %v5078 = vadd.f32 0.0, %v5077
      %v5079 = vpop.f32.mrb[0].mxu0
      %v5080 = vpop.f32.mrb[0].mxu0
      %v5081 = vadd.f32 0.0, %v5080
      %v5082 = vpop.f32.mrb[0].mxu0
      %5083 = vdwg.mxu0
      %5084 = vst.msk [vmem:[%s352 + $0x200] sm:$0xff] %vm4377, %v4958
      %5085 = vst.msk [vmem:[%s352 + $0x208] sm:$0xff] %vm4377, %v4961
      %5086 = vst.msk [vmem:[%s352 + $0x210] sm:$0xff] %vm4377, %v4966
      %5087 = vst.msk [vmem:[%s352 + $0x218] sm:$0xff] %vm4377, %v4969
      %5088 = vst.msk [vmem:[%s352 + $0x220] sm:$0xff] %vm4377, %v4974
      %5089 = vst.msk [vmem:[%s352 + $0x228] sm:$0xff] %vm4377, %v4977
      %5090 = vst.msk [vmem:[%s352 + $0x230] sm:$0xff] %vm4377, %v4982
      %5091 = vst.msk [vmem:[%s352 + $0x238] sm:$0xff] %vm4377, %v4985
      %5092 = vst.msk [vmem:[%s352 + $0x240] sm:$0xff] %vm4377, %v4990
      %5093 = vst.msk [vmem:[%s352 + $0x248] sm:$0xff] %vm4377, %v4993
      %5094 = vst.msk [vmem:[%s352 + $0x250] sm:$0xff] %vm4377, %v4998
      %5095 = vst.msk [vmem:[%s352 + $0x258] sm:$0xff] %vm4377, %v5001
      %5096 = vst.msk [vmem:[%s352 + $0x260] sm:$0xff] %vm4377, %v5006
      %5097 = vst.msk [vmem:[%s352 + $0x268] sm:$0xff] %vm4377, %v5009
      %5098 = vst.msk [vmem:[%s352 + $0x270] sm:$0xff] %vm4377, %v5014
      %5099 = vst.msk [vmem:[%s352 + $0x278] sm:$0xff] %vm4377, %v5017
      %5100 = vst.msk [vmem:[%s352 + $0x280] sm:$0xff] %vm4377, %v5022
      %5101 = vst.msk [vmem:[%s352 + $0x288] sm:$0xff] %vm4377, %v5025
      %5102 = vst.msk [vmem:[%s352 + $0x290] sm:$0xff] %vm4377, %v5030
      %5103 = vst.msk [vmem:[%s352 + $0x298] sm:$0xff] %vm4377, %v5033
      %5104 = vst.msk [vmem:[%s352 + $0x2a0] sm:$0xff] %vm4377, %v5038
      %5105 = vst.msk [vmem:[%s352 + $0x2a8] sm:$0xff] %vm4377, %v5041
      %5106 = vst.msk [vmem:[%s352 + $0x2b0] sm:$0xff] %vm4377, %v5046
      %5107 = vst.msk [vmem:[%s352 + $0x2b8] sm:$0xff] %vm4377, %v5049
      %5108 = vst.msk [vmem:[%s352 + $0x2c0] sm:$0xff] %vm4377, %v5054
      %5109 = vst.msk [vmem:[%s352 + $0x2c8] sm:$0xff] %vm4377, %v5057
      %5110 = vst.msk [vmem:[%s352 + $0x2d0] sm:$0xff] %vm4377, %v5062
      %5111 = vst.msk [vmem:[%s352 + $0x2d8] sm:$0xff] %vm4377, %v5065
      %5112 = vst.msk [vmem:[%s352 + $0x2e0] sm:$0xff] %vm4377, %v5070
      %5113 = vst.msk [vmem:[%s352 + $0x2e8] sm:$0xff] %vm4377, %v5073
      %5114 = vst.msk [vmem:[%s352 + $0x2f0] sm:$0xff] %vm4377, %v5078
      %5115 = vst.msk [vmem:[%s352 + $0x2f8] sm:$0xff] %vm4377, %v5081
      %v5116 = vld [vmem:[%s8 + $0x180] sm:$0xf]
      %v5117 = vld [vmem:[%s8 + $0x184] sm:$0xf]
      %v5118 = vld [vmem:[%s8 + $0x188] sm:$0xf]
      %v5119 = vld [vmem:[%s8 + $0x18c] sm:$0xf]
      %v5120 = vld [vmem:[%s8 + $0x190] sm:$0xf]
      %v5121 = vld [vmem:[%s8 + $0x194] sm:$0xf]
      %v5122 = vld [vmem:[%s8 + $0x198] sm:$0xf]
      %v5123 = vld [vmem:[%s8 + $0x19c] sm:$0xf]
      %v5124 = vld [vmem:[%s8 + $0x1a0] sm:$0xf]
      %v5125 = vld [vmem:[%s8 + $0x1a4] sm:$0xf]
      %v5126 = vld [vmem:[%s8 + $0x1a8] sm:$0xf]
      %v5127 = vld [vmem:[%s8 + $0x1ac] sm:$0xf]
      %v5128 = vld [vmem:[%s8 + $0x1b0] sm:$0xf]
      %v5129 = vld [vmem:[%s8 + $0x1b4] sm:$0xf]
      %v5130 = vld [vmem:[%s8 + $0x1b8] sm:$0xf]
      %v5131 = vld [vmem:[%s8 + $0x1bc] sm:$0xf]
      %v5132 = vld [vmem:[%s8 + $0x1c0] sm:$0xf]
      %v5133 = vld [vmem:[%s8 + $0x1c4] sm:$0xf]
      %v5134 = vld [vmem:[%s8 + $0x1c8] sm:$0xf]
      %v5135 = vld [vmem:[%s8 + $0x1cc] sm:$0xf]
      %v5136 = vld [vmem:[%s8 + $0x1d0] sm:$0xf]
      %v5137 = vld [vmem:[%s8 + $0x1d4] sm:$0xf]
      %v5138 = vld [vmem:[%s8 + $0x1d8] sm:$0xf]
      %v5139 = vld [vmem:[%s8 + $0x1dc] sm:$0xf]
      %v5140 = vld [vmem:[%s8 + $0x1e0] sm:$0xf]
      %v5141 = vld [vmem:[%s8 + $0x1e4] sm:$0xf]
      %v5142 = vld [vmem:[%s8 + $0x1e8] sm:$0xf]
      %v5143 = vld [vmem:[%s8 + $0x1ec] sm:$0xf]
      %v5144 = vld [vmem:[%s8 + $0x1f0] sm:$0xf]
      %v5145 = vld [vmem:[%s8 + $0x1f4] sm:$0xf]
      %v5146 = vld [vmem:[%s8 + $0x1f8] sm:$0xf]
      %v5147 = vld [vmem:[%s8 + $0x1fc] sm:$0xf]
      %v5180 = vunpack.c.l.b16 %v5116
      %v5181 = vunpack.c.l.b16 %v5117
      %v5182 = vunpack.c.l.b16 %v5118
      %v5183 = vunpack.c.l.b16 %v5119
      %v5184 = vunpack.c.l.b16 %v5120
      %v5185 = vunpack.c.l.b16 %v5121
      %v5186 = vunpack.c.l.b16 %v5122
      %v5187 = vunpack.c.l.b16 %v5123
      %v5188 = vunpack.c.l.b16 %v5124
      %v5189 = vunpack.c.l.b16 %v5125
      %v5190 = vunpack.c.l.b16 %v5126
      %v5191 = vunpack.c.l.b16 %v5127
      %v5192 = vunpack.c.l.b16 %v5128
      %v5193 = vunpack.c.l.b16 %v5129
      %v5194 = vunpack.c.l.b16 %v5130
      %v5195 = vunpack.c.l.b16 %v5131
      %v5196 = vunpack.c.l.b16 %v5132
      %v5197 = vunpack.c.l.b16 %v5133
      %v5198 = vunpack.c.l.b16 %v5134
      %v5199 = vunpack.c.l.b16 %v5135
      %v5200 = vunpack.c.l.b16 %v5136
      %v5201 = vunpack.c.l.b16 %v5137
      %v5202 = vunpack.c.l.b16 %v5138
      %v5203 = vunpack.c.l.b16 %v5139
      %v5204 = vunpack.c.l.b16 %v5140
      %v5205 = vunpack.c.l.b16 %v5141
      %v5206 = vunpack.c.l.b16 %v5142
      %v5207 = vunpack.c.l.b16 %v5143
      %v5208 = vunpack.c.l.b16 %v5144
      %v5209 = vunpack.c.l.b16 %v5145
      %v5210 = vunpack.c.l.b16 %v5146
      %v5211 = vunpack.c.l.b16 %v5147
      %v5212 = vpack.c.b16 %v5181, %v5180
      %v5213 = vpack.c.b16 %v5183, %v5182
      %v5214 = vpack.c.b16 %v5185, %v5184
      %v5215 = vpack.c.b16 %v5187, %v5186
      %v5216 = vpack.c.b16 %v5189, %v5188
      %v5217 = vpack.c.b16 %v5191, %v5190
      %v5218 = vpack.c.b16 %v5193, %v5192
      %v5219 = vpack.c.b16 %v5195, %v5194
      %v5220 = vpack.c.b16 %v5197, %v5196
      %v5221 = vpack.c.b16 %v5199, %v5198
      %v5222 = vpack.c.b16 %v5201, %v5200
      %v5223 = vpack.c.b16 %v5203, %v5202
      %v5224 = vpack.c.b16 %v5205, %v5204
      %v5225 = vpack.c.b16 %v5207, %v5206
      %v5226 = vpack.c.b16 %v5209, %v5208
      %v5227 = vpack.c.b16 %v5211, %v5210
      %v5229 = vsel %vm4149, %v5212, 0
      %v5232 = vsel %vm4149, %v5213, 0
      %v5235 = vsel %vm4149, %v5214, 0
      %v5238 = vsel %vm4149, %v5215, 0
      %v5241 = vsel %vm4149, %v5216, 0
      %v5244 = vsel %vm4149, %v5217, 0
      %v5247 = vsel %vm4149, %v5218, 0
      %v5250 = vsel %vm4149, %v5219, 0
      %v5253 = vsel %vm4149, %v5220, 0
      %v5256 = vsel %vm4149, %v5221, 0
      %v5259 = vsel %vm4149, %v5222, 0
      %v5262 = vsel %vm4149, %v5223, 0
      %v5265 = vsel %vm4149, %v5224, 0
      %v5268 = vsel %vm4149, %v5225, 0
      %v5271 = vsel %vm4149, %v5226, 0
      %v5274 = vsel %vm4149, %v5227, 0
      %5276 = vmatprep.subr.bf16.mxu0 0
      %5277 = vmatpush1.bf16.xpose.msra.mxu0 %v4199
      %5278 = vmatprep.subr.bf16.mxu0 0
      %5279 = vmatpush1.bf16.xpose.msra.mxu0 %v4202
      %5280 = vmatprep.subr.bf16.mxu0 0
      %5281 = vmatpush1.bf16.xpose.msra.mxu0 %v4205
      %5282 = vmatprep.subr.bf16.mxu0 0
      %5283 = vmatpush1.bf16.xpose.msra.mxu0 %v4208
      %5284 = vmatprep.subr.bf16.mxu0 0
      %5285 = vmatpush1.bf16.xpose.msra.mxu0 %v4211
      %5286 = vmatprep.subr.bf16.mxu0 0
      %5287 = vmatpush1.bf16.xpose.msra.mxu0 %v4214
      %5288 = vmatprep.subr.bf16.mxu0 0
      %5289 = vmatpush1.bf16.xpose.msra.mxu0 0
      %5290 = vmatprep.subr.bf16.mxu0 0
      %5291 = vmatpush1.bf16.xpose.msra.mxu0 0
      %5292 = vmatprep.subr.bf16.mxu0 0
      %5293 = vmatpush1.bf16.xpose.msra.mxu0 0
      %5294 = vmatprep.subr.bf16.mxu0 0
      %5295 = vmatpush1.bf16.xpose.msra.mxu0 0
      %5296 = vmatprep.subr.bf16.mxu0 0
      %5297 = vmatpush1.bf16.xpose.msra.mxu0 0
      %5298 = vmatprep.subr.bf16.mxu0 0
      %5299 = vmatpush1.bf16.xpose.msra.mxu0 0
      %5300 = vmatprep.subr.bf16.mxu0 0
      %5301 = vmatpush1.bf16.xpose.msra.mxu0 0
      %5302 = vmatprep.subr.bf16.mxu0 0
      %5303 = vmatpush1.bf16.xpose.msra.mxu0 0
      %5304 = vmatprep.subr.bf16.mxu0 0
      %5305 = vmatpush1.bf16.xpose.msra.mxu0 0
      %5306 = vmatprep.subr.bf16.mxu0 0
      %5307 = vmatpush1.bf16.xpose.msra.mxu0 0
      %5308 = vmatprep.mubr.bf16.mxu0 0
      %5309 = vmatmul.mubr.bf16.gmra.mrb[0].mxu0 %v5229
      %v5310 = vpop.f32.mrb[0].mxu0
      %v5311 = vadd.f32 0.0, %v5310
      %v5312 = vpop.f32.mrb[0].mxu0
      %v5313 = vpop.f32.mrb[0].mxu0
      %v5314 = vadd.f32 0.0, %v5313
      %v5315 = vpop.f32.mrb[0].mxu0
      %5316 = vmatprep.mubr.bf16.mxu0 0
      %5317 = vmatmul.mubr.bf16.gmra.mrb[0].mxu0 %v5232
      %v5318 = vpop.f32.mrb[0].mxu0
      %v5319 = vadd.f32 0.0, %v5318
      %v5320 = vpop.f32.mrb[0].mxu0
      %v5321 = vpop.f32.mrb[0].mxu0
      %v5322 = vadd.f32 0.0, %v5321
      %v5323 = vpop.f32.mrb[0].mxu0
      %5324 = vmatprep.mubr.bf16.mxu0 0
      %5325 = vmatmul.mubr.bf16.gmra.mrb[0].mxu0 %v5235
      %v5326 = vpop.f32.mrb[0].mxu0
      %v5327 = vadd.f32 0.0, %v5326
      %v5328 = vpop.f32.mrb[0].mxu0
      %v5329 = vpop.f32.mrb[0].mxu0
      %v5330 = vadd.f32 0.0, %v5329
      %v5331 = vpop.f32.mrb[0].mxu0
      %5332 = vmatprep.mubr.bf16.mxu0 0
      %5333 = vmatmul.mubr.bf16.gmra.mrb[0].mxu0 %v5238
      %v5334 = vpop.f32.mrb[0].mxu0
      %v5335 = vadd.f32 0.0, %v5334
      %v5336 = vpop.f32.mrb[0].mxu0
      %v5337 = vpop.f32.mrb[0].mxu0
      %v5338 = vadd.f32 0.0, %v5337
      %v5339 = vpop.f32.mrb[0].mxu0
      %5340 = vmatprep.mubr.bf16.mxu0 0
      %5341 = vmatmul.mubr.bf16.gmra.mrb[0].mxu0 %v5241
      %v5342 = vpop.f32.mrb[0].mxu0
      %v5343 = vadd.f32 0.0, %v5342
      %v5344 = vpop.f32.mrb[0].mxu0
      %v5345 = vpop.f32.mrb[0].mxu0
      %v5346 = vadd.f32 0.0, %v5345
      %v5347 = vpop.f32.mrb[0].mxu0
      %5348 = vmatprep.mubr.bf16.mxu0 0
      %5349 = vmatmul.mubr.bf16.gmra.mrb[0].mxu0 %v5244
      %v5350 = vpop.f32.mrb[0].mxu0
      %v5351 = vadd.f32 0.0, %v5350
      %v5352 = vpop.f32.mrb[0].mxu0
      %v5353 = vpop.f32.mrb[0].mxu0
      %v5354 = vadd.f32 0.0, %v5353
      %v5355 = vpop.f32.mrb[0].mxu0
      %5356 = vmatprep.mubr.bf16.mxu0 0
      %5357 = vmatmul.mubr.bf16.gmra.mrb[0].mxu0 %v5247
      %v5358 = vpop.f32.mrb[0].mxu0
      %v5359 = vadd.f32 0.0, %v5358
      %v5360 = vpop.f32.mrb[0].mxu0
      %v5361 = vpop.f32.mrb[0].mxu0
      %v5362 = vadd.f32 0.0, %v5361
      %v5363 = vpop.f32.mrb[0].mxu0
      %5364 = vmatprep.mubr.bf16.mxu0 0
      %5365 = vmatmul.mubr.bf16.gmra.mrb[0].mxu0 %v5250
      %v5366 = vpop.f32.mrb[0].mxu0
      %v5367 = vadd.f32 0.0, %v5366
      %v5368 = vpop.f32.mrb[0].mxu0
      %v5369 = vpop.f32.mrb[0].mxu0
      %v5370 = vadd.f32 0.0, %v5369
      %v5371 = vpop.f32.mrb[0].mxu0
      %5372 = vmatprep.mubr.bf16.mxu0 0
      %5373 = vmatmul.mubr.bf16.gmra.mrb[0].mxu0 %v5253
      %v5374 = vpop.f32.mrb[0].mxu0
      %v5375 = vadd.f32 0.0, %v5374
      %v5376 = vpop.f32.mrb[0].mxu0
      %v5377 = vpop.f32.mrb[0].mxu0
      %v5378 = vadd.f32 0.0, %v5377
      %v5379 = vpop.f32.mrb[0].mxu0
      %5380 = vmatprep.mubr.bf16.mxu0 0
      %5381 = vmatmul.mubr.bf16.gmra.mrb[0].mxu0 %v5256
      %v5382 = vpop.f32.mrb[0].mxu0
      %v5383 = vadd.f32 0.0, %v5382
      %v5384 = vpop.f32.mrb[0].mxu0
      %v5385 = vpop.f32.mrb[0].mxu0
      %v5386 = vadd.f32 0.0, %v5385
      %v5387 = vpop.f32.mrb[0].mxu0
      %5388 = vmatprep.mubr.bf16.mxu0 0
      %5389 = vmatmul.mubr.bf16.gmra.mrb[0].mxu0 %v5259
      %v5390 = vpop.f32.mrb[0].mxu0
      %v5391 = vadd.f32 0.0, %v5390
      %v5392 = vpop.f32.mrb[0].mxu0
      %v5393 = vpop.f32.mrb[0].mxu0
      %v5394 = vadd.f32 0.0, %v5393
      %v5395 = vpop.f32.mrb[0].mxu0
      %5396 = vmatprep.mubr.bf16.mxu0 0
      %5397 = vmatmul.mubr.bf16.gmra.mrb[0].mxu0 %v5262
      %v5398 = vpop.f32.mrb[0].mxu0
      %v5399 = vadd.f32 0.0, %v5398
      %v5400 = vpop.f32.mrb[0].mxu0
      %v5401 = vpop.f32.mrb[0].mxu0
      %v5402 = vadd.f32 0.0, %v5401
      %v5403 = vpop.f32.mrb[0].mxu0
      %5404 = vmatprep.mubr.bf16.mxu0 0
      %5405 = vmatmul.mubr.bf16.gmra.mrb[0].mxu0 %v5265
      %v5406 = vpop.f32.mrb[0].mxu0
      %v5407 = vadd.f32 0.0, %v5406
      %v5408 = vpop.f32.mrb[0].mxu0
      %v5409 = vpop.f32.mrb[0].mxu0
      %v5410 = vadd.f32 0.0, %v5409
      %v5411 = vpop.f32.mrb[0].mxu0
      %5412 = vmatprep.mubr.bf16.mxu0 0
      %5413 = vmatmul.mubr.bf16.gmra.mrb[0].mxu0 %v5268
      %v5414 = vpop.f32.mrb[0].mxu0
      %v5415 = vadd.f32 0.0, %v5414
      %v5416 = vpop.f32.mrb[0].mxu0
      %v5417 = vpop.f32.mrb[0].mxu0
      %v5418 = vadd.f32 0.0, %v5417
      %v5419 = vpop.f32.mrb[0].mxu0
      %5420 = vmatprep.mubr.bf16.mxu0 0
      %5421 = vmatmul.mubr.bf16.gmra.mrb[0].mxu0 %v5271
      %v5422 = vpop.f32.mrb[0].mxu0
      %v5423 = vadd.f32 0.0, %v5422
      %v5424 = vpop.f32.mrb[0].mxu0
      %v5425 = vpop.f32.mrb[0].mxu0
      %v5426 = vadd.f32 0.0, %v5425
      %v5427 = vpop.f32.mrb[0].mxu0
      %5428 = vmatprep.mubr.bf16.mxu0 0
      %5429 = vmatmul.mubr.bf16.gmra.mrb[0].mxu0 %v5274
      %v5430 = vpop.f32.mrb[0].mxu0
      %v5431 = vadd.f32 0.0, %v5430
      %v5432 = vpop.f32.mrb[0].mxu0
      %v5433 = vpop.f32.mrb[0].mxu0
      %v5434 = vadd.f32 0.0, %v5433
      %v5435 = vpop.f32.mrb[0].mxu0
      %5436 = vdwg.mxu0
      %5437 = vst.msk [vmem:[%s352 + $0x300] sm:$0xff] %vm4377, %v5311
      %5438 = vst.msk [vmem:[%s352 + $0x308] sm:$0xff] %vm4377, %v5314
      %5439 = vst.msk [vmem:[%s352 + $0x310] sm:$0xff] %vm4377, %v5319
      %5440 = vst.msk [vmem:[%s352 + $0x318] sm:$0xff] %vm4377, %v5322
      %5441 = vst.msk [vmem:[%s352 + $0x320] sm:$0xff] %vm4377, %v5327
      %5442 = vst.msk [vmem:[%s352 + $0x328] sm:$0xff] %vm4377, %v5330
      %5443 = vst.msk [vmem:[%s352 + $0x330] sm:$0xff] %vm4377, %v5335
      %5444 = vst.msk [vmem:[%s352 + $0x338] sm:$0xff] %vm4377, %v5338
      %5445 = vst.msk [vmem:[%s352 + $0x340] sm:$0xff] %vm4377, %v5343
      %5446 = vst.msk [vmem:[%s352 + $0x348] sm:$0xff] %vm4377, %v5346
      %5447 = vst.msk [vmem:[%s352 + $0x350] sm:$0xff] %vm4377, %v5351
      %5448 = vst.msk [vmem:[%s352 + $0x358] sm:$0xff] %vm4377, %v5354
      %5449 = vst.msk [vmem:[%s352 + $0x360] sm:$0xff] %vm4377, %v5359
      %5450 = vst.msk [vmem:[%s352 + $0x368] sm:$0xff] %vm4377, %v5362
      %5451 = vst.msk [vmem:[%s352 + $0x370] sm:$0xff] %vm4377, %v5367
      %5452 = vst.msk [vmem:[%s352 + $0x378] sm:$0xff] %vm4377, %v5370
      %5453 = vst.msk [vmem:[%s352 + $0x380] sm:$0xff] %vm4377, %v5375
      %5454 = vst.msk [vmem:[%s352 + $0x388] sm:$0xff] %vm4377, %v5378
      %5455 = vst.msk [vmem:[%s352 + $0x390] sm:$0xff] %vm4377, %v5383
      %5456 = vst.msk [vmem:[%s352 + $0x398] sm:$0xff] %vm4377, %v5386
      %5457 = vst.msk [vmem:[%s352 + $0x3a0] sm:$0xff] %vm4377, %v5391
      %5458 = vst.msk [vmem:[%s352 + $0x3a8] sm:$0xff] %vm4377, %v5394
      %5459 = vst.msk [vmem:[%s352 + $0x3b0] sm:$0xff] %vm4377, %v5399
      %5460 = vst.msk [vmem:[%s352 + $0x3b8] sm:$0xff] %vm4377, %v5402
      %5461 = vst.msk [vmem:[%s352 + $0x3c0] sm:$0xff] %vm4377, %v5407
      %5462 = vst.msk [vmem:[%s352 + $0x3c8] sm:$0xff] %vm4377, %v5410
      %5463 = vst.msk [vmem:[%s352 + $0x3d0] sm:$0xff] %vm4377, %v5415
      %5464 = vst.msk [vmem:[%s352 + $0x3d8] sm:$0xff] %vm4377, %v5418
      %5465 = vst.msk [vmem:[%s352 + $0x3e0] sm:$0xff] %vm4377, %v5423
      %5466 = vst.msk [vmem:[%s352 + $0x3e8] sm:$0xff] %vm4377, %v5426
      %5467 = vst.msk [vmem:[%s352 + $0x3f0] sm:$0xff] %vm4377, %v5431
      %5468 = vst.msk [vmem:[%s352 + $0x3f8] sm:$0xff] %vm4377, %v5434
      %v5469 = vld [vmem:[%s8 + $0x200] sm:$0xf]
      %v5470 = vld [vmem:[%s8 + $0x204] sm:$0xf]
      %v5471 = vld [vmem:[%s8 + $0x208] sm:$0xf]
      %v5472 = vld [vmem:[%s8 + $0x20c] sm:$0xf]
      %v5473 = vld [vmem:[%s8 + $0x210] sm:$0xf]
      %v5474 = vld [vmem:[%s8 + $0x214] sm:$0xf]
      %v5475 = vld [vmem:[%s8 + $0x218] sm:$0xf]
      %v5476 = vld [vmem:[%s8 + $0x21c] sm:$0xf]
      %v5477 = vld [vmem:[%s8 + $0x220] sm:$0xf]
      %v5478 = vld [vmem:[%s8 + $0x224] sm:$0xf]
      %v5479 = vld [vmem:[%s8 + $0x228] sm:$0xf]
      %v5480 = vld [vmem:[%s8 + $0x22c] sm:$0xf]
      %v5481 = vld [vmem:[%s8 + $0x230] sm:$0xf]
      %v5482 = vld [vmem:[%s8 + $0x234] sm:$0xf]
      %v5483 = vld [vmem:[%s8 + $0x238] sm:$0xf]
      %v5484 = vld [vmem:[%s8 + $0x23c] sm:$0xf]
      %v5485 = vld [vmem:[%s8 + $0x240] sm:$0xf]
      %v5486 = vld [vmem:[%s8 + $0x244] sm:$0xf]
      %v5487 = vld [vmem:[%s8 + $0x248] sm:$0xf]
      %v5488 = vld [vmem:[%s8 + $0x24c] sm:$0xf]
      %v5489 = vld [vmem:[%s8 + $0x250] sm:$0xf]
      %v5490 = vld [vmem:[%s8 + $0x254] sm:$0xf]
      %v5491 = vld [vmem:[%s8 + $0x258] sm:$0xf]
      %v5492 = vld [vmem:[%s8 + $0x25c] sm:$0xf]
      %v5493 = vld [vmem:[%s8 + $0x260] sm:$0xf]
      %v5494 = vld [vmem:[%s8 + $0x264] sm:$0xf]
      %v5495 = vld [vmem:[%s8 + $0x268] sm:$0xf]
      %v5496 = vld [vmem:[%s8 + $0x26c] sm:$0xf]
      %v5497 = vld [vmem:[%s8 + $0x270] sm:$0xf]
      %v5498 = vld [vmem:[%s8 + $0x274] sm:$0xf]
      %v5499 = vld [vmem:[%s8 + $0x278] sm:$0xf]
      %v5500 = vld [vmem:[%s8 + $0x27c] sm:$0xf]
      %v5533 = vunpack.c.l.b16 %v5469
      %v5534 = vunpack.c.l.b16 %v5470
      %v5535 = vunpack.c.l.b16 %v5471
      %v5536 = vunpack.c.l.b16 %v5472
      %v5537 = vunpack.c.l.b16 %v5473
      %v5538 = vunpack.c.l.b16 %v5474
      %v5539 = vunpack.c.l.b16 %v5475
      %v5540 = vunpack.c.l.b16 %v5476
      %v5541 = vunpack.c.l.b16 %v5477
      %v5542 = vunpack.c.l.b16 %v5478
      %v5543 = vunpack.c.l.b16 %v5479
      %v5544 = vunpack.c.l.b16 %v5480
      %v5545 = vunpack.c.l.b16 %v5481
      %v5546 = vunpack.c.l.b16 %v5482
      %v5547 = vunpack.c.l.b16 %v5483
      %v5548 = vunpack.c.l.b16 %v5484
      %v5549 = vunpack.c.l.b16 %v5485
      %v5550 = vunpack.c.l.b16 %v5486
      %v5551 = vunpack.c.l.b16 %v5487
      %v5552 = vunpack.c.l.b16 %v5488
      %v5553 = vunpack.c.l.b16 %v5489
      %v5554 = vunpack.c.l.b16 %v5490
      %v5555 = vunpack.c.l.b16 %v5491
      %v5556 = vunpack.c.l.b16 %v5492
      %v5557 = vunpack.c.l.b16 %v5493
      %v5558 = vunpack.c.l.b16 %v5494
      %v5559 = vunpack.c.l.b16 %v5495
      %v5560 = vunpack.c.l.b16 %v5496
      %v5561 = vunpack.c.l.b16 %v5497
      %v5562 = vunpack.c.l.b16 %v5498
      %v5563 = vunpack.c.l.b16 %v5499
      %v5564 = vunpack.c.l.b16 %v5500
      %v5565 = vpack.c.b16 %v5534, %v5533
      %v5566 = vpack.c.b16 %v5536, %v5535
      %v5567 = vpack.c.b16 %v5538, %v5537
      %v5568 = vpack.c.b16 %v5540, %v5539
      %v5569 = vpack.c.b16 %v5542, %v5541
      %v5570 = vpack.c.b16 %v5544, %v5543
      %v5571 = vpack.c.b16 %v5546, %v5545
      %v5572 = vpack.c.b16 %v5548, %v5547
      %v5573 = vpack.c.b16 %v5550, %v5549
      %v5574 = vpack.c.b16 %v5552, %v5551
      %v5575 = vpack.c.b16 %v5554, %v5553
      %v5576 = vpack.c.b16 %v5556, %v5555
      %v5577 = vpack.c.b16 %v5558, %v5557
      %v5578 = vpack.c.b16 %v5560, %v5559
      %v5579 = vpack.c.b16 %v5562, %v5561
      %v5580 = vpack.c.b16 %v5564, %v5563
      %v5582 = vsel %vm4149, %v5565, 0
      %v5585 = vsel %vm4149, %v5566, 0
      %v5588 = vsel %vm4149, %v5567, 0
      %v5591 = vsel %vm4149, %v5568, 0
      %v5594 = vsel %vm4149, %v5569, 0
      %v5597 = vsel %vm4149, %v5570, 0
      %v5600 = vsel %vm4149, %v5571, 0
      %v5603 = vsel %vm4149, %v5572, 0
      %v5606 = vsel %vm4149, %v5573, 0
      %v5609 = vsel %vm4149, %v5574, 0
      %v5612 = vsel %vm4149, %v5575, 0
      %v5615 = vsel %vm4149, %v5576, 0
      %v5618 = vsel %vm4149, %v5577, 0
      %v5621 = vsel %vm4149, %v5578, 0
      %v5624 = vsel %vm4149, %v5579, 0
      %v5627 = vsel %vm4149, %v5580, 0
      %5629 = vmatprep.subr.bf16.mxu0 0
      %5630 = vmatpush1.bf16.xpose.msra.mxu0 %v4199
      %5631 = vmatprep.subr.bf16.mxu0 0
      %5632 = vmatpush1.bf16.xpose.msra.mxu0 %v4202
      %5633 = vmatprep.subr.bf16.mxu0 0
      %5634 = vmatpush1.bf16.xpose.msra.mxu0 %v4205
      %5635 = vmatprep.subr.bf16.mxu0 0
      %5636 = vmatpush1.bf16.xpose.msra.mxu0 %v4208
      %5637 = vmatprep.subr.bf16.mxu0 0
      %5638 = vmatpush1.bf16.xpose.msra.mxu0 %v4211
      %5639 = vmatprep.subr.bf16.mxu0 0
      %5640 = vmatpush1.bf16.xpose.msra.mxu0 %v4214
      %5641 = vmatprep.subr.bf16.mxu0 0
      %5642 = vmatpush1.bf16.xpose.msra.mxu0 0
      %5643 = vmatprep.subr.bf16.mxu0 0
      %5644 = vmatpush1.bf16.xpose.msra.mxu0 0
      %5645 = vmatprep.subr.bf16.mxu0 0
      %5646 = vmatpush1.bf16.xpose.msra.mxu0 0
      %5647 = vmatprep.subr.bf16.mxu0 0
      %5648 = vmatpush1.bf16.xpose.msra.mxu0 0
      %5649 = vmatprep.subr.bf16.mxu0 0
      %5650 = vmatpush1.bf16.xpose.msra.mxu0 0
      %5651 = vmatprep.subr.bf16.mxu0 0
      %5652 = vmatpush1.bf16.xpose.msra.mxu0 0
      %5653 = vmatprep.subr.bf16.mxu0 0
      %5654 = vmatpush1.bf16.xpose.msra.mxu0 0
      %5655 = vmatprep.subr.bf16.mxu0 0
      %5656 = vmatpush1.bf16.xpose.msra.mxu0 0
      %5657 = vmatprep.subr.bf16.mxu0 0
      %5658 = vmatpush1.bf16.xpose.msra.mxu0 0
      %5659 = vmatprep.subr.bf16.mxu0 0
      %5660 = vmatpush1.bf16.xpose.msra.mxu0 0
      %5661 = vmatprep.mubr.bf16.mxu0 0
      %5662 = vmatmul.mubr.bf16.gmra.mrb[0].mxu0 %v5582
      %v5663 = vpop.f32.mrb[0].mxu0
      %v5664 = vadd.f32 0.0, %v5663
      %v5665 = vpop.f32.mrb[0].mxu0
      %v5666 = vpop.f32.mrb[0].mxu0
      %v5667 = vadd.f32 0.0, %v5666
      %v5668 = vpop.f32.mrb[0].mxu0
      %5669 = vmatprep.mubr.bf16.mxu0 0
      %5670 = vmatmul.mubr.bf16.gmra.mrb[0].mxu0 %v5585
      %v5671 = vpop.f32.mrb[0].mxu0
      %v5672 = vadd.f32 0.0, %v5671
      %v5673 = vpop.f32.mrb[0].mxu0
      %v5674 = vpop.f32.mrb[0].mxu0
      %v5675 = vadd.f32 0.0, %v5674
      %v5676 = vpop.f32.mrb[0].mxu0
      %5677 = vmatprep.mubr.bf16.mxu0 0
      %5678 = vmatmul.mubr.bf16.gmra.mrb[0].mxu0 %v5588
      %v5679 = vpop.f32.mrb[0].mxu0
      %v5680 = vadd.f32 0.0, %v5679
      %v5681 = vpop.f32.mrb[0].mxu0
      %v5682 = vpop.f32.mrb[0].mxu0
      %v5683 = vadd.f32 0.0, %v5682
      %v5684 = vpop.f32.mrb[0].mxu0
      %5685 = vmatprep.mubr.bf16.mxu0 0
      %5686 = vmatmul.mubr.bf16.gmra.mrb[0].mxu0 %v5591
      %v5687 = vpop.f32.mrb[0].mxu0
      %v5688 = vadd.f32 0.0, %v5687
      %v5689 = vpop.f32.mrb[0].mxu0
      %v5690 = vpop.f32.mrb[0].mxu0
      %v5691 = vadd.f32 0.0, %v5690
      %v5692 = vpop.f32.mrb[0].mxu0
      %5693 = vmatprep.mubr.bf16.mxu0 0
      %5694 = vmatmul.mubr.bf16.gmra.mrb[0].mxu0 %v5594
      %v5695 = vpop.f32.mrb[0].mxu0
      %v5696 = vadd.f32 0.0, %v5695
      %v5697 = vpop.f32.mrb[0].mxu0
      %v5698 = vpop.f32.mrb[0].mxu0
      %v5699 = vadd.f32 0.0, %v5698
      %v5700 = vpop.f32.mrb[0].mxu0
      %5701 = vmatprep.mubr.bf16.mxu0 0
      %5702 = vmatmul.mubr.bf16.gmra.mrb[0].mxu0 %v5597
      %v5703 = vpop.f32.mrb[0].mxu0
      %v5704 = vadd.f32 0.0, %v5703
      %v5705 = vpop.f32.mrb[0].mxu0
      %v5706 = vpop.f32.mrb[0].mxu0
      %v5707 = vadd.f32 0.0, %v5706
      %v5708 = vpop.f32.mrb[0].mxu0
      %5709 = vmatprep.mubr.bf16.mxu0 0
      %5710 = vmatmul.mubr.bf16.gmra.mrb[0].mxu0 %v5600
      %v5711 = vpop.f32.mrb[0].mxu0
      %v5712 = vadd.f32 0.0, %v5711
      %v5713 = vpop.f32.mrb[0].mxu0
      %v5714 = vpop.f32.mrb[0].mxu0
      %v5715 = vadd.f32 0.0, %v5714
      %v5716 = vpop.f32.mrb[0].mxu0
      %5717 = vmatprep.mubr.bf16.mxu0 0
      %5718 = vmatmul.mubr.bf16.gmra.mrb[0].mxu0 %v5603
      %v5719 = vpop.f32.mrb[0].mxu0
      %v5720 = vadd.f32 0.0, %v5719
      %v5721 = vpop.f32.mrb[0].mxu0
      %v5722 = vpop.f32.mrb[0].mxu0
      %v5723 = vadd.f32 0.0, %v5722
      %v5724 = vpop.f32.mrb[0].mxu0
      %5725 = vmatprep.mubr.bf16.mxu0 0
      %5726 = vmatmul.mubr.bf16.gmra.mrb[0].mxu0 %v5606
      %v5727 = vpop.f32.mrb[0].mxu0
      %v5728 = vadd.f32 0.0, %v5727
      %v5729 = vpop.f32.mrb[0].mxu0
      %v5730 = vpop.f32.mrb[0].mxu0
      %v5731 = vadd.f32 0.0, %v5730
      %v5732 = vpop.f32.mrb[0].mxu0
      %5733 = vmatprep.mubr.bf16.mxu0 0
      %5734 = vmatmul.mubr.bf16.gmra.mrb[0].mxu0 %v5609
      %v5735 = vpop.f32.mrb[0].mxu0
      %v5736 = vadd.f32 0.0, %v5735
      %v5737 = vpop.f32.mrb[0].mxu0
      %v5738 = vpop.f32.mrb[0].mxu0
      %v5739 = vadd.f32 0.0, %v5738
      %v5740 = vpop.f32.mrb[0].mxu0
      %5741 = vmatprep.mubr.bf16.mxu0 0
      %5742 = vmatmul.mubr.bf16.gmra.mrb[0].mxu0 %v5612
      %v5743 = vpop.f32.mrb[0].mxu0
      %v5744 = vadd.f32 0.0, %v5743
      %v5745 = vpop.f32.mrb[0].mxu0
      %v5746 = vpop.f32.mrb[0].mxu0
      %v5747 = vadd.f32 0.0, %v5746
      %v5748 = vpop.f32.mrb[0].mxu0
      %5749 = vmatprep.mubr.bf16.mxu0 0
      %5750 = vmatmul.mubr.bf16.gmra.mrb[0].mxu0 %v5615
      %v5751 = vpop.f32.mrb[0].mxu0
      %v5752 = vadd.f32 0.0, %v5751
      %v5753 = vpop.f32.mrb[0].mxu0
      %v5754 = vpop.f32.mrb[0].mxu0
      %v5755 = vadd.f32 0.0, %v5754
      %v5756 = vpop.f32.mrb[0].mxu0
      %5757 = vmatprep.mubr.bf16.mxu0 0
      %5758 = vmatmul.mubr.bf16.gmra.mrb[0].mxu0 %v5618
      %v5759 = vpop.f32.mrb[0].mxu0
      %v5760 = vadd.f32 0.0, %v5759
      %v5761 = vpop.f32.mrb[0].mxu0
      %v5762 = vpop.f32.mrb[0].mxu0
      %v5763 = vadd.f32 0.0, %v5762
      %v5764 = vpop.f32.mrb[0].mxu0
      %5765 = vmatprep.mubr.bf16.mxu0 0
      %5766 = vmatmul.mubr.bf16.gmra.mrb[0].mxu0 %v5621
      %v5767 = vpop.f32.mrb[0].mxu0
      %v5768 = vadd.f32 0.0, %v5767
      %v5769 = vpop.f32.mrb[0].mxu0
      %v5770 = vpop.f32.mrb[0].mxu0
      %v5771 = vadd.f32 0.0, %v5770
      %v5772 = vpop.f32.mrb[0].mxu0
      %5773 = vmatprep.mubr.bf16.mxu0 0
      %5774 = vmatmul.mubr.bf16.gmra.mrb[0].mxu0 %v5624
      %v5775 = vpop.f32.mrb[0].mxu0
      %v5776 = vadd.f32 0.0, %v5775
      %v5777 = vpop.f32.mrb[0].mxu0
      %v5778 = vpop.f32.mrb[0].mxu0
      %v5779 = vadd.f32 0.0, %v5778
      %v5780 = vpop.f32.mrb[0].mxu0
      %5781 = vmatprep.mubr.bf16.mxu0 0
      %5782 = vmatmul.mubr.bf16.gmra.mrb[0].mxu0 %v5627
      %v5783 = vpop.f32.mrb[0].mxu0
      %v5784 = vadd.f32 0.0, %v5783
      %v5785 = vpop.f32.mrb[0].mxu0
      %v5786 = vpop.f32.mrb[0].mxu0
      %v5787 = vadd.f32 0.0, %v5786
      %v5788 = vpop.f32.mrb[0].mxu0
      %5789 = vdwg.mxu0
      %5790 = vst.msk [vmem:[%s352 + $0x400] sm:$0xff] %vm4377, %v5664
      %5791 = vst.msk [vmem:[%s352 + $0x408] sm:$0xff] %vm4377, %v5667
      %5792 = vst.msk [vmem:[%s352 + $0x410] sm:$0xff] %vm4377, %v5672
      %5793 = vst.msk [vmem:[%s352 + $0x418] sm:$0xff] %vm4377, %v5675
      %5794 = vst.msk [vmem:[%s352 + $0x420] sm:$0xff] %vm4377, %v5680
      %5795 = vst.msk [vmem:[%s352 + $0x428] sm:$0xff] %vm4377, %v5683
      %5796 = vst.msk [vmem:[%s352 + $0x430] sm:$0xff] %vm4377, %v5688
      %5797 = vst.msk [vmem:[%s352 + $0x438] sm:$0xff] %vm4377, %v5691
      %5798 = vst.msk [vmem:[%s352 + $0x440] sm:$0xff] %vm4377, %v5696
      %5799 = vst.msk [vmem:[%s352 + $0x448] sm:$0xff] %vm4377, %v5699
      %5800 = vst.msk [vmem:[%s352 + $0x450] sm:$0xff] %vm4377, %v5704
      %5801 = vst.msk [vmem:[%s352 + $0x458] sm:$0xff] %vm4377, %v5707
      %5802 = vst.msk [vmem:[%s352 + $0x460] sm:$0xff] %vm4377, %v5712
      %5803 = vst.msk [vmem:[%s352 + $0x468] sm:$0xff] %vm4377, %v5715
      %5804 = vst.msk [vmem:[%s352 + $0x470] sm:$0xff] %vm4377, %v5720
      %5805 = vst.msk [vmem:[%s352 + $0x478] sm:$0xff] %vm4377, %v5723
      %5806 = vst.msk [vmem:[%s352 + $0x480] sm:$0xff] %vm4377, %v5728
      %5807 = vst.msk [vmem:[%s352 + $0x488] sm:$0xff] %vm4377, %v5731
      %5808 = vst.msk [vmem:[%s352 + $0x490] sm:$0xff] %vm4377, %v5736
      %5809 = vst.msk [vmem:[%s352 + $0x498] sm:$0xff] %vm4377, %v5739
      %5810 = vst.msk [vmem:[%s352 + $0x4a0] sm:$0xff] %vm4377, %v5744
      %5811 = vst.msk [vmem:[%s352 + $0x4a8] sm:$0xff] %vm4377, %v5747
      %5812 = vst.msk [vmem:[%s352 + $0x4b0] sm:$0xff] %vm4377, %v5752
      %5813 = vst.msk [vmem:[%s352 + $0x4b8] sm:$0xff] %vm4377, %v5755
      %5814 = vst.msk [vmem:[%s352 + $0x4c0] sm:$0xff] %vm4377, %v5760
      %5815 = vst.msk [vmem:[%s352 + $0x4c8] sm:$0xff] %vm4377, %v5763
      %5816 = vst.msk [vmem:[%s352 + $0x4d0] sm:$0xff] %vm4377, %v5768
      %5817 = vst.msk [vmem:[%s352 + $0x4d8] sm:$0xff] %vm4377, %v5771
      %5818 = vst.msk [vmem:[%s352 + $0x4e0] sm:$0xff] %vm4377, %v5776
      %5819 = vst.msk [vmem:[%s352 + $0x4e8] sm:$0xff] %vm4377, %v5779
      %5820 = vst.msk [vmem:[%s352 + $0x4f0] sm:$0xff] %vm4377, %v5784
      %5821 = vst.msk [vmem:[%s352 + $0x4f8] sm:$0xff] %vm4377, %v5787
      %v5822 = vld [vmem:[%s8 + $0x280] sm:$0xf]
      %v5823 = vld [vmem:[%s8 + $0x284] sm:$0xf]
      %v5824 = vld [vmem:[%s8 + $0x288] sm:$0xf]
      %v5825 = vld [vmem:[%s8 + $0x28c] sm:$0xf]
      %v5826 = vld [vmem:[%s8 + $0x290] sm:$0xf]
      %v5827 = vld [vmem:[%s8 + $0x294] sm:$0xf]
      %v5828 = vld [vmem:[%s8 + $0x298] sm:$0xf]
      %v5829 = vld [vmem:[%s8 + $0x29c] sm:$0xf]
      %v5830 = vld [vmem:[%s8 + $0x2a0] sm:$0xf]
      %v5831 = vld [vmem:[%s8 + $0x2a4] sm:$0xf]
      %v5832 = vld [vmem:[%s8 + $0x2a8] sm:$0xf]
      %v5833 = vld [vmem:[%s8 + $0x2ac] sm:$0xf]
      %v5834 = vld [vmem:[%s8 + $0x2b0] sm:$0xf]
      %v5835 = vld [vmem:[%s8 + $0x2b4] sm:$0xf]
      %v5836 = vld [vmem:[%s8 + $0x2b8] sm:$0xf]
      %v5837 = vld [vmem:[%s8 + $0x2bc] sm:$0xf]
      %v5838 = vld [vmem:[%s8 + $0x2c0] sm:$0xf]
      %v5839 = vld [vmem:[%s8 + $0x2c4] sm:$0xf]
      %v5840 = vld [vmem:[%s8 + $0x2c8] sm:$0xf]
      %v5841 = vld [vmem:[%s8 + $0x2cc] sm:$0xf]
      %v5842 = vld [vmem:[%s8 + $0x2d0] sm:$0xf]
      %v5843 = vld [vmem:[%s8 + $0x2d4] sm:$0xf]
      %v5844 = vld [vmem:[%s8 + $0x2d8] sm:$0xf]
      %v5845 = vld [vmem:[%s8 + $0x2dc] sm:$0xf]
      %v5846 = vld [vmem:[%s8 + $0x2e0] sm:$0xf]
      %v5847 = vld [vmem:[%s8 + $0x2e4] sm:$0xf]
      %v5848 = vld [vmem:[%s8 + $0x2e8] sm:$0xf]
      %v5849 = vld [vmem:[%s8 + $0x2ec] sm:$0xf]
      %v5850 = vld [vmem:[%s8 + $0x2f0] sm:$0xf]
      %v5851 = vld [vmem:[%s8 + $0x2f4] sm:$0xf]
      %v5852 = vld [vmem:[%s8 + $0x2f8] sm:$0xf]
      %v5853 = vld [vmem:[%s8 + $0x2fc] sm:$0xf]
      %v5886 = vunpack.c.l.b16 %v5822
      %v5887 = vunpack.c.l.b16 %v5823
      %v5888 = vunpack.c.l.b16 %v5824
      %v5889 = vunpack.c.l.b16 %v5825
      %v5890 = vunpack.c.l.b16 %v5826
      %v5891 = vunpack.c.l.b16 %v5827
      %v5892 = vunpack.c.l.b16 %v5828
      %v5893 = vunpack.c.l.b16 %v5829
      %v5894 = vunpack.c.l.b16 %v5830
      %v5895 = vunpack.c.l.b16 %v5831
      %v5896 = vunpack.c.l.b16 %v5832
      %v5897 = vunpack.c.l.b16 %v5833
      %v5898 = vunpack.c.l.b16 %v5834
      %v5899 = vunpack.c.l.b16 %v5835
      %v5900 = vunpack.c.l.b16 %v5836
      %v5901 = vunpack.c.l.b16 %v5837
      %v5902 = vunpack.c.l.b16 %v5838
      %v5903 = vunpack.c.l.b16 %v5839
      %v5904 = vunpack.c.l.b16 %v5840
      %v5905 = vunpack.c.l.b16 %v5841
      %v5906 = vunpack.c.l.b16 %v5842
      %v5907 = vunpack.c.l.b16 %v5843
      %v5908 = vunpack.c.l.b16 %v5844
      %v5909 = vunpack.c.l.b16 %v5845
      %v5910 = vunpack.c.l.b16 %v5846
      %v5911 = vunpack.c.l.b16 %v5847
      %v5912 = vunpack.c.l.b16 %v5848
      %v5913 = vunpack.c.l.b16 %v5849
      %v5914 = vunpack.c.l.b16 %v5850
      %v5915 = vunpack.c.l.b16 %v5851
      %v5916 = vunpack.c.l.b16 %v5852
      %v5917 = vunpack.c.l.b16 %v5853
      %v5918 = vpack.c.b16 %v5887, %v5886
      %v5919 = vpack.c.b16 %v5889, %v5888
      %v5920 = vpack.c.b16 %v5891, %v5890
      %v5921 = vpack.c.b16 %v5893, %v5892
      %v5922 = vpack.c.b16 %v5895, %v5894
      %v5923 = vpack.c.b16 %v5897, %v5896
      %v5924 = vpack.c.b16 %v5899, %v5898
      %v5925 = vpack.c.b16 %v5901, %v5900
      %v5926 = vpack.c.b16 %v5903, %v5902
      %v5927 = vpack.c.b16 %v5905, %v5904
      %v5928 = vpack.c.b16 %v5907, %v5906
      %v5929 = vpack.c.b16 %v5909, %v5908
      %v5930 = vpack.c.b16 %v5911, %v5910
      %v5931 = vpack.c.b16 %v5913, %v5912
      %v5932 = vpack.c.b16 %v5915, %v5914
      %v5933 = vpack.c.b16 %v5917, %v5916
      %v5935 = vsel %vm4149, %v5918, 0
      %v5938 = vsel %vm4149, %v5919, 0
      %v5941 = vsel %vm4149, %v5920, 0
      %v5944 = vsel %vm4149, %v5921, 0
      %v5947 = vsel %vm4149, %v5922, 0
      %v5950 = vsel %vm4149, %v5923, 0
      %v5953 = vsel %vm4149, %v5924, 0
      %v5956 = vsel %vm4149, %v5925, 0
      %v5959 = vsel %vm4149, %v5926, 0
      %v5962 = vsel %vm4149, %v5927, 0
      %v5965 = vsel %vm4149, %v5928, 0
      %v5968 = vsel %vm4149, %v5929, 0
      %v5971 = vsel %vm4149, %v5930, 0
      %v5974 = vsel %vm4149, %v5931, 0
      %v5977 = vsel %vm4149, %v5932, 0
      %v5980 = vsel %vm4149, %v5933, 0
      %5982 = vmatprep.subr.bf16.mxu0 0
      %5983 = vmatpush1.bf16.xpose.msra.mxu0 %v4199
      %5984 = vmatprep.subr.bf16.mxu0 0
      %5985 = vmatpush1.bf16.xpose.msra.mxu0 %v4202
      %5986 = vmatprep.subr.bf16.mxu0 0
      %5987 = vmatpush1.bf16.xpose.msra.mxu0 %v4205
      %5988 = vmatprep.subr.bf16.mxu0 0
      %5989 = vmatpush1.bf16.xpose.msra.mxu0 %v4208
      %5990 = vmatprep.subr.bf16.mxu0 0
      %5991 = vmatpush1.bf16.xpose.msra.mxu0 %v4211
      %5992 = vmatprep.subr.bf16.mxu0 0
      %5993 = vmatpush1.bf16.xpose.msra.mxu0 %v4214
      %5994 = vmatprep.subr.bf16.mxu0 0
      %5995 = vmatpush1.bf16.xpose.msra.mxu0 0
      %5996 = vmatprep.subr.bf16.mxu0 0
      %5997 = vmatpush1.bf16.xpose.msra.mxu0 0
      %5998 = vmatprep.subr.bf16.mxu0 0
      %5999 = vmatpush1.bf16.xpose.msra.mxu0 0
      %6000 = vmatprep.subr.bf16.mxu0 0
      %6001 = vmatpush1.bf16.xpose.msra.mxu0 0
      %6002 = vmatprep.subr.bf16.mxu0 0
      %6003 = vmatpush1.bf16.xpose.msra.mxu0 0
      %6004 = vmatprep.subr.bf16.mxu0 0
      %6005 = vmatpush1.bf16.xpose.msra.mxu0 0
      %6006 = vmatprep.subr.bf16.mxu0 0
      %6007 = vmatpush1.bf16.xpose.msra.mxu0 0
      %6008 = vmatprep.subr.bf16.mxu0 0
      %6009 = vmatpush1.bf16.xpose.msra.mxu0 0
      %6010 = vmatprep.subr.bf16.mxu0 0
      %6011 = vmatpush1.bf16.xpose.msra.mxu0 0
      %6012 = vmatprep.subr.bf16.mxu0 0
      %6013 = vmatpush1.bf16.xpose.msra.mxu0 0
      %6014 = vmatprep.mubr.bf16.mxu0 0
      %6015 = vmatmul.mubr.bf16.gmra.mrb[0].mxu0 %v5935
      %v6016 = vpop.f32.mrb[0].mxu0
      %v6017 = vadd.f32 0.0, %v6016
      %v6018 = vpop.f32.mrb[0].mxu0
      %v6019 = vpop.f32.mrb[0].mxu0
      %v6020 = vadd.f32 0.0, %v6019
      %v6021 = vpop.f32.mrb[0].mxu0
      %6022 = vmatprep.mubr.bf16.mxu0 0
      %6023 = vmatmul.mubr.bf16.gmra.mrb[0].mxu0 %v5938
      %v6024 = vpop.f32.mrb[0].mxu0
      %v6025 = vadd.f32 0.0, %v6024
      %v6026 = vpop.f32.mrb[0].mxu0
      %v6027 = vpop.f32.mrb[0].mxu0
      %v6028 = vadd.f32 0.0, %v6027
      %v6029 = vpop.f32.mrb[0].mxu0
      %6030 = vmatprep.mubr.bf16.mxu0 0
      %6031 = vmatmul.mubr.bf16.gmra.mrb[0].mxu0 %v5941
      %v6032 = vpop.f32.mrb[0].mxu0
      %v6033 = vadd.f32 0.0, %v6032
      %v6034 = vpop.f32.mrb[0].mxu0
      %v6035 = vpop.f32.mrb[0].mxu0
      %v6036 = vadd.f32 0.0, %v6035
      %v6037 = vpop.f32.mrb[0].mxu0
      %6038 = vmatprep.mubr.bf16.mxu0 0
      %6039 = vmatmul.mubr.bf16.gmra.mrb[0].mxu0 %v5944
      %v6040 = vpop.f32.mrb[0].mxu0
      %v6041 = vadd.f32 0.0, %v6040
      %v6042 = vpop.f32.mrb[0].mxu0
      %v6043 = vpop.f32.mrb[0].mxu0
      %v6044 = vadd.f32 0.0, %v6043
      %v6045 = vpop.f32.mrb[0].mxu0
      %6046 = vmatprep.mubr.bf16.mxu0 0
      %6047 = vmatmul.mubr.bf16.gmra.mrb[0].mxu0 %v5947
      %v6048 = vpop.f32.mrb[0].mxu0
      %v6049 = vadd.f32 0.0, %v6048
      %v6050 = vpop.f32.mrb[0].mxu0
      %v6051 = vpop.f32.mrb[0].mxu0
      %v6052 = vadd.f32 0.0, %v6051
      %v6053 = vpop.f32.mrb[0].mxu0
      %6054 = vmatprep.mubr.bf16.mxu0 0
      %6055 = vmatmul.mubr.bf16.gmra.mrb[0].mxu0 %v5950
      %v6056 = vpop.f32.mrb[0].mxu0
      %v6057 = vadd.f32 0.0, %v6056
      %v6058 = vpop.f32.mrb[0].mxu0
      %v6059 = vpop.f32.mrb[0].mxu0
      %v6060 = vadd.f32 0.0, %v6059
      %v6061 = vpop.f32.mrb[0].mxu0
      %6062 = vmatprep.mubr.bf16.mxu0 0
      %6063 = vmatmul.mubr.bf16.gmra.mrb[0].mxu0 %v5953
      %v6064 = vpop.f32.mrb[0].mxu0
      %v6065 = vadd.f32 0.0, %v6064
      %v6066 = vpop.f32.mrb[0].mxu0
      %v6067 = vpop.f32.mrb[0].mxu0
      %v6068 = vadd.f32 0.0, %v6067
      %v6069 = vpop.f32.mrb[0].mxu0
      %6070 = vmatprep.mubr.bf16.mxu0 0
      %6071 = vmatmul.mubr.bf16.gmra.mrb[0].mxu0 %v5956
      %v6072 = vpop.f32.mrb[0].mxu0
      %v6073 = vadd.f32 0.0, %v6072
      %v6074 = vpop.f32.mrb[0].mxu0
      %v6075 = vpop.f32.mrb[0].mxu0
      %v6076 = vadd.f32 0.0, %v6075
      %v6077 = vpop.f32.mrb[0].mxu0
      %6078 = vmatprep.mubr.bf16.mxu0 0
      %6079 = vmatmul.mubr.bf16.gmra.mrb[0].mxu0 %v5959
      %v6080 = vpop.f32.mrb[0].mxu0
      %v6081 = vadd.f32 0.0, %v6080
      %v6082 = vpop.f32.mrb[0].mxu0
      %v6083 = vpop.f32.mrb[0].mxu0
      %v6084 = vadd.f32 0.0, %v6083
      %v6085 = vpop.f32.mrb[0].mxu0
      %6086 = vmatprep.mubr.bf16.mxu0 0
      %6087 = vmatmul.mubr.bf16.gmra.mrb[0].mxu0 %v5962
      %v6088 = vpop.f32.mrb[0].mxu0
      %v6089 = vadd.f32 0.0, %v6088
      %v6090 = vpop.f32.mrb[0].mxu0
      %v6091 = vpop.f32.mrb[0].mxu0
      %v6092 = vadd.f32 0.0, %v6091
      %v6093 = vpop.f32.mrb[0].mxu0
      %6094 = vmatprep.mubr.bf16.mxu0 0
      %6095 = vmatmul.mubr.bf16.gmra.mrb[0].mxu0 %v5965
      %v6096 = vpop.f32.mrb[0].mxu0
      %v6097 = vadd.f32 0.0, %v6096
      %v6098 = vpop.f32.mrb[0].mxu0
      %v6099 = vpop.f32.mrb[0].mxu0
      %v6100 = vadd.f32 0.0, %v6099
      %v6101 = vpop.f32.mrb[0].mxu0
      %6102 = vmatprep.mubr.bf16.mxu0 0
      %6103 = vmatmul.mubr.bf16.gmra.mrb[0].mxu0 %v5968
      %v6104 = vpop.f32.mrb[0].mxu0
      %v6105 = vadd.f32 0.0, %v6104
      %v6106 = vpop.f32.mrb[0].mxu0
      %v6107 = vpop.f32.mrb[0].mxu0
      %v6108 = vadd.f32 0.0, %v6107
      %v6109 = vpop.f32.mrb[0].mxu0
      %6110 = vmatprep.mubr.bf16.mxu0 0
      %6111 = vmatmul.mubr.bf16.gmra.mrb[0].mxu0 %v5971
      %v6112 = vpop.f32.mrb[0].mxu0
      %v6113 = vadd.f32 0.0, %v6112
      %v6114 = vpop.f32.mrb[0].mxu0
      %v6115 = vpop.f32.mrb[0].mxu0
      %v6116 = vadd.f32 0.0, %v6115
      %v6117 = vpop.f32.mrb[0].mxu0
      %6118 = vmatprep.mubr.bf16.mxu0 0
      %6119 = vmatmul.mubr.bf16.gmra.mrb[0].mxu0 %v5974
      %v6120 = vpop.f32.mrb[0].mxu0
      %v6121 = vadd.f32 0.0, %v6120
      %v6122 = vpop.f32.mrb[0].mxu0
      %v6123 = vpop.f32.mrb[0].mxu0
      %v6124 = vadd.f32 0.0, %v6123
      %v6125 = vpop.f32.mrb[0].mxu0
      %6126 = vmatprep.mubr.bf16.mxu0 0
      %6127 = vmatmul.mubr.bf16.gmra.mrb[0].mxu0 %v5977
      %v6128 = vpop.f32.mrb[0].mxu0
      %v6129 = vadd.f32 0.0, %v6128
      %v6130 = vpop.f32.mrb[0].mxu0
      %v6131 = vpop.f32.mrb[0].mxu0
      %v6132 = vadd.f32 0.0, %v6131
      %v6133 = vpop.f32.mrb[0].mxu0
      %6134 = vmatprep.mubr.bf16.mxu0 0
      %6135 = vmatmul.mubr.bf16.gmra.mrb[0].mxu0 %v5980
      %v6136 = vpop.f32.mrb[0].mxu0
      %v6137 = vadd.f32 0.0, %v6136
      %v6138 = vpop.f32.mrb[0].mxu0
      %v6139 = vpop.f32.mrb[0].mxu0
      %v6140 = vadd.f32 0.0, %v6139
      %v6141 = vpop.f32.mrb[0].mxu0
      %6142 = vdwg.mxu0
      %6143 = vst.msk [vmem:[%s352 + $0x500] sm:$0xff] %vm4377, %v6017
      %6144 = vst.msk [vmem:[%s352 + $0x508] sm:$0xff] %vm4377, %v6020
      %6145 = vst.msk [vmem:[%s352 + $0x510] sm:$0xff] %vm4377, %v6025
      %6146 = vst.msk [vmem:[%s352 + $0x518] sm:$0xff] %vm4377, %v6028
      %6147 = vst.msk [vmem:[%s352 + $0x520] sm:$0xff] %vm4377, %v6033
      %6148 = vst.msk [vmem:[%s352 + $0x528] sm:$0xff] %vm4377, %v6036
      %6149 = vst.msk [vmem:[%s352 + $0x530] sm:$0xff] %vm4377, %v6041
      %6150 = vst.msk [vmem:[%s352 + $0x538] sm:$0xff] %vm4377, %v6044
      %6151 = vst.msk [vmem:[%s352 + $0x540] sm:$0xff] %vm4377, %v6049
      %6152 = vst.msk [vmem:[%s352 + $0x548] sm:$0xff] %vm4377, %v6052
      %6153 = vst.msk [vmem:[%s352 + $0x550] sm:$0xff] %vm4377, %v6057
      %6154 = vst.msk [vmem:[%s352 + $0x558] sm:$0xff] %vm4377, %v6060
      %6155 = vst.msk [vmem:[%s352 + $0x560] sm:$0xff] %vm4377, %v6065
      %6156 = vst.msk [vmem:[%s352 + $0x568] sm:$0xff] %vm4377, %v6068
      %6157 = vst.msk [vmem:[%s352 + $0x570] sm:$0xff] %vm4377, %v6073
      %6158 = vst.msk [vmem:[%s352 + $0x578] sm:$0xff] %vm4377, %v6076
      %6159 = vst.msk [vmem:[%s352 + $0x580] sm:$0xff] %vm4377, %v6081
      %6160 = vst.msk [vmem:[%s352 + $0x588] sm:$0xff] %vm4377, %v6084
      %6161 = vst.msk [vmem:[%s352 + $0x590] sm:$0xff] %vm4377, %v6089
      %6162 = vst.msk [vmem:[%s352 + $0x598] sm:$0xff] %vm4377, %v6092
      %6163 = vst.msk [vmem:[%s352 + $0x5a0] sm:$0xff] %vm4377, %v6097
      %6164 = vst.msk [vmem:[%s352 + $0x5a8] sm:$0xff] %vm4377, %v6100
      %6165 = vst.msk [vmem:[%s352 + $0x5b0] sm:$0xff] %vm4377, %v6105
      %6166 = vst.msk [vmem:[%s352 + $0x5b8] sm:$0xff] %vm4377, %v6108
      %6167 = vst.msk [vmem:[%s352 + $0x5c0] sm:$0xff] %vm4377, %v6113
      %6168 = vst.msk [vmem:[%s352 + $0x5c8] sm:$0xff] %vm4377, %v6116
      %6169 = vst.msk [vmem:[%s352 + $0x5d0] sm:$0xff] %vm4377, %v6121
      %6170 = vst.msk [vmem:[%s352 + $0x5d8] sm:$0xff] %vm4377, %v6124
      %6171 = vst.msk [vmem:[%s352 + $0x5e0] sm:$0xff] %vm4377, %v6129
      %6172 = vst.msk [vmem:[%s352 + $0x5e8] sm:$0xff] %vm4377, %v6132
      %6173 = vst.msk [vmem:[%s352 + $0x5f0] sm:$0xff] %vm4377, %v6137
      %6174 = vst.msk [vmem:[%s352 + $0x5f8] sm:$0xff] %vm4377, %v6140
      %v6175 = vld [vmem:[%s8 + $0x300] sm:$0xf]
      %v6176 = vld [vmem:[%s8 + $0x304] sm:$0xf]
      %v6177 = vld [vmem:[%s8 + $0x308] sm:$0xf]
      %v6178 = vld [vmem:[%s8 + $0x30c] sm:$0xf]
      %v6179 = vld [vmem:[%s8 + $0x310] sm:$0xf]
      %v6180 = vld [vmem:[%s8 + $0x314] sm:$0xf]
      %v6181 = vld [vmem:[%s8 + $0x318] sm:$0xf]
      %v6182 = vld [vmem:[%s8 + $0x31c] sm:$0xf]
      %v6183 = vld [vmem:[%s8 + $0x320] sm:$0xf]
      %v6184 = vld [vmem:[%s8 + $0x324] sm:$0xf]
      %v6185 = vld [vmem:[%s8 + $0x328] sm:$0xf]
      %v6186 = vld [vmem:[%s8 + $0x32c] sm:$0xf]
      %v6187 = vld [vmem:[%s8 + $0x330] sm:$0xf]
      %v6188 = vld [vmem:[%s8 + $0x334] sm:$0xf]
      %v6189 = vld [vmem:[%s8 + $0x338] sm:$0xf]
      %v6190 = vld [vmem:[%s8 + $0x33c] sm:$0xf]
      %v6191 = vld [vmem:[%s8 + $0x340] sm:$0xf]
      %v6192 = vld [vmem:[%s8 + $0x344] sm:$0xf]
      %v6193 = vld [vmem:[%s8 + $0x348] sm:$0xf]
      %v6194 = vld [vmem:[%s8 + $0x34c] sm:$0xf]
      %v6195 = vld [vmem:[%s8 + $0x350] sm:$0xf]
      %v6196 = vld [vmem:[%s8 + $0x354] sm:$0xf]
      %v6197 = vld [vmem:[%s8 + $0x358] sm:$0xf]
      %v6198 = vld [vmem:[%s8 + $0x35c] sm:$0xf]
      %v6199 = vld [vmem:[%s8 + $0x360] sm:$0xf]
      %v6200 = vld [vmem:[%s8 + $0x364] sm:$0xf]
      %v6201 = vld [vmem:[%s8 + $0x368] sm:$0xf]
      %v6202 = vld [vmem:[%s8 + $0x36c] sm:$0xf]
      %v6203 = vld [vmem:[%s8 + $0x370] sm:$0xf]
      %v6204 = vld [vmem:[%s8 + $0x374] sm:$0xf]
      %v6205 = vld [vmem:[%s8 + $0x378] sm:$0xf]
      %v6206 = vld [vmem:[%s8 + $0x37c] sm:$0xf]
      %v6239 = vunpack.c.l.b16 %v6175
      %v6240 = vunpack.c.l.b16 %v6176
      %v6241 = vunpack.c.l.b16 %v6177
      %v6242 = vunpack.c.l.b16 %v6178
      %v6243 = vunpack.c.l.b16 %v6179
      %v6244 = vunpack.c.l.b16 %v6180
      %v6245 = vunpack.c.l.b16 %v6181
      %v6246 = vunpack.c.l.b16 %v6182
      %v6247 = vunpack.c.l.b16 %v6183
      %v6248 = vunpack.c.l.b16 %v6184
      %v6249 = vunpack.c.l.b16 %v6185
      %v6250 = vunpack.c.l.b16 %v6186
      %v6251 = vunpack.c.l.b16 %v6187
      %v6252 = vunpack.c.l.b16 %v6188
      %v6253 = vunpack.c.l.b16 %v6189
      %v6254 = vunpack.c.l.b16 %v6190
      %v6255 = vunpack.c.l.b16 %v6191
      %v6256 = vunpack.c.l.b16 %v6192
      %v6257 = vunpack.c.l.b16 %v6193
      %v6258 = vunpack.c.l.b16 %v6194
      %v6259 = vunpack.c.l.b16 %v6195
      %v6260 = vunpack.c.l.b16 %v6196
      %v6261 = vunpack.c.l.b16 %v6197
      %v6262 = vunpack.c.l.b16 %v6198
      %v6263 = vunpack.c.l.b16 %v6199
      %v6264 = vunpack.c.l.b16 %v6200
      %v6265 = vunpack.c.l.b16 %v6201
      %v6266 = vunpack.c.l.b16 %v6202
      %v6267 = vunpack.c.l.b16 %v6203
      %v6268 = vunpack.c.l.b16 %v6204
      %v6269 = vunpack.c.l.b16 %v6205
      %v6270 = vunpack.c.l.b16 %v6206
      %v6271 = vpack.c.b16 %v6240, %v6239
      %v6272 = vpack.c.b16 %v6242, %v6241
      %v6273 = vpack.c.b16 %v6244, %v6243
      %v6274 = vpack.c.b16 %v6246, %v6245
      %v6275 = vpack.c.b16 %v6248, %v6247
      %v6276 = vpack.c.b16 %v6250, %v6249
      %v6277 = vpack.c.b16 %v6252, %v6251
      %v6278 = vpack.c.b16 %v6254, %v6253
      %v6279 = vpack.c.b16 %v6256, %v6255
      %v6280 = vpack.c.b16 %v6258, %v6257
      %v6281 = vpack.c.b16 %v6260, %v6259
      %v6282 = vpack.c.b16 %v6262, %v6261
      %v6283 = vpack.c.b16 %v6264, %v6263
      %v6284 = vpack.c.b16 %v6266, %v6265
      %v6285 = vpack.c.b16 %v6268, %v6267
      %v6286 = vpack.c.b16 %v6270, %v6269
      %v6288 = vsel %vm4149, %v6271, 0
      %v6291 = vsel %vm4149, %v6272, 0
      %v6294 = vsel %vm4149, %v6273, 0
      %v6297 = vsel %vm4149, %v6274, 0
      %v6300 = vsel %vm4149, %v6275, 0
      %v6303 = vsel %vm4149, %v6276, 0
      %v6306 = vsel %vm4149, %v6277, 0
      %v6309 = vsel %vm4149, %v6278, 0
      %v6312 = vsel %vm4149, %v6279, 0
      %v6315 = vsel %vm4149, %v6280, 0
      %v6318 = vsel %vm4149, %v6281, 0
      %v6321 = vsel %vm4149, %v6282, 0
      %v6324 = vsel %vm4149, %v6283, 0
      %v6327 = vsel %vm4149, %v6284, 0
      %v6330 = vsel %vm4149, %v6285, 0
      %v6333 = vsel %vm4149, %v6286, 0
      %6335 = vmatprep.subr.bf16.mxu0 0
      %6336 = vmatpush1.bf16.xpose.msra.mxu0 %v4199
      %6337 = vmatprep.subr.bf16.mxu0 0
      %6338 = vmatpush1.bf16.xpose.msra.mxu0 %v4202
      %6339 = vmatprep.subr.bf16.mxu0 0
      %6340 = vmatpush1.bf16.xpose.msra.mxu0 %v4205
      %6341 = vmatprep.subr.bf16.mxu0 0
      %6342 = vmatpush1.bf16.xpose.msra.mxu0 %v4208
      %6343 = vmatprep.subr.bf16.mxu0 0
      %6344 = vmatpush1.bf16.xpose.msra.mxu0 %v4211
      %6345 = vmatprep.subr.bf16.mxu0 0
      %6346 = vmatpush1.bf16.xpose.msra.mxu0 %v4214
      %6347 = vmatprep.subr.bf16.mxu0 0
      %6348 = vmatpush1.bf16.xpose.msra.mxu0 0
      %6349 = vmatprep.subr.bf16.mxu0 0
      %6350 = vmatpush1.bf16.xpose.msra.mxu0 0
      %6351 = vmatprep.subr.bf16.mxu0 0
      %6352 = vmatpush1.bf16.xpose.msra.mxu0 0
      %6353 = vmatprep.subr.bf16.mxu0 0
      %6354 = vmatpush1.bf16.xpose.msra.mxu0 0
      %6355 = vmatprep.subr.bf16.mxu0 0
      %6356 = vmatpush1.bf16.xpose.msra.mxu0 0
      %6357 = vmatprep.subr.bf16.mxu0 0
      %6358 = vmatpush1.bf16.xpose.msra.mxu0 0
      %6359 = vmatprep.subr.bf16.mxu0 0
      %6360 = vmatpush1.bf16.xpose.msra.mxu0 0
      %6361 = vmatprep.subr.bf16.mxu0 0
      %6362 = vmatpush1.bf16.xpose.msra.mxu0 0
      %6363 = vmatprep.subr.bf16.mxu0 0
      %6364 = vmatpush1.bf16.xpose.msra.mxu0 0
      %6365 = vmatprep.subr.bf16.mxu0 0
      %6366 = vmatpush1.bf16.xpose.msra.mxu0 0
      %6367 = vmatprep.mubr.bf16.mxu0 0
      %6368 = vmatmul.mubr.bf16.gmra.mrb[0].mxu0 %v6288
      %v6369 = vpop.f32.mrb[0].mxu0
      %v6370 = vadd.f32 0.0, %v6369
      %v6371 = vpop.f32.mrb[0].mxu0
      %v6372 = vpop.f32.mrb[0].mxu0
      %v6373 = vadd.f32 0.0, %v6372
      %v6374 = vpop.f32.mrb[0].mxu0
      %6375 = vmatprep.mubr.bf16.mxu0 0
      %6376 = vmatmul.mubr.bf16.gmra.mrb[0].mxu0 %v6291
      %v6377 = vpop.f32.mrb[0].mxu0
      %v6378 = vadd.f32 0.0, %v6377
      %v6379 = vpop.f32.mrb[0].mxu0
      %v6380 = vpop.f32.mrb[0].mxu0
      %v6381 = vadd.f32 0.0, %v6380
      %v6382 = vpop.f32.mrb[0].mxu0
      %6383 = vmatprep.mubr.bf16.mxu0 0
      %6384 = vmatmul.mubr.bf16.gmra.mrb[0].mxu0 %v6294
      %v6385 = vpop.f32.mrb[0].mxu0
      %v6386 = vadd.f32 0.0, %v6385
      %v6387 = vpop.f32.mrb[0].mxu0
      %v6388 = vpop.f32.mrb[0].mxu0
      %v6389 = vadd.f32 0.0, %v6388
      %v6390 = vpop.f32.mrb[0].mxu0
      %6391 = vmatprep.mubr.bf16.mxu0 0
      %6392 = vmatmul.mubr.bf16.gmra.mrb[0].mxu0 %v6297
      %v6393 = vpop.f32.mrb[0].mxu0
      %v6394 = vadd.f32 0.0, %v6393
      %v6395 = vpop.f32.mrb[0].mxu0
      %v6396 = vpop.f32.mrb[0].mxu0
      %v6397 = vadd.f32 0.0, %v6396
      %v6398 = vpop.f32.mrb[0].mxu0
      %6399 = vmatprep.mubr.bf16.mxu0 0
      %6400 = vmatmul.mubr.bf16.gmra.mrb[0].mxu0 %v6300
      %v6401 = vpop.f32.mrb[0].mxu0
      %v6402 = vadd.f32 0.0, %v6401
      %v6403 = vpop.f32.mrb[0].mxu0
      %v6404 = vpop.f32.mrb[0].mxu0
      %v6405 = vadd.f32 0.0, %v6404
      %v6406 = vpop.f32.mrb[0].mxu0
      %6407 = vmatprep.mubr.bf16.mxu0 0
      %6408 = vmatmul.mubr.bf16.gmra.mrb[0].mxu0 %v6303
      %v6409 = vpop.f32.mrb[0].mxu0
      %v6410 = vadd.f32 0.0, %v6409
      %v6411 = vpop.f32.mrb[0].mxu0
      %v6412 = vpop.f32.mrb[0].mxu0
      %v6413 = vadd.f32 0.0, %v6412
      %v6414 = vpop.f32.mrb[0].mxu0
      %6415 = vmatprep.mubr.bf16.mxu0 0
      %6416 = vmatmul.mubr.bf16.gmra.mrb[0].mxu0 %v6306
      %v6417 = vpop.f32.mrb[0].mxu0
      %v6418 = vadd.f32 0.0, %v6417
      %v6419 = vpop.f32.mrb[0].mxu0
      %v6420 = vpop.f32.mrb[0].mxu0
      %v6421 = vadd.f32 0.0, %v6420
      %v6422 = vpop.f32.mrb[0].mxu0
      %6423 = vmatprep.mubr.bf16.mxu0 0
      %6424 = vmatmul.mubr.bf16.gmra.mrb[0].mxu0 %v6309
      %v6425 = vpop.f32.mrb[0].mxu0
      %v6426 = vadd.f32 0.0, %v6425
      %v6427 = vpop.f32.mrb[0].mxu0
      %v6428 = vpop.f32.mrb[0].mxu0
      %v6429 = vadd.f32 0.0, %v6428
      %v6430 = vpop.f32.mrb[0].mxu0
      %6431 = vmatprep.mubr.bf16.mxu0 0
      %6432 = vmatmul.mubr.bf16.gmra.mrb[0].mxu0 %v6312
      %v6433 = vpop.f32.mrb[0].mxu0
      %v6434 = vadd.f32 0.0, %v6433
      %v6435 = vpop.f32.mrb[0].mxu0
      %v6436 = vpop.f32.mrb[0].mxu0
      %v6437 = vadd.f32 0.0, %v6436
      %v6438 = vpop.f32.mrb[0].mxu0
      %6439 = vmatprep.mubr.bf16.mxu0 0
      %6440 = vmatmul.mubr.bf16.gmra.mrb[0].mxu0 %v6315
      %v6441 = vpop.f32.mrb[0].mxu0
      %v6442 = vadd.f32 0.0, %v6441
      %v6443 = vpop.f32.mrb[0].mxu0
      %v6444 = vpop.f32.mrb[0].mxu0
      %v6445 = vadd.f32 0.0, %v6444
      %v6446 = vpop.f32.mrb[0].mxu0
      %6447 = vmatprep.mubr.bf16.mxu0 0
      %6448 = vmatmul.mubr.bf16.gmra.mrb[0].mxu0 %v6318
      %v6449 = vpop.f32.mrb[0].mxu0
      %v6450 = vadd.f32 0.0, %v6449
      %v6451 = vpop.f32.mrb[0].mxu0
      %v6452 = vpop.f32.mrb[0].mxu0
      %v6453 = vadd.f32 0.0, %v6452
      %v6454 = vpop.f32.mrb[0].mxu0
      %6455 = vmatprep.mubr.bf16.mxu0 0
      %6456 = vmatmul.mubr.bf16.gmra.mrb[0].mxu0 %v6321
      %v6457 = vpop.f32.mrb[0].mxu0
      %v6458 = vadd.f32 0.0, %v6457
      %v6459 = vpop.f32.mrb[0].mxu0
      %v6460 = vpop.f32.mrb[0].mxu0
      %v6461 = vadd.f32 0.0, %v6460
      %v6462 = vpop.f32.mrb[0].mxu0
      %6463 = vmatprep.mubr.bf16.mxu0 0
      %6464 = vmatmul.mubr.bf16.gmra.mrb[0].mxu0 %v6324
      %v6465 = vpop.f32.mrb[0].mxu0
      %v6466 = vadd.f32 0.0, %v6465
      %v6467 = vpop.f32.mrb[0].mxu0
      %v6468 = vpop.f32.mrb[0].mxu0
      %v6469 = vadd.f32 0.0, %v6468
      %v6470 = vpop.f32.mrb[0].mxu0
      %6471 = vmatprep.mubr.bf16.mxu0 0
      %6472 = vmatmul.mubr.bf16.gmra.mrb[0].mxu0 %v6327
      %v6473 = vpop.f32.mrb[0].mxu0
      %v6474 = vadd.f32 0.0, %v6473
      %v6475 = vpop.f32.mrb[0].mxu0
      %v6476 = vpop.f32.mrb[0].mxu0
      %v6477 = vadd.f32 0.0, %v6476
      %v6478 = vpop.f32.mrb[0].mxu0
      %6479 = vmatprep.mubr.bf16.mxu0 0
      %6480 = vmatmul.mubr.bf16.gmra.mrb[0].mxu0 %v6330
      %v6481 = vpop.f32.mrb[0].mxu0
      %v6482 = vadd.f32 0.0, %v6481
      %v6483 = vpop.f32.mrb[0].mxu0
      %v6484 = vpop.f32.mrb[0].mxu0
      %v6485 = vadd.f32 0.0, %v6484
      %v6486 = vpop.f32.mrb[0].mxu0
      %6487 = vmatprep.mubr.bf16.mxu0 0
      %6488 = vmatmul.mubr.bf16.gmra.mrb[0].mxu0 %v6333
      %v6489 = vpop.f32.mrb[0].mxu0
      %v6490 = vadd.f32 0.0, %v6489
      %v6491 = vpop.f32.mrb[0].mxu0
      %v6492 = vpop.f32.mrb[0].mxu0
      %v6493 = vadd.f32 0.0, %v6492
      %v6494 = vpop.f32.mrb[0].mxu0
      %6495 = vdwg.mxu0
      %6496 = vst.msk [vmem:[%s352 + $0x600] sm:$0xff] %vm4377, %v6370
      %6497 = vst.msk [vmem:[%s352 + $0x608] sm:$0xff] %vm4377, %v6373
      %6498 = vst.msk [vmem:[%s352 + $0x610] sm:$0xff] %vm4377, %v6378
      %6499 = vst.msk [vmem:[%s352 + $0x618] sm:$0xff] %vm4377, %v6381
      %6500 = vst.msk [vmem:[%s352 + $0x620] sm:$0xff] %vm4377, %v6386
      %6501 = vst.msk [vmem:[%s352 + $0x628] sm:$0xff] %vm4377, %v6389
      %6502 = vst.msk [vmem:[%s352 + $0x630] sm:$0xff] %vm4377, %v6394
      %6503 = vst.msk [vmem:[%s352 + $0x638] sm:$0xff] %vm4377, %v6397
      %6504 = vst.msk [vmem:[%s352 + $0x640] sm:$0xff] %vm4377, %v6402
      %6505 = vst.msk [vmem:[%s352 + $0x648] sm:$0xff] %vm4377, %v6405
      %6506 = vst.msk [vmem:[%s352 + $0x650] sm:$0xff] %vm4377, %v6410
      %6507 = vst.msk [vmem:[%s352 + $0x658] sm:$0xff] %vm4377, %v6413
      %6508 = vst.msk [vmem:[%s352 + $0x660] sm:$0xff] %vm4377, %v6418
      %6509 = vst.msk [vmem:[%s352 + $0x668] sm:$0xff] %vm4377, %v6421
      %6510 = vst.msk [vmem:[%s352 + $0x670] sm:$0xff] %vm4377, %v6426
      %6511 = vst.msk [vmem:[%s352 + $0x678] sm:$0xff] %vm4377, %v6429
      %6512 = vst.msk [vmem:[%s352 + $0x680] sm:$0xff] %vm4377, %v6434
      %6513 = vst.msk [vmem:[%s352 + $0x688] sm:$0xff] %vm4377, %v6437
      %6514 = vst.msk [vmem:[%s352 + $0x690] sm:$0xff] %vm4377, %v6442
      %6515 = vst.msk [vmem:[%s352 + $0x698] sm:$0xff] %vm4377, %v6445
      %6516 = vst.msk [vmem:[%s352 + $0x6a0] sm:$0xff] %vm4377, %v6450
      %6517 = vst.msk [vmem:[%s352 + $0x6a8] sm:$0xff] %vm4377, %v6453
      %6518 = vst.msk [vmem:[%s352 + $0x6b0] sm:$0xff] %vm4377, %v6458
      %6519 = vst.msk [vmem:[%s352 + $0x6b8] sm:$0xff] %vm4377, %v6461
      %6520 = vst.msk [vmem:[%s352 + $0x6c0] sm:$0xff] %vm4377, %v6466
      %6521 = vst.msk [vmem:[%s352 + $0x6c8] sm:$0xff] %vm4377, %v6469
      %6522 = vst.msk [vmem:[%s352 + $0x6d0] sm:$0xff] %vm4377, %v6474
      %6523 = vst.msk [vmem:[%s352 + $0x6d8] sm:$0xff] %vm4377, %v6477
      %6524 = vst.msk [vmem:[%s352 + $0x6e0] sm:$0xff] %vm4377, %v6482
      %6525 = vst.msk [vmem:[%s352 + $0x6e8] sm:$0xff] %vm4377, %v6485
      %6526 = vst.msk [vmem:[%s352 + $0x6f0] sm:$0xff] %vm4377, %v6490
      %6527 = vst.msk [vmem:[%s352 + $0x6f8] sm:$0xff] %vm4377, %v6493
      %v6528 = vld [vmem:[%s8 + $0x380] sm:$0xf]
      %v6529 = vld [vmem:[%s8 + $0x384] sm:$0xf]
      %v6530 = vld [vmem:[%s8 + $0x388] sm:$0xf]
      %v6531 = vld [vmem:[%s8 + $0x38c] sm:$0xf]
      %v6532 = vld [vmem:[%s8 + $0x390] sm:$0xf]
      %v6533 = vld [vmem:[%s8 + $0x394] sm:$0xf]
      %v6534 = vld [vmem:[%s8 + $0x398] sm:$0xf]
      %v6535 = vld [vmem:[%s8 + $0x39c] sm:$0xf]
      %v6536 = vld [vmem:[%s8 + $0x3a0] sm:$0xf]
      %v6537 = vld [vmem:[%s8 + $0x3a4] sm:$0xf]
      %v6538 = vld [vmem:[%s8 + $0x3a8] sm:$0xf]
      %v6539 = vld [vmem:[%s8 + $0x3ac] sm:$0xf]
      %v6540 = vld [vmem:[%s8 + $0x3b0] sm:$0xf]
      %v6541 = vld [vmem:[%s8 + $0x3b4] sm:$0xf]
      %v6542 = vld [vmem:[%s8 + $0x3b8] sm:$0xf]
      %v6543 = vld [vmem:[%s8 + $0x3bc] sm:$0xf]
      %v6544 = vld [vmem:[%s8 + $0x3c0] sm:$0xf]
      %v6545 = vld [vmem:[%s8 + $0x3c4] sm:$0xf]
      %v6546 = vld [vmem:[%s8 + $0x3c8] sm:$0xf]
      %v6547 = vld [vmem:[%s8 + $0x3cc] sm:$0xf]
      %v6548 = vld [vmem:[%s8 + $0x3d0] sm:$0xf]
      %v6549 = vld [vmem:[%s8 + $0x3d4] sm:$0xf]
      %v6550 = vld [vmem:[%s8 + $0x3d8] sm:$0xf]
      %v6551 = vld [vmem:[%s8 + $0x3dc] sm:$0xf]
      %v6552 = vld [vmem:[%s8 + $0x3e0] sm:$0xf]
      %v6553 = vld [vmem:[%s8 + $0x3e4] sm:$0xf]
      %v6554 = vld [vmem:[%s8 + $0x3e8] sm:$0xf]
      %v6555 = vld [vmem:[%s8 + $0x3ec] sm:$0xf]
      %v6556 = vld [vmem:[%s8 + $0x3f0] sm:$0xf]
      %v6557 = vld [vmem:[%s8 + $0x3f4] sm:$0xf]
      %v6558 = vld [vmem:[%s8 + $0x3f8] sm:$0xf]
      %v6559 = vld [vmem:[%s8 + $0x3fc] sm:$0xf]
      %v6592 = vunpack.c.l.b16 %v6528
      %v6593 = vunpack.c.l.b16 %v6529
      %v6594 = vunpack.c.l.b16 %v6530
      %v6595 = vunpack.c.l.b16 %v6531
      %v6596 = vunpack.c.l.b16 %v6532
      %v6597 = vunpack.c.l.b16 %v6533
      %v6598 = vunpack.c.l.b16 %v6534
      %v6599 = vunpack.c.l.b16 %v6535
      %v6600 = vunpack.c.l.b16 %v6536
      %v6601 = vunpack.c.l.b16 %v6537
      %v6602 = vunpack.c.l.b16 %v6538
      %v6603 = vunpack.c.l.b16 %v6539
      %v6604 = vunpack.c.l.b16 %v6540
      %v6605 = vunpack.c.l.b16 %v6541
      %v6606 = vunpack.c.l.b16 %v6542
      %v6607 = vunpack.c.l.b16 %v6543
      %v6608 = vunpack.c.l.b16 %v6544
      %v6609 = vunpack.c.l.b16 %v6545
      %v6610 = vunpack.c.l.b16 %v6546
      %v6611 = vunpack.c.l.b16 %v6547
      %v6612 = vunpack.c.l.b16 %v6548
      %v6613 = vunpack.c.l.b16 %v6549
      %v6614 = vunpack.c.l.b16 %v6550
      %v6615 = vunpack.c.l.b16 %v6551
      %v6616 = vunpack.c.l.b16 %v6552
      %v6617 = vunpack.c.l.b16 %v6553
      %v6618 = vunpack.c.l.b16 %v6554
      %v6619 = vunpack.c.l.b16 %v6555
      %v6620 = vunpack.c.l.b16 %v6556
      %v6621 = vunpack.c.l.b16 %v6557
      %v6622 = vunpack.c.l.b16 %v6558
      %v6623 = vunpack.c.l.b16 %v6559
      %v6624 = vpack.c.b16 %v6593, %v6592
      %v6625 = vpack.c.b16 %v6595, %v6594
      %v6626 = vpack.c.b16 %v6597, %v6596
      %v6627 = vpack.c.b16 %v6599, %v6598
      %v6628 = vpack.c.b16 %v6601, %v6600
      %v6629 = vpack.c.b16 %v6603, %v6602
      %v6630 = vpack.c.b16 %v6605, %v6604
      %v6631 = vpack.c.b16 %v6607, %v6606
      %v6632 = vpack.c.b16 %v6609, %v6608
      %v6633 = vpack.c.b16 %v6611, %v6610
      %v6634 = vpack.c.b16 %v6613, %v6612
      %v6635 = vpack.c.b16 %v6615, %v6614
      %v6636 = vpack.c.b16 %v6617, %v6616
      %v6637 = vpack.c.b16 %v6619, %v6618
      %v6638 = vpack.c.b16 %v6621, %v6620
      %v6639 = vpack.c.b16 %v6623, %v6622
      %v6641 = vsel %vm4149, %v6624, 0
      %v6644 = vsel %vm4149, %v6625, 0
      %v6647 = vsel %vm4149, %v6626, 0
      %v6650 = vsel %vm4149, %v6627, 0
      %v6653 = vsel %vm4149, %v6628, 0
      %v6656 = vsel %vm4149, %v6629, 0
      %v6659 = vsel %vm4149, %v6630, 0
      %v6662 = vsel %vm4149, %v6631, 0
      %v6665 = vsel %vm4149, %v6632, 0
      %v6668 = vsel %vm4149, %v6633, 0
      %v6671 = vsel %vm4149, %v6634, 0
      %v6674 = vsel %vm4149, %v6635, 0
      %v6677 = vsel %vm4149, %v6636, 0
      %v6680 = vsel %vm4149, %v6637, 0
      %v6683 = vsel %vm4149, %v6638, 0
      %v6686 = vsel %vm4149, %v6639, 0
      %6688 = vmatprep.subr.bf16.mxu0 0
      %6689 = vmatpush1.bf16.xpose.msra.mxu0 %v4199
      %6690 = vmatprep.subr.bf16.mxu0 0
      %6691 = vmatpush1.bf16.xpose.msra.mxu0 %v4202
      %6692 = vmatprep.subr.bf16.mxu0 0
      %6693 = vmatpush1.bf16.xpose.msra.mxu0 %v4205
      %6694 = vmatprep.subr.bf16.mxu0 0
      %6695 = vmatpush1.bf16.xpose.msra.mxu0 %v4208
      %6696 = vmatprep.subr.bf16.mxu0 0
      %6697 = vmatpush1.bf16.xpose.msra.mxu0 %v4211
      %6698 = vmatprep.subr.bf16.mxu0 0
      %6699 = vmatpush1.bf16.xpose.msra.mxu0 %v4214
      %6700 = vmatprep.subr.bf16.mxu0 0
      %6701 = vmatpush1.bf16.xpose.msra.mxu0 0
      %6702 = vmatprep.subr.bf16.mxu0 0
      %6703 = vmatpush1.bf16.xpose.msra.mxu0 0
      %6704 = vmatprep.subr.bf16.mxu0 0
      %6705 = vmatpush1.bf16.xpose.msra.mxu0 0
      %6706 = vmatprep.subr.bf16.mxu0 0
      %6707 = vmatpush1.bf16.xpose.msra.mxu0 0
      %6708 = vmatprep.subr.bf16.mxu0 0
      %6709 = vmatpush1.bf16.xpose.msra.mxu0 0
      %6710 = vmatprep.subr.bf16.mxu0 0
      %6711 = vmatpush1.bf16.xpose.msra.mxu0 0
      %6712 = vmatprep.subr.bf16.mxu0 0
      %6713 = vmatpush1.bf16.xpose.msra.mxu0 0
      %6714 = vmatprep.subr.bf16.mxu0 0
      %6715 = vmatpush1.bf16.xpose.msra.mxu0 0
      %6716 = vmatprep.subr.bf16.mxu0 0
      %6717 = vmatpush1.bf16.xpose.msra.mxu0 0
      %6718 = vmatprep.subr.bf16.mxu0 0
      %6719 = vmatpush1.bf16.xpose.msra.mxu0 0
      %6720 = vmatprep.mubr.bf16.mxu0 0
      %6721 = vmatmul.mubr.bf16.gmra.mrb[0].mxu0 %v6641
      %v6722 = vpop.f32.mrb[0].mxu0
      %v6723 = vadd.f32 0.0, %v6722
      %v6724 = vpop.f32.mrb[0].mxu0
      %v6725 = vpop.f32.mrb[0].mxu0
      %v6726 = vadd.f32 0.0, %v6725
      %v6727 = vpop.f32.mrb[0].mxu0
      %6728 = vmatprep.mubr.bf16.mxu0 0
      %6729 = vmatmul.mubr.bf16.gmra.mrb[0].mxu0 %v6644
      %v6730 = vpop.f32.mrb[0].mxu0
      %v6731 = vadd.f32 0.0, %v6730
      %v6732 = vpop.f32.mrb[0].mxu0
      %v6733 = vpop.f32.mrb[0].mxu0
      %v6734 = vadd.f32 0.0, %v6733
      %v6735 = vpop.f32.mrb[0].mxu0
      %6736 = vmatprep.mubr.bf16.mxu0 0
      %6737 = vmatmul.mubr.bf16.gmra.mrb[0].mxu0 %v6647
      %v6738 = vpop.f32.mrb[0].mxu0
      %v6739 = vadd.f32 0.0, %v6738
      %v6740 = vpop.f32.mrb[0].mxu0
      %v6741 = vpop.f32.mrb[0].mxu0
      %v6742 = vadd.f32 0.0, %v6741
      %v6743 = vpop.f32.mrb[0].mxu0
      %6744 = vmatprep.mubr.bf16.mxu0 0
      %6745 = vmatmul.mubr.bf16.gmra.mrb[0].mxu0 %v6650
      %v6746 = vpop.f32.mrb[0].mxu0
      %v6747 = vadd.f32 0.0, %v6746
      %v6748 = vpop.f32.mrb[0].mxu0
      %v6749 = vpop.f32.mrb[0].mxu0
      %v6750 = vadd.f32 0.0, %v6749
      %v6751 = vpop.f32.mrb[0].mxu0
      %6752 = vmatprep.mubr.bf16.mxu0 0
      %6753 = vmatmul.mubr.bf16.gmra.mrb[0].mxu0 %v6653
      %v6754 = vpop.f32.mrb[0].mxu0
      %v6755 = vadd.f32 0.0, %v6754
      %v6756 = vpop.f32.mrb[0].mxu0
      %v6757 = vpop.f32.mrb[0].mxu0
      %v6758 = vadd.f32 0.0, %v6757
      %v6759 = vpop.f32.mrb[0].mxu0
      %6760 = vmatprep.mubr.bf16.mxu0 0
      %6761 = vmatmul.mubr.bf16.gmra.mrb[0].mxu0 %v6656
      %v6762 = vpop.f32.mrb[0].mxu0
      %v6763 = vadd.f32 0.0, %v6762
      %v6764 = vpop.f32.mrb[0].mxu0
      %v6765 = vpop.f32.mrb[0].mxu0
      %v6766 = vadd.f32 0.0, %v6765
      %v6767 = vpop.f32.mrb[0].mxu0
      %6768 = vmatprep.mubr.bf16.mxu0 0
      %6769 = vmatmul.mubr.bf16.gmra.mrb[0].mxu0 %v6659
      %v6770 = vpop.f32.mrb[0].mxu0
      %v6771 = vadd.f32 0.0, %v6770
      %v6772 = vpop.f32.mrb[0].mxu0
      %v6773 = vpop.f32.mrb[0].mxu0
      %v6774 = vadd.f32 0.0, %v6773
      %v6775 = vpop.f32.mrb[0].mxu0
      %6776 = vmatprep.mubr.bf16.mxu0 0
      %6777 = vmatmul.mubr.bf16.gmra.mrb[0].mxu0 %v6662
      %v6778 = vpop.f32.mrb[0].mxu0
      %v6779 = vadd.f32 0.0, %v6778
      %v6780 = vpop.f32.mrb[0].mxu0
      %v6781 = vpop.f32.mrb[0].mxu0
      %v6782 = vadd.f32 0.0, %v6781
      %v6783 = vpop.f32.mrb[0].mxu0
      %6784 = vmatprep.mubr.bf16.mxu0 0
      %6785 = vmatmul.mubr.bf16.gmra.mrb[0].mxu0 %v6665
      %v6786 = vpop.f32.mrb[0].mxu0
      %v6787 = vadd.f32 0.0, %v6786
      %v6788 = vpop.f32.mrb[0].mxu0
      %v6789 = vpop.f32.mrb[0].mxu0
      %v6790 = vadd.f32 0.0, %v6789
      %v6791 = vpop.f32.mrb[0].mxu0
      %6792 = vmatprep.mubr.bf16.mxu0 0
      %6793 = vmatmul.mubr.bf16.gmra.mrb[0].mxu0 %v6668
      %v6794 = vpop.f32.mrb[0].mxu0
      %v6795 = vadd.f32 0.0, %v6794
      %v6796 = vpop.f32.mrb[0].mxu0
      %v6797 = vpop.f32.mrb[0].mxu0
      %v6798 = vadd.f32 0.0, %v6797
      %v6799 = vpop.f32.mrb[0].mxu0
      %6800 = vmatprep.mubr.bf16.mxu0 0
      %6801 = vmatmul.mubr.bf16.gmra.mrb[0].mxu0 %v6671
      %v6802 = vpop.f32.mrb[0].mxu0
      %v6803 = vadd.f32 0.0, %v6802
      %v6804 = vpop.f32.mrb[0].mxu0
      %v6805 = vpop.f32.mrb[0].mxu0
      %v6806 = vadd.f32 0.0, %v6805
      %v6807 = vpop.f32.mrb[0].mxu0
      %6808 = vmatprep.mubr.bf16.mxu0 0
      %6809 = vmatmul.mubr.bf16.gmra.mrb[0].mxu0 %v6674
      %v6810 = vpop.f32.mrb[0].mxu0
      %v6811 = vadd.f32 0.0, %v6810
      %v6812 = vpop.f32.mrb[0].mxu0
      %v6813 = vpop.f32.mrb[0].mxu0
      %v6814 = vadd.f32 0.0, %v6813
      %v6815 = vpop.f32.mrb[0].mxu0
      %6816 = vmatprep.mubr.bf16.mxu0 0
      %6817 = vmatmul.mubr.bf16.gmra.mrb[0].mxu0 %v6677
      %v6818 = vpop.f32.mrb[0].mxu0
      %v6819 = vadd.f32 0.0, %v6818
      %v6820 = vpop.f32.mrb[0].mxu0
      %v6821 = vpop.f32.mrb[0].mxu0
      %v6822 = vadd.f32 0.0, %v6821
      %v6823 = vpop.f32.mrb[0].mxu0
      %6824 = vmatprep.mubr.bf16.mxu0 0
      %6825 = vmatmul.mubr.bf16.gmra.mrb[0].mxu0 %v6680
      %v6826 = vpop.f32.mrb[0].mxu0
      %v6827 = vadd.f32 0.0, %v6826
      %v6828 = vpop.f32.mrb[0].mxu0
      %v6829 = vpop.f32.mrb[0].mxu0
      %v6830 = vadd.f32 0.0, %v6829
      %v6831 = vpop.f32.mrb[0].mxu0
      %6832 = vmatprep.mubr.bf16.mxu0 0
      %6833 = vmatmul.mubr.bf16.gmra.mrb[0].mxu0 %v6683
      %v6834 = vpop.f32.mrb[0].mxu0
      %v6835 = vadd.f32 0.0, %v6834
      %v6836 = vpop.f32.mrb[0].mxu0
      %v6837 = vpop.f32.mrb[0].mxu0
      %v6838 = vadd.f32 0.0, %v6837
      %v6839 = vpop.f32.mrb[0].mxu0
      %6840 = vmatprep.mubr.bf16.mxu0 0
      %6841 = vmatmul.mubr.bf16.gmra.mrb[0].mxu0 %v6686
      %v6842 = vpop.f32.mrb[0].mxu0
      %v6843 = vadd.f32 0.0, %v6842
      %v6844 = vpop.f32.mrb[0].mxu0
      %v6845 = vpop.f32.mrb[0].mxu0
      %v6846 = vadd.f32 0.0, %v6845
      %v6847 = vpop.f32.mrb[0].mxu0
      %6848 = vdwg.mxu0
      %6849 = vst.msk [vmem:[%s352 + $0x700] sm:$0xff] %vm4377, %v6723
      %6850 = vst.msk [vmem:[%s352 + $0x708] sm:$0xff] %vm4377, %v6726
      %6851 = vst.msk [vmem:[%s352 + $0x710] sm:$0xff] %vm4377, %v6731
      %6852 = vst.msk [vmem:[%s352 + $0x718] sm:$0xff] %vm4377, %v6734
      %6853 = vst.msk [vmem:[%s352 + $0x720] sm:$0xff] %vm4377, %v6739
      %6854 = vst.msk [vmem:[%s352 + $0x728] sm:$0xff] %vm4377, %v6742
      %6855 = vst.msk [vmem:[%s352 + $0x730] sm:$0xff] %vm4377, %v6747
      %6856 = vst.msk [vmem:[%s352 + $0x738] sm:$0xff] %vm4377, %v6750
      %6857 = vst.msk [vmem:[%s352 + $0x740] sm:$0xff] %vm4377, %v6755
      %6858 = vst.msk [vmem:[%s352 + $0x748] sm:$0xff] %vm4377, %v6758
      %6859 = vst.msk [vmem:[%s352 + $0x750] sm:$0xff] %vm4377, %v6763
      %6860 = vst.msk [vmem:[%s352 + $0x758] sm:$0xff] %vm4377, %v6766
      %6861 = vst.msk [vmem:[%s352 + $0x760] sm:$0xff] %vm4377, %v6771
      %6862 = vst.msk [vmem:[%s352 + $0x768] sm:$0xff] %vm4377, %v6774
      %6863 = vst.msk [vmem:[%s352 + $0x770] sm:$0xff] %vm4377, %v6779
      %6864 = vst.msk [vmem:[%s352 + $0x778] sm:$0xff] %vm4377, %v6782
      %6865 = vst.msk [vmem:[%s352 + $0x780] sm:$0xff] %vm4377, %v6787
      %6866 = vst.msk [vmem:[%s352 + $0x788] sm:$0xff] %vm4377, %v6790
      %6867 = vst.msk [vmem:[%s352 + $0x790] sm:$0xff] %vm4377, %v6795
      %6868 = vst.msk [vmem:[%s352 + $0x798] sm:$0xff] %vm4377, %v6798
      %6869 = vst.msk [vmem:[%s352 + $0x7a0] sm:$0xff] %vm4377, %v6803
      %6870 = vst.msk [vmem:[%s352 + $0x7a8] sm:$0xff] %vm4377, %v6806
      %6871 = vst.msk [vmem:[%s352 + $0x7b0] sm:$0xff] %vm4377, %v6811
      %6872 = vst.msk [vmem:[%s352 + $0x7b8] sm:$0xff] %vm4377, %v6814
      %6873 = vst.msk [vmem:[%s352 + $0x7c0] sm:$0xff] %vm4377, %v6819
      %6874 = vst.msk [vmem:[%s352 + $0x7c8] sm:$0xff] %vm4377, %v6822
      %6875 = vst.msk [vmem:[%s352 + $0x7d0] sm:$0xff] %vm4377, %v6827
      %6876 = vst.msk [vmem:[%s352 + $0x7d8] sm:$0xff] %vm4377, %v6830
      %6877 = vst.msk [vmem:[%s352 + $0x7e0] sm:$0xff] %vm4377, %v6835
      %6878 = vst.msk [vmem:[%s352 + $0x7e8] sm:$0xff] %vm4377, %v6838
      %6879 = vst.msk [vmem:[%s352 + $0x7f0] sm:$0xff] %vm4377, %v6843
      %6880 = vst.msk [vmem:[%s352 + $0x7f8] sm:$0xff] %vm4377, %v6846
      %v6881 = vld [vmem:[%s8 + $0x400] sm:$0xf]
      %v6882 = vld [vmem:[%s8 + $0x404] sm:$0xf]
      %v6883 = vld [vmem:[%s8 + $0x408] sm:$0xf]
      %v6884 = vld [vmem:[%s8 + $0x40c] sm:$0xf]
      %v6885 = vld [vmem:[%s8 + $0x410] sm:$0xf]
      %v6886 = vld [vmem:[%s8 + $0x414] sm:$0xf]
      %v6887 = vld [vmem:[%s8 + $0x418] sm:$0xf]
      %v6888 = vld [vmem:[%s8 + $0x41c] sm:$0xf]
      %v6889 = vld [vmem:[%s8 + $0x420] sm:$0xf]
      %v6890 = vld [vmem:[%s8 + $0x424] sm:$0xf]
      %v6891 = vld [vmem:[%s8 + $0x428] sm:$0xf]
      %v6892 = vld [vmem:[%s8 + $0x42c] sm:$0xf]
      %v6893 = vld [vmem:[%s8 + $0x430] sm:$0xf]
      %v6894 = vld [vmem:[%s8 + $0x434] sm:$0xf]
      %v6895 = vld [vmem:[%s8 + $0x438] sm:$0xf]
      %v6896 = vld [vmem:[%s8 + $0x43c] sm:$0xf]
      %v6897 = vld [vmem:[%s8 + $0x440] sm:$0xf]
      %v6898 = vld [vmem:[%s8 + $0x444] sm:$0xf]
      %v6899 = vld [vmem:[%s8 + $0x448] sm:$0xf]
      %v6900 = vld [vmem:[%s8 + $0x44c] sm:$0xf]
      %v6901 = vld [vmem:[%s8 + $0x450] sm:$0xf]
      %v6902 = vld [vmem:[%s8 + $0x454] sm:$0xf]
      %v6903 = vld [vmem:[%s8 + $0x458] sm:$0xf]
      %v6904 = vld [vmem:[%s8 + $0x45c] sm:$0xf]
      %v6905 = vld [vmem:[%s8 + $0x460] sm:$0xf]
      %v6906 = vld [vmem:[%s8 + $0x464] sm:$0xf]
      %v6907 = vld [vmem:[%s8 + $0x468] sm:$0xf]
      %v6908 = vld [vmem:[%s8 + $0x46c] sm:$0xf]
      %v6909 = vld [vmem:[%s8 + $0x470] sm:$0xf]
      %v6910 = vld [vmem:[%s8 + $0x474] sm:$0xf]
      %v6911 = vld [vmem:[%s8 + $0x478] sm:$0xf]
      %v6912 = vld [vmem:[%s8 + $0x47c] sm:$0xf]
      %v6945 = vunpack.c.l.b16 %v6881
      %v6946 = vunpack.c.l.b16 %v6882
      %v6947 = vunpack.c.l.b16 %v6883
      %v6948 = vunpack.c.l.b16 %v6884
      %v6949 = vunpack.c.l.b16 %v6885
      %v6950 = vunpack.c.l.b16 %v6886
      %v6951 = vunpack.c.l.b16 %v6887
      %v6952 = vunpack.c.l.b16 %v6888
      %v6953 = vunpack.c.l.b16 %v6889
      %v6954 = vunpack.c.l.b16 %v6890
      %v6955 = vunpack.c.l.b16 %v6891
      %v6956 = vunpack.c.l.b16 %v6892
      %v6957 = vunpack.c.l.b16 %v6893
      %v6958 = vunpack.c.l.b16 %v6894
      %v6959 = vunpack.c.l.b16 %v6895
      %v6960 = vunpack.c.l.b16 %v6896
      %v6961 = vunpack.c.l.b16 %v6897
      %v6962 = vunpack.c.l.b16 %v6898
      %v6963 = vunpack.c.l.b16 %v6899
      %v6964 = vunpack.c.l.b16 %v6900
      %v6965 = vunpack.c.l.b16 %v6901
      %v6966 = vunpack.c.l.b16 %v6902
      %v6967 = vunpack.c.l.b16 %v6903
      %v6968 = vunpack.c.l.b16 %v6904
      %v6969 = vunpack.c.l.b16 %v6905
      %v6970 = vunpack.c.l.b16 %v6906
      %v6971 = vunpack.c.l.b16 %v6907
      %v6972 = vunpack.c.l.b16 %v6908
      %v6973 = vunpack.c.l.b16 %v6909
      %v6974 = vunpack.c.l.b16 %v6910
      %v6975 = vunpack.c.l.b16 %v6911
      %v6976 = vunpack.c.l.b16 %v6912
      %v6977 = vpack.c.b16 %v6946, %v6945
      %v6978 = vpack.c.b16 %v6948, %v6947
      %v6979 = vpack.c.b16 %v6950, %v6949
      %v6980 = vpack.c.b16 %v6952, %v6951
      %v6981 = vpack.c.b16 %v6954, %v6953
      %v6982 = vpack.c.b16 %v6956, %v6955
      %v6983 = vpack.c.b16 %v6958, %v6957
      %v6984 = vpack.c.b16 %v6960, %v6959
      %v6985 = vpack.c.b16 %v6962, %v6961
      %v6986 = vpack.c.b16 %v6964, %v6963
      %v6987 = vpack.c.b16 %v6966, %v6965
      %v6988 = vpack.c.b16 %v6968, %v6967
      %v6989 = vpack.c.b16 %v6970, %v6969
      %v6990 = vpack.c.b16 %v6972, %v6971
      %v6991 = vpack.c.b16 %v6974, %v6973
      %v6992 = vpack.c.b16 %v6976, %v6975
      %v6994 = vsel %vm4149, %v6977, 0
      %v6997 = vsel %vm4149, %v6978, 0
      %v7000 = vsel %vm4149, %v6979, 0
      %v7003 = vsel %vm4149, %v6980, 0
      %v7006 = vsel %vm4149, %v6981, 0
      %v7009 = vsel %vm4149, %v6982, 0
      %v7012 = vsel %vm4149, %v6983, 0
      %v7015 = vsel %vm4149, %v6984, 0
      %v7018 = vsel %vm4149, %v6985, 0
      %v7021 = vsel %vm4149, %v6986, 0
      %v7024 = vsel %vm4149, %v6987, 0
      %v7027 = vsel %vm4149, %v6988, 0
      %v7030 = vsel %vm4149, %v6989, 0
      %v7033 = vsel %vm4149, %v6990, 0
      %v7036 = vsel %vm4149, %v6991, 0
      %v7039 = vsel %vm4149, %v6992, 0
      %7041 = vmatprep.subr.bf16.mxu0 0
      %7042 = vmatpush1.bf16.xpose.msra.mxu0 %v4199
      %7043 = vmatprep.subr.bf16.mxu0 0
      %7044 = vmatpush1.bf16.xpose.msra.mxu0 %v4202
      %7045 = vmatprep.subr.bf16.mxu0 0
      %7046 = vmatpush1.bf16.xpose.msra.mxu0 %v4205
      %7047 = vmatprep.subr.bf16.mxu0 0
      %7048 = vmatpush1.bf16.xpose.msra.mxu0 %v4208
      %7049 = vmatprep.subr.bf16.mxu0 0
      %7050 = vmatpush1.bf16.xpose.msra.mxu0 %v4211
      %7051 = vmatprep.subr.bf16.mxu0 0
      %7052 = vmatpush1.bf16.xpose.msra.mxu0 %v4214
      %7053 = vmatprep.subr.bf16.mxu0 0
      %7054 = vmatpush1.bf16.xpose.msra.mxu0 0
      %7055 = vmatprep.subr.bf16.mxu0 0
      %7056 = vmatpush1.bf16.xpose.msra.mxu0 0
      %7057 = vmatprep.subr.bf16.mxu0 0
      %7058 = vmatpush1.bf16.xpose.msra.mxu0 0
      %7059 = vmatprep.subr.bf16.mxu0 0
      %7060 = vmatpush1.bf16.xpose.msra.mxu0 0
      %7061 = vmatprep.subr.bf16.mxu0 0
      %7062 = vmatpush1.bf16.xpose.msra.mxu0 0
      %7063 = vmatprep.subr.bf16.mxu0 0
      %7064 = vmatpush1.bf16.xpose.msra.mxu0 0
      %7065 = vmatprep.subr.bf16.mxu0 0
      %7066 = vmatpush1.bf16.xpose.msra.mxu0 0
      %7067 = vmatprep.subr.bf16.mxu0 0
      %7068 = vmatpush1.bf16.xpose.msra.mxu0 0
      %7069 = vmatprep.subr.bf16.mxu0 0
      %7070 = vmatpush1.bf16.xpose.msra.mxu0 0
      %7071 = vmatprep.subr.bf16.mxu0 0
      %7072 = vmatpush1.bf16.xpose.msra.mxu0 0
      %7073 = vmatprep.mubr.bf16.mxu0 0
      %7074 = vmatmul.mubr.bf16.gmra.mrb[0].mxu0 %v6994
      %v7075 = vpop.f32.mrb[0].mxu0
      %v7076 = vadd.f32 0.0, %v7075
      %v7077 = vpop.f32.mrb[0].mxu0
      %v7078 = vpop.f32.mrb[0].mxu0
      %v7079 = vadd.f32 0.0, %v7078
      %v7080 = vpop.f32.mrb[0].mxu0
      %7081 = vmatprep.mubr.bf16.mxu0 0
      %7082 = vmatmul.mubr.bf16.gmra.mrb[0].mxu0 %v6997
      %v7083 = vpop.f32.mrb[0].mxu0
      %v7084 = vadd.f32 0.0, %v7083
      %v7085 = vpop.f32.mrb[0].mxu0
      %v7086 = vpop.f32.mrb[0].mxu0
      %v7087 = vadd.f32 0.0, %v7086
      %v7088 = vpop.f32.mrb[0].mxu0
      %7089 = vmatprep.mubr.bf16.mxu0 0
      %7090 = vmatmul.mubr.bf16.gmra.mrb[0].mxu0 %v7000
      %v7091 = vpop.f32.mrb[0].mxu0
      %v7092 = vadd.f32 0.0, %v7091
      %v7093 = vpop.f32.mrb[0].mxu0
      %v7094 = vpop.f32.mrb[0].mxu0
      %v7095 = vadd.f32 0.0, %v7094
      %v7096 = vpop.f32.mrb[0].mxu0
      %7097 = vmatprep.mubr.bf16.mxu0 0
      %7098 = vmatmul.mubr.bf16.gmra.mrb[0].mxu0 %v7003
      %v7099 = vpop.f32.mrb[0].mxu0
      %v7100 = vadd.f32 0.0, %v7099
      %v7101 = vpop.f32.mrb[0].mxu0
      %v7102 = vpop.f32.mrb[0].mxu0
      %v7103 = vadd.f32 0.0, %v7102
      %v7104 = vpop.f32.mrb[0].mxu0
      %7105 = vmatprep.mubr.bf16.mxu0 0
      %7106 = vmatmul.mubr.bf16.gmra.mrb[0].mxu0 %v7006
      %v7107 = vpop.f32.mrb[0].mxu0
      %v7108 = vadd.f32 0.0, %v7107
      %v7109 = vpop.f32.mrb[0].mxu0
      %v7110 = vpop.f32.mrb[0].mxu0
      %v7111 = vadd.f32 0.0, %v7110
      %v7112 = vpop.f32.mrb[0].mxu0
      %7113 = vmatprep.mubr.bf16.mxu0 0
      %7114 = vmatmul.mubr.bf16.gmra.mrb[0].mxu0 %v7009
      %v7115 = vpop.f32.mrb[0].mxu0
      %v7116 = vadd.f32 0.0, %v7115
      %v7117 = vpop.f32.mrb[0].mxu0
      %v7118 = vpop.f32.mrb[0].mxu0
      %v7119 = vadd.f32 0.0, %v7118
      %v7120 = vpop.f32.mrb[0].mxu0
      %7121 = vmatprep.mubr.bf16.mxu0 0
      %7122 = vmatmul.mubr.bf16.gmra.mrb[0].mxu0 %v7012
      %v7123 = vpop.f32.mrb[0].mxu0
      %v7124 = vadd.f32 0.0, %v7123
      %v7125 = vpop.f32.mrb[0].mxu0
      %v7126 = vpop.f32.mrb[0].mxu0
      %v7127 = vadd.f32 0.0, %v7126
      %v7128 = vpop.f32.mrb[0].mxu0
      %7129 = vmatprep.mubr.bf16.mxu0 0
      %7130 = vmatmul.mubr.bf16.gmra.mrb[0].mxu0 %v7015
      %v7131 = vpop.f32.mrb[0].mxu0
      %v7132 = vadd.f32 0.0, %v7131
      %v7133 = vpop.f32.mrb[0].mxu0
      %v7134 = vpop.f32.mrb[0].mxu0
      %v7135 = vadd.f32 0.0, %v7134
      %v7136 = vpop.f32.mrb[0].mxu0
      %7137 = vmatprep.mubr.bf16.mxu0 0
      %7138 = vmatmul.mubr.bf16.gmra.mrb[0].mxu0 %v7018
      %v7139 = vpop.f32.mrb[0].mxu0
      %v7140 = vadd.f32 0.0, %v7139
      %v7141 = vpop.f32.mrb[0].mxu0
      %v7142 = vpop.f32.mrb[0].mxu0
      %v7143 = vadd.f32 0.0, %v7142
      %v7144 = vpop.f32.mrb[0].mxu0
      %7145 = vmatprep.mubr.bf16.mxu0 0
      %7146 = vmatmul.mubr.bf16.gmra.mrb[0].mxu0 %v7021
      %v7147 = vpop.f32.mrb[0].mxu0
      %v7148 = vadd.f32 0.0, %v7147
      %v7149 = vpop.f32.mrb[0].mxu0
      %v7150 = vpop.f32.mrb[0].mxu0
      %v7151 = vadd.f32 0.0, %v7150
      %v7152 = vpop.f32.mrb[0].mxu0
      %7153 = vmatprep.mubr.bf16.mxu0 0
      %7154 = vmatmul.mubr.bf16.gmra.mrb[0].mxu0 %v7024
      %v7155 = vpop.f32.mrb[0].mxu0
      %v7156 = vadd.f32 0.0, %v7155
      %v7157 = vpop.f32.mrb[0].mxu0
      %v7158 = vpop.f32.mrb[0].mxu0
      %v7159 = vadd.f32 0.0, %v7158
      %v7160 = vpop.f32.mrb[0].mxu0
      %7161 = vmatprep.mubr.bf16.mxu0 0
      %7162 = vmatmul.mubr.bf16.gmra.mrb[0].mxu0 %v7027
      %v7163 = vpop.f32.mrb[0].mxu0
      %v7164 = vadd.f32 0.0, %v7163
      %v7165 = vpop.f32.mrb[0].mxu0
      %v7166 = vpop.f32.mrb[0].mxu0
      %v7167 = vadd.f32 0.0, %v7166
      %v7168 = vpop.f32.mrb[0].mxu0
      %7169 = vmatprep.mubr.bf16.mxu0 0
      %7170 = vmatmul.mubr.bf16.gmra.mrb[0].mxu0 %v7030
      %v7171 = vpop.f32.mrb[0].mxu0
      %v7172 = vadd.f32 0.0, %v7171
      %v7173 = vpop.f32.mrb[0].mxu0
      %v7174 = vpop.f32.mrb[0].mxu0
      %v7175 = vadd.f32 0.0, %v7174
      %v7176 = vpop.f32.mrb[0].mxu0
      %7177 = vmatprep.mubr.bf16.mxu0 0
      %7178 = vmatmul.mubr.bf16.gmra.mrb[0].mxu0 %v7033
      %v7179 = vpop.f32.mrb[0].mxu0
      %v7180 = vadd.f32 0.0, %v7179
      %v7181 = vpop.f32.mrb[0].mxu0
      %v7182 = vpop.f32.mrb[0].mxu0
      %v7183 = vadd.f32 0.0, %v7182
      %v7184 = vpop.f32.mrb[0].mxu0
      %7185 = vmatprep.mubr.bf16.mxu0 0
      %7186 = vmatmul.mubr.bf16.gmra.mrb[0].mxu0 %v7036
      %v7187 = vpop.f32.mrb[0].mxu0
      %v7188 = vadd.f32 0.0, %v7187
      %v7189 = vpop.f32.mrb[0].mxu0
      %v7190 = vpop.f32.mrb[0].mxu0
      %v7191 = vadd.f32 0.0, %v7190
      %v7192 = vpop.f32.mrb[0].mxu0
      %7193 = vmatprep.mubr.bf16.mxu0 0
      %7194 = vmatmul.mubr.bf16.gmra.mrb[0].mxu0 %v7039
      %v7195 = vpop.f32.mrb[0].mxu0
      %v7196 = vadd.f32 0.0, %v7195
      %v7197 = vpop.f32.mrb[0].mxu0
      %v7198 = vpop.f32.mrb[0].mxu0
      %v7199 = vadd.f32 0.0, %v7198
      %v7200 = vpop.f32.mrb[0].mxu0
      %7201 = vdwg.mxu0
      %7202 = vst.msk [vmem:[%s352 + $0x800] sm:$0xff] %vm4377, %v7076
      %7203 = vst.msk [vmem:[%s352 + $0x808] sm:$0xff] %vm4377, %v7079
      %7204 = vst.msk [vmem:[%s352 + $0x810] sm:$0xff] %vm4377, %v7084
      %7205 = vst.msk [vmem:[%s352 + $0x818] sm:$0xff] %vm4377, %v7087
      %7206 = vst.msk [vmem:[%s352 + $0x820] sm:$0xff] %vm4377, %v7092
      %7207 = vst.msk [vmem:[%s352 + $0x828] sm:$0xff] %vm4377, %v7095
      %7208 = vst.msk [vmem:[%s352 + $0x830] sm:$0xff] %vm4377, %v7100
      %7209 = vst.msk [vmem:[%s352 + $0x838] sm:$0xff] %vm4377, %v7103
      %7210 = vst.msk [vmem:[%s352 + $0x840] sm:$0xff] %vm4377, %v7108
      %7211 = vst.msk [vmem:[%s352 + $0x848] sm:$0xff] %vm4377, %v7111
      %7212 = vst.msk [vmem:[%s352 + $0x850] sm:$0xff] %vm4377, %v7116
      %7213 = vst.msk [vmem:[%s352 + $0x858] sm:$0xff] %vm4377, %v7119
      %7214 = vst.msk [vmem:[%s352 + $0x860] sm:$0xff] %vm4377, %v7124
      %7215 = vst.msk [vmem:[%s352 + $0x868] sm:$0xff] %vm4377, %v7127
      %7216 = vst.msk [vmem:[%s352 + $0x870] sm:$0xff] %vm4377, %v7132
      %7217 = vst.msk [vmem:[%s352 + $0x878] sm:$0xff] %vm4377, %v7135
      %7218 = vst.msk [vmem:[%s352 + $0x880] sm:$0xff] %vm4377, %v7140
      %7219 = vst.msk [vmem:[%s352 + $0x888] sm:$0xff] %vm4377, %v7143
      %7220 = vst.msk [vmem:[%s352 + $0x890] sm:$0xff] %vm4377, %v7148
      %7221 = vst.msk [vmem:[%s352 + $0x898] sm:$0xff] %vm4377, %v7151
      %7222 = vst.msk [vmem:[%s352 + $0x8a0] sm:$0xff] %vm4377, %v7156
      %7223 = vst.msk [vmem:[%s352 + $0x8a8] sm:$0xff] %vm4377, %v7159
      %7224 = vst.msk [vmem:[%s352 + $0x8b0] sm:$0xff] %vm4377, %v7164
      %7225 = vst.msk [vmem:[%s352 + $0x8b8] sm:$0xff] %vm4377, %v7167
      %7226 = vst.msk [vmem:[%s352 + $0x8c0] sm:$0xff] %vm4377, %v7172
      %7227 = vst.msk [vmem:[%s352 + $0x8c8] sm:$0xff] %vm4377, %v7175
      %7228 = vst.msk [vmem:[%s352 + $0x8d0] sm:$0xff] %vm4377, %v7180
      %7229 = vst.msk [vmem:[%s352 + $0x8d8] sm:$0xff] %vm4377, %v7183
      %7230 = vst.msk [vmem:[%s352 + $0x8e0] sm:$0xff] %vm4377, %v7188
      %7231 = vst.msk [vmem:[%s352 + $0x8e8] sm:$0xff] %vm4377, %v7191
      %7232 = vst.msk [vmem:[%s352 + $0x8f0] sm:$0xff] %vm4377, %v7196
      %7233 = vst.msk [vmem:[%s352 + $0x8f8] sm:$0xff] %vm4377, %v7199
      %v7234 = vld [vmem:[%s8 + $0x480] sm:$0xf]
      %v7235 = vld [vmem:[%s8 + $0x484] sm:$0xf]
      %v7236 = vld [vmem:[%s8 + $0x488] sm:$0xf]
      %v7237 = vld [vmem:[%s8 + $0x48c] sm:$0xf]
      %v7238 = vld [vmem:[%s8 + $0x490] sm:$0xf]
      %v7239 = vld [vmem:[%s8 + $0x494] sm:$0xf]
      %v7240 = vld [vmem:[%s8 + $0x498] sm:$0xf]
      %v7241 = vld [vmem:[%s8 + $0x49c] sm:$0xf]
      %v7242 = vld [vmem:[%s8 + $0x4a0] sm:$0xf]
      %v7243 = vld [vmem:[%s8 + $0x4a4] sm:$0xf]
      %v7244 = vld [vmem:[%s8 + $0x4a8] sm:$0xf]
      %v7245 = vld [vmem:[%s8 + $0x4ac] sm:$0xf]
      %v7246 = vld [vmem:[%s8 + $0x4b0] sm:$0xf]
      %v7247 = vld [vmem:[%s8 + $0x4b4] sm:$0xf]
      %v7248 = vld [vmem:[%s8 + $0x4b8] sm:$0xf]
      %v7249 = vld [vmem:[%s8 + $0x4bc] sm:$0xf]
      %v7250 = vld [vmem:[%s8 + $0x4c0] sm:$0xf]
      %v7251 = vld [vmem:[%s8 + $0x4c4] sm:$0xf]
      %v7252 = vld [vmem:[%s8 + $0x4c8] sm:$0xf]
      %v7253 = vld [vmem:[%s8 + $0x4cc] sm:$0xf]
      %v7254 = vld [vmem:[%s8 + $0x4d0] sm:$0xf]
      %v7255 = vld [vmem:[%s8 + $0x4d4] sm:$0xf]
      %v7256 = vld [vmem:[%s8 + $0x4d8] sm:$0xf]
      %v7257 = vld [vmem:[%s8 + $0x4dc] sm:$0xf]
      %v7258 = vld [vmem:[%s8 + $0x4e0] sm:$0xf]
      %v7259 = vld [vmem:[%s8 + $0x4e4] sm:$0xf]
      %v7260 = vld [vmem:[%s8 + $0x4e8] sm:$0xf]
      %v7261 = vld [vmem:[%s8 + $0x4ec] sm:$0xf]
      %v7262 = vld [vmem:[%s8 + $0x4f0] sm:$0xf]
      %v7263 = vld [vmem:[%s8 + $0x4f4] sm:$0xf]
      %v7264 = vld [vmem:[%s8 + $0x4f8] sm:$0xf]
      %v7265 = vld [vmem:[%s8 + $0x4fc] sm:$0xf]
      %v7298 = vunpack.c.l.b16 %v7234
      %v7299 = vunpack.c.l.b16 %v7235
      %v7300 = vunpack.c.l.b16 %v7236
      %v7301 = vunpack.c.l.b16 %v7237
      %v7302 = vunpack.c.l.b16 %v7238
      %v7303 = vunpack.c.l.b16 %v7239
      %v7304 = vunpack.c.l.b16 %v7240
      %v7305 = vunpack.c.l.b16 %v7241
      %v7306 = vunpack.c.l.b16 %v7242
      %v7307 = vunpack.c.l.b16 %v7243
      %v7308 = vunpack.c.l.b16 %v7244
      %v7309 = vunpack.c.l.b16 %v7245
      %v7310 = vunpack.c.l.b16 %v7246
      %v7311 = vunpack.c.l.b16 %v7247
      %v7312 = vunpack.c.l.b16 %v7248
      %v7313 = vunpack.c.l.b16 %v7249
      %v7314 = vunpack.c.l.b16 %v7250
      %v7315 = vunpack.c.l.b16 %v7251
      %v7316 = vunpack.c.l.b16 %v7252
      %v7317 = vunpack.c.l.b16 %v7253
      %v7318 = vunpack.c.l.b16 %v7254
      %v7319 = vunpack.c.l.b16 %v7255
      %v7320 = vunpack.c.l.b16 %v7256
      %v7321 = vunpack.c.l.b16 %v7257
      %v7322 = vunpack.c.l.b16 %v7258
      %v7323 = vunpack.c.l.b16 %v7259
      %v7324 = vunpack.c.l.b16 %v7260
      %v7325 = vunpack.c.l.b16 %v7261
      %v7326 = vunpack.c.l.b16 %v7262
      %v7327 = vunpack.c.l.b16 %v7263
      %v7328 = vunpack.c.l.b16 %v7264
      %v7329 = vunpack.c.l.b16 %v7265
      %v7330 = vpack.c.b16 %v7299, %v7298
      %v7331 = vpack.c.b16 %v7301, %v7300
      %v7332 = vpack.c.b16 %v7303, %v7302
      %v7333 = vpack.c.b16 %v7305, %v7304
      %v7334 = vpack.c.b16 %v7307, %v7306
      %v7335 = vpack.c.b16 %v7309, %v7308
      %v7336 = vpack.c.b16 %v7311, %v7310
      %v7337 = vpack.c.b16 %v7313, %v7312
      %v7338 = vpack.c.b16 %v7315, %v7314
      %v7339 = vpack.c.b16 %v7317, %v7316
      %v7340 = vpack.c.b16 %v7319, %v7318
      %v7341 = vpack.c.b16 %v7321, %v7320
      %v7342 = vpack.c.b16 %v7323, %v7322
      %v7343 = vpack.c.b16 %v7325, %v7324
      %v7344 = vpack.c.b16 %v7327, %v7326
      %v7345 = vpack.c.b16 %v7329, %v7328
      %v7347 = vsel %vm4149, %v7330, 0
      %v7350 = vsel %vm4149, %v7331, 0
      %v7353 = vsel %vm4149, %v7332, 0
      %v7356 = vsel %vm4149, %v7333, 0
      %v7359 = vsel %vm4149, %v7334, 0
      %v7362 = vsel %vm4149, %v7335, 0
      %v7365 = vsel %vm4149, %v7336, 0
      %v7368 = vsel %vm4149, %v7337, 0
      %v7371 = vsel %vm4149, %v7338, 0
      %v7374 = vsel %vm4149, %v7339, 0
      %v7377 = vsel %vm4149, %v7340, 0
      %v7380 = vsel %vm4149, %v7341, 0
      %v7383 = vsel %vm4149, %v7342, 0
      %v7386 = vsel %vm4149, %v7343, 0
      %v7389 = vsel %vm4149, %v7344, 0
      %v7392 = vsel %vm4149, %v7345, 0
      %7394 = vmatprep.subr.bf16.mxu0 0
      %7395 = vmatpush1.bf16.xpose.msra.mxu0 %v4199
      %7396 = vmatprep.subr.bf16.mxu0 0
      %7397 = vmatpush1.bf16.xpose.msra.mxu0 %v4202
      %7398 = vmatprep.subr.bf16.mxu0 0
      %7399 = vmatpush1.bf16.xpose.msra.mxu0 %v4205
      %7400 = vmatprep.subr.bf16.mxu0 0
      %7401 = vmatpush1.bf16.xpose.msra.mxu0 %v4208
      %7402 = vmatprep.subr.bf16.mxu0 0
      %7403 = vmatpush1.bf16.xpose.msra.mxu0 %v4211
      %7404 = vmatprep.subr.bf16.mxu0 0
      %7405 = vmatpush1.bf16.xpose.msra.mxu0 %v4214
      %7406 = vmatprep.subr.bf16.mxu0 0
      %7407 = vmatpush1.bf16.xpose.msra.mxu0 0
      %7408 = vmatprep.subr.bf16.mxu0 0
      %7409 = vmatpush1.bf16.xpose.msra.mxu0 0
      %7410 = vmatprep.subr.bf16.mxu0 0
      %7411 = vmatpush1.bf16.xpose.msra.mxu0 0
      %7412 = vmatprep.subr.bf16.mxu0 0
      %7413 = vmatpush1.bf16.xpose.msra.mxu0 0
      %7414 = vmatprep.subr.bf16.mxu0 0
      %7415 = vmatpush1.bf16.xpose.msra.mxu0 0
      %7416 = vmatprep.subr.bf16.mxu0 0
      %7417 = vmatpush1.bf16.xpose.msra.mxu0 0
      %7418 = vmatprep.subr.bf16.mxu0 0
      %7419 = vmatpush1.bf16.xpose.msra.mxu0 0
      %7420 = vmatprep.subr.bf16.mxu0 0
      %7421 = vmatpush1.bf16.xpose.msra.mxu0 0
      %7422 = vmatprep.subr.bf16.mxu0 0
      %7423 = vmatpush1.bf16.xpose.msra.mxu0 0
      %7424 = vmatprep.subr.bf16.mxu0 0
      %7425 = vmatpush1.bf16.xpose.msra.mxu0 0
      %7426 = vmatprep.mubr.bf16.mxu0 0
      %7427 = vmatmul.mubr.bf16.gmra.mrb[0].mxu0 %v7347
      %v7428 = vpop.f32.mrb[0].mxu0
      %v7429 = vadd.f32 0.0, %v7428
      %v7430 = vpop.f32.mrb[0].mxu0
      %v7431 = vpop.f32.mrb[0].mxu0
      %v7432 = vadd.f32 0.0, %v7431
      %v7433 = vpop.f32.mrb[0].mxu0
      %7434 = vmatprep.mubr.bf16.mxu0 0
      %7435 = vmatmul.mubr.bf16.gmra.mrb[0].mxu0 %v7350
      %v7436 = vpop.f32.mrb[0].mxu0
      %v7437 = vadd.f32 0.0, %v7436
      %v7438 = vpop.f32.mrb[0].mxu0
      %v7439 = vpop.f32.mrb[0].mxu0
      %v7440 = vadd.f32 0.0, %v7439
      %v7441 = vpop.f32.mrb[0].mxu0
      %7442 = vmatprep.mubr.bf16.mxu0 0
      %7443 = vmatmul.mubr.bf16.gmra.mrb[0].mxu0 %v7353
      %v7444 = vpop.f32.mrb[0].mxu0
      %v7445 = vadd.f32 0.0, %v7444
      %v7446 = vpop.f32.mrb[0].mxu0
      %v7447 = vpop.f32.mrb[0].mxu0
      %v7448 = vadd.f32 0.0, %v7447
      %v7449 = vpop.f32.mrb[0].mxu0
      %7450 = vmatprep.mubr.bf16.mxu0 0
      %7451 = vmatmul.mubr.bf16.gmra.mrb[0].mxu0 %v7356
      %v7452 = vpop.f32.mrb[0].mxu0
      %v7453 = vadd.f32 0.0, %v7452
      %v7454 = vpop.f32.mrb[0].mxu0
      %v7455 = vpop.f32.mrb[0].mxu0
      %v7456 = vadd.f32 0.0, %v7455
      %v7457 = vpop.f32.mrb[0].mxu0
      %7458 = vmatprep.mubr.bf16.mxu0 0
      %7459 = vmatmul.mubr.bf16.gmra.mrb[0].mxu0 %v7359
      %v7460 = vpop.f32.mrb[0].mxu0
      %v7461 = vadd.f32 0.0, %v7460
      %v7462 = vpop.f32.mrb[0].mxu0
      %v7463 = vpop.f32.mrb[0].mxu0
      %v7464 = vadd.f32 0.0, %v7463
      %v7465 = vpop.f32.mrb[0].mxu0
      %7466 = vmatprep.mubr.bf16.mxu0 0
      %7467 = vmatmul.mubr.bf16.gmra.mrb[0].mxu0 %v7362
      %v7468 = vpop.f32.mrb[0].mxu0
      %v7469 = vadd.f32 0.0, %v7468
      %v7470 = vpop.f32.mrb[0].mxu0
      %v7471 = vpop.f32.mrb[0].mxu0
      %v7472 = vadd.f32 0.0, %v7471
      %v7473 = vpop.f32.mrb[0].mxu0
      %7474 = vmatprep.mubr.bf16.mxu0 0
      %7475 = vmatmul.mubr.bf16.gmra.mrb[0].mxu0 %v7365
      %v7476 = vpop.f32.mrb[0].mxu0
      %v7477 = vadd.f32 0.0, %v7476
      %v7478 = vpop.f32.mrb[0].mxu0
      %v7479 = vpop.f32.mrb[0].mxu0
      %v7480 = vadd.f32 0.0, %v7479
      %v7481 = vpop.f32.mrb[0].mxu0
      %7482 = vmatprep.mubr.bf16.mxu0 0
      %7483 = vmatmul.mubr.bf16.gmra.mrb[0].mxu0 %v7368
      %v7484 = vpop.f32.mrb[0].mxu0
      %v7485 = vadd.f32 0.0, %v7484
      %v7486 = vpop.f32.mrb[0].mxu0
      %v7487 = vpop.f32.mrb[0].mxu0
      %v7488 = vadd.f32 0.0, %v7487
      %v7489 = vpop.f32.mrb[0].mxu0
      %7490 = vmatprep.mubr.bf16.mxu0 0
      %7491 = vmatmul.mubr.bf16.gmra.mrb[0].mxu0 %v7371
      %v7492 = vpop.f32.mrb[0].mxu0
      %v7493 = vadd.f32 0.0, %v7492
      %v7494 = vpop.f32.mrb[0].mxu0
      %v7495 = vpop.f32.mrb[0].mxu0
      %v7496 = vadd.f32 0.0, %v7495
      %v7497 = vpop.f32.mrb[0].mxu0
      %7498 = vmatprep.mubr.bf16.mxu0 0
      %7499 = vmatmul.mubr.bf16.gmra.mrb[0].mxu0 %v7374
      %v7500 = vpop.f32.mrb[0].mxu0
      %v7501 = vadd.f32 0.0, %v7500
      %v7502 = vpop.f32.mrb[0].mxu0
      %v7503 = vpop.f32.mrb[0].mxu0
      %v7504 = vadd.f32 0.0, %v7503
      %v7505 = vpop.f32.mrb[0].mxu0
      %7506 = vmatprep.mubr.bf16.mxu0 0
      %7507 = vmatmul.mubr.bf16.gmra.mrb[0].mxu0 %v7377
      %v7508 = vpop.f32.mrb[0].mxu0
      %v7509 = vadd.f32 0.0, %v7508
      %v7510 = vpop.f32.mrb[0].mxu0
      %v7511 = vpop.f32.mrb[0].mxu0
      %v7512 = vadd.f32 0.0, %v7511
      %v7513 = vpop.f32.mrb[0].mxu0
      %7514 = vmatprep.mubr.bf16.mxu0 0
      %7515 = vmatmul.mubr.bf16.gmra.mrb[0].mxu0 %v7380
      %v7516 = vpop.f32.mrb[0].mxu0
      %v7517 = vadd.f32 0.0, %v7516
      %v7518 = vpop.f32.mrb[0].mxu0
      %v7519 = vpop.f32.mrb[0].mxu0
      %v7520 = vadd.f32 0.0, %v7519
      %v7521 = vpop.f32.mrb[0].mxu0
      %7522 = vmatprep.mubr.bf16.mxu0 0
      %7523 = vmatmul.mubr.bf16.gmra.mrb[0].mxu0 %v7383
      %v7524 = vpop.f32.mrb[0].mxu0
      %v7525 = vadd.f32 0.0, %v7524
      %v7526 = vpop.f32.mrb[0].mxu0
      %v7527 = vpop.f32.mrb[0].mxu0
      %v7528 = vadd.f32 0.0, %v7527
      %v7529 = vpop.f32.mrb[0].mxu0
      %7530 = vmatprep.mubr.bf16.mxu0 0
      %7531 = vmatmul.mubr.bf16.gmra.mrb[0].mxu0 %v7386
      %v7532 = vpop.f32.mrb[0].mxu0
      %v7533 = vadd.f32 0.0, %v7532
      %v7534 = vpop.f32.mrb[0].mxu0
      %v7535 = vpop.f32.mrb[0].mxu0
      %v7536 = vadd.f32 0.0, %v7535
      %v7537 = vpop.f32.mrb[0].mxu0
      %7538 = vmatprep.mubr.bf16.mxu0 0
      %7539 = vmatmul.mubr.bf16.gmra.mrb[0].mxu0 %v7389
      %v7540 = vpop.f32.mrb[0].mxu0
      %v7541 = vadd.f32 0.0, %v7540
      %v7542 = vpop.f32.mrb[0].mxu0
      %v7543 = vpop.f32.mrb[0].mxu0
      %v7544 = vadd.f32 0.0, %v7543
      %v7545 = vpop.f32.mrb[0].mxu0
      %7546 = vmatprep.mubr.bf16.mxu0 0
      %7547 = vmatmul.mubr.bf16.gmra.mrb[0].mxu0 %v7392
      %v7548 = vpop.f32.mrb[0].mxu0
      %v7549 = vadd.f32 0.0, %v7548
      %v7550 = vpop.f32.mrb[0].mxu0
      %v7551 = vpop.f32.mrb[0].mxu0
      %v7552 = vadd.f32 0.0, %v7551
      %v7553 = vpop.f32.mrb[0].mxu0
      %7554 = vdwg.mxu0
      %7555 = vst.msk [vmem:[%s352 + $0x900] sm:$0xff] %vm4377, %v7429
      %7556 = vst.msk [vmem:[%s352 + $0x908] sm:$0xff] %vm4377, %v7432
      %7557 = vst.msk [vmem:[%s352 + $0x910] sm:$0xff] %vm4377, %v7437
      %7558 = vst.msk [vmem:[%s352 + $0x918] sm:$0xff] %vm4377, %v7440
      %7559 = vst.msk [vmem:[%s352 + $0x920] sm:$0xff] %vm4377, %v7445
      %7560 = vst.msk [vmem:[%s352 + $0x928] sm:$0xff] %vm4377, %v7448
      %7561 = vst.msk [vmem:[%s352 + $0x930] sm:$0xff] %vm4377, %v7453
      %7562 = vst.msk [vmem:[%s352 + $0x938] sm:$0xff] %vm4377, %v7456
      %7563 = vst.msk [vmem:[%s352 + $0x940] sm:$0xff] %vm4377, %v7461
      %7564 = vst.msk [vmem:[%s352 + $0x948] sm:$0xff] %vm4377, %v7464
      %7565 = vst.msk [vmem:[%s352 + $0x950] sm:$0xff] %vm4377, %v7469
      %7566 = vst.msk [vmem:[%s352 + $0x958] sm:$0xff] %vm4377, %v7472
      %7567 = vst.msk [vmem:[%s352 + $0x960] sm:$0xff] %vm4377, %v7477
      %7568 = vst.msk [vmem:[%s352 + $0x968] sm:$0xff] %vm4377, %v7480
      %7569 = vst.msk [vmem:[%s352 + $0x970] sm:$0xff] %vm4377, %v7485
      %7570 = vst.msk [vmem:[%s352 + $0x978] sm:$0xff] %vm4377, %v7488
      %7571 = vst.msk [vmem:[%s352 + $0x980] sm:$0xff] %vm4377, %v7493
      %7572 = vst.msk [vmem:[%s352 + $0x988] sm:$0xff] %vm4377, %v7496
      %7573 = vst.msk [vmem:[%s352 + $0x990] sm:$0xff] %vm4377, %v7501
      %7574 = vst.msk [vmem:[%s352 + $0x998] sm:$0xff] %vm4377, %v7504
      %7575 = vst.msk [vmem:[%s352 + $0x9a0] sm:$0xff] %vm4377, %v7509
      %7576 = vst.msk [vmem:[%s352 + $0x9a8] sm:$0xff] %vm4377, %v7512
      %7577 = vst.msk [vmem:[%s352 + $0x9b0] sm:$0xff] %vm4377, %v7517
      %7578 = vst.msk [vmem:[%s352 + $0x9b8] sm:$0xff] %vm4377, %v7520
      %7579 = vst.msk [vmem:[%s352 + $0x9c0] sm:$0xff] %vm4377, %v7525
      %7580 = vst.msk [vmem:[%s352 + $0x9c8] sm:$0xff] %vm4377, %v7528
      %7581 = vst.msk [vmem:[%s352 + $0x9d0] sm:$0xff] %vm4377, %v7533
      %7582 = vst.msk [vmem:[%s352 + $0x9d8] sm:$0xff] %vm4377, %v7536
      %7583 = vst.msk [vmem:[%s352 + $0x9e0] sm:$0xff] %vm4377, %v7541
      %7584 = vst.msk [vmem:[%s352 + $0x9e8] sm:$0xff] %vm4377, %v7544
      %7585 = vst.msk [vmem:[%s352 + $0x9f0] sm:$0xff] %vm4377, %v7549
      %7586 = vst.msk [vmem:[%s352 + $0x9f8] sm:$0xff] %vm4377, %v7552
      %v7587 = vld [vmem:[%s8 + $0x500] sm:$0xf]
      %v7588 = vld [vmem:[%s8 + $0x504] sm:$0xf]
      %v7589 = vld [vmem:[%s8 + $0x508] sm:$0xf]
      %v7590 = vld [vmem:[%s8 + $0x50c] sm:$0xf]
      %v7591 = vld [vmem:[%s8 + $0x510] sm:$0xf]
      %v7592 = vld [vmem:[%s8 + $0x514] sm:$0xf]
      %v7593 = vld [vmem:[%s8 + $0x518] sm:$0xf]
      %v7594 = vld [vmem:[%s8 + $0x51c] sm:$0xf]
      %v7595 = vld [vmem:[%s8 + $0x520] sm:$0xf]
      %v7596 = vld [vmem:[%s8 + $0x524] sm:$0xf]
      %v7597 = vld [vmem:[%s8 + $0x528] sm:$0xf]
      %v7598 = vld [vmem:[%s8 + $0x52c] sm:$0xf]
      %v7599 = vld [vmem:[%s8 + $0x530] sm:$0xf]
      %v7600 = vld [vmem:[%s8 + $0x534] sm:$0xf]
      %v7601 = vld [vmem:[%s8 + $0x538] sm:$0xf]
      %v7602 = vld [vmem:[%s8 + $0x53c] sm:$0xf]
      %v7603 = vld [vmem:[%s8 + $0x540] sm:$0xf]
      %v7604 = vld [vmem:[%s8 + $0x544] sm:$0xf]
      %v7605 = vld [vmem:[%s8 + $0x548] sm:$0xf]
      %v7606 = vld [vmem:[%s8 + $0x54c] sm:$0xf]
      %v7607 = vld [vmem:[%s8 + $0x550] sm:$0xf]
      %v7608 = vld [vmem:[%s8 + $0x554] sm:$0xf]
      %v7609 = vld [vmem:[%s8 + $0x558] sm:$0xf]
      %v7610 = vld [vmem:[%s8 + $0x55c] sm:$0xf]
      %v7611 = vld [vmem:[%s8 + $0x560] sm:$0xf]
      %v7612 = vld [vmem:[%s8 + $0x564] sm:$0xf]
      %v7613 = vld [vmem:[%s8 + $0x568] sm:$0xf]
      %v7614 = vld [vmem:[%s8 + $0x56c] sm:$0xf]
      %v7615 = vld [vmem:[%s8 + $0x570] sm:$0xf]
      %v7616 = vld [vmem:[%s8 + $0x574] sm:$0xf]
      %v7617 = vld [vmem:[%s8 + $0x578] sm:$0xf]
      %v7618 = vld [vmem:[%s8 + $0x57c] sm:$0xf]
      %v7651 = vunpack.c.l.b16 %v7587
      %v7652 = vunpack.c.l.b16 %v7588
      %v7653 = vunpack.c.l.b16 %v7589
      %v7654 = vunpack.c.l.b16 %v7590
      %v7655 = vunpack.c.l.b16 %v7591
      %v7656 = vunpack.c.l.b16 %v7592
      %v7657 = vunpack.c.l.b16 %v7593
      %v7658 = vunpack.c.l.b16 %v7594
      %v7659 = vunpack.c.l.b16 %v7595
      %v7660 = vunpack.c.l.b16 %v7596
      %v7661 = vunpack.c.l.b16 %v7597
      %v7662 = vunpack.c.l.b16 %v7598
      %v7663 = vunpack.c.l.b16 %v7599
      %v7664 = vunpack.c.l.b16 %v7600
      %v7665 = vunpack.c.l.b16 %v7601
      %v7666 = vunpack.c.l.b16 %v7602
      %v7667 = vunpack.c.l.b16 %v7603
      %v7668 = vunpack.c.l.b16 %v7604
      %v7669 = vunpack.c.l.b16 %v7605
      %v7670 = vunpack.c.l.b16 %v7606
      %v7671 = vunpack.c.l.b16 %v7607
      %v7672 = vunpack.c.l.b16 %v7608
      %v7673 = vunpack.c.l.b16 %v7609
      %v7674 = vunpack.c.l.b16 %v7610
      %v7675 = vunpack.c.l.b16 %v7611
      %v7676 = vunpack.c.l.b16 %v7612
      %v7677 = vunpack.c.l.b16 %v7613
      %v7678 = vunpack.c.l.b16 %v7614
      %v7679 = vunpack.c.l.b16 %v7615
      %v7680 = vunpack.c.l.b16 %v7616
      %v7681 = vunpack.c.l.b16 %v7617
      %v7682 = vunpack.c.l.b16 %v7618
      %v7683 = vpack.c.b16 %v7652, %v7651
      %v7684 = vpack.c.b16 %v7654, %v7653
      %v7685 = vpack.c.b16 %v7656, %v7655
      %v7686 = vpack.c.b16 %v7658, %v7657
      %v7687 = vpack.c.b16 %v7660, %v7659
      %v7688 = vpack.c.b16 %v7662, %v7661
      %v7689 = vpack.c.b16 %v7664, %v7663
      %v7690 = vpack.c.b16 %v7666, %v7665
      %v7691 = vpack.c.b16 %v7668, %v7667
      %v7692 = vpack.c.b16 %v7670, %v7669
      %v7693 = vpack.c.b16 %v7672, %v7671
      %v7694 = vpack.c.b16 %v7674, %v7673
      %v7695 = vpack.c.b16 %v7676, %v7675
      %v7696 = vpack.c.b16 %v7678, %v7677
      %v7697 = vpack.c.b16 %v7680, %v7679
      %v7698 = vpack.c.b16 %v7682, %v7681
      %v7700 = vsel %vm4149, %v7683, 0
      %v7703 = vsel %vm4149, %v7684, 0
      %v7706 = vsel %vm4149, %v7685, 0
      %v7709 = vsel %vm4149, %v7686, 0
      %v7712 = vsel %vm4149, %v7687, 0
      %v7715 = vsel %vm4149, %v7688, 0
      %v7718 = vsel %vm4149, %v7689, 0
      %v7721 = vsel %vm4149, %v7690, 0
      %v7724 = vsel %vm4149, %v7691, 0
      %v7727 = vsel %vm4149, %v7692, 0
      %v7730 = vsel %vm4149, %v7693, 0
      %v7733 = vsel %vm4149, %v7694, 0
      %v7736 = vsel %vm4149, %v7695, 0
      %v7739 = vsel %vm4149, %v7696, 0
      %v7742 = vsel %vm4149, %v7697, 0
      %v7745 = vsel %vm4149, %v7698, 0
      %7747 = vmatprep.subr.bf16.mxu0 0
      %7748 = vmatpush1.bf16.xpose.msra.mxu0 %v4199
      %7749 = vmatprep.subr.bf16.mxu0 0
      %7750 = vmatpush1.bf16.xpose.msra.mxu0 %v4202
      %7751 = vmatprep.subr.bf16.mxu0 0
      %7752 = vmatpush1.bf16.xpose.msra.mxu0 %v4205
      %7753 = vmatprep.subr.bf16.mxu0 0
      %7754 = vmatpush1.bf16.xpose.msra.mxu0 %v4208
      %7755 = vmatprep.subr.bf16.mxu0 0
      %7756 = vmatpush1.bf16.xpose.msra.mxu0 %v4211
      %7757 = vmatprep.subr.bf16.mxu0 0
      %7758 = vmatpush1.bf16.xpose.msra.mxu0 %v4214
      %7759 = vmatprep.subr.bf16.mxu0 0
      %7760 = vmatpush1.bf16.xpose.msra.mxu0 0
      %7761 = vmatprep.subr.bf16.mxu0 0
      %7762 = vmatpush1.bf16.xpose.msra.mxu0 0
      %7763 = vmatprep.subr.bf16.mxu0 0
      %7764 = vmatpush1.bf16.xpose.msra.mxu0 0
      %7765 = vmatprep.subr.bf16.mxu0 0
      %7766 = vmatpush1.bf16.xpose.msra.mxu0 0
      %7767 = vmatprep.subr.bf16.mxu0 0
      %7768 = vmatpush1.bf16.xpose.msra.mxu0 0
      %7769 = vmatprep.subr.bf16.mxu0 0
      %7770 = vmatpush1.bf16.xpose.msra.mxu0 0
      %7771 = vmatprep.subr.bf16.mxu0 0
      %7772 = vmatpush1.bf16.xpose.msra.mxu0 0
      %7773 = vmatprep.subr.bf16.mxu0 0
      %7774 = vmatpush1.bf16.xpose.msra.mxu0 0
      %7775 = vmatprep.subr.bf16.mxu0 0
      %7776 = vmatpush1.bf16.xpose.msra.mxu0 0
      %7777 = vmatprep.subr.bf16.mxu0 0
      %7778 = vmatpush1.bf16.xpose.msra.mxu0 0
      %7779 = vmatprep.mubr.bf16.mxu0 0
      %7780 = vmatmul.mubr.bf16.gmra.mrb[0].mxu0 %v7700
      %v7781 = vpop.f32.mrb[0].mxu0
      %v7782 = vadd.f32 0.0, %v7781
      %v7783 = vpop.f32.mrb[0].mxu0
      %v7784 = vpop.f32.mrb[0].mxu0
      %v7785 = vadd.f32 0.0, %v7784
      %v7786 = vpop.f32.mrb[0].mxu0
      %7787 = vmatprep.mubr.bf16.mxu0 0
      %7788 = vmatmul.mubr.bf16.gmra.mrb[0].mxu0 %v7703
      %v7789 = vpop.f32.mrb[0].mxu0
      %v7790 = vadd.f32 0.0, %v7789
      %v7791 = vpop.f32.mrb[0].mxu0
      %v7792 = vpop.f32.mrb[0].mxu0
      %v7793 = vadd.f32 0.0, %v7792
      %v7794 = vpop.f32.mrb[0].mxu0
      %7795 = vmatprep.mubr.bf16.mxu0 0
      %7796 = vmatmul.mubr.bf16.gmra.mrb[0].mxu0 %v7706
      %v7797 = vpop.f32.mrb[0].mxu0
      %v7798 = vadd.f32 0.0, %v7797
      %v7799 = vpop.f32.mrb[0].mxu0
      %v7800 = vpop.f32.mrb[0].mxu0
      %v7801 = vadd.f32 0.0, %v7800
      %v7802 = vpop.f32.mrb[0].mxu0
      %7803 = vmatprep.mubr.bf16.mxu0 0
      %7804 = vmatmul.mubr.bf16.gmra.mrb[0].mxu0 %v7709
      %v7805 = vpop.f32.mrb[0].mxu0
      %v7806 = vadd.f32 0.0, %v7805
      %v7807 = vpop.f32.mrb[0].mxu0
      %v7808 = vpop.f32.mrb[0].mxu0
      %v7809 = vadd.f32 0.0, %v7808
      %v7810 = vpop.f32.mrb[0].mxu0
      %7811 = vmatprep.mubr.bf16.mxu0 0
      %7812 = vmatmul.mubr.bf16.gmra.mrb[0].mxu0 %v7712
      %v7813 = vpop.f32.mrb[0].mxu0
      %v7814 = vadd.f32 0.0, %v7813
      %v7815 = vpop.f32.mrb[0].mxu0
      %v7816 = vpop.f32.mrb[0].mxu0
      %v7817 = vadd.f32 0.0, %v7816
      %v7818 = vpop.f32.mrb[0].mxu0
      %7819 = vmatprep.mubr.bf16.mxu0 0
      %7820 = vmatmul.mubr.bf16.gmra.mrb[0].mxu0 %v7715
      %v7821 = vpop.f32.mrb[0].mxu0
      %v7822 = vadd.f32 0.0, %v7821
      %v7823 = vpop.f32.mrb[0].mxu0
      %v7824 = vpop.f32.mrb[0].mxu0
      %v7825 = vadd.f32 0.0, %v7824
      %v7826 = vpop.f32.mrb[0].mxu0
      %7827 = vmatprep.mubr.bf16.mxu0 0
      %7828 = vmatmul.mubr.bf16.gmra.mrb[0].mxu0 %v7718
      %v7829 = vpop.f32.mrb[0].mxu0
      %v7830 = vadd.f32 0.0, %v7829
      %v7831 = vpop.f32.mrb[0].mxu0
      %v7832 = vpop.f32.mrb[0].mxu0
      %v7833 = vadd.f32 0.0, %v7832
      %v7834 = vpop.f32.mrb[0].mxu0
      %7835 = vmatprep.mubr.bf16.mxu0 0
      %7836 = vmatmul.mubr.bf16.gmra.mrb[0].mxu0 %v7721
      %v7837 = vpop.f32.mrb[0].mxu0
      %v7838 = vadd.f32 0.0, %v7837
      %v7839 = vpop.f32.mrb[0].mxu0
      %v7840 = vpop.f32.mrb[0].mxu0
      %v7841 = vadd.f32 0.0, %v7840
      %v7842 = vpop.f32.mrb[0].mxu0
      %7843 = vmatprep.mubr.bf16.mxu0 0
      %7844 = vmatmul.mubr.bf16.gmra.mrb[0].mxu0 %v7724
      %v7845 = vpop.f32.mrb[0].mxu0
      %v7846 = vadd.f32 0.0, %v7845
      %v7847 = vpop.f32.mrb[0].mxu0
      %v7848 = vpop.f32.mrb[0].mxu0
      %v7849 = vadd.f32 0.0, %v7848
      %v7850 = vpop.f32.mrb[0].mxu0
      %7851 = vmatprep.mubr.bf16.mxu0 0
      %7852 = vmatmul.mubr.bf16.gmra.mrb[0].mxu0 %v7727
      %v7853 = vpop.f32.mrb[0].mxu0
      %v7854 = vadd.f32 0.0, %v7853
      %v7855 = vpop.f32.mrb[0].mxu0
      %v7856 = vpop.f32.mrb[0].mxu0
      %v7857 = vadd.f32 0.0, %v7856
      %v7858 = vpop.f32.mrb[0].mxu0
      %7859 = vmatprep.mubr.bf16.mxu0 0
      %7860 = vmatmul.mubr.bf16.gmra.mrb[0].mxu0 %v7730
      %v7861 = vpop.f32.mrb[0].mxu0
      %v7862 = vadd.f32 0.0, %v7861
      %v7863 = vpop.f32.mrb[0].mxu0
      %v7864 = vpop.f32.mrb[0].mxu0
      %v7865 = vadd.f32 0.0, %v7864
      %v7866 = vpop.f32.mrb[0].mxu0
      %7867 = vmatprep.mubr.bf16.mxu0 0
      %7868 = vmatmul.mubr.bf16.gmra.mrb[0].mxu0 %v7733
      %v7869 = vpop.f32.mrb[0].mxu0
      %v7870 = vadd.f32 0.0, %v7869
      %v7871 = vpop.f32.mrb[0].mxu0
      %v7872 = vpop.f32.mrb[0].mxu0
      %v7873 = vadd.f32 0.0, %v7872
      %v7874 = vpop.f32.mrb[0].mxu0
      %7875 = vmatprep.mubr.bf16.mxu0 0
      %7876 = vmatmul.mubr.bf16.gmra.mrb[0].mxu0 %v7736
      %v7877 = vpop.f32.mrb[0].mxu0
      %v7878 = vadd.f32 0.0, %v7877
      %v7879 = vpop.f32.mrb[0].mxu0
      %v7880 = vpop.f32.mrb[0].mxu0
      %v7881 = vadd.f32 0.0, %v7880
      %v7882 = vpop.f32.mrb[0].mxu0
      %7883 = vmatprep.mubr.bf16.mxu0 0
      %7884 = vmatmul.mubr.bf16.gmra.mrb[0].mxu0 %v7739
      %v7885 = vpop.f32.mrb[0].mxu0
      %v7886 = vadd.f32 0.0, %v7885
      %v7887 = vpop.f32.mrb[0].mxu0
      %v7888 = vpop.f32.mrb[0].mxu0
      %v7889 = vadd.f32 0.0, %v7888
      %v7890 = vpop.f32.mrb[0].mxu0
      %7891 = vmatprep.mubr.bf16.mxu0 0
      %7892 = vmatmul.mubr.bf16.gmra.mrb[0].mxu0 %v7742
      %v7893 = vpop.f32.mrb[0].mxu0
      %v7894 = vadd.f32 0.0, %v7893
      %v7895 = vpop.f32.mrb[0].mxu0
      %v7896 = vpop.f32.mrb[0].mxu0
      %v7897 = vadd.f32 0.0, %v7896
      %v7898 = vpop.f32.mrb[0].mxu0
      %7899 = vmatprep.mubr.bf16.mxu0 0
      %7900 = vmatmul.mubr.bf16.gmra.mrb[0].mxu0 %v7745
      %v7901 = vpop.f32.mrb[0].mxu0
      %v7902 = vadd.f32 0.0, %v7901
      %v7903 = vpop.f32.mrb[0].mxu0
      %v7904 = vpop.f32.mrb[0].mxu0
      %v7905 = vadd.f32 0.0, %v7904
      %v7906 = vpop.f32.mrb[0].mxu0
      %7907 = vdwg.mxu0
      %7908 = vst.msk [vmem:[%s352 + $0xa00] sm:$0xff] %vm4377, %v7782
      %7909 = vst.msk [vmem:[%s352 + $0xa08] sm:$0xff] %vm4377, %v7785
      %7910 = vst.msk [vmem:[%s352 + $0xa10] sm:$0xff] %vm4377, %v7790
      %7911 = vst.msk [vmem:[%s352 + $0xa18] sm:$0xff] %vm4377, %v7793
      %7912 = vst.msk [vmem:[%s352 + $0xa20] sm:$0xff] %vm4377, %v7798
      %7913 = vst.msk [vmem:[%s352 + $0xa28] sm:$0xff] %vm4377, %v7801
      %7914 = vst.msk [vmem:[%s352 + $0xa30] sm:$0xff] %vm4377, %v7806
      %7915 = vst.msk [vmem:[%s352 + $0xa38] sm:$0xff] %vm4377, %v7809
      %7916 = vst.msk [vmem:[%s352 + $0xa40] sm:$0xff] %vm4377, %v7814
      %7917 = vst.msk [vmem:[%s352 + $0xa48] sm:$0xff] %vm4377, %v7817
      %7918 = vst.msk [vmem:[%s352 + $0xa50] sm:$0xff] %vm4377, %v7822
      %7919 = vst.msk [vmem:[%s352 + $0xa58] sm:$0xff] %vm4377, %v7825
      %7920 = vst.msk [vmem:[%s352 + $0xa60] sm:$0xff] %vm4377, %v7830
      %7921 = vst.msk [vmem:[%s352 + $0xa68] sm:$0xff] %vm4377, %v7833
      %7922 = vst.msk [vmem:[%s352 + $0xa70] sm:$0xff] %vm4377, %v7838
      %7923 = vst.msk [vmem:[%s352 + $0xa78] sm:$0xff] %vm4377, %v7841
      %7924 = vst.msk [vmem:[%s352 + $0xa80] sm:$0xff] %vm4377, %v7846
      %7925 = vst.msk [vmem:[%s352 + $0xa88] sm:$0xff] %vm4377, %v7849
      %7926 = vst.msk [vmem:[%s352 + $0xa90] sm:$0xff] %vm4377, %v7854
      %7927 = vst.msk [vmem:[%s352 + $0xa98] sm:$0xff] %vm4377, %v7857
      %7928 = vst.msk [vmem:[%s352 + $0xaa0] sm:$0xff] %vm4377, %v7862
      %7929 = vst.msk [vmem:[%s352 + $0xaa8] sm:$0xff] %vm4377, %v7865
      %7930 = vst.msk [vmem:[%s352 + $0xab0] sm:$0xff] %vm4377, %v7870
      %7931 = vst.msk [vmem:[%s352 + $0xab8] sm:$0xff] %vm4377, %v7873
      %7932 = vst.msk [vmem:[%s352 + $0xac0] sm:$0xff] %vm4377, %v7878
      %7933 = vst.msk [vmem:[%s352 + $0xac8] sm:$0xff] %vm4377, %v7881
      %7934 = vst.msk [vmem:[%s352 + $0xad0] sm:$0xff] %vm4377, %v7886
      %7935 = vst.msk [vmem:[%s352 + $0xad8] sm:$0xff] %vm4377, %v7889
      %7936 = vst.msk [vmem:[%s352 + $0xae0] sm:$0xff] %vm4377, %v7894
      %7937 = vst.msk [vmem:[%s352 + $0xae8] sm:$0xff] %vm4377, %v7897
      %7938 = vst.msk [vmem:[%s352 + $0xaf0] sm:$0xff] %vm4377, %v7902
      %7939 = vst.msk [vmem:[%s352 + $0xaf8] sm:$0xff] %vm4377, %v7905
      %v7940 = vld [vmem:[%s8 + $0x580] sm:$0xf]
      %v7941 = vld [vmem:[%s8 + $0x584] sm:$0xf]
      %v7942 = vld [vmem:[%s8 + $0x588] sm:$0xf]
      %v7943 = vld [vmem:[%s8 + $0x58c] sm:$0xf]
      %v7944 = vld [vmem:[%s8 + $0x590] sm:$0xf]
      %v7945 = vld [vmem:[%s8 + $0x594] sm:$0xf]
      %v7946 = vld [vmem:[%s8 + $0x598] sm:$0xf]
      %v7947 = vld [vmem:[%s8 + $0x59c] sm:$0xf]
      %v7948 = vld [vmem:[%s8 + $0x5a0] sm:$0xf]
      %v7949 = vld [vmem:[%s8 + $0x5a4] sm:$0xf]
      %v7950 = vld [vmem:[%s8 + $0x5a8] sm:$0xf]
      %v7951 = vld [vmem:[%s8 + $0x5ac] sm:$0xf]
      %v7952 = vld [vmem:[%s8 + $0x5b0] sm:$0xf]
      %v7953 = vld [vmem:[%s8 + $0x5b4] sm:$0xf]
      %v7954 = vld [vmem:[%s8 + $0x5b8] sm:$0xf]
      %v7955 = vld [vmem:[%s8 + $0x5bc] sm:$0xf]
      %v7956 = vld [vmem:[%s8 + $0x5c0] sm:$0xf]
      %v7957 = vld [vmem:[%s8 + $0x5c4] sm:$0xf]
      %v7958 = vld [vmem:[%s8 + $0x5c8] sm:$0xf]
      %v7959 = vld [vmem:[%s8 + $0x5cc] sm:$0xf]
      %v7960 = vld [vmem:[%s8 + $0x5d0] sm:$0xf]
      %v7961 = vld [vmem:[%s8 + $0x5d4] sm:$0xf]
      %v7962 = vld [vmem:[%s8 + $0x5d8] sm:$0xf]
      %v7963 = vld [vmem:[%s8 + $0x5dc] sm:$0xf]
      %v7964 = vld [vmem:[%s8 + $0x5e0] sm:$0xf]
      %v7965 = vld [vmem:[%s8 + $0x5e4] sm:$0xf]
      %v7966 = vld [vmem:[%s8 + $0x5e8] sm:$0xf]
      %v7967 = vld [vmem:[%s8 + $0x5ec] sm:$0xf]
      %v7968 = vld [vmem:[%s8 + $0x5f0] sm:$0xf]
      %v7969 = vld [vmem:[%s8 + $0x5f4] sm:$0xf]
      %v7970 = vld [vmem:[%s8 + $0x5f8] sm:$0xf]
      %v7971 = vld [vmem:[%s8 + $0x5fc] sm:$0xf]
      %v8004 = vunpack.c.l.b16 %v7940
      %v8005 = vunpack.c.l.b16 %v7941
      %v8006 = vunpack.c.l.b16 %v7942
      %v8007 = vunpack.c.l.b16 %v7943
      %v8008 = vunpack.c.l.b16 %v7944
      %v8009 = vunpack.c.l.b16 %v7945
      %v8010 = vunpack.c.l.b16 %v7946
      %v8011 = vunpack.c.l.b16 %v7947
      %v8012 = vunpack.c.l.b16 %v7948
      %v8013 = vunpack.c.l.b16 %v7949
      %v8014 = vunpack.c.l.b16 %v7950
      %v8015 = vunpack.c.l.b16 %v7951
      %v8016 = vunpack.c.l.b16 %v7952
      %v8017 = vunpack.c.l.b16 %v7953
      %v8018 = vunpack.c.l.b16 %v7954
      %v8019 = vunpack.c.l.b16 %v7955
      %v8020 = vunpack.c.l.b16 %v7956
      %v8021 = vunpack.c.l.b16 %v7957
      %v8022 = vunpack.c.l.b16 %v7958
      %v8023 = vunpack.c.l.b16 %v7959
      %v8024 = vunpack.c.l.b16 %v7960
      %v8025 = vunpack.c.l.b16 %v7961
      %v8026 = vunpack.c.l.b16 %v7962
      %v8027 = vunpack.c.l.b16 %v7963
      %v8028 = vunpack.c.l.b16 %v7964
      %v8029 = vunpack.c.l.b16 %v7965
      %v8030 = vunpack.c.l.b16 %v7966
      %v8031 = vunpack.c.l.b16 %v7967
      %v8032 = vunpack.c.l.b16 %v7968
      %v8033 = vunpack.c.l.b16 %v7969
      %v8034 = vunpack.c.l.b16 %v7970
      %v8035 = vunpack.c.l.b16 %v7971
      %v8036 = vpack.c.b16 %v8005, %v8004
      %v8037 = vpack.c.b16 %v8007, %v8006
      %v8038 = vpack.c.b16 %v8009, %v8008
      %v8039 = vpack.c.b16 %v8011, %v8010
      %v8040 = vpack.c.b16 %v8013, %v8012
      %v8041 = vpack.c.b16 %v8015, %v8014
      %v8042 = vpack.c.b16 %v8017, %v8016
      %v8043 = vpack.c.b16 %v8019, %v8018
      %v8044 = vpack.c.b16 %v8021, %v8020
      %v8045 = vpack.c.b16 %v8023, %v8022
      %v8046 = vpack.c.b16 %v8025, %v8024
      %v8047 = vpack.c.b16 %v8027, %v8026
      %v8048 = vpack.c.b16 %v8029, %v8028
      %v8049 = vpack.c.b16 %v8031, %v8030
      %v8050 = vpack.c.b16 %v8033, %v8032
      %v8051 = vpack.c.b16 %v8035, %v8034
      %v8053 = vsel %vm4149, %v8036, 0
      %v8056 = vsel %vm4149, %v8037, 0
      %v8059 = vsel %vm4149, %v8038, 0
      %v8062 = vsel %vm4149, %v8039, 0
      %v8065 = vsel %vm4149, %v8040, 0
      %v8068 = vsel %vm4149, %v8041, 0
      %v8071 = vsel %vm4149, %v8042, 0
      %v8074 = vsel %vm4149, %v8043, 0
      %v8077 = vsel %vm4149, %v8044, 0
      %v8080 = vsel %vm4149, %v8045, 0
      %v8083 = vsel %vm4149, %v8046, 0
      %v8086 = vsel %vm4149, %v8047, 0
      %v8089 = vsel %vm4149, %v8048, 0
      %v8092 = vsel %vm4149, %v8049, 0
      %v8095 = vsel %vm4149, %v8050, 0
      %v8098 = vsel %vm4149, %v8051, 0
      %8100 = vmatprep.subr.bf16.mxu0 0
      %8101 = vmatpush1.bf16.xpose.msra.mxu0 %v4199
      %8102 = vmatprep.subr.bf16.mxu0 0
      %8103 = vmatpush1.bf16.xpose.msra.mxu0 %v4202
      %8104 = vmatprep.subr.bf16.mxu0 0
      %8105 = vmatpush1.bf16.xpose.msra.mxu0 %v4205
      %8106 = vmatprep.subr.bf16.mxu0 0
      %8107 = vmatpush1.bf16.xpose.msra.mxu0 %v4208
      %8108 = vmatprep.subr.bf16.mxu0 0
      %8109 = vmatpush1.bf16.xpose.msra.mxu0 %v4211
      %8110 = vmatprep.subr.bf16.mxu0 0
      %8111 = vmatpush1.bf16.xpose.msra.mxu0 %v4214
      %8112 = vmatprep.subr.bf16.mxu0 0
      %8113 = vmatpush1.bf16.xpose.msra.mxu0 0
      %8114 = vmatprep.subr.bf16.mxu0 0
      %8115 = vmatpush1.bf16.xpose.msra.mxu0 0
      %8116 = vmatprep.subr.bf16.mxu0 0
      %8117 = vmatpush1.bf16.xpose.msra.mxu0 0
      %8118 = vmatprep.subr.bf16.mxu0 0
      %8119 = vmatpush1.bf16.xpose.msra.mxu0 0
      %8120 = vmatprep.subr.bf16.mxu0 0
      %8121 = vmatpush1.bf16.xpose.msra.mxu0 0
      %8122 = vmatprep.subr.bf16.mxu0 0
      %8123 = vmatpush1.bf16.xpose.msra.mxu0 0
      %8124 = vmatprep.subr.bf16.mxu0 0
      %8125 = vmatpush1.bf16.xpose.msra.mxu0 0
      %8126 = vmatprep.subr.bf16.mxu0 0
      %8127 = vmatpush1.bf16.xpose.msra.mxu0 0
      %8128 = vmatprep.subr.bf16.mxu0 0
      %8129 = vmatpush1.bf16.xpose.msra.mxu0 0
      %8130 = vmatprep.subr.bf16.mxu0 0
      %8131 = vmatpush1.bf16.xpose.msra.mxu0 0
      %8132 = vmatprep.mubr.bf16.mxu0 0
      %8133 = vmatmul.mubr.bf16.gmra.mrb[0].mxu0 %v8053
      %v8134 = vpop.f32.mrb[0].mxu0
      %v8135 = vadd.f32 0.0, %v8134
      %v8136 = vpop.f32.mrb[0].mxu0
      %v8137 = vpop.f32.mrb[0].mxu0
      %v8138 = vadd.f32 0.0, %v8137
      %v8139 = vpop.f32.mrb[0].mxu0
      %8140 = vmatprep.mubr.bf16.mxu0 0
      %8141 = vmatmul.mubr.bf16.gmra.mrb[0].mxu0 %v8056
      %v8142 = vpop.f32.mrb[0].mxu0
      %v8143 = vadd.f32 0.0, %v8142
      %v8144 = vpop.f32.mrb[0].mxu0
      %v8145 = vpop.f32.mrb[0].mxu0
      %v8146 = vadd.f32 0.0, %v8145
      %v8147 = vpop.f32.mrb[0].mxu0
      %8148 = vmatprep.mubr.bf16.mxu0 0
      %8149 = vmatmul.mubr.bf16.gmra.mrb[0].mxu0 %v8059
      %v8150 = vpop.f32.mrb[0].mxu0
      %v8151 = vadd.f32 0.0, %v8150
      %v8152 = vpop.f32.mrb[0].mxu0
      %v8153 = vpop.f32.mrb[0].mxu0
      %v8154 = vadd.f32 0.0, %v8153
      %v8155 = vpop.f32.mrb[0].mxu0
      %8156 = vmatprep.mubr.bf16.mxu0 0
      %8157 = vmatmul.mubr.bf16.gmra.mrb[0].mxu0 %v8062
      %v8158 = vpop.f32.mrb[0].mxu0
      %v8159 = vadd.f32 0.0, %v8158
      %v8160 = vpop.f32.mrb[0].mxu0
      %v8161 = vpop.f32.mrb[0].mxu0
      %v8162 = vadd.f32 0.0, %v8161
      %v8163 = vpop.f32.mrb[0].mxu0
      %8164 = vmatprep.mubr.bf16.mxu0 0
      %8165 = vmatmul.mubr.bf16.gmra.mrb[0].mxu0 %v8065
      %v8166 = vpop.f32.mrb[0].mxu0
      %v8167 = vadd.f32 0.0, %v8166
      %v8168 = vpop.f32.mrb[0].mxu0
      %v8169 = vpop.f32.mrb[0].mxu0
      %v8170 = vadd.f32 0.0, %v8169
      %v8171 = vpop.f32.mrb[0].mxu0
      %8172 = vmatprep.mubr.bf16.mxu0 0
      %8173 = vmatmul.mubr.bf16.gmra.mrb[0].mxu0 %v8068
      %v8174 = vpop.f32.mrb[0].mxu0
      %v8175 = vadd.f32 0.0, %v8174
      %v8176 = vpop.f32.mrb[0].mxu0
      %v8177 = vpop.f32.mrb[0].mxu0
      %v8178 = vadd.f32 0.0, %v8177
      %v8179 = vpop.f32.mrb[0].mxu0
      %8180 = vmatprep.mubr.bf16.mxu0 0
      %8181 = vmatmul.mubr.bf16.gmra.mrb[0].mxu0 %v8071
      %v8182 = vpop.f32.mrb[0].mxu0
      %v8183 = vadd.f32 0.0, %v8182
      %v8184 = vpop.f32.mrb[0].mxu0
      %v8185 = vpop.f32.mrb[0].mxu0
      %v8186 = vadd.f32 0.0, %v8185
      %v8187 = vpop.f32.mrb[0].mxu0
      %8188 = vmatprep.mubr.bf16.mxu0 0
      %8189 = vmatmul.mubr.bf16.gmra.mrb[0].mxu0 %v8074
      %v8190 = vpop.f32.mrb[0].mxu0
      %v8191 = vadd.f32 0.0, %v8190
      %v8192 = vpop.f32.mrb[0].mxu0
      %v8193 = vpop.f32.mrb[0].mxu0
      %v8194 = vadd.f32 0.0, %v8193
      %v8195 = vpop.f32.mrb[0].mxu0
      %8196 = vmatprep.mubr.bf16.mxu0 0
      %8197 = vmatmul.mubr.bf16.gmra.mrb[0].mxu0 %v8077
      %v8198 = vpop.f32.mrb[0].mxu0
      %v8199 = vadd.f32 0.0, %v8198
      %v8200 = vpop.f32.mrb[0].mxu0
      %v8201 = vpop.f32.mrb[0].mxu0
      %v8202 = vadd.f32 0.0, %v8201
      %v8203 = vpop.f32.mrb[0].mxu0
      %8204 = vmatprep.mubr.bf16.mxu0 0
      %8205 = vmatmul.mubr.bf16.gmra.mrb[0].mxu0 %v8080
      %v8206 = vpop.f32.mrb[0].mxu0
      %v8207 = vadd.f32 0.0, %v8206
      %v8208 = vpop.f32.mrb[0].mxu0
      %v8209 = vpop.f32.mrb[0].mxu0
      %v8210 = vadd.f32 0.0, %v8209
      %v8211 = vpop.f32.mrb[0].mxu0
      %8212 = vmatprep.mubr.bf16.mxu0 0
      %8213 = vmatmul.mubr.bf16.gmra.mrb[0].mxu0 %v8083
      %v8214 = vpop.f32.mrb[0].mxu0
      %v8215 = vadd.f32 0.0, %v8214
      %v8216 = vpop.f32.mrb[0].mxu0
      %v8217 = vpop.f32.mrb[0].mxu0
      %v8218 = vadd.f32 0.0, %v8217
      %v8219 = vpop.f32.mrb[0].mxu0
      %8220 = vmatprep.mubr.bf16.mxu0 0
      %8221 = vmatmul.mubr.bf16.gmra.mrb[0].mxu0 %v8086
      %v8222 = vpop.f32.mrb[0].mxu0
      %v8223 = vadd.f32 0.0, %v8222
      %v8224 = vpop.f32.mrb[0].mxu0
      %v8225 = vpop.f32.mrb[0].mxu0
      %v8226 = vadd.f32 0.0, %v8225
      %v8227 = vpop.f32.mrb[0].mxu0
      %8228 = vmatprep.mubr.bf16.mxu0 0
      %8229 = vmatmul.mubr.bf16.gmra.mrb[0].mxu0 %v8089
      %v8230 = vpop.f32.mrb[0].mxu0
      %v8231 = vadd.f32 0.0, %v8230
      %v8232 = vpop.f32.mrb[0].mxu0
      %v8233 = vpop.f32.mrb[0].mxu0
      %v8234 = vadd.f32 0.0, %v8233
      %v8235 = vpop.f32.mrb[0].mxu0
      %8236 = vmatprep.mubr.bf16.mxu0 0
      %8237 = vmatmul.mubr.bf16.gmra.mrb[0].mxu0 %v8092
      %v8238 = vpop.f32.mrb[0].mxu0
      %v8239 = vadd.f32 0.0, %v8238
      %v8240 = vpop.f32.mrb[0].mxu0
      %v8241 = vpop.f32.mrb[0].mxu0
      %v8242 = vadd.f32 0.0, %v8241
      %v8243 = vpop.f32.mrb[0].mxu0
      %8244 = vmatprep.mubr.bf16.mxu0 0
      %8245 = vmatmul.mubr.bf16.gmra.mrb[0].mxu0 %v8095
      %v8246 = vpop.f32.mrb[0].mxu0
      %v8247 = vadd.f32 0.0, %v8246
      %v8248 = vpop.f32.mrb[0].mxu0
      %v8249 = vpop.f32.mrb[0].mxu0
      %v8250 = vadd.f32 0.0, %v8249
      %v8251 = vpop.f32.mrb[0].mxu0
      %8252 = vmatprep.mubr.bf16.mxu0 0
      %8253 = vmatmul.mubr.bf16.gmra.mrb[0].mxu0 %v8098
      %v8254 = vpop.f32.mrb[0].mxu0
      %v8255 = vadd.f32 0.0, %v8254
      %v8256 = vpop.f32.mrb[0].mxu0
      %v8257 = vpop.f32.mrb[0].mxu0
      %v8258 = vadd.f32 0.0, %v8257
      %v8259 = vpop.f32.mrb[0].mxu0
      %8260 = vdwg.mxu0
      %8261 = vst.msk [vmem:[%s352 + $0xb00] sm:$0xff] %vm4377, %v8135
      %8262 = vst.msk [vmem:[%s352 + $0xb08] sm:$0xff] %vm4377, %v8138
      %8263 = vst.msk [vmem:[%s352 + $0xb10] sm:$0xff] %vm4377, %v8143
      %8264 = vst.msk [vmem:[%s352 + $0xb18] sm:$0xff] %vm4377, %v8146
      %8265 = vst.msk [vmem:[%s352 + $0xb20] sm:$0xff] %vm4377, %v8151
      %8266 = vst.msk [vmem:[%s352 + $0xb28] sm:$0xff] %vm4377, %v8154
      %8267 = vst.msk [vmem:[%s352 + $0xb30] sm:$0xff] %vm4377, %v8159
      %8268 = vst.msk [vmem:[%s352 + $0xb38] sm:$0xff] %vm4377, %v8162
      %8269 = vst.msk [vmem:[%s352 + $0xb40] sm:$0xff] %vm4377, %v8167
      %8270 = vst.msk [vmem:[%s352 + $0xb48] sm:$0xff] %vm4377, %v8170
      %8271 = vst.msk [vmem:[%s352 + $0xb50] sm:$0xff] %vm4377, %v8175
      %8272 = vst.msk [vmem:[%s352 + $0xb58] sm:$0xff] %vm4377, %v8178
      %8273 = vst.msk [vmem:[%s352 + $0xb60] sm:$0xff] %vm4377, %v8183
      %8274 = vst.msk [vmem:[%s352 + $0xb68] sm:$0xff] %vm4377, %v8186
      %8275 = vst.msk [vmem:[%s352 + $0xb70] sm:$0xff] %vm4377, %v8191
      %8276 = vst.msk [vmem:[%s352 + $0xb78] sm:$0xff] %vm4377, %v8194
      %8277 = vst.msk [vmem:[%s352 + $0xb80] sm:$0xff] %vm4377, %v8199
      %8278 = vst.msk [vmem:[%s352 + $0xb88] sm:$0xff] %vm4377, %v8202
      %8279 = vst.msk [vmem:[%s352 + $0xb90] sm:$0xff] %vm4377, %v8207
      %8280 = vst.msk [vmem:[%s352 + $0xb98] sm:$0xff] %vm4377, %v8210
      %8281 = vst.msk [vmem:[%s352 + $0xba0] sm:$0xff] %vm4377, %v8215
      %8282 = vst.msk [vmem:[%s352 + $0xba8] sm:$0xff] %vm4377, %v8218
      %8283 = vst.msk [vmem:[%s352 + $0xbb0] sm:$0xff] %vm4377, %v8223
      %8284 = vst.msk [vmem:[%s352 + $0xbb8] sm:$0xff] %vm4377, %v8226
      %8285 = vst.msk [vmem:[%s352 + $0xbc0] sm:$0xff] %vm4377, %v8231
      %8286 = vst.msk [vmem:[%s352 + $0xbc8] sm:$0xff] %vm4377, %v8234
      %8287 = vst.msk [vmem:[%s352 + $0xbd0] sm:$0xff] %vm4377, %v8239
      %8288 = vst.msk [vmem:[%s352 + $0xbd8] sm:$0xff] %vm4377, %v8242
      %8289 = vst.msk [vmem:[%s352 + $0xbe0] sm:$0xff] %vm4377, %v8247
      %8290 = vst.msk [vmem:[%s352 + $0xbe8] sm:$0xff] %vm4377, %v8250
      %8291 = vst.msk [vmem:[%s352 + $0xbf0] sm:$0xff] %vm4377, %v8255
      %8292 = vst.msk [vmem:[%s352 + $0xbf8] sm:$0xff] %vm4377, %v8258
      %v8293 = vld [vmem:[%s8 + $0x600] sm:$0xf]
      %v8294 = vld [vmem:[%s8 + $0x604] sm:$0xf]
      %v8295 = vld [vmem:[%s8 + $0x608] sm:$0xf]
      %v8296 = vld [vmem:[%s8 + $0x60c] sm:$0xf]
      %v8297 = vld [vmem:[%s8 + $0x610] sm:$0xf]
      %v8298 = vld [vmem:[%s8 + $0x614] sm:$0xf]
      %v8299 = vld [vmem:[%s8 + $0x618] sm:$0xf]
      %v8300 = vld [vmem:[%s8 + $0x61c] sm:$0xf]
      %v8301 = vld [vmem:[%s8 + $0x620] sm:$0xf]
      %v8302 = vld [vmem:[%s8 + $0x624] sm:$0xf]
      %v8303 = vld [vmem:[%s8 + $0x628] sm:$0xf]
      %v8304 = vld [vmem:[%s8 + $0x62c] sm:$0xf]
      %v8305 = vld [vmem:[%s8 + $0x630] sm:$0xf]
      %v8306 = vld [vmem:[%s8 + $0x634] sm:$0xf]
      %v8307 = vld [vmem:[%s8 + $0x638] sm:$0xf]
      %v8308 = vld [vmem:[%s8 + $0x63c] sm:$0xf]
      %v8309 = vld [vmem:[%s8 + $0x640] sm:$0xf]
      %v8310 = vld [vmem:[%s8 + $0x644] sm:$0xf]
      %v8311 = vld [vmem:[%s8 + $0x648] sm:$0xf]
      %v8312 = vld [vmem:[%s8 + $0x64c] sm:$0xf]
      %v8313 = vld [vmem:[%s8 + $0x650] sm:$0xf]
      %v8314 = vld [vmem:[%s8 + $0x654] sm:$0xf]
      %v8315 = vld [vmem:[%s8 + $0x658] sm:$0xf]
      %v8316 = vld [vmem:[%s8 + $0x65c] sm:$0xf]
      %v8317 = vld [vmem:[%s8 + $0x660] sm:$0xf]
      %v8318 = vld [vmem:[%s8 + $0x664] sm:$0xf]
      %v8319 = vld [vmem:[%s8 + $0x668] sm:$0xf]
      %v8320 = vld [vmem:[%s8 + $0x66c] sm:$0xf]
      %v8321 = vld [vmem:[%s8 + $0x670] sm:$0xf]
      %v8322 = vld [vmem:[%s8 + $0x674] sm:$0xf]
      %v8323 = vld [vmem:[%s8 + $0x678] sm:$0xf]
      %v8324 = vld [vmem:[%s8 + $0x67c] sm:$0xf]
      %v8357 = vunpack.c.l.b16 %v8293
      %v8358 = vunpack.c.l.b16 %v8294
      %v8359 = vunpack.c.l.b16 %v8295
      %v8360 = vunpack.c.l.b16 %v8296
      %v8361 = vunpack.c.l.b16 %v8297
      %v8362 = vunpack.c.l.b16 %v8298
      %v8363 = vunpack.c.l.b16 %v8299
      %v8364 = vunpack.c.l.b16 %v8300
      %v8365 = vunpack.c.l.b16 %v8301
      %v8366 = vunpack.c.l.b16 %v8302
      %v8367 = vunpack.c.l.b16 %v8303
      %v8368 = vunpack.c.l.b16 %v8304
      %v8369 = vunpack.c.l.b16 %v8305
      %v8370 = vunpack.c.l.b16 %v8306
      %v8371 = vunpack.c.l.b16 %v8307
      %v8372 = vunpack.c.l.b16 %v8308
      %v8373 = vunpack.c.l.b16 %v8309
      %v8374 = vunpack.c.l.b16 %v8310
      %v8375 = vunpack.c.l.b16 %v8311
      %v8376 = vunpack.c.l.b16 %v8312
      %v8377 = vunpack.c.l.b16 %v8313
      %v8378 = vunpack.c.l.b16 %v8314
      %v8379 = vunpack.c.l.b16 %v8315
      %v8380 = vunpack.c.l.b16 %v8316
      %v8381 = vunpack.c.l.b16 %v8317
      %v8382 = vunpack.c.l.b16 %v8318
      %v8383 = vunpack.c.l.b16 %v8319
      %v8384 = vunpack.c.l.b16 %v8320
      %v8385 = vunpack.c.l.b16 %v8321
      %v8386 = vunpack.c.l.b16 %v8322
      %v8387 = vunpack.c.l.b16 %v8323
      %v8388 = vunpack.c.l.b16 %v8324
      %v8389 = vpack.c.b16 %v8358, %v8357
      %v8390 = vpack.c.b16 %v8360, %v8359
      %v8391 = vpack.c.b16 %v8362, %v8361
      %v8392 = vpack.c.b16 %v8364, %v8363
      %v8393 = vpack.c.b16 %v8366, %v8365
      %v8394 = vpack.c.b16 %v8368, %v8367
      %v8395 = vpack.c.b16 %v8370, %v8369
      %v8396 = vpack.c.b16 %v8372, %v8371
      %v8397 = vpack.c.b16 %v8374, %v8373
      %v8398 = vpack.c.b16 %v8376, %v8375
      %v8399 = vpack.c.b16 %v8378, %v8377
      %v8400 = vpack.c.b16 %v8380, %v8379
      %v8401 = vpack.c.b16 %v8382, %v8381
      %v8402 = vpack.c.b16 %v8384, %v8383
      %v8403 = vpack.c.b16 %v8386, %v8385
      %v8404 = vpack.c.b16 %v8388, %v8387
      %v8406 = vsel %vm4149, %v8389, 0
      %v8409 = vsel %vm4149, %v8390, 0
      %v8412 = vsel %vm4149, %v8391, 0
      %v8415 = vsel %vm4149, %v8392, 0
      %v8418 = vsel %vm4149, %v8393, 0
      %v8421 = vsel %vm4149, %v8394, 0
      %v8424 = vsel %vm4149, %v8395, 0
      %v8427 = vsel %vm4149, %v8396, 0
      %v8430 = vsel %vm4149, %v8397, 0
      %v8433 = vsel %vm4149, %v8398, 0
      %v8436 = vsel %vm4149, %v8399, 0
      %v8439 = vsel %vm4149, %v8400, 0
      %v8442 = vsel %vm4149, %v8401, 0
      %v8445 = vsel %vm4149, %v8402, 0
      %v8448 = vsel %vm4149, %v8403, 0
      %v8451 = vsel %vm4149, %v8404, 0
      %8453 = vmatprep.subr.bf16.mxu0 0
      %8454 = vmatpush1.bf16.xpose.msra.mxu0 %v4199
      %8455 = vmatprep.subr.bf16.mxu0 0
      %8456 = vmatpush1.bf16.xpose.msra.mxu0 %v4202
      %8457 = vmatprep.subr.bf16.mxu0 0
      %8458 = vmatpush1.bf16.xpose.msra.mxu0 %v4205
      %8459 = vmatprep.subr.bf16.mxu0 0
      %8460 = vmatpush1.bf16.xpose.msra.mxu0 %v4208
      %8461 = vmatprep.subr.bf16.mxu0 0
      %8462 = vmatpush1.bf16.xpose.msra.mxu0 %v4211
      %8463 = vmatprep.subr.bf16.mxu0 0
      %8464 = vmatpush1.bf16.xpose.msra.mxu0 %v4214
      %8465 = vmatprep.subr.bf16.mxu0 0
      %8466 = vmatpush1.bf16.xpose.msra.mxu0 0
      %8467 = vmatprep.subr.bf16.mxu0 0
      %8468 = vmatpush1.bf16.xpose.msra.mxu0 0
      %8469 = vmatprep.subr.bf16.mxu0 0
      %8470 = vmatpush1.bf16.xpose.msra.mxu0 0
      %8471 = vmatprep.subr.bf16.mxu0 0
      %8472 = vmatpush1.bf16.xpose.msra.mxu0 0
      %8473 = vmatprep.subr.bf16.mxu0 0
      %8474 = vmatpush1.bf16.xpose.msra.mxu0 0
      %8475 = vmatprep.subr.bf16.mxu0 0
      %8476 = vmatpush1.bf16.xpose.msra.mxu0 0
      %8477 = vmatprep.subr.bf16.mxu0 0
      %8478 = vmatpush1.bf16.xpose.msra.mxu0 0
      %8479 = vmatprep.subr.bf16.mxu0 0
      %8480 = vmatpush1.bf16.xpose.msra.mxu0 0
      %8481 = vmatprep.subr.bf16.mxu0 0
      %8482 = vmatpush1.bf16.xpose.msra.mxu0 0
      %8483 = vmatprep.subr.bf16.mxu0 0
      %8484 = vmatpush1.bf16.xpose.msra.mxu0 0
      %8485 = vmatprep.mubr.bf16.mxu0 0
      %8486 = vmatmul.mubr.bf16.gmra.mrb[0].mxu0 %v8406
      %v8487 = vpop.f32.mrb[0].mxu0
      %v8488 = vadd.f32 0.0, %v8487
      %v8489 = vpop.f32.mrb[0].mxu0
      %v8490 = vpop.f32.mrb[0].mxu0
      %v8491 = vadd.f32 0.0, %v8490
      %v8492 = vpop.f32.mrb[0].mxu0
      %8493 = vmatprep.mubr.bf16.mxu0 0
      %8494 = vmatmul.mubr.bf16.gmra.mrb[0].mxu0 %v8409
      %v8495 = vpop.f32.mrb[0].mxu0
      %v8496 = vadd.f32 0.0, %v8495
      %v8497 = vpop.f32.mrb[0].mxu0
      %v8498 = vpop.f32.mrb[0].mxu0
      %v8499 = vadd.f32 0.0, %v8498
      %v8500 = vpop.f32.mrb[0].mxu0
      %8501 = vmatprep.mubr.bf16.mxu0 0
      %8502 = vmatmul.mubr.bf16.gmra.mrb[0].mxu0 %v8412
      %v8503 = vpop.f32.mrb[0].mxu0
      %v8504 = vadd.f32 0.0, %v8503
      %v8505 = vpop.f32.mrb[0].mxu0
      %v8506 = vpop.f32.mrb[0].mxu0
      %v8507 = vadd.f32 0.0, %v8506
      %v8508 = vpop.f32.mrb[0].mxu0
      %8509 = vmatprep.mubr.bf16.mxu0 0
      %8510 = vmatmul.mubr.bf16.gmra.mrb[0].mxu0 %v8415
      %v8511 = vpop.f32.mrb[0].mxu0
      %v8512 = vadd.f32 0.0, %v8511
      %v8513 = vpop.f32.mrb[0].mxu0
      %v8514 = vpop.f32.mrb[0].mxu0
      %v8515 = vadd.f32 0.0, %v8514
      %v8516 = vpop.f32.mrb[0].mxu0
      %8517 = vmatprep.mubr.bf16.mxu0 0
      %8518 = vmatmul.mubr.bf16.gmra.mrb[0].mxu0 %v8418
      %v8519 = vpop.f32.mrb[0].mxu0
      %v8520 = vadd.f32 0.0, %v8519
      %v8521 = vpop.f32.mrb[0].mxu0
      %v8522 = vpop.f32.mrb[0].mxu0
      %v8523 = vadd.f32 0.0, %v8522
      %v8524 = vpop.f32.mrb[0].mxu0
      %8525 = vmatprep.mubr.bf16.mxu0 0
      %8526 = vmatmul.mubr.bf16.gmra.mrb[0].mxu0 %v8421
      %v8527 = vpop.f32.mrb[0].mxu0
      %v8528 = vadd.f32 0.0, %v8527
      %v8529 = vpop.f32.mrb[0].mxu0
      %v8530 = vpop.f32.mrb[0].mxu0
      %v8531 = vadd.f32 0.0, %v8530
      %v8532 = vpop.f32.mrb[0].mxu0
      %8533 = vmatprep.mubr.bf16.mxu0 0
      %8534 = vmatmul.mubr.bf16.gmra.mrb[0].mxu0 %v8424
      %v8535 = vpop.f32.mrb[0].mxu0
      %v8536 = vadd.f32 0.0, %v8535
      %v8537 = vpop.f32.mrb[0].mxu0
      %v8538 = vpop.f32.mrb[0].mxu0
      %v8539 = vadd.f32 0.0, %v8538
      %v8540 = vpop.f32.mrb[0].mxu0
      %8541 = vmatprep.mubr.bf16.mxu0 0
      %8542 = vmatmul.mubr.bf16.gmra.mrb[0].mxu0 %v8427
      %v8543 = vpop.f32.mrb[0].mxu0
      %v8544 = vadd.f32 0.0, %v8543
      %v8545 = vpop.f32.mrb[0].mxu0
      %v8546 = vpop.f32.mrb[0].mxu0
      %v8547 = vadd.f32 0.0, %v8546
      %v8548 = vpop.f32.mrb[0].mxu0
      %8549 = vmatprep.mubr.bf16.mxu0 0
      %8550 = vmatmul.mubr.bf16.gmra.mrb[0].mxu0 %v8430
      %v8551 = vpop.f32.mrb[0].mxu0
      %v8552 = vadd.f32 0.0, %v8551
      %v8553 = vpop.f32.mrb[0].mxu0
      %v8554 = vpop.f32.mrb[0].mxu0
      %v8555 = vadd.f32 0.0, %v8554
      %v8556 = vpop.f32.mrb[0].mxu0
      %8557 = vmatprep.mubr.bf16.mxu0 0
      %8558 = vmatmul.mubr.bf16.gmra.mrb[0].mxu0 %v8433
      %v8559 = vpop.f32.mrb[0].mxu0
      %v8560 = vadd.f32 0.0, %v8559
      %v8561 = vpop.f32.mrb[0].mxu0
      %v8562 = vpop.f32.mrb[0].mxu0
      %v8563 = vadd.f32 0.0, %v8562
      %v8564 = vpop.f32.mrb[0].mxu0
      %8565 = vmatprep.mubr.bf16.mxu0 0
      %8566 = vmatmul.mubr.bf16.gmra.mrb[0].mxu0 %v8436
      %v8567 = vpop.f32.mrb[0].mxu0
      %v8568 = vadd.f32 0.0, %v8567
      %v8569 = vpop.f32.mrb[0].mxu0
      %v8570 = vpop.f32.mrb[0].mxu0
      %v8571 = vadd.f32 0.0, %v8570
      %v8572 = vpop.f32.mrb[0].mxu0
      %8573 = vmatprep.mubr.bf16.mxu0 0
      %8574 = vmatmul.mubr.bf16.gmra.mrb[0].mxu0 %v8439
      %v8575 = vpop.f32.mrb[0].mxu0
      %v8576 = vadd.f32 0.0, %v8575
      %v8577 = vpop.f32.mrb[0].mxu0
      %v8578 = vpop.f32.mrb[0].mxu0
      %v8579 = vadd.f32 0.0, %v8578
      %v8580 = vpop.f32.mrb[0].mxu0
      %8581 = vmatprep.mubr.bf16.mxu0 0
      %8582 = vmatmul.mubr.bf16.gmra.mrb[0].mxu0 %v8442
      %v8583 = vpop.f32.mrb[0].mxu0
      %v8584 = vadd.f32 0.0, %v8583
      %v8585 = vpop.f32.mrb[0].mxu0
      %v8586 = vpop.f32.mrb[0].mxu0
      %v8587 = vadd.f32 0.0, %v8586
      %v8588 = vpop.f32.mrb[0].mxu0
      %8589 = vmatprep.mubr.bf16.mxu0 0
      %8590 = vmatmul.mubr.bf16.gmra.mrb[0].mxu0 %v8445
      %v8591 = vpop.f32.mrb[0].mxu0
      %v8592 = vadd.f32 0.0, %v8591
      %v8593 = vpop.f32.mrb[0].mxu0
      %v8594 = vpop.f32.mrb[0].mxu0
      %v8595 = vadd.f32 0.0, %v8594
      %v8596 = vpop.f32.mrb[0].mxu0
      %8597 = vmatprep.mubr.bf16.mxu0 0
      %8598 = vmatmul.mubr.bf16.gmra.mrb[0].mxu0 %v8448
      %v8599 = vpop.f32.mrb[0].mxu0
      %v8600 = vadd.f32 0.0, %v8599
      %v8601 = vpop.f32.mrb[0].mxu0
      %v8602 = vpop.f32.mrb[0].mxu0
      %v8603 = vadd.f32 0.0, %v8602
      %v8604 = vpop.f32.mrb[0].mxu0
      %8605 = vmatprep.mubr.bf16.mxu0 0
      %8606 = vmatmul.mubr.bf16.gmra.mrb[0].mxu0 %v8451
      %v8607 = vpop.f32.mrb[0].mxu0
      %v8608 = vadd.f32 0.0, %v8607
      %v8609 = vpop.f32.mrb[0].mxu0
      %v8610 = vpop.f32.mrb[0].mxu0
      %v8611 = vadd.f32 0.0, %v8610
      %v8612 = vpop.f32.mrb[0].mxu0
      %8613 = vdwg.mxu0
      %8614 = vst.msk [vmem:[%s352 + $0xc00] sm:$0xff] %vm4377, %v8488
      %8615 = vst.msk [vmem:[%s352 + $0xc08] sm:$0xff] %vm4377, %v8491
      %8616 = vst.msk [vmem:[%s352 + $0xc10] sm:$0xff] %vm4377, %v8496
      %8617 = vst.msk [vmem:[%s352 + $0xc18] sm:$0xff] %vm4377, %v8499
      %8618 = vst.msk [vmem:[%s352 + $0xc20] sm:$0xff] %vm4377, %v8504
      %8619 = vst.msk [vmem:[%s352 + $0xc28] sm:$0xff] %vm4377, %v8507
      %8620 = vst.msk [vmem:[%s352 + $0xc30] sm:$0xff] %vm4377, %v8512
      %8621 = vst.msk [vmem:[%s352 + $0xc38] sm:$0xff] %vm4377, %v8515
      %8622 = vst.msk [vmem:[%s352 + $0xc40] sm:$0xff] %vm4377, %v8520
      %8623 = vst.msk [vmem:[%s352 + $0xc48] sm:$0xff] %vm4377, %v8523
      %8624 = vst.msk [vmem:[%s352 + $0xc50] sm:$0xff] %vm4377, %v8528
      %8625 = vst.msk [vmem:[%s352 + $0xc58] sm:$0xff] %vm4377, %v8531
      %8626 = vst.msk [vmem:[%s352 + $0xc60] sm:$0xff] %vm4377, %v8536
      %8627 = vst.msk [vmem:[%s352 + $0xc68] sm:$0xff] %vm4377, %v8539
      %8628 = vst.msk [vmem:[%s352 + $0xc70] sm:$0xff] %vm4377, %v8544
      %8629 = vst.msk [vmem:[%s352 + $0xc78] sm:$0xff] %vm4377, %v8547
      %8630 = vst.msk [vmem:[%s352 + $0xc80] sm:$0xff] %vm4377, %v8552
      %8631 = vst.msk [vmem:[%s352 + $0xc88] sm:$0xff] %vm4377, %v8555
      %8632 = vst.msk [vmem:[%s352 + $0xc90] sm:$0xff] %vm4377, %v8560
      %8633 = vst.msk [vmem:[%s352 + $0xc98] sm:$0xff] %vm4377, %v8563
      %8634 = vst.msk [vmem:[%s352 + $0xca0] sm:$0xff] %vm4377, %v8568
      %8635 = vst.msk [vmem:[%s352 + $0xca8] sm:$0xff] %vm4377, %v8571
      %8636 = vst.msk [vmem:[%s352 + $0xcb0] sm:$0xff] %vm4377, %v8576
      %8637 = vst.msk [vmem:[%s352 + $0xcb8] sm:$0xff] %vm4377, %v8579
      %8638 = vst.msk [vmem:[%s352 + $0xcc0] sm:$0xff] %vm4377, %v8584
      %8639 = vst.msk [vmem:[%s352 + $0xcc8] sm:$0xff] %vm4377, %v8587
      %8640 = vst.msk [vmem:[%s352 + $0xcd0] sm:$0xff] %vm4377, %v8592
      %8641 = vst.msk [vmem:[%s352 + $0xcd8] sm:$0xff] %vm4377, %v8595
      %8642 = vst.msk [vmem:[%s352 + $0xce0] sm:$0xff] %vm4377, %v8600
      %8643 = vst.msk [vmem:[%s352 + $0xce8] sm:$0xff] %vm4377, %v8603
      %8644 = vst.msk [vmem:[%s352 + $0xcf0] sm:$0xff] %vm4377, %v8608
      %8645 = vst.msk [vmem:[%s352 + $0xcf8] sm:$0xff] %vm4377, %v8611
      %v8646 = vld [vmem:[%s8 + $0x680] sm:$0xf]
      %v8647 = vld [vmem:[%s8 + $0x684] sm:$0xf]
      %v8648 = vld [vmem:[%s8 + $0x688] sm:$0xf]
      %v8649 = vld [vmem:[%s8 + $0x68c] sm:$0xf]
      %v8650 = vld [vmem:[%s8 + $0x690] sm:$0xf]
      %v8651 = vld [vmem:[%s8 + $0x694] sm:$0xf]
      %v8652 = vld [vmem:[%s8 + $0x698] sm:$0xf]
      %v8653 = vld [vmem:[%s8 + $0x69c] sm:$0xf]
      %v8654 = vld [vmem:[%s8 + $0x6a0] sm:$0xf]
      %v8655 = vld [vmem:[%s8 + $0x6a4] sm:$0xf]
      %v8656 = vld [vmem:[%s8 + $0x6a8] sm:$0xf]
      %v8657 = vld [vmem:[%s8 + $0x6ac] sm:$0xf]
      %v8658 = vld [vmem:[%s8 + $0x6b0] sm:$0xf]
      %v8659 = vld [vmem:[%s8 + $0x6b4] sm:$0xf]
      %v8660 = vld [vmem:[%s8 + $0x6b8] sm:$0xf]
      %v8661 = vld [vmem:[%s8 + $0x6bc] sm:$0xf]
      %v8662 = vld [vmem:[%s8 + $0x6c0] sm:$0xf]
      %v8663 = vld [vmem:[%s8 + $0x6c4] sm:$0xf]
      %v8664 = vld [vmem:[%s8 + $0x6c8] sm:$0xf]
      %v8665 = vld [vmem:[%s8 + $0x6cc] sm:$0xf]
      %v8666 = vld [vmem:[%s8 + $0x6d0] sm:$0xf]
      %v8667 = vld [vmem:[%s8 + $0x6d4] sm:$0xf]
      %v8668 = vld [vmem:[%s8 + $0x6d8] sm:$0xf]
      %v8669 = vld [vmem:[%s8 + $0x6dc] sm:$0xf]
      %v8670 = vld [vmem:[%s8 + $0x6e0] sm:$0xf]
      %v8671 = vld [vmem:[%s8 + $0x6e4] sm:$0xf]
      %v8672 = vld [vmem:[%s8 + $0x6e8] sm:$0xf]
      %v8673 = vld [vmem:[%s8 + $0x6ec] sm:$0xf]
      %v8674 = vld [vmem:[%s8 + $0x6f0] sm:$0xf]
      %v8675 = vld [vmem:[%s8 + $0x6f4] sm:$0xf]
      %v8676 = vld [vmem:[%s8 + $0x6f8] sm:$0xf]
      %v8677 = vld [vmem:[%s8 + $0x6fc] sm:$0xf]
      %v8710 = vunpack.c.l.b16 %v8646
      %v8711 = vunpack.c.l.b16 %v8647
      %v8712 = vunpack.c.l.b16 %v8648
      %v8713 = vunpack.c.l.b16 %v8649
      %v8714 = vunpack.c.l.b16 %v8650
      %v8715 = vunpack.c.l.b16 %v8651
      %v8716 = vunpack.c.l.b16 %v8652
      %v8717 = vunpack.c.l.b16 %v8653
      %v8718 = vunpack.c.l.b16 %v8654
      %v8719 = vunpack.c.l.b16 %v8655
      %v8720 = vunpack.c.l.b16 %v8656
      %v8721 = vunpack.c.l.b16 %v8657
      %v8722 = vunpack.c.l.b16 %v8658
      %v8723 = vunpack.c.l.b16 %v8659
      %v8724 = vunpack.c.l.b16 %v8660
      %v8725 = vunpack.c.l.b16 %v8661
      %v8726 = vunpack.c.l.b16 %v8662
      %v8727 = vunpack.c.l.b16 %v8663
      %v8728 = vunpack.c.l.b16 %v8664
      %v8729 = vunpack.c.l.b16 %v8665
      %v8730 = vunpack.c.l.b16 %v8666
      %v8731 = vunpack.c.l.b16 %v8667
      %v8732 = vunpack.c.l.b16 %v8668
      %v8733 = vunpack.c.l.b16 %v8669
      %v8734 = vunpack.c.l.b16 %v8670
      %v8735 = vunpack.c.l.b16 %v8671
      %v8736 = vunpack.c.l.b16 %v8672
      %v8737 = vunpack.c.l.b16 %v8673
      %v8738 = vunpack.c.l.b16 %v8674
      %v8739 = vunpack.c.l.b16 %v8675
      %v8740 = vunpack.c.l.b16 %v8676
      %v8741 = vunpack.c.l.b16 %v8677
      %v8742 = vpack.c.b16 %v8711, %v8710
      %v8743 = vpack.c.b16 %v8713, %v8712
      %v8744 = vpack.c.b16 %v8715, %v8714
      %v8745 = vpack.c.b16 %v8717, %v8716
      %v8746 = vpack.c.b16 %v8719, %v8718
      %v8747 = vpack.c.b16 %v8721, %v8720
      %v8748 = vpack.c.b16 %v8723, %v8722
      %v8749 = vpack.c.b16 %v8725, %v8724
      %v8750 = vpack.c.b16 %v8727, %v8726
      %v8751 = vpack.c.b16 %v8729, %v8728
      %v8752 = vpack.c.b16 %v8731, %v8730
      %v8753 = vpack.c.b16 %v8733, %v8732
      %v8754 = vpack.c.b16 %v8735, %v8734
      %v8755 = vpack.c.b16 %v8737, %v8736
      %v8756 = vpack.c.b16 %v8739, %v8738
      %v8757 = vpack.c.b16 %v8741, %v8740
      %v8759 = vsel %vm4149, %v8742, 0
      %v8762 = vsel %vm4149, %v8743, 0
      %v8765 = vsel %vm4149, %v8744, 0
      %v8768 = vsel %vm4149, %v8745, 0
      %v8771 = vsel %vm4149, %v8746, 0
      %v8774 = vsel %vm4149, %v8747, 0
      %v8777 = vsel %vm4149, %v8748, 0
      %v8780 = vsel %vm4149, %v8749, 0
      %v8783 = vsel %vm4149, %v8750, 0
      %v8786 = vsel %vm4149, %v8751, 0
      %v8789 = vsel %vm4149, %v8752, 0
      %v8792 = vsel %vm4149, %v8753, 0
      %v8795 = vsel %vm4149, %v8754, 0
      %v8798 = vsel %vm4149, %v8755, 0
      %v8801 = vsel %vm4149, %v8756, 0
      %v8804 = vsel %vm4149, %v8757, 0
      %8806 = vmatprep.subr.bf16.mxu0 0
      %8807 = vmatpush1.bf16.xpose.msra.mxu0 %v4199
      %8808 = vmatprep.subr.bf16.mxu0 0
      %8809 = vmatpush1.bf16.xpose.msra.mxu0 %v4202
      %8810 = vmatprep.subr.bf16.mxu0 0
      %8811 = vmatpush1.bf16.xpose.msra.mxu0 %v4205
      %8812 = vmatprep.subr.bf16.mxu0 0
      %8813 = vmatpush1.bf16.xpose.msra.mxu0 %v4208
      %8814 = vmatprep.subr.bf16.mxu0 0
      %8815 = vmatpush1.bf16.xpose.msra.mxu0 %v4211
      %8816 = vmatprep.subr.bf16.mxu0 0
      %8817 = vmatpush1.bf16.xpose.msra.mxu0 %v4214
      %8818 = vmatprep.subr.bf16.mxu0 0
      %8819 = vmatpush1.bf16.xpose.msra.mxu0 0
      %8820 = vmatprep.subr.bf16.mxu0 0
      %8821 = vmatpush1.bf16.xpose.msra.mxu0 0
      %8822 = vmatprep.subr.bf16.mxu0 0
      %8823 = vmatpush1.bf16.xpose.msra.mxu0 0
      %8824 = vmatprep.subr.bf16.mxu0 0
      %8825 = vmatpush1.bf16.xpose.msra.mxu0 0
      %8826 = vmatprep.subr.bf16.mxu0 0
      %8827 = vmatpush1.bf16.xpose.msra.mxu0 0
      %8828 = vmatprep.subr.bf16.mxu0 0
      %8829 = vmatpush1.bf16.xpose.msra.mxu0 0
      %8830 = vmatprep.subr.bf16.mxu0 0
      %8831 = vmatpush1.bf16.xpose.msra.mxu0 0
      %8832 = vmatprep.subr.bf16.mxu0 0
      %8833 = vmatpush1.bf16.xpose.msra.mxu0 0
      %8834 = vmatprep.subr.bf16.mxu0 0
      %8835 = vmatpush1.bf16.xpose.msra.mxu0 0
      %8836 = vmatprep.subr.bf16.mxu0 0
      %8837 = vmatpush1.bf16.xpose.msra.mxu0 0
      %8838 = vmatprep.mubr.bf16.mxu0 0
      %8839 = vmatmul.mubr.bf16.gmra.mrb[0].mxu0 %v8759
      %v8840 = vpop.f32.mrb[0].mxu0
      %v8841 = vadd.f32 0.0, %v8840
      %v8842 = vpop.f32.mrb[0].mxu0
      %v8843 = vpop.f32.mrb[0].mxu0
      %v8844 = vadd.f32 0.0, %v8843
      %v8845 = vpop.f32.mrb[0].mxu0
      %8846 = vmatprep.mubr.bf16.mxu0 0
      %8847 = vmatmul.mubr.bf16.gmra.mrb[0].mxu0 %v8762
      %v8848 = vpop.f32.mrb[0].mxu0
      %v8849 = vadd.f32 0.0, %v8848
      %v8850 = vpop.f32.mrb[0].mxu0
      %v8851 = vpop.f32.mrb[0].mxu0
      %v8852 = vadd.f32 0.0, %v8851
      %v8853 = vpop.f32.mrb[0].mxu0
      %8854 = vmatprep.mubr.bf16.mxu0 0
      %8855 = vmatmul.mubr.bf16.gmra.mrb[0].mxu0 %v8765
      %v8856 = vpop.f32.mrb[0].mxu0
      %v8857 = vadd.f32 0.0, %v8856
      %v8858 = vpop.f32.mrb[0].mxu0
      %v8859 = vpop.f32.mrb[0].mxu0
      %v8860 = vadd.f32 0.0, %v8859
      %v8861 = vpop.f32.mrb[0].mxu0
      %8862 = vmatprep.mubr.bf16.mxu0 0
      %8863 = vmatmul.mubr.bf16.gmra.mrb[0].mxu0 %v8768
      %v8864 = vpop.f32.mrb[0].mxu0
      %v8865 = vadd.f32 0.0, %v8864
      %v8866 = vpop.f32.mrb[0].mxu0
      %v8867 = vpop.f32.mrb[0].mxu0
      %v8868 = vadd.f32 0.0, %v8867
      %v8869 = vpop.f32.mrb[0].mxu0
      %8870 = vmatprep.mubr.bf16.mxu0 0
      %8871 = vmatmul.mubr.bf16.gmra.mrb[0].mxu0 %v8771
      %v8872 = vpop.f32.mrb[0].mxu0
      %v8873 = vadd.f32 0.0, %v8872
      %v8874 = vpop.f32.mrb[0].mxu0
      %v8875 = vpop.f32.mrb[0].mxu0
      %v8876 = vadd.f32 0.0, %v8875
      %v8877 = vpop.f32.mrb[0].mxu0
      %8878 = vmatprep.mubr.bf16.mxu0 0
      %8879 = vmatmul.mubr.bf16.gmra.mrb[0].mxu0 %v8774
      %v8880 = vpop.f32.mrb[0].mxu0
      %v8881 = vadd.f32 0.0, %v8880
      %v8882 = vpop.f32.mrb[0].mxu0
      %v8883 = vpop.f32.mrb[0].mxu0
      %v8884 = vadd.f32 0.0, %v8883
      %v8885 = vpop.f32.mrb[0].mxu0
      %8886 = vmatprep.mubr.bf16.mxu0 0
      %8887 = vmatmul.mubr.bf16.gmra.mrb[0].mxu0 %v8777
      %v8888 = vpop.f32.mrb[0].mxu0
      %v8889 = vadd.f32 0.0, %v8888
      %v8890 = vpop.f32.mrb[0].mxu0
      %v8891 = vpop.f32.mrb[0].mxu0
      %v8892 = vadd.f32 0.0, %v8891
      %v8893 = vpop.f32.mrb[0].mxu0
      %8894 = vmatprep.mubr.bf16.mxu0 0
      %8895 = vmatmul.mubr.bf16.gmra.mrb[0].mxu0 %v8780
      %v8896 = vpop.f32.mrb[0].mxu0
      %v8897 = vadd.f32 0.0, %v8896
      %v8898 = vpop.f32.mrb[0].mxu0
      %v8899 = vpop.f32.mrb[0].mxu0
      %v8900 = vadd.f32 0.0, %v8899
      %v8901 = vpop.f32.mrb[0].mxu0
      %8902 = vmatprep.mubr.bf16.mxu0 0
      %8903 = vmatmul.mubr.bf16.gmra.mrb[0].mxu0 %v8783
      %v8904 = vpop.f32.mrb[0].mxu0
      %v8905 = vadd.f32 0.0, %v8904
      %v8906 = vpop.f32.mrb[0].mxu0
      %v8907 = vpop.f32.mrb[0].mxu0
      %v8908 = vadd.f32 0.0, %v8907
      %v8909 = vpop.f32.mrb[0].mxu0
      %8910 = vmatprep.mubr.bf16.mxu0 0
      %8911 = vmatmul.mubr.bf16.gmra.mrb[0].mxu0 %v8786
      %v8912 = vpop.f32.mrb[0].mxu0
      %v8913 = vadd.f32 0.0, %v8912
      %v8914 = vpop.f32.mrb[0].mxu0
      %v8915 = vpop.f32.mrb[0].mxu0
      %v8916 = vadd.f32 0.0, %v8915
      %v8917 = vpop.f32.mrb[0].mxu0
      %8918 = vmatprep.mubr.bf16.mxu0 0
      %8919 = vmatmul.mubr.bf16.gmra.mrb[0].mxu0 %v8789
      %v8920 = vpop.f32.mrb[0].mxu0
      %v8921 = vadd.f32 0.0, %v8920
      %v8922 = vpop.f32.mrb[0].mxu0
      %v8923 = vpop.f32.mrb[0].mxu0
      %v8924 = vadd.f32 0.0, %v8923
      %v8925 = vpop.f32.mrb[0].mxu0
      %8926 = vmatprep.mubr.bf16.mxu0 0
      %8927 = vmatmul.mubr.bf16.gmra.mrb[0].mxu0 %v8792
      %v8928 = vpop.f32.mrb[0].mxu0
      %v8929 = vadd.f32 0.0, %v8928
      %v8930 = vpop.f32.mrb[0].mxu0
      %v8931 = vpop.f32.mrb[0].mxu0
      %v8932 = vadd.f32 0.0, %v8931
      %v8933 = vpop.f32.mrb[0].mxu0
      %8934 = vmatprep.mubr.bf16.mxu0 0
      %8935 = vmatmul.mubr.bf16.gmra.mrb[0].mxu0 %v8795
      %v8936 = vpop.f32.mrb[0].mxu0
      %v8937 = vadd.f32 0.0, %v8936
      %v8938 = vpop.f32.mrb[0].mxu0
      %v8939 = vpop.f32.mrb[0].mxu0
      %v8940 = vadd.f32 0.0, %v8939
      %v8941 = vpop.f32.mrb[0].mxu0
      %8942 = vmatprep.mubr.bf16.mxu0 0
      %8943 = vmatmul.mubr.bf16.gmra.mrb[0].mxu0 %v8798
      %v8944 = vpop.f32.mrb[0].mxu0
      %v8945 = vadd.f32 0.0, %v8944
      %v8946 = vpop.f32.mrb[0].mxu0
      %v8947 = vpop.f32.mrb[0].mxu0
      %v8948 = vadd.f32 0.0, %v8947
      %v8949 = vpop.f32.mrb[0].mxu0
      %8950 = vmatprep.mubr.bf16.mxu0 0
      %8951 = vmatmul.mubr.bf16.gmra.mrb[0].mxu0 %v8801
      %v8952 = vpop.f32.mrb[0].mxu0
      %v8953 = vadd.f32 0.0, %v8952
      %v8954 = vpop.f32.mrb[0].mxu0
      %v8955 = vpop.f32.mrb[0].mxu0
      %v8956 = vadd.f32 0.0, %v8955
      %v8957 = vpop.f32.mrb[0].mxu0
      %8958 = vmatprep.mubr.bf16.mxu0 0
      %8959 = vmatmul.mubr.bf16.gmra.mrb[0].mxu0 %v8804
      %v8960 = vpop.f32.mrb[0].mxu0
      %v8961 = vadd.f32 0.0, %v8960
      %v8962 = vpop.f32.mrb[0].mxu0
      %v8963 = vpop.f32.mrb[0].mxu0
      %v8964 = vadd.f32 0.0, %v8963
      %v8965 = vpop.f32.mrb[0].mxu0
      %8966 = vdwg.mxu0
      %8967 = vst.msk [vmem:[%s352 + $0xd00] sm:$0xff] %vm4377, %v8841
      %8968 = vst.msk [vmem:[%s352 + $0xd08] sm:$0xff] %vm4377, %v8844
      %8969 = vst.msk [vmem:[%s352 + $0xd10] sm:$0xff] %vm4377, %v8849
      %8970 = vst.msk [vmem:[%s352 + $0xd18] sm:$0xff] %vm4377, %v8852
      %8971 = vst.msk [vmem:[%s352 + $0xd20] sm:$0xff] %vm4377, %v8857
      %8972 = vst.msk [vmem:[%s352 + $0xd28] sm:$0xff] %vm4377, %v8860
      %8973 = vst.msk [vmem:[%s352 + $0xd30] sm:$0xff] %vm4377, %v8865
      %8974 = vst.msk [vmem:[%s352 + $0xd38] sm:$0xff] %vm4377, %v8868
      %8975 = vst.msk [vmem:[%s352 + $0xd40] sm:$0xff] %vm4377, %v8873
      %8976 = vst.msk [vmem:[%s352 + $0xd48] sm:$0xff] %vm4377, %v8876
      %8977 = vst.msk [vmem:[%s352 + $0xd50] sm:$0xff] %vm4377, %v8881
      %8978 = vst.msk [vmem:[%s352 + $0xd58] sm:$0xff] %vm4377, %v8884
      %8979 = vst.msk [vmem:[%s352 + $0xd60] sm:$0xff] %vm4377, %v8889
      %8980 = vst.msk [vmem:[%s352 + $0xd68] sm:$0xff] %vm4377, %v8892
      %8981 = vst.msk [vmem:[%s352 + $0xd70] sm:$0xff] %vm4377, %v8897
      %8982 = vst.msk [vmem:[%s352 + $0xd78] sm:$0xff] %vm4377, %v8900
      %8983 = vst.msk [vmem:[%s352 + $0xd80] sm:$0xff] %vm4377, %v8905
      %8984 = vst.msk [vmem:[%s352 + $0xd88] sm:$0xff] %vm4377, %v8908
      %8985 = vst.msk [vmem:[%s352 + $0xd90] sm:$0xff] %vm4377, %v8913
      %8986 = vst.msk [vmem:[%s352 + $0xd98] sm:$0xff] %vm4377, %v8916
      %8987 = vst.msk [vmem:[%s352 + $0xda0] sm:$0xff] %vm4377, %v8921
      %8988 = vst.msk [vmem:[%s352 + $0xda8] sm:$0xff] %vm4377, %v8924
      %8989 = vst.msk [vmem:[%s352 + $0xdb0] sm:$0xff] %vm4377, %v8929
      %8990 = vst.msk [vmem:[%s352 + $0xdb8] sm:$0xff] %vm4377, %v8932
      %8991 = vst.msk [vmem:[%s352 + $0xdc0] sm:$0xff] %vm4377, %v8937
      %8992 = vst.msk [vmem:[%s352 + $0xdc8] sm:$0xff] %vm4377, %v8940
      %8993 = vst.msk [vmem:[%s352 + $0xdd0] sm:$0xff] %vm4377, %v8945
      %8994 = vst.msk [vmem:[%s352 + $0xdd8] sm:$0xff] %vm4377, %v8948
      %8995 = vst.msk [vmem:[%s352 + $0xde0] sm:$0xff] %vm4377, %v8953
      %8996 = vst.msk [vmem:[%s352 + $0xde8] sm:$0xff] %vm4377, %v8956
      %8997 = vst.msk [vmem:[%s352 + $0xdf0] sm:$0xff] %vm4377, %v8961
      %8998 = vst.msk [vmem:[%s352 + $0xdf8] sm:$0xff] %vm4377, %v8964
      %v8999 = vld [vmem:[%s8 + $0x700] sm:$0xf]
      %v9000 = vld [vmem:[%s8 + $0x704] sm:$0xf]
      %v9001 = vld [vmem:[%s8 + $0x708] sm:$0xf]
      %v9002 = vld [vmem:[%s8 + $0x70c] sm:$0xf]
      %v9003 = vld [vmem:[%s8 + $0x710] sm:$0xf]
      %v9004 = vld [vmem:[%s8 + $0x714] sm:$0xf]
      %v9005 = vld [vmem:[%s8 + $0x718] sm:$0xf]
      %v9006 = vld [vmem:[%s8 + $0x71c] sm:$0xf]
      %v9007 = vld [vmem:[%s8 + $0x720] sm:$0xf]
      %v9008 = vld [vmem:[%s8 + $0x724] sm:$0xf]
      %v9009 = vld [vmem:[%s8 + $0x728] sm:$0xf]
      %v9010 = vld [vmem:[%s8 + $0x72c] sm:$0xf]
      %v9011 = vld [vmem:[%s8 + $0x730] sm:$0xf]
      %v9012 = vld [vmem:[%s8 + $0x734] sm:$0xf]
      %v9013 = vld [vmem:[%s8 + $0x738] sm:$0xf]
      %v9014 = vld [vmem:[%s8 + $0x73c] sm:$0xf]
      %v9015 = vld [vmem:[%s8 + $0x740] sm:$0xf]
      %v9016 = vld [vmem:[%s8 + $0x744] sm:$0xf]
      %v9017 = vld [vmem:[%s8 + $0x748] sm:$0xf]
      %v9018 = vld [vmem:[%s8 + $0x74c] sm:$0xf]
      %v9019 = vld [vmem:[%s8 + $0x750] sm:$0xf]
      %v9020 = vld [vmem:[%s8 + $0x754] sm:$0xf]
      %v9021 = vld [vmem:[%s8 + $0x758] sm:$0xf]
      %v9022 = vld [vmem:[%s8 + $0x75c] sm:$0xf]
      %v9023 = vld [vmem:[%s8 + $0x760] sm:$0xf]
      %v9024 = vld [vmem:[%s8 + $0x764] sm:$0xf]
      %v9025 = vld [vmem:[%s8 + $0x768] sm:$0xf]
      %v9026 = vld [vmem:[%s8 + $0x76c] sm:$0xf]
      %v9027 = vld [vmem:[%s8 + $0x770] sm:$0xf]
      %v9028 = vld [vmem:[%s8 + $0x774] sm:$0xf]
      %v9029 = vld [vmem:[%s8 + $0x778] sm:$0xf]
      %v9030 = vld [vmem:[%s8 + $0x77c] sm:$0xf]
      %v9063 = vunpack.c.l.b16 %v8999
      %v9064 = vunpack.c.l.b16 %v9000
      %v9065 = vunpack.c.l.b16 %v9001
      %v9066 = vunpack.c.l.b16 %v9002
      %v9067 = vunpack.c.l.b16 %v9003
      %v9068 = vunpack.c.l.b16 %v9004
      %v9069 = vunpack.c.l.b16 %v9005
      %v9070 = vunpack.c.l.b16 %v9006
      %v9071 = vunpack.c.l.b16 %v9007
      %v9072 = vunpack.c.l.b16 %v9008
      %v9073 = vunpack.c.l.b16 %v9009
      %v9074 = vunpack.c.l.b16 %v9010
      %v9075 = vunpack.c.l.b16 %v9011
      %v9076 = vunpack.c.l.b16 %v9012
      %v9077 = vunpack.c.l.b16 %v9013
      %v9078 = vunpack.c.l.b16 %v9014
      %v9079 = vunpack.c.l.b16 %v9015
      %v9080 = vunpack.c.l.b16 %v9016
      %v9081 = vunpack.c.l.b16 %v9017
      %v9082 = vunpack.c.l.b16 %v9018
      %v9083 = vunpack.c.l.b16 %v9019
      %v9084 = vunpack.c.l.b16 %v9020
      %v9085 = vunpack.c.l.b16 %v9021
      %v9086 = vunpack.c.l.b16 %v9022
      %v9087 = vunpack.c.l.b16 %v9023
      %v9088 = vunpack.c.l.b16 %v9024
      %v9089 = vunpack.c.l.b16 %v9025
      %v9090 = vunpack.c.l.b16 %v9026
      %v9091 = vunpack.c.l.b16 %v9027
      %v9092 = vunpack.c.l.b16 %v9028
      %v9093 = vunpack.c.l.b16 %v9029
      %v9094 = vunpack.c.l.b16 %v9030
      %v9095 = vpack.c.b16 %v9064, %v9063
      %v9096 = vpack.c.b16 %v9066, %v9065
      %v9097 = vpack.c.b16 %v9068, %v9067
      %v9098 = vpack.c.b16 %v9070, %v9069
      %v9099 = vpack.c.b16 %v9072, %v9071
      %v9100 = vpack.c.b16 %v9074, %v9073
      %v9101 = vpack.c.b16 %v9076, %v9075
      %v9102 = vpack.c.b16 %v9078, %v9077
      %v9103 = vpack.c.b16 %v9080, %v9079
      %v9104 = vpack.c.b16 %v9082, %v9081
      %v9105 = vpack.c.b16 %v9084, %v9083
      %v9106 = vpack.c.b16 %v9086, %v9085
      %v9107 = vpack.c.b16 %v9088, %v9087
      %v9108 = vpack.c.b16 %v9090, %v9089
      %v9109 = vpack.c.b16 %v9092, %v9091
      %v9110 = vpack.c.b16 %v9094, %v9093
      %v9112 = vsel %vm4149, %v9095, 0
      %v9115 = vsel %vm4149, %v9096, 0
      %v9118 = vsel %vm4149, %v9097, 0
      %v9121 = vsel %vm4149, %v9098, 0
      %v9124 = vsel %vm4149, %v9099, 0
      %v9127 = vsel %vm4149, %v9100, 0
      %v9130 = vsel %vm4149, %v9101, 0
      %v9133 = vsel %vm4149, %v9102, 0
      %v9136 = vsel %vm4149, %v9103, 0
      %v9139 = vsel %vm4149, %v9104, 0
      %v9142 = vsel %vm4149, %v9105, 0
      %v9145 = vsel %vm4149, %v9106, 0
      %v9148 = vsel %vm4149, %v9107, 0
      %v9151 = vsel %vm4149, %v9108, 0
      %v9154 = vsel %vm4149, %v9109, 0
      %v9157 = vsel %vm4149, %v9110, 0
      %9159 = vmatprep.subr.bf16.mxu0 0
      %9160 = vmatpush1.bf16.xpose.msra.mxu0 %v4199
      %9161 = vmatprep.subr.bf16.mxu0 0
      %9162 = vmatpush1.bf16.xpose.msra.mxu0 %v4202
      %9163 = vmatprep.subr.bf16.mxu0 0
      %9164 = vmatpush1.bf16.xpose.msra.mxu0 %v4205
      %9165 = vmatprep.subr.bf16.mxu0 0
      %9166 = vmatpush1.bf16.xpose.msra.mxu0 %v4208
      %9167 = vmatprep.subr.bf16.mxu0 0
      %9168 = vmatpush1.bf16.xpose.msra.mxu0 %v4211
      %9169 = vmatprep.subr.bf16.mxu0 0
      %9170 = vmatpush1.bf16.xpose.msra.mxu0 %v4214
      %9171 = vmatprep.subr.bf16.mxu0 0
      %9172 = vmatpush1.bf16.xpose.msra.mxu0 0
      %9173 = vmatprep.subr.bf16.mxu0 0
      %9174 = vmatpush1.bf16.xpose.msra.mxu0 0
      %9175 = vmatprep.subr.bf16.mxu0 0
      %9176 = vmatpush1.bf16.xpose.msra.mxu0 0
      %9177 = vmatprep.subr.bf16.mxu0 0
      %9178 = vmatpush1.bf16.xpose.msra.mxu0 0
      %9179 = vmatprep.subr.bf16.mxu0 0
      %9180 = vmatpush1.bf16.xpose.msra.mxu0 0
      %9181 = vmatprep.subr.bf16.mxu0 0
      %9182 = vmatpush1.bf16.xpose.msra.mxu0 0
      %9183 = vmatprep.subr.bf16.mxu0 0
      %9184 = vmatpush1.bf16.xpose.msra.mxu0 0
      %9185 = vmatprep.subr.bf16.mxu0 0
      %9186 = vmatpush1.bf16.xpose.msra.mxu0 0
      %9187 = vmatprep.subr.bf16.mxu0 0
      %9188 = vmatpush1.bf16.xpose.msra.mxu0 0
      %9189 = vmatprep.subr.bf16.mxu0 0
      %9190 = vmatpush1.bf16.xpose.msra.mxu0 0
      %9191 = vmatprep.mubr.bf16.mxu0 0
      %9192 = vmatmul.mubr.bf16.gmra.mrb[0].mxu0 %v9112
      %v9193 = vpop.f32.mrb[0].mxu0
      %v9194 = vadd.f32 0.0, %v9193
      %v9195 = vpop.f32.mrb[0].mxu0
      %v9196 = vpop.f32.mrb[0].mxu0
      %v9197 = vadd.f32 0.0, %v9196
      %v9198 = vpop.f32.mrb[0].mxu0
      %9199 = vmatprep.mubr.bf16.mxu0 0
      %9200 = vmatmul.mubr.bf16.gmra.mrb[0].mxu0 %v9115
      %v9201 = vpop.f32.mrb[0].mxu0
      %v9202 = vadd.f32 0.0, %v9201
      %v9203 = vpop.f32.mrb[0].mxu0
      %v9204 = vpop.f32.mrb[0].mxu0
      %v9205 = vadd.f32 0.0, %v9204
      %v9206 = vpop.f32.mrb[0].mxu0
      %9207 = vmatprep.mubr.bf16.mxu0 0
      %9208 = vmatmul.mubr.bf16.gmra.mrb[0].mxu0 %v9118
      %v9209 = vpop.f32.mrb[0].mxu0
      %v9210 = vadd.f32 0.0, %v9209
      %v9211 = vpop.f32.mrb[0].mxu0
      %v9212 = vpop.f32.mrb[0].mxu0
      %v9213 = vadd.f32 0.0, %v9212
      %v9214 = vpop.f32.mrb[0].mxu0
      %9215 = vmatprep.mubr.bf16.mxu0 0
      %9216 = vmatmul.mubr.bf16.gmra.mrb[0].mxu0 %v9121
      %v9217 = vpop.f32.mrb[0].mxu0
      %v9218 = vadd.f32 0.0, %v9217
      %v9219 = vpop.f32.mrb[0].mxu0
      %v9220 = vpop.f32.mrb[0].mxu0
      %v9221 = vadd.f32 0.0, %v9220
      %v9222 = vpop.f32.mrb[0].mxu0
      %9223 = vmatprep.mubr.bf16.mxu0 0
      %9224 = vmatmul.mubr.bf16.gmra.mrb[0].mxu0 %v9124
      %v9225 = vpop.f32.mrb[0].mxu0
      %v9226 = vadd.f32 0.0, %v9225
      %v9227 = vpop.f32.mrb[0].mxu0
      %v9228 = vpop.f32.mrb[0].mxu0
      %v9229 = vadd.f32 0.0, %v9228
      %v9230 = vpop.f32.mrb[0].mxu0
      %9231 = vmatprep.mubr.bf16.mxu0 0
      %9232 = vmatmul.mubr.bf16.gmra.mrb[0].mxu0 %v9127
      %v9233 = vpop.f32.mrb[0].mxu0
      %v9234 = vadd.f32 0.0, %v9233
      %v9235 = vpop.f32.mrb[0].mxu0
      %v9236 = vpop.f32.mrb[0].mxu0
      %v9237 = vadd.f32 0.0, %v9236
      %v9238 = vpop.f32.mrb[0].mxu0
      %9239 = vmatprep.mubr.bf16.mxu0 0
      %9240 = vmatmul.mubr.bf16.gmra.mrb[0].mxu0 %v9130
      %v9241 = vpop.f32.mrb[0].mxu0
      %v9242 = vadd.f32 0.0, %v9241
      %v9243 = vpop.f32.mrb[0].mxu0
      %v9244 = vpop.f32.mrb[0].mxu0
      %v9245 = vadd.f32 0.0, %v9244
      %v9246 = vpop.f32.mrb[0].mxu0
      %9247 = vmatprep.mubr.bf16.mxu0 0
      %9248 = vmatmul.mubr.bf16.gmra.mrb[0].mxu0 %v9133
      %v9249 = vpop.f32.mrb[0].mxu0
      %v9250 = vadd.f32 0.0, %v9249
      %v9251 = vpop.f32.mrb[0].mxu0
      %v9252 = vpop.f32.mrb[0].mxu0
      %v9253 = vadd.f32 0.0, %v9252
      %v9254 = vpop.f32.mrb[0].mxu0
      %9255 = vmatprep.mubr.bf16.mxu0 0
      %9256 = vmatmul.mubr.bf16.gmra.mrb[0].mxu0 %v9136
      %v9257 = vpop.f32.mrb[0].mxu0
      %v9258 = vadd.f32 0.0, %v9257
      %v9259 = vpop.f32.mrb[0].mxu0
      %v9260 = vpop.f32.mrb[0].mxu0
      %v9261 = vadd.f32 0.0, %v9260
      %v9262 = vpop.f32.mrb[0].mxu0
      %9263 = vmatprep.mubr.bf16.mxu0 0
      %9264 = vmatmul.mubr.bf16.gmra.mrb[0].mxu0 %v9139
      %v9265 = vpop.f32.mrb[0].mxu0
      %v9266 = vadd.f32 0.0, %v9265
      %v9267 = vpop.f32.mrb[0].mxu0
      %v9268 = vpop.f32.mrb[0].mxu0
      %v9269 = vadd.f32 0.0, %v9268
      %v9270 = vpop.f32.mrb[0].mxu0
      %9271 = vmatprep.mubr.bf16.mxu0 0
      %9272 = vmatmul.mubr.bf16.gmra.mrb[0].mxu0 %v9142
      %v9273 = vpop.f32.mrb[0].mxu0
      %v9274 = vadd.f32 0.0, %v9273
      %v9275 = vpop.f32.mrb[0].mxu0
      %v9276 = vpop.f32.mrb[0].mxu0
      %v9277 = vadd.f32 0.0, %v9276
      %v9278 = vpop.f32.mrb[0].mxu0
      %9279 = vmatprep.mubr.bf16.mxu0 0
      %9280 = vmatmul.mubr.bf16.gmra.mrb[0].mxu0 %v9145
      %v9281 = vpop.f32.mrb[0].mxu0
      %v9282 = vadd.f32 0.0, %v9281
      %v9283 = vpop.f32.mrb[0].mxu0
      %v9284 = vpop.f32.mrb[0].mxu0
      %v9285 = vadd.f32 0.0, %v9284
      %v9286 = vpop.f32.mrb[0].mxu0
      %9287 = vmatprep.mubr.bf16.mxu0 0
      %9288 = vmatmul.mubr.bf16.gmra.mrb[0].mxu0 %v9148
      %v9289 = vpop.f32.mrb[0].mxu0
      %v9290 = vadd.f32 0.0, %v9289
      %v9291 = vpop.f32.mrb[0].mxu0
      %v9292 = vpop.f32.mrb[0].mxu0
      %v9293 = vadd.f32 0.0, %v9292
      %v9294 = vpop.f32.mrb[0].mxu0
      %9295 = vmatprep.mubr.bf16.mxu0 0
      %9296 = vmatmul.mubr.bf16.gmra.mrb[0].mxu0 %v9151
      %v9297 = vpop.f32.mrb[0].mxu0
      %v9298 = vadd.f32 0.0, %v9297
      %v9299 = vpop.f32.mrb[0].mxu0
      %v9300 = vpop.f32.mrb[0].mxu0
      %v9301 = vadd.f32 0.0, %v9300
      %v9302 = vpop.f32.mrb[0].mxu0
      %9303 = vmatprep.mubr.bf16.mxu0 0
      %9304 = vmatmul.mubr.bf16.gmra.mrb[0].mxu0 %v9154
      %v9305 = vpop.f32.mrb[0].mxu0
      %v9306 = vadd.f32 0.0, %v9305
      %v9307 = vpop.f32.mrb[0].mxu0
      %v9308 = vpop.f32.mrb[0].mxu0
      %v9309 = vadd.f32 0.0, %v9308
      %v9310 = vpop.f32.mrb[0].mxu0
      %9311 = vmatprep.mubr.bf16.mxu0 0
      %9312 = vmatmul.mubr.bf16.gmra.mrb[0].mxu0 %v9157
      %v9313 = vpop.f32.mrb[0].mxu0
      %v9314 = vadd.f32 0.0, %v9313
      %v9315 = vpop.f32.mrb[0].mxu0
      %v9316 = vpop.f32.mrb[0].mxu0
      %v9317 = vadd.f32 0.0, %v9316
      %v9318 = vpop.f32.mrb[0].mxu0
      %9319 = vdwg.mxu0
      %9320 = vst.msk [vmem:[%s352 + $0xe00] sm:$0xff] %vm4377, %v9194
      %9321 = vst.msk [vmem:[%s352 + $0xe08] sm:$0xff] %vm4377, %v9197
      %9322 = vst.msk [vmem:[%s352 + $0xe10] sm:$0xff] %vm4377, %v9202
      %9323 = vst.msk [vmem:[%s352 + $0xe18] sm:$0xff] %vm4377, %v9205
      %9324 = vst.msk [vmem:[%s352 + $0xe20] sm:$0xff] %vm4377, %v9210
      %9325 = vst.msk [vmem:[%s352 + $0xe28] sm:$0xff] %vm4377, %v9213
      %9326 = vst.msk [vmem:[%s352 + $0xe30] sm:$0xff] %vm4377, %v9218
      %9327 = vst.msk [vmem:[%s352 + $0xe38] sm:$0xff] %vm4377, %v9221
      %9328 = vst.msk [vmem:[%s352 + $0xe40] sm:$0xff] %vm4377, %v9226
      %9329 = vst.msk [vmem:[%s352 + $0xe48] sm:$0xff] %vm4377, %v9229
      %9330 = vst.msk [vmem:[%s352 + $0xe50] sm:$0xff] %vm4377, %v9234
      %9331 = vst.msk [vmem:[%s352 + $0xe58] sm:$0xff] %vm4377, %v9237
      %9332 = vst.msk [vmem:[%s352 + $0xe60] sm:$0xff] %vm4377, %v9242
      %9333 = vst.msk [vmem:[%s352 + $0xe68] sm:$0xff] %vm4377, %v9245
      %9334 = vst.msk [vmem:[%s352 + $0xe70] sm:$0xff] %vm4377, %v9250
      %9335 = vst.msk [vmem:[%s352 + $0xe78] sm:$0xff] %vm4377, %v9253
      %9336 = vst.msk [vmem:[%s352 + $0xe80] sm:$0xff] %vm4377, %v9258
      %9337 = vst.msk [vmem:[%s352 + $0xe88] sm:$0xff] %vm4377, %v9261
      %9338 = vst.msk [vmem:[%s352 + $0xe90] sm:$0xff] %vm4377, %v9266
      %9339 = vst.msk [vmem:[%s352 + $0xe98] sm:$0xff] %vm4377, %v9269
      %9340 = vst.msk [vmem:[%s352 + $0xea0] sm:$0xff] %vm4377, %v9274
      %9341 = vst.msk [vmem:[%s352 + $0xea8] sm:$0xff] %vm4377, %v9277
      %9342 = vst.msk [vmem:[%s352 + $0xeb0] sm:$0xff] %vm4377, %v9282
      %9343 = vst.msk [vmem:[%s352 + $0xeb8] sm:$0xff] %vm4377, %v9285
      %9344 = vst.msk [vmem:[%s352 + $0xec0] sm:$0xff] %vm4377, %v9290
      %9345 = vst.msk [vmem:[%s352 + $0xec8] sm:$0xff] %vm4377, %v9293
      %9346 = vst.msk [vmem:[%s352 + $0xed0] sm:$0xff] %vm4377, %v9298
      %9347 = vst.msk [vmem:[%s352 + $0xed8] sm:$0xff] %vm4377, %v9301
      %9348 = vst.msk [vmem:[%s352 + $0xee0] sm:$0xff] %vm4377, %v9306
      %9349 = vst.msk [vmem:[%s352 + $0xee8] sm:$0xff] %vm4377, %v9309
      %9350 = vst.msk [vmem:[%s352 + $0xef0] sm:$0xff] %vm4377, %v9314
      %9351 = vst.msk [vmem:[%s352 + $0xef8] sm:$0xff] %vm4377, %v9317
      %v9352 = vld [vmem:[%s8 + $0x780] sm:$0xf]
      %v9353 = vld [vmem:[%s8 + $0x784] sm:$0xf]
      %v9354 = vld [vmem:[%s8 + $0x788] sm:$0xf]
      %v9355 = vld [vmem:[%s8 + $0x78c] sm:$0xf]
      %v9356 = vld [vmem:[%s8 + $0x790] sm:$0xf]
      %v9357 = vld [vmem:[%s8 + $0x794] sm:$0xf]
      %v9358 = vld [vmem:[%s8 + $0x798] sm:$0xf]
      %v9359 = vld [vmem:[%s8 + $0x79c] sm:$0xf]
      %v9360 = vld [vmem:[%s8 + $0x7a0] sm:$0xf]
      %v9361 = vld [vmem:[%s8 + $0x7a4] sm:$0xf]
      %v9362 = vld [vmem:[%s8 + $0x7a8] sm:$0xf]
      %v9363 = vld [vmem:[%s8 + $0x7ac] sm:$0xf]
      %v9364 = vld [vmem:[%s8 + $0x7b0] sm:$0xf]
      %v9365 = vld [vmem:[%s8 + $0x7b4] sm:$0xf]
      %v9366 = vld [vmem:[%s8 + $0x7b8] sm:$0xf]
      %v9367 = vld [vmem:[%s8 + $0x7bc] sm:$0xf]
      %v9368 = vld [vmem:[%s8 + $0x7c0] sm:$0x1]
      %v9386 = vunpack.c.l.b16 %v9352
      %v9387 = vunpack.c.l.b16 %v9353
      %v9388 = vunpack.c.l.b16 %v9354
      %v9389 = vunpack.c.l.b16 %v9355
      %v9390 = vunpack.c.l.b16 %v9356
      %v9391 = vunpack.c.l.b16 %v9357
      %v9392 = vunpack.c.l.b16 %v9358
      %v9393 = vunpack.c.l.b16 %v9359
      %v9394 = vunpack.c.l.b16 %v9360
      %v9395 = vunpack.c.l.b16 %v9361
      %v9396 = vunpack.c.l.b16 %v9362
      %v9397 = vunpack.c.l.b16 %v9363
      %v9398 = vunpack.c.l.b16 %v9364
      %v9399 = vunpack.c.l.b16 %v9365
      %v9400 = vunpack.c.l.b16 %v9366
      %v9401 = vunpack.c.l.b16 %v9367
      %v9402 = vunpack.c.l.b16 %v9368
      %v9403 = vpack.c.b16 %v9387, %v9386
      %v9404 = vpack.c.b16 %v9389, %v9388
      %v9405 = vpack.c.b16 %v9391, %v9390
      %v9406 = vpack.c.b16 %v9393, %v9392
      %v9407 = vpack.c.b16 %v9395, %v9394
      %v9408 = vpack.c.b16 %v9397, %v9396
      %v9409 = vpack.c.b16 %v9399, %v9398
      %v9410 = vpack.c.b16 %v9401, %v9400
      %v9411 = vpack.c.b16 %v9402, %v9402
      %v9413 = vsel %vm4149, %v9403, 0
      %v9416 = vsel %vm4149, %v9404, 0
      %v9419 = vsel %vm4149, %v9405, 0
      %v9422 = vsel %vm4149, %v9406, 0
      %v9425 = vsel %vm4149, %v9407, 0
      %v9428 = vsel %vm4149, %v9408, 0
      %v9431 = vsel %vm4149, %v9409, 0
      %v9434 = vsel %vm4149, %v9410, 0
      %v9437 = vsel %vm4149, %v9411, 0
      %9439 = vmatprep.subr.bf16.mxu0 0
      %9440 = vmatpush1.bf16.xpose.msra.mxu0 %v4199
      %9441 = vmatprep.subr.bf16.mxu0 0
      %9442 = vmatpush1.bf16.xpose.msra.mxu0 %v4202
      %9443 = vmatprep.subr.bf16.mxu0 0
      %9444 = vmatpush1.bf16.xpose.msra.mxu0 %v4205
      %9445 = vmatprep.subr.bf16.mxu0 0
      %9446 = vmatpush1.bf16.xpose.msra.mxu0 %v4208
      %9447 = vmatprep.subr.bf16.mxu0 0
      %9448 = vmatpush1.bf16.xpose.msra.mxu0 %v4211
      %9449 = vmatprep.subr.bf16.mxu0 0
      %9450 = vmatpush1.bf16.xpose.msra.mxu0 %v4214
      %9451 = vmatprep.subr.bf16.mxu0 0
      %9452 = vmatpush1.bf16.xpose.msra.mxu0 0
      %9453 = vmatprep.subr.bf16.mxu0 0
      %9454 = vmatpush1.bf16.xpose.msra.mxu0 0
      %9455 = vmatprep.subr.bf16.mxu0 0
      %9456 = vmatpush1.bf16.xpose.msra.mxu0 0
      %9457 = vmatprep.subr.bf16.mxu0 0
      %9458 = vmatpush1.bf16.xpose.msra.mxu0 0
      %9459 = vmatprep.subr.bf16.mxu0 0
      %9460 = vmatpush1.bf16.xpose.msra.mxu0 0
      %9461 = vmatprep.subr.bf16.mxu0 0
      %9462 = vmatpush1.bf16.xpose.msra.mxu0 0
      %9463 = vmatprep.subr.bf16.mxu0 0
      %9464 = vmatpush1.bf16.xpose.msra.mxu0 0
      %9465 = vmatprep.subr.bf16.mxu0 0
      %9466 = vmatpush1.bf16.xpose.msra.mxu0 0
      %9467 = vmatprep.subr.bf16.mxu0 0
      %9468 = vmatpush1.bf16.xpose.msra.mxu0 0
      %9469 = vmatprep.subr.bf16.mxu0 0
      %9470 = vmatpush1.bf16.xpose.msra.mxu0 0
      %9471 = vmatprep.mubr.bf16.mxu0 0
      %9472 = vmatmul.mubr.bf16.gmra.mrb[0].mxu0 %v9413
      %v9473 = vpop.f32.mrb[0].mxu0
      %v9474 = vadd.f32 0.0, %v9473
      %v9475 = vpop.f32.mrb[0].mxu0
      %v9476 = vpop.f32.mrb[0].mxu0
      %v9477 = vadd.f32 0.0, %v9476
      %v9478 = vpop.f32.mrb[0].mxu0
      %9479 = vmatprep.mubr.bf16.mxu0 0
      %9480 = vmatmul.mubr.bf16.gmra.mrb[0].mxu0 %v9416
      %v9481 = vpop.f32.mrb[0].mxu0
      %v9482 = vadd.f32 0.0, %v9481
      %v9483 = vpop.f32.mrb[0].mxu0
      %v9484 = vpop.f32.mrb[0].mxu0
      %v9485 = vadd.f32 0.0, %v9484
      %v9486 = vpop.f32.mrb[0].mxu0
      %9487 = vmatprep.mubr.bf16.mxu0 0
      %9488 = vmatmul.mubr.bf16.gmra.mrb[0].mxu0 %v9419
      %v9489 = vpop.f32.mrb[0].mxu0
      %v9490 = vadd.f32 0.0, %v9489
      %v9491 = vpop.f32.mrb[0].mxu0
      %v9492 = vpop.f32.mrb[0].mxu0
      %v9493 = vadd.f32 0.0, %v9492
      %v9494 = vpop.f32.mrb[0].mxu0
      %9495 = vmatprep.mubr.bf16.mxu0 0
      %9496 = vmatmul.mubr.bf16.gmra.mrb[0].mxu0 %v9422
      %v9497 = vpop.f32.mrb[0].mxu0
      %v9498 = vadd.f32 0.0, %v9497
      %v9499 = vpop.f32.mrb[0].mxu0
      %v9500 = vpop.f32.mrb[0].mxu0
      %v9501 = vadd.f32 0.0, %v9500
      %v9502 = vpop.f32.mrb[0].mxu0
      %9503 = vmatprep.mubr.bf16.mxu0 0
      %9504 = vmatmul.mubr.bf16.gmra.mrb[0].mxu0 %v9425
      %v9505 = vpop.f32.mrb[0].mxu0
      %v9506 = vadd.f32 0.0, %v9505
      %v9507 = vpop.f32.mrb[0].mxu0
      %v9508 = vpop.f32.mrb[0].mxu0
      %v9509 = vadd.f32 0.0, %v9508
      %v9510 = vpop.f32.mrb[0].mxu0
      %9511 = vmatprep.mubr.bf16.mxu0 0
      %9512 = vmatmul.mubr.bf16.gmra.mrb[0].mxu0 %v9428
      %v9513 = vpop.f32.mrb[0].mxu0
      %v9514 = vadd.f32 0.0, %v9513
      %v9515 = vpop.f32.mrb[0].mxu0
      %v9516 = vpop.f32.mrb[0].mxu0
      %v9517 = vadd.f32 0.0, %v9516
      %v9518 = vpop.f32.mrb[0].mxu0
      %9519 = vmatprep.mubr.bf16.mxu0 0
      %9520 = vmatmul.mubr.bf16.gmra.mrb[0].mxu0 %v9431
      %v9521 = vpop.f32.mrb[0].mxu0
      %v9522 = vadd.f32 0.0, %v9521
      %v9523 = vpop.f32.mrb[0].mxu0
      %v9524 = vpop.f32.mrb[0].mxu0
      %v9525 = vadd.f32 0.0, %v9524
      %v9526 = vpop.f32.mrb[0].mxu0
      %9527 = vmatprep.mubr.bf16.mxu0 0
      %9528 = vmatmul.mubr.bf16.gmra.mrb[0].mxu0 %v9434
      %v9529 = vpop.f32.mrb[0].mxu0
      %v9530 = vadd.f32 0.0, %v9529
      %v9531 = vpop.f32.mrb[0].mxu0
      %v9532 = vpop.f32.mrb[0].mxu0
      %v9533 = vadd.f32 0.0, %v9532
      %v9534 = vpop.f32.mrb[0].mxu0
      %9535 = vmatprep.mubr.bf16.mxu0 0
      %9536 = vmatmul.mubr.bf16.gmra.mrb[0].mxu0 %v9437
      %v9537 = vpop.f32.mrb[0].mxu0
      %v9538 = vadd.f32 0.0, %v9537
      %v9539 = vpop.f32.mrb[0].mxu0
      %v9540 = vpop.f32.mrb[0].mxu0
      %v9541 = vpop.f32.mrb[0].mxu0
      %9542 = vdwg.mxu0
      %9543 = vst.msk [vmem:[%s352 + $0xf00] sm:$0xff] %vm4377, %v9474
      %9544 = vst.msk [vmem:[%s352 + $0xf08] sm:$0xff] %vm4377, %v9477
      %9545 = vst.msk [vmem:[%s352 + $0xf10] sm:$0xff] %vm4377, %v9482
      %9546 = vst.msk [vmem:[%s352 + $0xf18] sm:$0xff] %vm4377, %v9485
      %9547 = vst.msk [vmem:[%s352 + $0xf20] sm:$0xff] %vm4377, %v9490
      %9548 = vst.msk [vmem:[%s352 + $0xf28] sm:$0xff] %vm4377, %v9493
      %9549 = vst.msk [vmem:[%s352 + $0xf30] sm:$0xff] %vm4377, %v9498
      %9550 = vst.msk [vmem:[%s352 + $0xf38] sm:$0xff] %vm4377, %v9501
      %9551 = vst.msk [vmem:[%s352 + $0xf40] sm:$0xff] %vm4377, %v9506
      %9552 = vst.msk [vmem:[%s352 + $0xf48] sm:$0xff] %vm4377, %v9509
      %9553 = vst.msk [vmem:[%s352 + $0xf50] sm:$0xff] %vm4377, %v9514
      %9554 = vst.msk [vmem:[%s352 + $0xf58] sm:$0xff] %vm4377, %v9517
      %9555 = vst.msk [vmem:[%s352 + $0xf60] sm:$0xff] %vm4377, %v9522
      %9556 = vst.msk [vmem:[%s352 + $0xf68] sm:$0xff] %vm4377, %v9525
      %9557 = vst.msk [vmem:[%s352 + $0xf70] sm:$0xff] %vm4377, %v9530
      %9558 = vst.msk [vmem:[%s352 + $0xf78] sm:$0xff] %vm4377, %v9533
      %vm9559 = vcmask 655360
      %9560 = vst.msk [vmem:[%s352 + $0xf80] sm:$0x1] %vm9559, %v9538
      %p9561 = scmp.lt.s32.totalorder %s20, 1
      %s9562 = scalar_select %p9561, %s20, 1
      %s9563 = smul.addr %s9562, 497
      %s9564 = smul.addr %s9563, 8
      %s9565 = scalar_lea.vmem %s9, %s9564
      // Predicated region
      $region57: #{depth_corr_forward.1} parent=55 // pred_check
        %p9566 = pneg %p237
      $region58: #{depth_corr_forward.1} parent=55 // pred_check_branch
        %9568 = sbr.rel (%p9566) target = $region60
      $region59: #{depth_corr_forward.1} parent=55 // pred_region
        _
      $region60: #{depth_corr_forward.1} parent=55 // pred_fallthru
        _
    $region56: #{depth_corr_forward.1} parent=5 // pred_fallthru
      _
    %p9569 = scmp.le.s32.totalorder 2, %s15
    // Predicated region
    $region61: #{depth_corr_forward.1} parent=5 // pred_check
      %p9570 = pneg %p9569
    $region62: #{depth_corr_forward.1} parent=5 // pred_check_branch
      %9572 = sbr.rel (%p9570) target = $region64
    $region63: #{depth_corr_forward.1} parent=5 // pred_region
      %s9573 = ssub.s32 %s15, 2
      // Predicated region
      $region65: #{depth_corr_forward.1} parent=63 // pred_check
        %p9574 = pneg %p243
      $region66: #{depth_corr_forward.1} parent=63 // pred_check_branch
        %9576 = sbr.rel (%p9574) target = $region68
      $region67: #{depth_corr_forward.1} parent=63 // pred_region
        %p9577 = scmp.lt.s32.totalorder %s21, 1
        %s9578 = scalar_select %p9577, %s21, 1
        %s9579 = smul.addr %s9578, 497
        %s9580 = smul.addr %s9579, 8
        %s9581 = scalar_lea.vmem %s9, %s9580
      $region68: #{depth_corr_forward.1} parent=63 // pred_fallthru
        _
    $region64: #{depth_corr_forward.1} parent=5 // pred_fallthru
      _
  $region6: #{depth_corr_forward.1} parent=0 // loop_footer
    %s19 = sadd.s32 1, %s15
  $region7: #{depth_corr_forward.1} parent=0 // loop_footer_branch
    %14 = sbr.rel target = $region3
  $region8: #{depth_corr_forward.1} parent=0 // loop_exit
    _

</llo_original>
